<compile_context>
chip_gen: v7x
topology: tpu7x:2x2x1
jax: 0.10.0
libtpu: 0.0.40
codegen_flags: <defaults>
</compile_context>

<pallas_src>
import jax
import jax.numpy as jnp
import numpy as np
from jax.experimental import pallas as pl
from jax.experimental.pallas import tpu as pltpu

EPS = 1e-5
DILS = (3, 6, 9)                         # dilations of the three 3x3x3 branches
PMAX = max(DILS)
# Distinct depth offsets needed per output slice: (-9, -6, -3, 0, 3, 6, 9)
PLANE_OFFS = tuple(sorted({(kd - 1) * d for d in DILS for kd in range(3)}))
CENTER = PLANE_OFFS.index(0)


# ---------------------------------------------------------------------------
# Fused ASPP kernel
# ---------------------------------------------------------------------------
def _make_aspp_kernel(H, W, C, Cp, compute_dtype):
    HW = H * W
    cd = compute_dtype

    def kernel(pm9, pm6, pm3, pc0, pp3, pp6, pp9,     # 7 depth planes (unpadded H/W)
               wd_ref, bd_ref, w5d_ref,               # dilated branches
               w1_ref, b1_ref, w51_ref,               # 1x1 branch
               w0_ref, b0_ref, w50_ref,               # pooled branch
               b5_ref,                                # folded final bias
               out_ref,
               pad_ref, patch_ref, acc_ref):          # VMEM scratch
        planes = (pm9, pm6, pm3, pc0, pp3, pp6, pp9)

        # ---- H/W zero-padding in VMEM: zero the bordered buffer, then drop each
        # unpadded plane at offset (PMAX, PMAX).  Re-done every grid step so no
        # persistent-scratch init is required (safe under megacore partitioning).
        pad_ref[...] = jnp.zeros_like(pad_ref)
        for p in range(len(planes)):
            pad_ref[p, PMAX:PMAX + H, PMAX:PMAX + W, :] = planes[p][0, 0, :, :, :]

        # ---- branch 1: 1x1x1 conv (BN folded) + ReLU ----------------------
        center = planes[CENTER][0, 0, :, :, :].reshape(HW, C)
        y1 = jnp.maximum(
            jnp.dot(center, w1_ref[...], preferred_element_type=jnp.float32)
            + b1_ref[...], 0.0)

        # ---- branch 0: AdaptiveAvgPool3d((d,1,1)) == mean over (H, W) per depth
        # slice, 1x1 conv + BN + ReLU.  The trilinear upsample from spatial size
        # (1, 1) with align_corners=True is exactly a broadcast over (H, W).
        pooled = jnp.mean(center.astype(jnp.float32), axis=0, keepdims=True)
        y0 = jnp.maximum(
            jnp.dot(pooled.astype(cd), w0_ref[...],
                    preferred_element_type=jnp.float32) + b0_ref[...], 0.0)

        # ---- init the 5*Cout -> Cout projection accumulator ----------------
        acc_ref[...] = (
            b5_ref[...]
            + jnp.dot(y1.astype(cd), w51_ref[...], preferred_element_type=jnp.float32)
            + jnp.dot(y0.astype(cd), w50_ref[...], preferred_element_type=jnp.float32))

        # ---- branches 2..4: dilated 3x3x3 convs via in-VMEM im2col ----------
        for j, dil in enumerate(DILS):
            acc_d = jnp.zeros((HW, Cp), jnp.float32)
            for kd in range(3):
                p = PLANE_OFFS.index((kd - 1) * dil)
                for kh in range(3):
                    h0 = PMAX + (kh - 1) * dil
                    for kw in range(3):
                        woff = PMAX + (kw - 1) * dil
                        t = kh * 3 + kw
                        patch_ref[:, :, t * C:(t + 1) * C] = (
                            pad_ref[p, h0:h0 + H, woff:woff + W, :])
                # One MXU matmul per depth tap: K = 9*C (keeps the MXU fed and
                # removes the 26 extra (HW, Cout) accumulation passes).
                acc_d = acc_d + jnp.dot(
                    patch_ref[...].reshape(HW, 9 * C), wd_ref[j, kd, :, :],
                    preferred_element_type=jnp.float32)
            yj = jnp.maximum(acc_d + bd_ref[j, :, :], 0.0)
            acc_ref[...] += jnp.dot(yj.astype(cd), w5d_ref[j, :, :],
                                    preferred_element_type=jnp.float32)

        # ---- final ReLU (BN5 + conv bias already folded), lane-dense store ----
        out_ref[...] = jnp.maximum(acc_ref[...], 0.0).astype(
            out_ref.dtype).reshape(out_ref.shape)

    return kernel


def _round_up(x, m):
    return (x + m - 1) // m * m


def _fold_bn(w, bn, conv_bias=None):
    gamma, beta, mean, var = bn
    s = gamma / jnp.sqrt(var + EPS)
    b = beta - mean * s
    if conv_bias is not None:
        b = b + conv_bias * s
    return w * s[:, None, None, None, None], b


def _aspp_forward_impl(x_ncdhw, params, compute_dtype):
    cd = compute_dtype
    # NCDHW -> NDHWC, already in the compute dtype.
    x = jnp.transpose(x_ncdhw, (0, 2, 3, 4, 1)).astype(cd)   # (N, D, H, W, C)
    N, D, H, W, C = x.shape
    Cout = params['w0'].shape[0]
    Cp = _round_up(Cout, 128)            # lane-dense output stores
    HW = H * W
    Hp, Wp = H + 2 * PMAX, W + 2 * PMAX

    # Pad the DEPTH axis only; H/W zero padding is done in VMEM inside the
    # kernel, so every plane DMA moves exactly H*W*C elements.
    xdp = jnp.pad(x, ((0, 0), (PMAX, PMAX), (0, 0), (0, 0), (0, 0)))

    def padc(m):                         # zero-pad trailing (out-channel) dim -> Cp
        return jnp.pad(m, [(0, 0)] * (m.ndim - 1) + [(0, Cp - Cout)])

    # ---- fold BN scales into matmul weights; only biases remain in-kernel ----
    w0f, b0f = _fold_bn(params['w0'], params['bn0'])
    w1f, b1f = _fold_bn(params['w1'], params['bn1'])
    w0m = padc(w0f[:, :, 0, 0, 0].T)                     # (C, Cp)
    w1m = padc(w1f[:, :, 0, 0, 0].T)                     # (C, Cp)
    b0v = padc(b0f.reshape(1, Cout))                     # (1, Cp)
    b1v = padc(b1f.reshape(1, Cout))

    wds, bds = [], []
    for i in (2, 3, 4):
        wf, bf = _fold_bn(params[f'w{i}'], params[f'bn{i}'])
        # (Cout, C, kd, kh, kw) -> (kd, kh, kw, C, Cout) -> (kd, 9*C, Cout);
        # row index (kh*3 + kw)*C + c matches the im2col patch layout.
        wt = jnp.transpose(wf, (2, 3, 4, 1, 0)).reshape(3, 9 * C, Cout)
        wds.append(padc(wt))
        bds.append(padc(bf.reshape(1, Cout)))
    wd = jnp.stack(wds, axis=0)                          # (3, 3, 9*C, Cp)
    bd = jnp.stack(bds, axis=0)                          # (3, 1, Cp)

    # ---- final 1x1x1 projection: fold BN5 (+ conv bias) into w5 / b5 --------
    g5, be5, m5, v5 = params['bn5']
    s5 = g5 / jnp.sqrt(v5 + EPS)
    b5v = padc((be5 - m5 * s5 + params['b5'] * s5).reshape(1, Cout))
    w5m = params['w5'][:, :, 0, 0, 0].T * s5[None, :]    # (5*Cout, Cout), BN-scaled

    def pad5(blk):                                       # (Cout, Cout) -> (Cp, Cp)
        return jnp.pad(blk, ((0, Cp - Cout), (0, Cp - Cout)))

    w50 = pad5(w5m[0 * Cout:1 * Cout])                   # pooled-branch block
    w51 = pad5(w5m[1 * Cout:2 * Cout])                   # 1x1-branch block
    w5d = jnp.stack([pad5(w5m[(2 + k) * Cout:(3 + k) * Cout]) for k in range(3)], 0)

    # ---- BlockSpecs ----------------------------------------------------------
    def plane_spec(off):
        def imap(n, d, off=off):
            return (n, d + PMAX + off, 0, 0, 0)
        return pl.BlockSpec((1, 1, H, W, C), imap)

    def resident_spec(arr):              # constant block index -> fetched once
        zeros = (0,) * arr.ndim
        return pl.BlockSpec(arr.shape, lambda n, d, z=zeros: z)

    weight_ops = (wd.astype(cd), bd.astype(jnp.float32), w5d.astype(cd),
                  w1m.astype(cd), b1v.astype(jnp.float32), w51.astype(cd),
                  w0m.astype(cd), b0v.astype(jnp.float32), w50.astype(cd),
                  b5v.astype(jnp.float32))

    in_specs = ([plane_spec(off) for off in PLANE_OFFS]
                + [resident_spec(w) for w in weight_ops])
    out_spec = pl.BlockSpec((1, 1, HW, Cp), lambda n, d: (n, d, 0, 0))

    # ---- VMEM budget & compiler params --------------------------------------
    esz = jnp.dtype(cd).itemsize
    plane_b = H * W * C * esz
    wbytes = sum(int(np.prod(w.shape)) * w.dtype.itemsize for w in weight_ops)
    scratch_b = (len(PLANE_OFFS) * Hp * Wp * C * esz     # zero-bordered planes
                 + H * W * 9 * C * esz                   # im2col patch
                 + HW * Cp * 4)                          # f32 accumulator
    need = (2 * len(PLANE_OFFS) * plane_b                # double-buffered plane DMAs
            + 2 * wbytes                                 # resident weights (2 bufs)
            + 2 * HW * Cp * 4                            # output pipeline
            + scratch_b
            + 3 * HW * Cp * 4 + H * W * 9 * C * esz)     # in-flight temporaries
    try:
        phys = int(getattr(pltpu.get_tpu_info(), "vmem_capacity_bytes", 64 << 20))
    except Exception:
        phys = 64 << 20                                  # conservative (v7x)
    vmem_limit = int(min(int(phys * 0.85), max(32 << 20, need + (8 << 20))))

    flops_nd = (3 * (3 * 2 * HW * 9 * C * Cp + 2 * HW * Cp * Cp)   # dilated branches
                + 2 * HW * C * Cp + 2 * HW * Cp * Cp               # 1x1 branch
                + 2 * C * Cp + 2 * Cp * Cp)                        # pooled branch
    cost = pl.CostEstimate(
        flops=int(N * D * flops_nd), transcendentals=0,
        bytes_accessed=int(N * D * (len(PLANE_OFFS) * plane_b + HW * Cp * 4)
                           + wbytes))

    kernel = _make_aspp_kernel(H, W, C, Cp, cd)
    out = pl.pallas_call(
        kernel,
        out_shape=jax.ShapeDtypeStruct((N, D, HW, Cp), jnp.float32),
        grid_spec=pltpu.PrefetchScalarGridSpec(
            num_scalar_prefetch=0,
            grid=(N, D),
            in_specs=in_specs,
            out_specs=out_spec,
            scratch_shapes=[
                pltpu.VMEM((len(PLANE_OFFS), Hp, Wp, C), cd),   # padded planes
                pltpu.VMEM((H, W, 9 * C), cd),                  # im2col patch
                pltpu.VMEM((HW, Cp), jnp.float32),              # projection acc
            ],
        ),
        compiler_params=pltpu.CompilerParams(
            dimension_semantics=("parallel", "parallel"),
            vmem_limit_bytes=vmem_limit),
        cost_estimate=cost,
    )(*([xdp] * len(PLANE_OFFS)), *weight_ops)

    out = out[:, :, :, :Cout].reshape(N, D, H, W, Cout)
    return jnp.transpose(out, (0, 4, 1, 2, 3))           # back to NCDHW


_aspp_jit = jax.jit(_aspp_forward_impl, static_argnames=("compute_dtype",))


def aspp_forward(x, params, compute_dtype=jnp.bfloat16):
    """ASPP forward (inference).  compute_dtype selects the MXU input dtype."""
    return _aspp_jit(x, params, compute_dtype=compute_dtype)


# ---------------------------------------------------------------------------
# Pure-JAX reference (for verification only)
# ---------------------------------------------------------------------------
def ref_forward(x, params):
    def conv(x, w, dil, pad, bias=None):
        y = jax.lax.conv_general_dilated(
            x, w, window_strides=(1, 1, 1), padding=[(pad, pad)] * 3,
            rhs_dilation=(dil, dil, dil),
            dimension_numbers=('NCDHW', 'OIDHW', 'NCDHW'))
        if bias is not None:
            y = y + bias[None, :, None, None, None]
        return y

    def bn_relu(y, bn):
        g, b, m, v = (p[None, :, None, None, None] for p in bn)
        return jax.nn.relu((y - m) / jnp.sqrt(v + EPS) * g + b)

    N, C, D, H, W = x.shape
    Cout = params['w0'].shape[0]
    pooled = jnp.mean(x, axis=(3, 4), keepdims=True)      # AdaptiveAvgPool3d((D,1,1))
    x0 = bn_relu(conv(pooled, params['w0'], 1, 0), params['bn0'])
    x0 = jnp.broadcast_to(x0, (N, Cout, D, H, W))          # trilinear upsample == bcast
    x1 = bn_relu(conv(x, params['w1'], 1, 0), params['bn1'])
    x2 = bn_relu(conv(x, params['w2'], 3, 3), params['bn2'])
    x3 = bn_relu(conv(x, params['w3'], 6, 6), params['bn3'])
    x4 = bn_relu(conv(x, params['w4'], 9, 9), params['bn4'])
    cat = jnp.concatenate([x0, x1, x2, x3, x4], axis=1)
    return bn_relu(conv(cat, params['w5'], 1, 0, params['b5']), params['bn5'])


# ---------------------------------------------------------------------------
# Deterministic parameter init
# ---------------------------------------------------------------------------
def init_params(key, Cin, Cout):
    ks = iter(jax.random.split(key, 64))

    def nrm(shape, s=0.1):
        return (s * jax.random.normal(next(ks), shape)).astype(jnp.float32)

    def bn():
        gamma = jax.random.uniform(next(ks), (Cout,), minval=0.5, maxval=1.5).astype(jnp.float32)
        beta = nrm((Cout,))
        mean = nrm((Cout,))
        var = jax.random.uniform(next(ks), (Cout,), minval=0.5, maxval=1.5).astype(jnp.float32)
        return (gamma, beta, mean, var)

    p = {}
    p['w0'] = nrm((Cout, Cin, 1, 1, 1)); p['bn0'] = bn()
    p['w1'] = nrm((Cout, Cin, 1, 1, 1)); p['bn1'] = bn()
    p['w2'] = nrm((Cout, Cin, 3, 3, 3)); p['bn2'] = bn()
    p['w3'] = nrm((Cout, Cin, 3, 3, 3)); p['bn3'] = bn()
    p['w4'] = nrm((Cout, Cin, 3, 3, 3)); p['bn4'] = bn()
    p['w5'] = nrm((Cout, 5 * Cout, 1, 1, 1)); p['b5'] = nrm((Cout,)); p['bn5'] = bn()
    return p


if __name__ == "__main__":
    key = jax.random.PRNGKey(0)
    kx, kp = jax.random.split(key)

    N, Cin, Cout, D, H, W = 2, 4, 8, 8, 8, 8          # small synthetic shapes
    x = jax.random.normal(kx, (N, Cin, D, H, W), dtype=jnp.float32)
    params = init_params(kp, Cin, Cout)

    ref = jax.block_until_ready(ref_forward(x, params))

    # f32 path: validates the fused structure at a tight tolerance.
    out_f32 = jax.block_until_ready(aspp_forward(x, params, compute_dtype=jnp.float32))
    assert out_f32.shape == (N, Cout, D, H, W)
    np.testing.assert_allclose(np.asarray(out_f32), np.asarray(ref), rtol=2e-2, atol=2e-2)

    # bf16 MXU path (default): looser tolerance for bf16 matmul inputs.
    out_bf16 = jax.block_until_ready(aspp_forward(x, params))
    assert out_bf16.shape == (N, Cout, D, H, W)
    np.testing.assert_allclose(np.asarray(out_bf16), np.asarray(ref), rtol=5e-2, atol=5e-2)

    print("KERNEL_OK")
</pallas_src>

<mosaic_0001>
module attributes {stable_mosaic.version = 11 : i64} {
  func.func @kernel(%arg0: i32, %arg1: i32, %arg2: memref<1x1x8x8x4xf32, #tpu.memory_space<vmem>>, %arg3: memref<1x1x8x8x4xf32, #tpu.memory_space<vmem>>, %arg4: memref<1x1x8x8x4xf32, #tpu.memory_space<vmem>>, %arg5: memref<1x1x8x8x4xf32, #tpu.memory_space<vmem>>, %arg6: memref<1x1x8x8x4xf32, #tpu.memory_space<vmem>>, %arg7: memref<1x1x8x8x4xf32, #tpu.memory_space<vmem>>, %arg8: memref<1x1x8x8x4xf32, #tpu.memory_space<vmem>>, %arg9: memref<3x3x36x128xf32, #tpu.memory_space<vmem>>, %arg10: memref<3x1x128xf32, #tpu.memory_space<vmem>>, %arg11: memref<3x128x128xf32, #tpu.memory_space<vmem>>, %arg12: memref<4x128xf32, #tpu.memory_space<vmem>>, %arg13: memref<1x128xf32, #tpu.memory_space<vmem>>, %arg14: memref<128x128xf32, #tpu.memory_space<vmem>>, %arg15: memref<4x128xf32, #tpu.memory_space<vmem>>, %arg16: memref<1x128xf32, #tpu.memory_space<vmem>>, %arg17: memref<128x128xf32, #tpu.memory_space<vmem>>, %arg18: memref<1x128xf32, #tpu.memory_space<vmem>>, %arg19: memref<1x1x64x128xf32, #tpu.memory_space<vmem>>, %arg20: memref<7x26x26x4xf32, #tpu.memory_space<vmem>>, %arg21: memref<8x8x36xf32, #tpu.memory_space<vmem>>, %arg22: memref<64x128xf32, #tpu.memory_space<vmem>>) attributes {dimension_semantics = [#tpu.dimension_semantics<parallel>, #tpu.dimension_semantics<parallel>], iteration_bounds = array<i64: 2, 8>, scalar_prefetch = 0 : i64, scratch_operands = 3 : i64, tpu.core_type = #tpu.core_type<tc>, window_params = [{transform_indices = @transform_0, window_bounds = array<i64: 1, 1, 8, 8, 4>}, {transform_indices = @transform_1, window_bounds = array<i64: 1, 1, 8, 8, 4>}, {transform_indices = @transform_2, window_bounds = array<i64: 1, 1, 8, 8, 4>}, {transform_indices = @transform_3, window_bounds = array<i64: 1, 1, 8, 8, 4>}, {transform_indices = @transform_4, window_bounds = array<i64: 1, 1, 8, 8, 4>}, {transform_indices = @transform_5, window_bounds = array<i64: 1, 1, 8, 8, 4>}, {transform_indices = @transform_6, window_bounds = array<i64: 1, 1, 8, 8, 4>}, {pipeline_mode = #tpu.pipeline_mode<synchronous>, transform_indices = @transform_7, window_bounds = array<i64: 3, 3, 36, 128>}, {pipeline_mode = #tpu.pipeline_mode<synchronous>, transform_indices = @transform_8, window_bounds = array<i64: 3, 1, 128>}, {pipeline_mode = #tpu.pipeline_mode<synchronous>, transform_indices = @transform_9, window_bounds = array<i64: 3, 128, 128>}, {pipeline_mode = #tpu.pipeline_mode<synchronous>, transform_indices = @transform_10, window_bounds = array<i64: 4, 128>}, {pipeline_mode = #tpu.pipeline_mode<synchronous>, transform_indices = @transform_11, window_bounds = array<i64: 1, 128>}, {pipeline_mode = #tpu.pipeline_mode<synchronous>, transform_indices = @transform_12, window_bounds = array<i64: 128, 128>}, {pipeline_mode = #tpu.pipeline_mode<synchronous>, transform_indices = @transform_13, window_bounds = array<i64: 4, 128>}, {pipeline_mode = #tpu.pipeline_mode<synchronous>, transform_indices = @transform_14, window_bounds = array<i64: 1, 128>}, {pipeline_mode = #tpu.pipeline_mode<synchronous>, transform_indices = @transform_15, window_bounds = array<i64: 128, 128>}, {pipeline_mode = #tpu.pipeline_mode<synchronous>, transform_indices = @transform_16, window_bounds = array<i64: 1, 128>}, {transform_indices = @transform_17, window_bounds = array<i64: 1, 1, 64, 128>}]} {
    %cst = arith.constant 0.000000e+00 : f32
    %0 = vector.broadcast %cst : f32 to vector<7x26x26x4xf32>
    %c0 = arith.constant 0 : index
    %c0_0 = arith.constant 0 : index
    %c0_1 = arith.constant 0 : index
    %c0_2 = arith.constant 0 : index
    %1 = vector.load %arg20[%c0, %c0_0, %c0_1, %c0_2] : memref<7x26x26x4xf32, #tpu.memory_space<vmem>>, vector<7x26x26x4xf32>
    tpu.vector_store %arg20[%c0, %c0_0, %c0_1, %c0_2], %0 {strides = array<i32>} : memref<7x26x26x4xf32, #tpu.memory_space<vmem>>, vector<7x26x26x4xf32>,
    %c0_3 = arith.constant 0 : index
    %c0_4 = arith.constant 0 : index
    %c0_5 = arith.constant 0 : index
    %c0_6 = arith.constant 0 : index
    %c0_7 = arith.constant 0 : index
    %2 = vector.load %arg2[%c0_3, %c0_4, %c0_5, %c0_6, %c0_7] : memref<1x1x8x8x4xf32, #tpu.memory_space<vmem>>, vector<1x1x8x8x4xf32>
    %3 = vector.shape_cast %2 : vector<1x1x8x8x4xf32> to vector<8x8x4xf32>
    %c0_8 = arith.constant 0 : index
    %c9 = arith.constant 9 : index
    %c9_9 = arith.constant 9 : index
    %c0_10 = arith.constant 0 : index
    %4 = vector.load %arg20[%c0_8, %c9, %c9_9, %c0_10] : memref<7x26x26x4xf32, #tpu.memory_space<vmem>>, vector<1x8x8x4xf32>
    %5 = vector.shape_cast %4 : vector<1x8x8x4xf32> to vector<8x8x4xf32>
    %6 = vector.shape_cast %3 : vector<8x8x4xf32> to vector<1x8x8x4xf32>
    tpu.vector_store %arg20[%c0_8, %c9, %c9_9, %c0_10], %6 {strides = array<i32>} : memref<7x26x26x4xf32, #tpu.memory_space<vmem>>, vector<1x8x8x4xf32>,
    %c0_11 = arith.constant 0 : index
    %c0_12 = arith.constant 0 : index
    %c0_13 = arith.constant 0 : index
    %c0_14 = arith.constant 0 : index
    %c0_15 = arith.constant 0 : index
    %7 = vector.load %arg3[%c0_11, %c0_12, %c0_13, %c0_14, %c0_15] : memref<1x1x8x8x4xf32, #tpu.memory_space<vmem>>, vector<1x1x8x8x4xf32>
    %8 = vector.shape_cast %7 : vector<1x1x8x8x4xf32> to vector<8x8x4xf32>
    %c1 = arith.constant 1 : index
    %c9_16 = arith.constant 9 : index
    %c9_17 = arith.constant 9 : index
    %c0_18 = arith.constant 0 : index
    %9 = vector.load %arg20[%c1, %c9_16, %c9_17, %c0_18] : memref<7x26x26x4xf32, #tpu.memory_space<vmem>>, vector<1x8x8x4xf32>
    %10 = vector.shape_cast %9 : vector<1x8x8x4xf32> to vector<8x8x4xf32>
    %11 = vector.shape_cast %8 : vector<8x8x4xf32> to vector<1x8x8x4xf32>
    tpu.vector_store %arg20[%c1, %c9_16, %c9_17, %c0_18], %11 {strides = array<i32>} : memref<7x26x26x4xf32, #tpu.memory_space<vmem>>, vector<1x8x8x4xf32>,
    %c0_19 = arith.constant 0 : index
    %c0_20 = arith.constant 0 : index
    %c0_21 = arith.constant 0 : index
    %c0_22 = arith.constant 0 : index
    %c0_23 = arith.constant 0 : index
    %12 = vector.load %arg4[%c0_19, %c0_20, %c0_21, %c0_22, %c0_23] : memref<1x1x8x8x4xf32, #tpu.memory_space<vmem>>, vector<1x1x8x8x4xf32>
    %13 = vector.shape_cast %12 : vector<1x1x8x8x4xf32> to vector<8x8x4xf32>
    %c2 = arith.constant 2 : index
    %c9_24 = arith.constant 9 : index
    %c9_25 = arith.constant 9 : index
    %c0_26 = arith.constant 0 : index
    %14 = vector.load %arg20[%c2, %c9_24, %c9_25, %c0_26] : memref<7x26x26x4xf32, #tpu.memory_space<vmem>>, vector<1x8x8x4xf32>
    %15 = vector.shape_cast %14 : vector<1x8x8x4xf32> to vector<8x8x4xf32>
    %16 = vector.shape_cast %13 : vector<8x8x4xf32> to vector<1x8x8x4xf32>
    tpu.vector_store %arg20[%c2, %c9_24, %c9_25, %c0_26], %16 {strides = array<i32>} : memref<7x26x26x4xf32, #tpu.memory_space<vmem>>, vector<1x8x8x4xf32>,
    %c0_27 = arith.constant 0 : index
    %c0_28 = arith.constant 0 : index
    %c0_29 = arith.constant 0 : index
    %c0_30 = arith.constant 0 : index
    %c0_31 = arith.constant 0 : index
    %17 = vector.load %arg5[%c0_27, %c0_28, %c0_29, %c0_30, %c0_31] : memref<1x1x8x8x4xf32, #tpu.memory_space<vmem>>, vector<1x1x8x8x4xf32>
    %18 = vector.shape_cast %17 : vector<1x1x8x8x4xf32> to vector<8x8x4xf32>
    %c3 = arith.constant 3 : index
    %c9_32 = arith.constant 9 : index
    %c9_33 = arith.constant 9 : index
    %c0_34 = arith.constant 0 : index
    %19 = vector.load %arg20[%c3, %c9_32, %c9_33, %c0_34] : memref<7x26x26x4xf32, #tpu.memory_space<vmem>>, vector<1x8x8x4xf32>
    %20 = vector.shape_cast %19 : vector<1x8x8x4xf32> to vector<8x8x4xf32>
    %21 = vector.shape_cast %18 : vector<8x8x4xf32> to vector<1x8x8x4xf32>
    tpu.vector_store %arg20[%c3, %c9_32, %c9_33, %c0_34], %21 {strides = array<i32>} : memref<7x26x26x4xf32, #tpu.memory_space<vmem>>, vector<1x8x8x4xf32>,
    %c0_35 = arith.constant 0 : index
    %c0_36 = arith.constant 0 : index
    %c0_37 = arith.constant 0 : index
    %c0_38 = arith.constant 0 : index
    %c0_39 = arith.constant 0 : index
    %22 = vector.load %arg6[%c0_35, %c0_36, %c0_37, %c0_38, %c0_39] : memref<1x1x8x8x4xf32, #tpu.memory_space<vmem>>, vector<1x1x8x8x4xf32>
    %23 = vector.shape_cast %22 : vector<1x1x8x8x4xf32> to vector<8x8x4xf32>
    %c4 = arith.constant 4 : index
    %c9_40 = arith.constant 9 : index
    %c9_41 = arith.constant 9 : index
    %c0_42 = arith.constant 0 : index
    %24 = vector.load %arg20[%c4, %c9_40, %c9_41, %c0_42] : memref<7x26x26x4xf32, #tpu.memory_space<vmem>>, vector<1x8x8x4xf32>
    %25 = vector.shape_cast %24 : vector<1x8x8x4xf32> to vector<8x8x4xf32>
    %26 = vector.shape_cast %23 : vector<8x8x4xf32> to vector<1x8x8x4xf32>
    tpu.vector_store %arg20[%c4, %c9_40, %c9_41, %c0_42], %26 {strides = array<i32>} : memref<7x26x26x4xf32, #tpu.memory_space<vmem>>, vector<1x8x8x4xf32>,
    %c0_43 = arith.constant 0 : index
    %c0_44 = arith.constant 0 : index
    %c0_45 = arith.constant 0 : index
    %c0_46 = arith.constant 0 : index
    %c0_47 = arith.constant 0 : index
    %27 = vector.load %arg7[%c0_43, %c0_44, %c0_45, %c0_46, %c0_47] : memref<1x1x8x8x4xf32, #tpu.memory_space<vmem>>, vector<1x1x8x8x4xf32>
    %28 = vector.shape_cast %27 : vector<1x1x8x8x4xf32> to vector<8x8x4xf32>
    %c5 = arith.constant 5 : index
    %c9_48 = arith.constant 9 : index
    %c9_49 = arith.constant 9 : index
    %c0_50 = arith.constant 0 : index
    %29 = vector.load %arg20[%c5, %c9_48, %c9_49, %c0_50] : memref<7x26x26x4xf32, #tpu.memory_space<vmem>>, vector<1x8x8x4xf32>
    %30 = vector.shape_cast %29 : vector<1x8x8x4xf32> to vector<8x8x4xf32>
    %31 = vector.shape_cast %28 : vector<8x8x4xf32> to vector<1x8x8x4xf32>
    tpu.vector_store %arg20[%c5, %c9_48, %c9_49, %c0_50], %31 {strides = array<i32>} : memref<7x26x26x4xf32, #tpu.memory_space<vmem>>, vector<1x8x8x4xf32>,
    %c0_51 = arith.constant 0 : index
    %c0_52 = arith.constant 0 : index
    %c0_53 = arith.constant 0 : index
    %c0_54 = arith.constant 0 : index
    %c0_55 = arith.constant 0 : index
    %32 = vector.load %arg8[%c0_51, %c0_52, %c0_53, %c0_54, %c0_55] : memref<1x1x8x8x4xf32, #tpu.memory_space<vmem>>, vector<1x1x8x8x4xf32>
    %33 = vector.shape_cast %32 : vector<1x1x8x8x4xf32> to vector<8x8x4xf32>
    %c6 = arith.constant 6 : index
    %c9_56 = arith.constant 9 : index
    %c9_57 = arith.constant 9 : index
    %c0_58 = arith.constant 0 : index
    %34 = vector.load %arg20[%c6, %c9_56, %c9_57, %c0_58] : memref<7x26x26x4xf32, #tpu.memory_space<vmem>>, vector<1x8x8x4xf32>
    %35 = vector.shape_cast %34 : vector<1x8x8x4xf32> to vector<8x8x4xf32>
    %36 = vector.shape_cast %33 : vector<8x8x4xf32> to vector<1x8x8x4xf32>
    tpu.vector_store %arg20[%c6, %c9_56, %c9_57, %c0_58], %36 {strides = array<i32>} : memref<7x26x26x4xf32, #tpu.memory_space<vmem>>, vector<1x8x8x4xf32>,
    %c0_59 = arith.constant 0 : index
    %c0_60 = arith.constant 0 : index
    %c0_61 = arith.constant 0 : index
    %c0_62 = arith.constant 0 : index
    %c0_63 = arith.constant 0 : index
    %37 = vector.load %arg5[%c0_59, %c0_60, %c0_61, %c0_62, %c0_63] : memref<1x1x8x8x4xf32, #tpu.memory_space<vmem>>, vector<1x1x8x8x4xf32>
    %38 = vector.shape_cast %37 : vector<1x1x8x8x4xf32> to vector<8x8x4xf32>
    %39 = vector.shape_cast %38 : vector<8x8x4xf32> to vector<64x4xf32>
    %c0_64 = arith.constant 0 : index
    %c0_65 = arith.constant 0 : index
    %40 = vector.load %arg12[%c0_64, %c0_65] : memref<4x128xf32, #tpu.memory_space<vmem>>, vector<4x128xf32>
    %cst_66 = arith.constant dense<0.000000e+00> : vector<64x128xf32>
    %41 = tpu.matmul %39, %40, %cst_66 {dimension_numbers = #tpu.dot_dimension_numbers<[1], [0], [0], [1], [0, 0, 1, 1], [], []>} : vector<64x4xf32>, vector<4x128xf32>, vector<64x128xf32> -> vector<64x128xf32>
    %c0_67 = arith.constant 0 : index
    %c0_68 = arith.constant 0 : index
    %42 = vector.load %arg13[%c0_67, %c0_68] : memref<1x128xf32, #tpu.memory_space<vmem>>, vector<1x128xf32>
    %43 = vector.broadcast %42 : vector<1x128xf32> to vector<64x128xf32>
    %44 = arith.addf %41, %43 : vector<64x128xf32>
    %cst_69 = arith.constant 0.000000e+00 : f32
    %45 = vector.broadcast %cst_69 : f32 to vector<64x128xf32>
    %46 = arith.maximumf %44, %45 : vector<64x128xf32>
    %cst_70 = arith.constant dense<0.000000e+00> : vector<4xf32>
    %47 = vector.multi_reduction <add>, %39, %cst_70 [0] : vector<64x4xf32> to vector<4xf32>
    %48 = vector.shape_cast %47 : vector<4xf32> to vector<1x4xf32>
    %cst_71 = arith.constant 6.400000e+01 : f32
    %49 = vector.broadcast %cst_71 : f32 to vector<1x4xf32>
    %50 = arith.divf %48, %49 : vector<1x4xf32>
    %c0_72 = arith.constant 0 : index
    %c0_73 = arith.constant 0 : index
    %51 = vector.load %arg15[%c0_72, %c0_73] : memref<4x128xf32, #tpu.memory_space<vmem>>, vector<4x128xf32>
    %cst_74 = arith.constant dense<0.000000e+00> : vector<1x128xf32>
    %52 = tpu.matmul %50, %51, %cst_74 {dimension_numbers = #tpu.dot_dimension_numbers<[1], [0], [0], [1], [0, 0, 1, 1], [], []>} : vector<1x4xf32>, vector<4x128xf32>, vector<1x128xf32> -> vector<1x128xf32>
    %c0_75 = arith.constant 0 : index
    %c0_76 = arith.constant 0 : index
    %53 = vector.load %arg16[%c0_75, %c0_76] : memref<1x128xf32, #tpu.memory_space<vmem>>, vector<1x128xf32>
    %54 = arith.addf %52, %53 : vector<1x128xf32>
    %cst_77 = arith.constant 0.000000e+00 : f32
    %55 = vector.broadcast %cst_77 : f32 to vector<1x128xf32>
    %56 = arith.maximumf %54, %55 : vector<1x128xf32>
    %c0_78 = arith.constant 0 : index
    %c0_79 = arith.constant 0 : index
    %57 = vector.load %arg18[%c0_78, %c0_79] : memref<1x128xf32, #tpu.memory_space<vmem>>, vector<1x128xf32>
    %c0_80 = arith.constant 0 : index
    %c0_81 = arith.constant 0 : index
    %58 = vector.load %arg14[%c0_80, %c0_81] : memref<128x128xf32, #tpu.memory_space<vmem>>, vector<128x128xf32>
    %cst_82 = arith.constant dense<0.000000e+00> : vector<64x128xf32>
    %59 = tpu.matmul %46, %58, %cst_82 {dimension_numbers = #tpu.dot_dimension_numbers<[1], [0], [0], [1], [0, 0, 1, 1], [], []>} : vector<64x128xf32>, vector<128x128xf32>, vector<64x128xf32> -> vector<64x128xf32>
    %60 = vector.broadcast %57 : vector<1x128xf32> to vector<64x128xf32>
    %61 = arith.addf %60, %59 : vector<64x128xf32>
    %c0_83 = arith.constant 0 : index
    %c0_84 = arith.constant 0 : index
    %62 = vector.load %arg17[%c0_83, %c0_84] : memref<128x128xf32, #tpu.memory_space<vmem>>, vector<128x128xf32>
    %cst_85 = arith.constant dense<0.000000e+00> : vector<1x128xf32>
    %63 = tpu.matmul %56, %62, %cst_85 {dimension_numbers = #tpu.dot_dimension_numbers<[1], [0], [0], [1], [0, 0, 1, 1], [], []>} : vector<1x128xf32>, vector<128x128xf32>, vector<1x128xf32> -> vector<1x128xf32>
    %64 = vector.broadcast %63 : vector<1x128xf32> to vector<64x128xf32>
    %65 = arith.addf %61, %64 : vector<64x128xf32>
    %c0_86 = arith.constant 0 : index
    %c0_87 = arith.constant 0 : index
    %66 = vector.load %arg22[%c0_86, %c0_87] : memref<64x128xf32, #tpu.memory_space<vmem>>, vector<64x128xf32>
    tpu.vector_store %arg22[%c0_86, %c0_87], %65 {strides = array<i32>} : memref<64x128xf32, #tpu.memory_space<vmem>>, vector<64x128xf32>,
    %cst_88 = arith.constant 0.000000e+00 : f32
    %67 = vector.broadcast %cst_88 : f32 to vector<64x128xf32>
    %c2_89 = arith.constant 2 : index
    %c6_90 = arith.constant 6 : index
    %c6_91 = arith.constant 6 : index
    %c0_92 = arith.constant 0 : index
    %68 = vector.load %arg20[%c2_89, %c6_90, %c6_91, %c0_92] : memref<7x26x26x4xf32, #tpu.memory_space<vmem>>, vector<1x8x8x4xf32>
    %69 = vector.shape_cast %68 : vector<1x8x8x4xf32> to vector<8x8x4xf32>
    %c0_93 = arith.constant 0 : index
    %c0_94 = arith.constant 0 : index
    %c0_95 = arith.constant 0 : index
    %70 = vector.load %arg21[%c0_93, %c0_94, %c0_95] : memref<8x8x36xf32, #tpu.memory_space<vmem>>, vector<8x8x4xf32>
    tpu.vector_store %arg21[%c0_93, %c0_94, %c0_95], %69 {strides = array<i32>} : memref<8x8x36xf32, #tpu.memory_space<vmem>>, vector<8x8x4xf32>,
    %c2_96 = arith.constant 2 : index
    %c6_97 = arith.constant 6 : index
    %c9_98 = arith.constant 9 : index
    %c0_99 = arith.constant 0 : index
    %71 = vector.load %arg20[%c2_96, %c6_97, %c9_98, %c0_99] : memref<7x26x26x4xf32, #tpu.memory_space<vmem>>, vector<1x8x8x4xf32>
    %72 = vector.shape_cast %71 : vector<1x8x8x4xf32> to vector<8x8x4xf32>
    %c0_100 = arith.constant 0 : index
    %c0_101 = arith.constant 0 : index
    %c4_102 = arith.constant 4 : index
    %73 = vector.load %arg21[%c0_100, %c0_101, %c4_102] : memref<8x8x36xf32, #tpu.memory_space<vmem>>, vector<8x8x4xf32>
    tpu.vector_store %arg21[%c0_100, %c0_101, %c4_102], %72 {strides = array<i32>} : memref<8x8x36xf32, #tpu.memory_space<vmem>>, vector<8x8x4xf32>,
    %c2_103 = arith.constant 2 : index
    %c6_104 = arith.constant 6 : index
    %c12 = arith.constant 12 : index
    %c0_105 = arith.constant 0 : index
    %74 = vector.load %arg20[%c2_103, %c6_104, %c12, %c0_105] : memref<7x26x26x4xf32, #tpu.memory_space<vmem>>, vector<1x8x8x4xf32>
    %75 = vector.shape_cast %74 : vector<1x8x8x4xf32> to vector<8x8x4xf32>
    %c0_106 = arith.constant 0 : index
    %c0_107 = arith.constant 0 : index
    %c8 = arith.constant 8 : index
    %76 = vector.load %arg21[%c0_106, %c0_107, %c8] : memref<8x8x36xf32, #tpu.memory_space<vmem>>, vector<8x8x4xf32>
    tpu.vector_store %arg21[%c0_106, %c0_107, %c8], %75 {strides = array<i32>} : memref<8x8x36xf32, #tpu.memory_space<vmem>>, vector<8x8x4xf32>,
    %c2_108 = arith.constant 2 : index
    %c9_109 = arith.constant 9 : index
    %c6_110 = arith.constant 6 : index
    %c0_111 = arith.constant 0 : index
    %77 = vector.load %arg20[%c2_108, %c9_109, %c6_110, %c0_111] : memref<7x26x26x4xf32, #tpu.memory_space<vmem>>, vector<1x8x8x4xf32>
    %78 = vector.shape_cast %77 : vector<1x8x8x4xf32> to vector<8x8x4xf32>
    %c0_112 = arith.constant 0 : index
    %c0_113 = arith.constant 0 : index
    %c12_114 = arith.constant 12 : index
    %79 = vector.load %arg21[%c0_112, %c0_113, %c12_114] : memref<8x8x36xf32, #tpu.memory_space<vmem>>, vector<8x8x4xf32>
    tpu.vector_store %arg21[%c0_112, %c0_113, %c12_114], %78 {strides = array<i32>} : memref<8x8x36xf32, #tpu.memory_space<vmem>>, vector<8x8x4xf32>,
    %c2_115 = arith.constant 2 : index
    %c9_116 = arith.constant 9 : index
    %c9_117 = arith.constant 9 : index
    %c0_118 = arith.constant 0 : index
    %80 = vector.load %arg20[%c2_115, %c9_116, %c9_117, %c0_118] : memref<7x26x26x4xf32, #tpu.memory_space<vmem>>, vector<1x8x8x4xf32>
    %81 = vector.shape_cast %80 : vector<1x8x8x4xf32> to vector<8x8x4xf32>
    %c0_119 = arith.constant 0 : index
    %c0_120 = arith.constant 0 : index
    %c16 = arith.constant 16 : index
    %82 = vector.load %arg21[%c0_119, %c0_120, %c16] : memref<8x8x36xf32, #tpu.memory_space<vmem>>, vector<8x8x4xf32>
    tpu.vector_store %arg21[%c0_119, %c0_120, %c16], %81 {strides = array<i32>} : memref<8x8x36xf32, #tpu.memory_space<vmem>>, vector<8x8x4xf32>,
    %c2_121 = arith.constant 2 : index
    %c9_122 = arith.constant 9 : index
    %c12_123 = arith.constant 12 : index
    %c0_124 = arith.constant 0 : index
    %83 = vector.load %arg20[%c2_121, %c9_122, %c12_123, %c0_124] : memref<7x26x26x4xf32, #tpu.memory_space<vmem>>, vector<1x8x8x4xf32>
    %84 = vector.shape_cast %83 : vector<1x8x8x4xf32> to vector<8x8x4xf32>
    %c0_125 = arith.constant 0 : index
    %c0_126 = arith.constant 0 : index
    %c20 = arith.constant 20 : index
    %85 = vector.load %arg21[%c0_125, %c0_126, %c20] : memref<8x8x36xf32, #tpu.memory_space<vmem>>, vector<8x8x4xf32>
    tpu.vector_store %arg21[%c0_125, %c0_126, %c20], %84 {strides = array<i32>} : memref<8x8x36xf32, #tpu.memory_space<vmem>>, vector<8x8x4xf32>,
    %c2_127 = arith.constant 2 : index
    %c12_128 = arith.constant 12 : index
    %c6_129 = arith.constant 6 : index
    %c0_130 = arith.constant 0 : index
    %86 = vector.load %arg20[%c2_127, %c12_128, %c6_129, %c0_130] : memref<7x26x26x4xf32, #tpu.memory_space<vmem>>, vector<1x8x8x4xf32>
    %87 = vector.shape_cast %86 : vector<1x8x8x4xf32> to vector<8x8x4xf32>
    %c0_131 = arith.constant 0 : index
    %c0_132 = arith.constant 0 : index
    %c24 = arith.constant 24 : index
    %88 = vector.load %arg21[%c0_131, %c0_132, %c24] : memref<8x8x36xf32, #tpu.memory_space<vmem>>, vector<8x8x4xf32>
    tpu.vector_store %arg21[%c0_131, %c0_132, %c24], %87 {strides = array<i32>} : memref<8x8x36xf32, #tpu.memory_space<vmem>>, vector<8x8x4xf32>,
    %c2_133 = arith.constant 2 : index
    %c12_134 = arith.constant 12 : index
    %c9_135 = arith.constant 9 : index
    %c0_136 = arith.constant 0 : index
    %89 = vector.load %arg20[%c2_133, %c12_134, %c9_135, %c0_136] : memref<7x26x26x4xf32, #tpu.memory_space<vmem>>, vector<1x8x8x4xf32>
    %90 = vector.shape_cast %89 : vector<1x8x8x4xf32> to vector<8x8x4xf32>
    %c0_137 = arith.constant 0 : index
    %c0_138 = arith.constant 0 : index
    %c28 = arith.constant 28 : index
    %91 = vector.load %arg21[%c0_137, %c0_138, %c28] : memref<8x8x36xf32, #tpu.memory_space<vmem>>, vector<8x8x4xf32>
    tpu.vector_store %arg21[%c0_137, %c0_138, %c28], %90 {strides = array<i32>} : memref<8x8x36xf32, #tpu.memory_space<vmem>>, vector<8x8x4xf32>,
    %c2_139 = arith.constant 2 : index
    %c12_140 = arith.constant 12 : index
    %c12_141 = arith.constant 12 : index
    %c0_142 = arith.constant 0 : index
    %92 = vector.load %arg20[%c2_139, %c12_140, %c12_141, %c0_142] : memref<7x26x26x4xf32, #tpu.memory_space<vmem>>, vector<1x8x8x4xf32>
    %93 = vector.shape_cast %92 : vector<1x8x8x4xf32> to vector<8x8x4xf32>
    %c0_143 = arith.constant 0 : index
    %c0_144 = arith.constant 0 : index
    %c32 = arith.constant 32 : index
    %94 = vector.load %arg21[%c0_143, %c0_144, %c32] : memref<8x8x36xf32, #tpu.memory_space<vmem>>, vector<8x8x4xf32>
    tpu.vector_store %arg21[%c0_143, %c0_144, %c32], %93 {strides = array<i32>} : memref<8x8x36xf32, #tpu.memory_space<vmem>>, vector<8x8x4xf32>,
    %c0_145 = arith.constant 0 : index
    %c0_146 = arith.constant 0 : index
    %c0_147 = arith.constant 0 : index
    %95 = vector.load %arg21[%c0_145, %c0_146, %c0_147] : memref<8x8x36xf32, #tpu.memory_space<vmem>>, vector<8x8x36xf32>
    %96 = vector.shape_cast %95 : vector<8x8x36xf32> to vector<64x36xf32>
    %c0_148 = arith.constant 0 : index
    %c0_149 = arith.constant 0 : index
    %c0_150 = arith.constant 0 : index
    %c0_151 = arith.constant 0 : index
    %97 = vector.load %arg9[%c0_148, %c0_149, %c0_150, %c0_151] : memref<3x3x36x128xf32, #tpu.memory_space<vmem>>, vector<1x1x36x128xf32>
    %98 = vector.shape_cast %97 : vector<1x1x36x128xf32> to vector<36x128xf32>
    %cst_152 = arith.constant dense<0.000000e+00> : vector<64x128xf32>
    %99 = tpu.matmul %96, %98, %cst_152 {dimension_numbers = #tpu.dot_dimension_numbers<[1], [0], [0], [1], [0, 0, 1, 1], [], []>} : vector<64x36xf32>, vector<36x128xf32>, vector<64x128xf32> -> vector<64x128xf32>
    %100 = arith.addf %67, %99 : vector<64x128xf32>
    %c3_153 = arith.constant 3 : index
    %c6_154 = arith.constant 6 : index
    %c6_155 = arith.constant 6 : index
    %c0_156 = arith.constant 0 : index
    %101 = vector.load %arg20[%c3_153, %c6_154, %c6_155, %c0_156] : memref<7x26x26x4xf32, #tpu.memory_space<vmem>>, vector<1x8x8x4xf32>
    %102 = vector.shape_cast %101 : vector<1x8x8x4xf32> to vector<8x8x4xf32>
    %c0_157 = arith.constant 0 : index
    %c0_158 = arith.constant 0 : index
    %c0_159 = arith.constant 0 : index
    %103 = vector.load %arg21[%c0_157, %c0_158, %c0_159] : memref<8x8x36xf32, #tpu.memory_space<vmem>>, vector<8x8x4xf32>
    tpu.vector_store %arg21[%c0_157, %c0_158, %c0_159], %102 {strides = array<i32>} : memref<8x8x36xf32, #tpu.memory_space<vmem>>, vector<8x8x4xf32>,
    %c3_160 = arith.constant 3 : index
    %c6_161 = arith.constant 6 : index
    %c9_162 = arith.constant 9 : index
    %c0_163 = arith.constant 0 : index
    %104 = vector.load %arg20[%c3_160, %c6_161, %c9_162, %c0_163] : memref<7x26x26x4xf32, #tpu.memory_space<vmem>>, vector<1x8x8x4xf32>
    %105 = vector.shape_cast %104 : vector<1x8x8x4xf32> to vector<8x8x4xf32>
    %c0_164 = arith.constant 0 : index
    %c0_165 = arith.constant 0 : index
    %c4_166 = arith.constant 4 : index
    %106 = vector.load %arg21[%c0_164, %c0_165, %c4_166] : memref<8x8x36xf32, #tpu.memory_space<vmem>>, vector<8x8x4xf32>
    tpu.vector_store %arg21[%c0_164, %c0_165, %c4_166], %105 {strides = array<i32>} : memref<8x8x36xf32, #tpu.memory_space<vmem>>, vector<8x8x4xf32>,
    %c3_167 = arith.constant 3 : index
    %c6_168 = arith.constant 6 : index
    %c12_169 = arith.constant 12 : index
    %c0_170 = arith.constant 0 : index
    %107 = vector.load %arg20[%c3_167, %c6_168, %c12_169, %c0_170] : memref<7x26x26x4xf32, #tpu.memory_space<vmem>>, vector<1x8x8x4xf32>
    %108 = vector.shape_cast %107 : vector<1x8x8x4xf32> to vector<8x8x4xf32>
    %c0_171 = arith.constant 0 : index
    %c0_172 = arith.constant 0 : index
    %c8_173 = arith.constant 8 : index
    %109 = vector.load %arg21[%c0_171, %c0_172, %c8_173] : memref<8x8x36xf32, #tpu.memory_space<vmem>>, vector<8x8x4xf32>
    tpu.vector_store %arg21[%c0_171, %c0_172, %c8_173], %108 {strides = array<i32>} : memref<8x8x36xf32, #tpu.memory_space<vmem>>, vector<8x8x4xf32>,
    %c3_174 = arith.constant 3 : index
    %c9_175 = arith.constant 9 : index
    %c6_176 = arith.constant 6 : index
    %c0_177 = arith.constant 0 : index
    %110 = vector.load %arg20[%c3_174, %c9_175, %c6_176, %c0_177] : memref<7x26x26x4xf32, #tpu.memory_space<vmem>>, vector<1x8x8x4xf32>
    %111 = vector.shape_cast %110 : vector<1x8x8x4xf32> to vector<8x8x4xf32>
    %c0_178 = arith.constant 0 : index
    %c0_179 = arith.constant 0 : index
    %c12_180 = arith.constant 12 : index
    %112 = vector.load %arg21[%c0_178, %c0_179, %c12_180] : memref<8x8x36xf32, #tpu.memory_space<vmem>>, vector<8x8x4xf32>
    tpu.vector_store %arg21[%c0_178, %c0_179, %c12_180], %111 {strides = array<i32>} : memref<8x8x36xf32, #tpu.memory_space<vmem>>, vector<8x8x4xf32>,
    %c3_181 = arith.constant 3 : index
    %c9_182 = arith.constant 9 : index
    %c9_183 = arith.constant 9 : index
    %c0_184 = arith.constant 0 : index
    %113 = vector.load %arg20[%c3_181, %c9_182, %c9_183, %c0_184] : memref<7x26x26x4xf32, #tpu.memory_space<vmem>>, vector<1x8x8x4xf32>
    %114 = vector.shape_cast %113 : vector<1x8x8x4xf32> to vector<8x8x4xf32>
    %c0_185 = arith.constant 0 : index
    %c0_186 = arith.constant 0 : index
    %c16_187 = arith.constant 16 : index
    %115 = vector.load %arg21[%c0_185, %c0_186, %c16_187] : memref<8x8x36xf32, #tpu.memory_space<vmem>>, vector<8x8x4xf32>
    tpu.vector_store %arg21[%c0_185, %c0_186, %c16_187], %114 {strides = array<i32>} : memref<8x8x36xf32, #tpu.memory_space<vmem>>, vector<8x8x4xf32>,
    %c3_188 = arith.constant 3 : index
    %c9_189 = arith.constant 9 : index
    %c12_190 = arith.constant 12 : index
    %c0_191 = arith.constant 0 : index
    %116 = vector.load %arg20[%c3_188, %c9_189, %c12_190, %c0_191] : memref<7x26x26x4xf32, #tpu.memory_space<vmem>>, vector<1x8x8x4xf32>
    %117 = vector.shape_cast %116 : vector<1x8x8x4xf32> to vector<8x8x4xf32>
    %c0_192 = arith.constant 0 : index
    %c0_193 = arith.constant 0 : index
    %c20_194 = arith.constant 20 : index
    %118 = vector.load %arg21[%c0_192, %c0_193, %c20_194] : memref<8x8x36xf32, #tpu.memory_space<vmem>>, vector<8x8x4xf32>
    tpu.vector_store %arg21[%c0_192, %c0_193, %c20_194], %117 {strides = array<i32>} : memref<8x8x36xf32, #tpu.memory_space<vmem>>, vector<8x8x4xf32>,
    %c3_195 = arith.constant 3 : index
    %c12_196 = arith.constant 12 : index
    %c6_197 = arith.constant 6 : index
    %c0_198 = arith.constant 0 : index
    %119 = vector.load %arg20[%c3_195, %c12_196, %c6_197, %c0_198] : memref<7x26x26x4xf32, #tpu.memory_space<vmem>>, vector<1x8x8x4xf32>
    %120 = vector.shape_cast %119 : vector<1x8x8x4xf32> to vector<8x8x4xf32>
    %c0_199 = arith.constant 0 : index
    %c0_200 = arith.constant 0 : index
    %c24_201 = arith.constant 24 : index
    %121 = vector.load %arg21[%c0_199, %c0_200, %c24_201] : memref<8x8x36xf32, #tpu.memory_space<vmem>>, vector<8x8x4xf32>
    tpu.vector_store %arg21[%c0_199, %c0_200, %c24_201], %120 {strides = array<i32>} : memref<8x8x36xf32, #tpu.memory_space<vmem>>, vector<8x8x4xf32>,
    %c3_202 = arith.constant 3 : index
    %c12_203 = arith.constant 12 : index
    %c9_204 = arith.constant 9 : index
    %c0_205 = arith.constant 0 : index
    %122 = vector.load %arg20[%c3_202, %c12_203, %c9_204, %c0_205] : memref<7x26x26x4xf32, #tpu.memory_space<vmem>>, vector<1x8x8x4xf32>
    %123 = vector.shape_cast %122 : vector<1x8x8x4xf32> to vector<8x8x4xf32>
    %c0_206 = arith.constant 0 : index
    %c0_207 = arith.constant 0 : index
    %c28_208 = arith.constant 28 : index
    %124 = vector.load %arg21[%c0_206, %c0_207, %c28_208] : memref<8x8x36xf32, #tpu.memory_space<vmem>>, vector<8x8x4xf32>
    tpu.vector_store %arg21[%c0_206, %c0_207, %c28_208], %123 {strides = array<i32>} : memref<8x8x36xf32, #tpu.memory_space<vmem>>, vector<8x8x4xf32>,
    %c3_209 = arith.constant 3 : index
    %c12_210 = arith.constant 12 : index
    %c12_211 = arith.constant 12 : index
    %c0_212 = arith.constant 0 : index
    %125 = vector.load %arg20[%c3_209, %c12_210, %c12_211, %c0_212] : memref<7x26x26x4xf32, #tpu.memory_space<vmem>>, vector<1x8x8x4xf32>
    %126 = vector.shape_cast %125 : vector<1x8x8x4xf32> to vector<8x8x4xf32>
    %c0_213 = arith.constant 0 : index
    %c0_214 = arith.constant 0 : index
    %c32_215 = arith.constant 32 : index
    %127 = vector.load %arg21[%c0_213, %c0_214, %c32_215] : memref<8x8x36xf32, #tpu.memory_space<vmem>>, vector<8x8x4xf32>
    tpu.vector_store %arg21[%c0_213, %c0_214, %c32_215], %126 {strides = array<i32>} : memref<8x8x36xf32, #tpu.memory_space<vmem>>, vector<8x8x4xf32>,
    %c0_216 = arith.constant 0 : index
    %c0_217 = arith.constant 0 : index
    %c0_218 = arith.constant 0 : index
    %128 = vector.load %arg21[%c0_216, %c0_217, %c0_218] : memref<8x8x36xf32, #tpu.memory_space<vmem>>, vector<8x8x36xf32>
    %129 = vector.shape_cast %128 : vector<8x8x36xf32> to vector<64x36xf32>
    %c0_219 = arith.constant 0 : index
    %c1_220 = arith.constant 1 : index
    %c0_221 = arith.constant 0 : index
    %c0_222 = arith.constant 0 : index
    %130 = vector.load %arg9[%c0_219, %c1_220, %c0_221, %c0_222] : memref<3x3x36x128xf32, #tpu.memory_space<vmem>>, vector<1x1x36x128xf32>
    %131 = vector.shape_cast %130 : vector<1x1x36x128xf32> to vector<36x128xf32>
    %cst_223 = arith.constant dense<0.000000e+00> : vector<64x128xf32>
    %132 = tpu.matmul %129, %131, %cst_223 {dimension_numbers = #tpu.dot_dimension_numbers<[1], [0], [0], [1], [0, 0, 1, 1], [], []>} : vector<64x36xf32>, vector<36x128xf32>, vector<64x128xf32> -> vector<64x128xf32>
    %133 = arith.addf %100, %132 : vector<64x128xf32>
    %c4_224 = arith.constant 4 : index
    %c6_225 = arith.constant 6 : index
    %c6_226 = arith.constant 6 : index
    %c0_227 = arith.constant 0 : index
    %134 = vector.load %arg20[%c4_224, %c6_225, %c6_226, %c0_227] : memref<7x26x26x4xf32, #tpu.memory_space<vmem>>, vector<1x8x8x4xf32>
    %135 = vector.shape_cast %134 : vector<1x8x8x4xf32> to vector<8x8x4xf32>
    %c0_228 = arith.constant 0 : index
    %c0_229 = arith.constant 0 : index
    %c0_230 = arith.constant 0 : index
    %136 = vector.load %arg21[%c0_228, %c0_229, %c0_230] : memref<8x8x36xf32, #tpu.memory_space<vmem>>, vector<8x8x4xf32>
    tpu.vector_store %arg21[%c0_228, %c0_229, %c0_230], %135 {strides = array<i32>} : memref<8x8x36xf32, #tpu.memory_space<vmem>>, vector<8x8x4xf32>,
    %c4_231 = arith.constant 4 : index
    %c6_232 = arith.constant 6 : index
    %c9_233 = arith.constant 9 : index
    %c0_234 = arith.constant 0 : index
    %137 = vector.load %arg20[%c4_231, %c6_232, %c9_233, %c0_234] : memref<7x26x26x4xf32, #tpu.memory_space<vmem>>, vector<1x8x8x4xf32>
    %138 = vector.shape_cast %137 : vector<1x8x8x4xf32> to vector<8x8x4xf32>
    %c0_235 = arith.constant 0 : index
    %c0_236 = arith.constant 0 : index
    %c4_237 = arith.constant 4 : index
    %139 = vector.load %arg21[%c0_235, %c0_236, %c4_237] : memref<8x8x36xf32, #tpu.memory_space<vmem>>, vector<8x8x4xf32>
    tpu.vector_store %arg21[%c0_235, %c0_236, %c4_237], %138 {strides = array<i32>} : memref<8x8x36xf32, #tpu.memory_space<vmem>>, vector<8x8x4xf32>,
    %c4_238 = arith.constant 4 : index
    %c6_239 = arith.constant 6 : index
    %c12_240 = arith.constant 12 : index
    %c0_241 = arith.constant 0 : index
    %140 = vector.load %arg20[%c4_238, %c6_239, %c12_240, %c0_241] : memref<7x26x26x4xf32, #tpu.memory_space<vmem>>, vector<1x8x8x4xf32>
    %141 = vector.shape_cast %140 : vector<1x8x8x4xf32> to vector<8x8x4xf32>
    %c0_242 = arith.constant 0 : index
    %c0_243 = arith.constant 0 : index
    %c8_244 = arith.constant 8 : index
    %142 = vector.load %arg21[%c0_242, %c0_243, %c8_244] : memref<8x8x36xf32, #tpu.memory_space<vmem>>, vector<8x8x4xf32>
    tpu.vector_store %arg21[%c0_242, %c0_243, %c8_244], %141 {strides = array<i32>} : memref<8x8x36xf32, #tpu.memory_space<vmem>>, vector<8x8x4xf32>,
    %c4_245 = arith.constant 4 : index
    %c9_246 = arith.constant 9 : index
    %c6_247 = arith.constant 6 : index
    %c0_248 = arith.constant 0 : index
    %143 = vector.load %arg20[%c4_245, %c9_246, %c6_247, %c0_248] : memref<7x26x26x4xf32, #tpu.memory_space<vmem>>, vector<1x8x8x4xf32>
    %144 = vector.shape_cast %143 : vector<1x8x8x4xf32> to vector<8x8x4xf32>
    %c0_249 = arith.constant 0 : index
    %c0_250 = arith.constant 0 : index
    %c12_251 = arith.constant 12 : index
    %145 = vector.load %arg21[%c0_249, %c0_250, %c12_251] : memref<8x8x36xf32, #tpu.memory_space<vmem>>, vector<8x8x4xf32>
    tpu.vector_store %arg21[%c0_249, %c0_250, %c12_251], %144 {strides = array<i32>} : memref<8x8x36xf32, #tpu.memory_space<vmem>>, vector<8x8x4xf32>,
    %c4_252 = arith.constant 4 : index
    %c9_253 = arith.constant 9 : index
    %c9_254 = arith.constant 9 : index
    %c0_255 = arith.constant 0 : index
    %146 = vector.load %arg20[%c4_252, %c9_253, %c9_254, %c0_255] : memref<7x26x26x4xf32, #tpu.memory_space<vmem>>, vector<1x8x8x4xf32>
    %147 = vector.shape_cast %146 : vector<1x8x8x4xf32> to vector<8x8x4xf32>
    %c0_256 = arith.constant 0 : index
    %c0_257 = arith.constant 0 : index
    %c16_258 = arith.constant 16 : index
    %148 = vector.load %arg21[%c0_256, %c0_257, %c16_258] : memref<8x8x36xf32, #tpu.memory_space<vmem>>, vector<8x8x4xf32>
    tpu.vector_store %arg21[%c0_256, %c0_257, %c16_258], %147 {strides = array<i32>} : memref<8x8x36xf32, #tpu.memory_space<vmem>>, vector<8x8x4xf32>,
    %c4_259 = arith.constant 4 : index
    %c9_260 = arith.constant 9 : index
    %c12_261 = arith.constant 12 : index
    %c0_262 = arith.constant 0 : index
    %149 = vector.load %arg20[%c4_259, %c9_260, %c12_261, %c0_262] : memref<7x26x26x4xf32, #tpu.memory_space<vmem>>, vector<1x8x8x4xf32>
    %150 = vector.shape_cast %149 : vector<1x8x8x4xf32> to vector<8x8x4xf32>
    %c0_263 = arith.constant 0 : index
    %c0_264 = arith.constant 0 : index
    %c20_265 = arith.constant 20 : index
    %151 = vector.load %arg21[%c0_263, %c0_264, %c20_265] : memref<8x8x36xf32, #tpu.memory_space<vmem>>, vector<8x8x4xf32>
    tpu.vector_store %arg21[%c0_263, %c0_264, %c20_265], %150 {strides = array<i32>} : memref<8x8x36xf32, #tpu.memory_space<vmem>>, vector<8x8x4xf32>,
    %c4_266 = arith.constant 4 : index
    %c12_267 = arith.constant 12 : index
    %c6_268 = arith.constant 6 : index
    %c0_269 = arith.constant 0 : index
    %152 = vector.load %arg20[%c4_266, %c12_267, %c6_268, %c0_269] : memref<7x26x26x4xf32, #tpu.memory_space<vmem>>, vector<1x8x8x4xf32>
    %153 = vector.shape_cast %152 : vector<1x8x8x4xf32> to vector<8x8x4xf32>
    %c0_270 = arith.constant 0 : index
    %c0_271 = arith.constant 0 : index
    %c24_272 = arith.constant 24 : index
    %154 = vector.load %arg21[%c0_270, %c0_271, %c24_272] : memref<8x8x36xf32, #tpu.memory_space<vmem>>, vector<8x8x4xf32>
    tpu.vector_store %arg21[%c0_270, %c0_271, %c24_272], %153 {strides = array<i32>} : memref<8x8x36xf32, #tpu.memory_space<vmem>>, vector<8x8x4xf32>,
    %c4_273 = arith.constant 4 : index
    %c12_274 = arith.constant 12 : index
    %c9_275 = arith.constant 9 : index
    %c0_276 = arith.constant 0 : index
    %155 = vector.load %arg20[%c4_273, %c12_274, %c9_275, %c0_276] : memref<7x26x26x4xf32, #tpu.memory_space<vmem>>, vector<1x8x8x4xf32>
    %156 = vector.shape_cast %155 : vector<1x8x8x4xf32> to vector<8x8x4xf32>
    %c0_277 = arith.constant 0 : index
    %c0_278 = arith.constant 0 : index
    %c28_279 = arith.constant 28 : index
    %157 = vector.load %arg21[%c0_277, %c0_278, %c28_279] : memref<8x8x36xf32, #tpu.memory_space<vmem>>, vector<8x8x4xf32>
    tpu.vector_store %arg21[%c0_277, %c0_278, %c28_279], %156 {strides = array<i32>} : memref<8x8x36xf32, #tpu.memory_space<vmem>>, vector<8x8x4xf32>,
    %c4_280 = arith.constant 4 : index
    %c12_281 = arith.constant 12 : index
    %c12_282 = arith.constant 12 : index
    %c0_283 = arith.constant 0 : index
    %158 = vector.load %arg20[%c4_280, %c12_281, %c12_282, %c0_283] : memref<7x26x26x4xf32, #tpu.memory_space<vmem>>, vector<1x8x8x4xf32>
    %159 = vector.shape_cast %158 : vector<1x8x8x4xf32> to vector<8x8x4xf32>
    %c0_284 = arith.constant 0 : index
    %c0_285 = arith.constant 0 : index
    %c32_286 = arith.constant 32 : index
    %160 = vector.load %arg21[%c0_284, %c0_285, %c32_286] : memref<8x8x36xf32, #tpu.memory_space<vmem>>, vector<8x8x4xf32>
    tpu.vector_store %arg21[%c0_284, %c0_285, %c32_286], %159 {strides = array<i32>} : memref<8x8x36xf32, #tpu.memory_space<vmem>>, vector<8x8x4xf32>,
    %c0_287 = arith.constant 0 : index
    %c0_288 = arith.constant 0 : index
    %c0_289 = arith.constant 0 : index
    %161 = vector.load %arg21[%c0_287, %c0_288, %c0_289] : memref<8x8x36xf32, #tpu.memory_space<vmem>>, vector<8x8x36xf32>
    %162 = vector.shape_cast %161 : vector<8x8x36xf32> to vector<64x36xf32>
    %c0_290 = arith.constant 0 : index
    %c2_291 = arith.constant 2 : index
    %c0_292 = arith.constant 0 : index
    %c0_293 = arith.constant 0 : index
    %163 = vector.load %arg9[%c0_290, %c2_291, %c0_292, %c0_293] : memref<3x3x36x128xf32, #tpu.memory_space<vmem>>, vector<1x1x36x128xf32>
    %164 = vector.shape_cast %163 : vector<1x1x36x128xf32> to vector<36x128xf32>
    %cst_294 = arith.constant dense<0.000000e+00> : vector<64x128xf32>
    %165 = tpu.matmul %162, %164, %cst_294 {dimension_numbers = #tpu.dot_dimension_numbers<[1], [0], [0], [1], [0, 0, 1, 1], [], []>} : vector<64x36xf32>, vector<36x128xf32>, vector<64x128xf32> -> vector<64x128xf32>
    %166 = arith.addf %133, %165 : vector<64x128xf32>
    %c0_295 = arith.constant 0 : index
    %c0_296 = arith.constant 0 : index
    %c0_297 = arith.constant 0 : index
    %167 = vector.load %arg10[%c0_295, %c0_296, %c0_297] : memref<3x1x128xf32, #tpu.memory_space<vmem>>, vector<1x1x128xf32>
    %168 = vector.shape_cast %167 : vector<1x1x128xf32> to vector<1x128xf32>
    %169 = vector.broadcast %168 : vector<1x128xf32> to vector<64x128xf32>
    %170 = arith.addf %166, %169 : vector<64x128xf32>
    %cst_298 = arith.constant 0.000000e+00 : f32
    %171 = vector.broadcast %cst_298 : f32 to vector<64x128xf32>
    %172 = arith.maximumf %170, %171 : vector<64x128xf32>
    %c0_299 = arith.constant 0 : index
    %c0_300 = arith.constant 0 : index
    %173 = vector.load %arg22[%c0_299, %c0_300] : memref<64x128xf32, #tpu.memory_space<vmem>>, vector<64x128xf32>
    %c0_301 = arith.constant 0 : index
    %c0_302 = arith.constant 0 : index
    %c0_303 = arith.constant 0 : index
    %174 = vector.load %arg11[%c0_301, %c0_302, %c0_303] : memref<3x128x128xf32, #tpu.memory_space<vmem>>, vector<1x128x128xf32>
    %175 = vector.shape_cast %174 : vector<1x128x128xf32> to vector<128x128xf32>
    %cst_304 = arith.constant dense<0.000000e+00> : vector<64x128xf32>
    %176 = tpu.matmul %172, %175, %cst_304 {dimension_numbers = #tpu.dot_dimension_numbers<[1], [0], [0], [1], [0, 0, 1, 1], [], []>} : vector<64x128xf32>, vector<128x128xf32>, vector<64x128xf32> -> vector<64x128xf32>
    %177 = arith.addf %173, %176 : vector<64x128xf32>
    %c0_305 = arith.constant 0 : index
    %c0_306 = arith.constant 0 : index
    %178 = vector.load %arg22[%c0_305, %c0_306] : memref<64x128xf32, #tpu.memory_space<vmem>>, vector<64x128xf32>
    tpu.vector_store %arg22[%c0_305, %c0_306], %177 {strides = array<i32>} : memref<64x128xf32, #tpu.memory_space<vmem>>, vector<64x128xf32>,
    %cst_307 = arith.constant 0.000000e+00 : f32
    %179 = vector.broadcast %cst_307 : f32 to vector<64x128xf32>
    %c1_308 = arith.constant 1 : index
    %c3_309 = arith.constant 3 : index
    %c3_310 = arith.constant 3 : index
    %c0_311 = arith.constant 0 : index
    %180 = vector.load %arg20[%c1_308, %c3_309, %c3_310, %c0_311] : memref<7x26x26x4xf32, #tpu.memory_space<vmem>>, vector<1x8x8x4xf32>
    %181 = vector.shape_cast %180 : vector<1x8x8x4xf32> to vector<8x8x4xf32>
    %c0_312 = arith.constant 0 : index
    %c0_313 = arith.constant 0 : index
    %c0_314 = arith.constant 0 : index
    %182 = vector.load %arg21[%c0_312, %c0_313, %c0_314] : memref<8x8x36xf32, #tpu.memory_space<vmem>>, vector<8x8x4xf32>
    tpu.vector_store %arg21[%c0_312, %c0_313, %c0_314], %181 {strides = array<i32>} : memref<8x8x36xf32, #tpu.memory_space<vmem>>, vector<8x8x4xf32>,
    %c1_315 = arith.constant 1 : index
    %c3_316 = arith.constant 3 : index
    %c9_317 = arith.constant 9 : index
    %c0_318 = arith.constant 0 : index
    %183 = vector.load %arg20[%c1_315, %c3_316, %c9_317, %c0_318] : memref<7x26x26x4xf32, #tpu.memory_space<vmem>>, vector<1x8x8x4xf32>
    %184 = vector.shape_cast %183 : vector<1x8x8x4xf32> to vector<8x8x4xf32>
    %c0_319 = arith.constant 0 : index
    %c0_320 = arith.constant 0 : index
    %c4_321 = arith.constant 4 : index
    %185 = vector.load %arg21[%c0_319, %c0_320, %c4_321] : memref<8x8x36xf32, #tpu.memory_space<vmem>>, vector<8x8x4xf32>
    tpu.vector_store %arg21[%c0_319, %c0_320, %c4_321], %184 {strides = array<i32>} : memref<8x8x36xf32, #tpu.memory_space<vmem>>, vector<8x8x4xf32>,
    %c1_322 = arith.constant 1 : index
    %c3_323 = arith.constant 3 : index
    %c15 = arith.constant 15 : index
    %c0_324 = arith.constant 0 : index
    %186 = vector.load %arg20[%c1_322, %c3_323, %c15, %c0_324] : memref<7x26x26x4xf32, #tpu.memory_space<vmem>>, vector<1x8x8x4xf32>
    %187 = vector.shape_cast %186 : vector<1x8x8x4xf32> to vector<8x8x4xf32>
    %c0_325 = arith.constant 0 : index
    %c0_326 = arith.constant 0 : index
    %c8_327 = arith.constant 8 : index
    %188 = vector.load %arg21[%c0_325, %c0_326, %c8_327] : memref<8x8x36xf32, #tpu.memory_space<vmem>>, vector<8x8x4xf32>
    tpu.vector_store %arg21[%c0_325, %c0_326, %c8_327], %187 {strides = array<i32>} : memref<8x8x36xf32, #tpu.memory_space<vmem>>, vector<8x8x4xf32>,
    %c1_328 = arith.constant 1 : index
    %c9_329 = arith.constant 9 : index
    %c3_330 = arith.constant 3 : index
    %c0_331 = arith.constant 0 : index
    %189 = vector.load %arg20[%c1_328, %c9_329, %c3_330, %c0_331] : memref<7x26x26x4xf32, #tpu.memory_space<vmem>>, vector<1x8x8x4xf32>
    %190 = vector.shape_cast %189 : vector<1x8x8x4xf32> to vector<8x8x4xf32>
    %c0_332 = arith.constant 0 : index
    %c0_333 = arith.constant 0 : index
    %c12_334 = arith.constant 12 : index
    %191 = vector.load %arg21[%c0_332, %c0_333, %c12_334] : memref<8x8x36xf32, #tpu.memory_space<vmem>>, vector<8x8x4xf32>
    tpu.vector_store %arg21[%c0_332, %c0_333, %c12_334], %190 {strides = array<i32>} : memref<8x8x36xf32, #tpu.memory_space<vmem>>, vector<8x8x4xf32>,
    %c1_335 = arith.constant 1 : index
    %c9_336 = arith.constant 9 : index
    %c9_337 = arith.constant 9 : index
    %c0_338 = arith.constant 0 : index
    %192 = vector.load %arg20[%c1_335, %c9_336, %c9_337, %c0_338] : memref<7x26x26x4xf32, #tpu.memory_space<vmem>>, vector<1x8x8x4xf32>
    %193 = vector.shape_cast %192 : vector<1x8x8x4xf32> to vector<8x8x4xf32>
    %c0_339 = arith.constant 0 : index
    %c0_340 = arith.constant 0 : index
    %c16_341 = arith.constant 16 : index
    %194 = vector.load %arg21[%c0_339, %c0_340, %c16_341] : memref<8x8x36xf32, #tpu.memory_space<vmem>>, vector<8x8x4xf32>
    tpu.vector_store %arg21[%c0_339, %c0_340, %c16_341], %193 {strides = array<i32>} : memref<8x8x36xf32, #tpu.memory_space<vmem>>, vector<8x8x4xf32>,
    %c1_342 = arith.constant 1 : index
    %c9_343 = arith.constant 9 : index
    %c15_344 = arith.constant 15 : index
    %c0_345 = arith.constant 0 : index
    %195 = vector.load %arg20[%c1_342, %c9_343, %c15_344, %c0_345] : memref<7x26x26x4xf32, #tpu.memory_space<vmem>>, vector<1x8x8x4xf32>
    %196 = vector.shape_cast %195 : vector<1x8x8x4xf32> to vector<8x8x4xf32>
    %c0_346 = arith.constant 0 : index
    %c0_347 = arith.constant 0 : index
    %c20_348 = arith.constant 20 : index
    %197 = vector.load %arg21[%c0_346, %c0_347, %c20_348] : memref<8x8x36xf32, #tpu.memory_space<vmem>>, vector<8x8x4xf32>
    tpu.vector_store %arg21[%c0_346, %c0_347, %c20_348], %196 {strides = array<i32>} : memref<8x8x36xf32, #tpu.memory_space<vmem>>, vector<8x8x4xf32>,
    %c1_349 = arith.constant 1 : index
    %c15_350 = arith.constant 15 : index
    %c3_351 = arith.constant 3 : index
    %c0_352 = arith.constant 0 : index
    %198 = vector.load %arg20[%c1_349, %c15_350, %c3_351, %c0_352] : memref<7x26x26x4xf32, #tpu.memory_space<vmem>>, vector<1x8x8x4xf32>
    %199 = vector.shape_cast %198 : vector<1x8x8x4xf32> to vector<8x8x4xf32>
    %c0_353 = arith.constant 0 : index
    %c0_354 = arith.constant 0 : index
    %c24_355 = arith.constant 24 : index
    %200 = vector.load %arg21[%c0_353, %c0_354, %c24_355] : memref<8x8x36xf32, #tpu.memory_space<vmem>>, vector<8x8x4xf32>
    tpu.vector_store %arg21[%c0_353, %c0_354, %c24_355], %199 {strides = array<i32>} : memref<8x8x36xf32, #tpu.memory_space<vmem>>, vector<8x8x4xf32>,
    %c1_356 = arith.constant 1 : index
    %c15_357 = arith.constant 15 : index
    %c9_358 = arith.constant 9 : index
    %c0_359 = arith.constant 0 : index
    %201 = vector.load %arg20[%c1_356, %c15_357, %c9_358, %c0_359] : memref<7x26x26x4xf32, #tpu.memory_space<vmem>>, vector<1x8x8x4xf32>
    %202 = vector.shape_cast %201 : vector<1x8x8x4xf32> to vector<8x8x4xf32>
    %c0_360 = arith.constant 0 : index
    %c0_361 = arith.constant 0 : index
    %c28_362 = arith.constant 28 : index
    %203 = vector.load %arg21[%c0_360, %c0_361, %c28_362] : memref<8x8x36xf32, #tpu.memory_space<vmem>>, vector<8x8x4xf32>
    tpu.vector_store %arg21[%c0_360, %c0_361, %c28_362], %202 {strides = array<i32>} : memref<8x8x36xf32, #tpu.memory_space<vmem>>, vector<8x8x4xf32>,
    %c1_363 = arith.constant 1 : index
    %c15_364 = arith.constant 15 : index
    %c15_365 = arith.constant 15 : index
    %c0_366 = arith.constant 0 : index
    %204 = vector.load %arg20[%c1_363, %c15_364, %c15_365, %c0_366] : memref<7x26x26x4xf32, #tpu.memory_space<vmem>>, vector<1x8x8x4xf32>
    %205 = vector.shape_cast %204 : vector<1x8x8x4xf32> to vector<8x8x4xf32>
    %c0_367 = arith.constant 0 : index
    %c0_368 = arith.constant 0 : index
    %c32_369 = arith.constant 32 : index
    %206 = vector.load %arg21[%c0_367, %c0_368, %c32_369] : memref<8x8x36xf32, #tpu.memory_space<vmem>>, vector<8x8x4xf32>
    tpu.vector_store %arg21[%c0_367, %c0_368, %c32_369], %205 {strides = array<i32>} : memref<8x8x36xf32, #tpu.memory_space<vmem>>, vector<8x8x4xf32>,
    %c0_370 = arith.constant 0 : index
    %c0_371 = arith.constant 0 : index
    %c0_372 = arith.constant 0 : index
    %207 = vector.load %arg21[%c0_370, %c0_371, %c0_372] : memref<8x8x36xf32, #tpu.memory_space<vmem>>, vector<8x8x36xf32>
    %208 = vector.shape_cast %207 : vector<8x8x36xf32> to vector<64x36xf32>
    %c1_373 = arith.constant 1 : index
    %c0_374 = arith.constant 0 : index
    %c0_375 = arith.constant 0 : index
    %c0_376 = arith.constant 0 : index
    %209 = vector.load %arg9[%c1_373, %c0_374, %c0_375, %c0_376] : memref<3x3x36x128xf32, #tpu.memory_space<vmem>>, vector<1x1x36x128xf32>
    %210 = vector.shape_cast %209 : vector<1x1x36x128xf32> to vector<36x128xf32>
    %cst_377 = arith.constant dense<0.000000e+00> : vector<64x128xf32>
    %211 = tpu.matmul %208, %210, %cst_377 {dimension_numbers = #tpu.dot_dimension_numbers<[1], [0], [0], [1], [0, 0, 1, 1], [], []>} : vector<64x36xf32>, vector<36x128xf32>, vector<64x128xf32> -> vector<64x128xf32>
    %212 = arith.addf %179, %211 : vector<64x128xf32>
    %c3_378 = arith.constant 3 : index
    %c3_379 = arith.constant 3 : index
    %c3_380 = arith.constant 3 : index
    %c0_381 = arith.constant 0 : index
    %213 = vector.load %arg20[%c3_378, %c3_379, %c3_380, %c0_381] : memref<7x26x26x4xf32, #tpu.memory_space<vmem>>, vector<1x8x8x4xf32>
    %214 = vector.shape_cast %213 : vector<1x8x8x4xf32> to vector<8x8x4xf32>
    %c0_382 = arith.constant 0 : index
    %c0_383 = arith.constant 0 : index
    %c0_384 = arith.constant 0 : index
    %215 = vector.load %arg21[%c0_382, %c0_383, %c0_384] : memref<8x8x36xf32, #tpu.memory_space<vmem>>, vector<8x8x4xf32>
    tpu.vector_store %arg21[%c0_382, %c0_383, %c0_384], %214 {strides = array<i32>} : memref<8x8x36xf32, #tpu.memory_space<vmem>>, vector<8x8x4xf32>,
    %c3_385 = arith.constant 3 : index
    %c3_386 = arith.constant 3 : index
    %c9_387 = arith.constant 9 : index
    %c0_388 = arith.constant 0 : index
    %216 = vector.load %arg20[%c3_385, %c3_386, %c9_387, %c0_388] : memref<7x26x26x4xf32, #tpu.memory_space<vmem>>, vector<1x8x8x4xf32>
    %217 = vector.shape_cast %216 : vector<1x8x8x4xf32> to vector<8x8x4xf32>
    %c0_389 = arith.constant 0 : index
    %c0_390 = arith.constant 0 : index
    %c4_391 = arith.constant 4 : index
    %218 = vector.load %arg21[%c0_389, %c0_390, %c4_391] : memref<8x8x36xf32, #tpu.memory_space<vmem>>, vector<8x8x4xf32>
    tpu.vector_store %arg21[%c0_389, %c0_390, %c4_391], %217 {strides = array<i32>} : memref<8x8x36xf32, #tpu.memory_space<vmem>>, vector<8x8x4xf32>,
    %c3_392 = arith.constant 3 : index
    %c3_393 = arith.constant 3 : index
    %c15_394 = arith.constant 15 : index
    %c0_395 = arith.constant 0 : index
    %219 = vector.load %arg20[%c3_392, %c3_393, %c15_394, %c0_395] : memref<7x26x26x4xf32, #tpu.memory_space<vmem>>, vector<1x8x8x4xf32>
    %220 = vector.shape_cast %219 : vector<1x8x8x4xf32> to vector<8x8x4xf32>
    %c0_396 = arith.constant 0 : index
    %c0_397 = arith.constant 0 : index
    %c8_398 = arith.constant 8 : index
    %221 = vector.load %arg21[%c0_396, %c0_397, %c8_398] : memref<8x8x36xf32, #tpu.memory_space<vmem>>, vector<8x8x4xf32>
    tpu.vector_store %arg21[%c0_396, %c0_397, %c8_398], %220 {strides = array<i32>} : memref<8x8x36xf32, #tpu.memory_space<vmem>>, vector<8x8x4xf32>,
    %c3_399 = arith.constant 3 : index
    %c9_400 = arith.constant 9 : index
    %c3_401 = arith.constant 3 : index
    %c0_402 = arith.constant 0 : index
    %222 = vector.load %arg20[%c3_399, %c9_400, %c3_401, %c0_402] : memref<7x26x26x4xf32, #tpu.memory_space<vmem>>, vector<1x8x8x4xf32>
    %223 = vector.shape_cast %222 : vector<1x8x8x4xf32> to vector<8x8x4xf32>
    %c0_403 = arith.constant 0 : index
    %c0_404 = arith.constant 0 : index
    %c12_405 = arith.constant 12 : index
    %224 = vector.load %arg21[%c0_403, %c0_404, %c12_405] : memref<8x8x36xf32, #tpu.memory_space<vmem>>, vector<8x8x4xf32>
    tpu.vector_store %arg21[%c0_403, %c0_404, %c12_405], %223 {strides = array<i32>} : memref<8x8x36xf32, #tpu.memory_space<vmem>>, vector<8x8x4xf32>,
    %c3_406 = arith.constant 3 : index
    %c9_407 = arith.constant 9 : index
    %c9_408 = arith.constant 9 : index
    %c0_409 = arith.constant 0 : index
    %225 = vector.load %arg20[%c3_406, %c9_407, %c9_408, %c0_409] : memref<7x26x26x4xf32, #tpu.memory_space<vmem>>, vector<1x8x8x4xf32>
    %226 = vector.shape_cast %225 : vector<1x8x8x4xf32> to vector<8x8x4xf32>
    %c0_410 = arith.constant 0 : index
    %c0_411 = arith.constant 0 : index
    %c16_412 = arith.constant 16 : index
    %227 = vector.load %arg21[%c0_410, %c0_411, %c16_412] : memref<8x8x36xf32, #tpu.memory_space<vmem>>, vector<8x8x4xf32>
    tpu.vector_store %arg21[%c0_410, %c0_411, %c16_412], %226 {strides = array<i32>} : memref<8x8x36xf32, #tpu.memory_space<vmem>>, vector<8x8x4xf32>,
    %c3_413 = arith.constant 3 : index
    %c9_414 = arith.constant 9 : index
    %c15_415 = arith.constant 15 : index
    %c0_416 = arith.constant 0 : index
    %228 = vector.load %arg20[%c3_413, %c9_414, %c15_415, %c0_416] : memref<7x26x26x4xf32, #tpu.memory_space<vmem>>, vector<1x8x8x4xf32>
    %229 = vector.shape_cast %228 : vector<1x8x8x4xf32> to vector<8x8x4xf32>
    %c0_417 = arith.constant 0 : index
    %c0_418 = arith.constant 0 : index
    %c20_419 = arith.constant 20 : index
    %230 = vector.load %arg21[%c0_417, %c0_418, %c20_419] : memref<8x8x36xf32, #tpu.memory_space<vmem>>, vector<8x8x4xf32>
    tpu.vector_store %arg21[%c0_417, %c0_418, %c20_419], %229 {strides = array<i32>} : memref<8x8x36xf32, #tpu.memory_space<vmem>>, vector<8x8x4xf32>,
    %c3_420 = arith.constant 3 : index
    %c15_421 = arith.constant 15 : index
    %c3_422 = arith.constant 3 : index
    %c0_423 = arith.constant 0 : index
    %231 = vector.load %arg20[%c3_420, %c15_421, %c3_422, %c0_423] : memref<7x26x26x4xf32, #tpu.memory_space<vmem>>, vector<1x8x8x4xf32>
    %232 = vector.shape_cast %231 : vector<1x8x8x4xf32> to vector<8x8x4xf32>
    %c0_424 = arith.constant 0 : index
    %c0_425 = arith.constant 0 : index
    %c24_426 = arith.constant 24 : index
    %233 = vector.load %arg21[%c0_424, %c0_425, %c24_426] : memref<8x8x36xf32, #tpu.memory_space<vmem>>, vector<8x8x4xf32>
    tpu.vector_store %arg21[%c0_424, %c0_425, %c24_426], %232 {strides = array<i32>} : memref<8x8x36xf32, #tpu.memory_space<vmem>>, vector<8x8x4xf32>,
    %c3_427 = arith.constant 3 : index
    %c15_428 = arith.constant 15 : index
    %c9_429 = arith.constant 9 : index
    %c0_430 = arith.constant 0 : index
    %234 = vector.load %arg20[%c3_427, %c15_428, %c9_429, %c0_430] : memref<7x26x26x4xf32, #tpu.memory_space<vmem>>, vector<1x8x8x4xf32>
    %235 = vector.shape_cast %234 : vector<1x8x8x4xf32> to vector<8x8x4xf32>
    %c0_431 = arith.constant 0 : index
    %c0_432 = arith.constant 0 : index
    %c28_433 = arith.constant 28 : index
    %236 = vector.load %arg21[%c0_431, %c0_432, %c28_433] : memref<8x8x36xf32, #tpu.memory_space<vmem>>, vector<8x8x4xf32>
    tpu.vector_store %arg21[%c0_431, %c0_432, %c28_433], %235 {strides = array<i32>} : memref<8x8x36xf32, #tpu.memory_space<vmem>>, vector<8x8x4xf32>,
    %c3_434 = arith.constant 3 : index
    %c15_435 = arith.constant 15 : index
    %c15_436 = arith.constant 15 : index
    %c0_437 = arith.constant 0 : index
    %237 = vector.load %arg20[%c3_434, %c15_435, %c15_436, %c0_437] : memref<7x26x26x4xf32, #tpu.memory_space<vmem>>, vector<1x8x8x4xf32>
    %238 = vector.shape_cast %237 : vector<1x8x8x4xf32> to vector<8x8x4xf32>
    %c0_438 = arith.constant 0 : index
    %c0_439 = arith.constant 0 : index
    %c32_440 = arith.constant 32 : index
    %239 = vector.load %arg21[%c0_438, %c0_439, %c32_440] : memref<8x8x36xf32, #tpu.memory_space<vmem>>, vector<8x8x4xf32>
    tpu.vector_store %arg21[%c0_438, %c0_439, %c32_440], %238 {strides = array<i32>} : memref<8x8x36xf32, #tpu.memory_space<vmem>>, vector<8x8x4xf32>,
    %c0_441 = arith.constant 0 : index
    %c0_442 = arith.constant 0 : index
    %c0_443 = arith.constant 0 : index
    %240 = vector.load %arg21[%c0_441, %c0_442, %c0_443] : memref<8x8x36xf32, #tpu.memory_space<vmem>>, vector<8x8x36xf32>
    %241 = vector.shape_cast %240 : vector<8x8x36xf32> to vector<64x36xf32>
    %c1_444 = arith.constant 1 : index
    %c1_445 = arith.constant 1 : index
    %c0_446 = arith.constant 0 : index
    %c0_447 = arith.constant 0 : index
    %242 = vector.load %arg9[%c1_444, %c1_445, %c0_446, %c0_447] : memref<3x3x36x128xf32, #tpu.memory_space<vmem>>, vector<1x1x36x128xf32>
    %243 = vector.shape_cast %242 : vector<1x1x36x128xf32> to vector<36x128xf32>
    %cst_448 = arith.constant dense<0.000000e+00> : vector<64x128xf32>
    %244 = tpu.matmul %241, %243, %cst_448 {dimension_numbers = #tpu.dot_dimension_numbers<[1], [0], [0], [1], [0, 0, 1, 1], [], []>} : vector<64x36xf32>, vector<36x128xf32>, vector<64x128xf32> -> vector<64x128xf32>
    %245 = arith.addf %212, %244 : vector<64x128xf32>
    %c5_449 = arith.constant 5 : index
    %c3_450 = arith.constant 3 : index
    %c3_451 = arith.constant 3 : index
    %c0_452 = arith.constant 0 : index
    %246 = vector.load %arg20[%c5_449, %c3_450, %c3_451, %c0_452] : memref<7x26x26x4xf32, #tpu.memory_space<vmem>>, vector<1x8x8x4xf32>
    %247 = vector.shape_cast %246 : vector<1x8x8x4xf32> to vector<8x8x4xf32>
    %c0_453 = arith.constant 0 : index
    %c0_454 = arith.constant 0 : index
    %c0_455 = arith.constant 0 : index
    %248 = vector.load %arg21[%c0_453, %c0_454, %c0_455] : memref<8x8x36xf32, #tpu.memory_space<vmem>>, vector<8x8x4xf32>
    tpu.vector_store %arg21[%c0_453, %c0_454, %c0_455], %247 {strides = array<i32>} : memref<8x8x36xf32, #tpu.memory_space<vmem>>, vector<8x8x4xf32>,
    %c5_456 = arith.constant 5 : index
    %c3_457 = arith.constant 3 : index
    %c9_458 = arith.constant 9 : index
    %c0_459 = arith.constant 0 : index
    %249 = vector.load %arg20[%c5_456, %c3_457, %c9_458, %c0_459] : memref<7x26x26x4xf32, #tpu.memory_space<vmem>>, vector<1x8x8x4xf32>
    %250 = vector.shape_cast %249 : vector<1x8x8x4xf32> to vector<8x8x4xf32>
    %c0_460 = arith.constant 0 : index
    %c0_461 = arith.constant 0 : index
    %c4_462 = arith.constant 4 : index
    %251 = vector.load %arg21[%c0_460, %c0_461, %c4_462] : memref<8x8x36xf32, #tpu.memory_space<vmem>>, vector<8x8x4xf32>
    tpu.vector_store %arg21[%c0_460, %c0_461, %c4_462], %250 {strides = array<i32>} : memref<8x8x36xf32, #tpu.memory_space<vmem>>, vector<8x8x4xf32>,
    %c5_463 = arith.constant 5 : index
    %c3_464 = arith.constant 3 : index
    %c15_465 = arith.constant 15 : index
    %c0_466 = arith.constant 0 : index
    %252 = vector.load %arg20[%c5_463, %c3_464, %c15_465, %c0_466] : memref<7x26x26x4xf32, #tpu.memory_space<vmem>>, vector<1x8x8x4xf32>
    %253 = vector.shape_cast %252 : vector<1x8x8x4xf32> to vector<8x8x4xf32>
    %c0_467 = arith.constant 0 : index
    %c0_468 = arith.constant 0 : index
    %c8_469 = arith.constant 8 : index
    %254 = vector.load %arg21[%c0_467, %c0_468, %c8_469] : memref<8x8x36xf32, #tpu.memory_space<vmem>>, vector<8x8x4xf32>
    tpu.vector_store %arg21[%c0_467, %c0_468, %c8_469], %253 {strides = array<i32>} : memref<8x8x36xf32, #tpu.memory_space<vmem>>, vector<8x8x4xf32>,
    %c5_470 = arith.constant 5 : index
    %c9_471 = arith.constant 9 : index
    %c3_472 = arith.constant 3 : index
    %c0_473 = arith.constant 0 : index
    %255 = vector.load %arg20[%c5_470, %c9_471, %c3_472, %c0_473] : memref<7x26x26x4xf32, #tpu.memory_space<vmem>>, vector<1x8x8x4xf32>
    %256 = vector.shape_cast %255 : vector<1x8x8x4xf32> to vector<8x8x4xf32>
    %c0_474 = arith.constant 0 : index
    %c0_475 = arith.constant 0 : index
    %c12_476 = arith.constant 12 : index
    %257 = vector.load %arg21[%c0_474, %c0_475, %c12_476] : memref<8x8x36xf32, #tpu.memory_space<vmem>>, vector<8x8x4xf32>
    tpu.vector_store %arg21[%c0_474, %c0_475, %c12_476], %256 {strides = array<i32>} : memref<8x8x36xf32, #tpu.memory_space<vmem>>, vector<8x8x4xf32>,
    %c5_477 = arith.constant 5 : index
    %c9_478 = arith.constant 9 : index
    %c9_479 = arith.constant 9 : index
    %c0_480 = arith.constant 0 : index
    %258 = vector.load %arg20[%c5_477, %c9_478, %c9_479, %c0_480] : memref<7x26x26x4xf32, #tpu.memory_space<vmem>>, vector<1x8x8x4xf32>
    %259 = vector.shape_cast %258 : vector<1x8x8x4xf32> to vector<8x8x4xf32>
    %c0_481 = arith.constant 0 : index
    %c0_482 = arith.constant 0 : index
    %c16_483 = arith.constant 16 : index
    %260 = vector.load %arg21[%c0_481, %c0_482, %c16_483] : memref<8x8x36xf32, #tpu.memory_space<vmem>>, vector<8x8x4xf32>
    tpu.vector_store %arg21[%c0_481, %c0_482, %c16_483], %259 {strides = array<i32>} : memref<8x8x36xf32, #tpu.memory_space<vmem>>, vector<8x8x4xf32>,
    %c5_484 = arith.constant 5 : index
    %c9_485 = arith.constant 9 : index
    %c15_486 = arith.constant 15 : index
    %c0_487 = arith.constant 0 : index
    %261 = vector.load %arg20[%c5_484, %c9_485, %c15_486, %c0_487] : memref<7x26x26x4xf32, #tpu.memory_space<vmem>>, vector<1x8x8x4xf32>
    %262 = vector.shape_cast %261 : vector<1x8x8x4xf32> to vector<8x8x4xf32>
    %c0_488 = arith.constant 0 : index
    %c0_489 = arith.constant 0 : index
    %c20_490 = arith.constant 20 : index
    %263 = vector.load %arg21[%c0_488, %c0_489, %c20_490] : memref<8x8x36xf32, #tpu.memory_space<vmem>>, vector<8x8x4xf32>
    tpu.vector_store %arg21[%c0_488, %c0_489, %c20_490], %262 {strides = array<i32>} : memref<8x8x36xf32, #tpu.memory_space<vmem>>, vector<8x8x4xf32>,
    %c5_491 = arith.constant 5 : index
    %c15_492 = arith.constant 15 : index
    %c3_493 = arith.constant 3 : index
    %c0_494 = arith.constant 0 : index
    %264 = vector.load %arg20[%c5_491, %c15_492, %c3_493, %c0_494] : memref<7x26x26x4xf32, #tpu.memory_space<vmem>>, vector<1x8x8x4xf32>
    %265 = vector.shape_cast %264 : vector<1x8x8x4xf32> to vector<8x8x4xf32>
    %c0_495 = arith.constant 0 : index
    %c0_496 = arith.constant 0 : index
    %c24_497 = arith.constant 24 : index
    %266 = vector.load %arg21[%c0_495, %c0_496, %c24_497] : memref<8x8x36xf32, #tpu.memory_space<vmem>>, vector<8x8x4xf32>
    tpu.vector_store %arg21[%c0_495, %c0_496, %c24_497], %265 {strides = array<i32>} : memref<8x8x36xf32, #tpu.memory_space<vmem>>, vector<8x8x4xf32>,
    %c5_498 = arith.constant 5 : index
    %c15_499 = arith.constant 15 : index
    %c9_500 = arith.constant 9 : index
    %c0_501 = arith.constant 0 : index
    %267 = vector.load %arg20[%c5_498, %c15_499, %c9_500, %c0_501] : memref<7x26x26x4xf32, #tpu.memory_space<vmem>>, vector<1x8x8x4xf32>
    %268 = vector.shape_cast %267 : vector<1x8x8x4xf32> to vector<8x8x4xf32>
    %c0_502 = arith.constant 0 : index
    %c0_503 = arith.constant 0 : index
    %c28_504 = arith.constant 28 : index
    %269 = vector.load %arg21[%c0_502, %c0_503, %c28_504] : memref<8x8x36xf32, #tpu.memory_space<vmem>>, vector<8x8x4xf32>
    tpu.vector_store %arg21[%c0_502, %c0_503, %c28_504], %268 {strides = array<i32>} : memref<8x8x36xf32, #tpu.memory_space<vmem>>, vector<8x8x4xf32>,
    %c5_505 = arith.constant 5 : index
    %c15_506 = arith.constant 15 : index
    %c15_507 = arith.constant 15 : index
    %c0_508 = arith.constant 0 : index
    %270 = vector.load %arg20[%c5_505, %c15_506, %c15_507, %c0_508] : memref<7x26x26x4xf32, #tpu.memory_space<vmem>>, vector<1x8x8x4xf32>
    %271 = vector.shape_cast %270 : vector<1x8x8x4xf32> to vector<8x8x4xf32>
    %c0_509 = arith.constant 0 : index
    %c0_510 = arith.constant 0 : index
    %c32_511 = arith.constant 32 : index
    %272 = vector.load %arg21[%c0_509, %c0_510, %c32_511] : memref<8x8x36xf32, #tpu.memory_space<vmem>>, vector<8x8x4xf32>
    tpu.vector_store %arg21[%c0_509, %c0_510, %c32_511], %271 {strides = array<i32>} : memref<8x8x36xf32, #tpu.memory_space<vmem>>, vector<8x8x4xf32>,
    %c0_512 = arith.constant 0 : index
    %c0_513 = arith.constant 0 : index
    %c0_514 = arith.constant 0 : index
    %273 = vector.load %arg21[%c0_512, %c0_513, %c0_514] : memref<8x8x36xf32, #tpu.memory_space<vmem>>, vector<8x8x36xf32>
    %274 = vector.shape_cast %273 : vector<8x8x36xf32> to vector<64x36xf32>
    %c1_515 = arith.constant 1 : index
    %c2_516 = arith.constant 2 : index
    %c0_517 = arith.constant 0 : index
    %c0_518 = arith.constant 0 : index
    %275 = vector.load %arg9[%c1_515, %c2_516, %c0_517, %c0_518] : memref<3x3x36x128xf32, #tpu.memory_space<vmem>>, vector<1x1x36x128xf32>
    %276 = vector.shape_cast %275 : vector<1x1x36x128xf32> to vector<36x128xf32>
    %cst_519 = arith.constant dense<0.000000e+00> : vector<64x128xf32>
    %277 = tpu.matmul %274, %276, %cst_519 {dimension_numbers = #tpu.dot_dimension_numbers<[1], [0], [0], [1], [0, 0, 1, 1], [], []>} : vector<64x36xf32>, vector<36x128xf32>, vector<64x128xf32> -> vector<64x128xf32>
    %278 = arith.addf %245, %277 : vector<64x128xf32>
    %c1_520 = arith.constant 1 : index
    %c0_521 = arith.constant 0 : index
    %c0_522 = arith.constant 0 : index
    %279 = vector.load %arg10[%c1_520, %c0_521, %c0_522] : memref<3x1x128xf32, #tpu.memory_space<vmem>>, vector<1x1x128xf32>
    %280 = vector.shape_cast %279 : vector<1x1x128xf32> to vector<1x128xf32>
    %281 = vector.broadcast %280 : vector<1x128xf32> to vector<64x128xf32>
    %282 = arith.addf %278, %281 : vector<64x128xf32>
    %cst_523 = arith.constant 0.000000e+00 : f32
    %283 = vector.broadcast %cst_523 : f32 to vector<64x128xf32>
    %284 = arith.maximumf %282, %283 : vector<64x128xf32>
    %c0_524 = arith.constant 0 : index
    %c0_525 = arith.constant 0 : index
    %285 = vector.load %arg22[%c0_524, %c0_525] : memref<64x128xf32, #tpu.memory_space<vmem>>, vector<64x128xf32>
    %c1_526 = arith.constant 1 : index
    %c0_527 = arith.constant 0 : index
    %c0_528 = arith.constant 0 : index
    %286 = vector.load %arg11[%c1_526, %c0_527, %c0_528] : memref<3x128x128xf32, #tpu.memory_space<vmem>>, vector<1x128x128xf32>
    %287 = vector.shape_cast %286 : vector<1x128x128xf32> to vector<128x128xf32>
    %cst_529 = arith.constant dense<0.000000e+00> : vector<64x128xf32>
    %288 = tpu.matmul %284, %287, %cst_529 {dimension_numbers = #tpu.dot_dimension_numbers<[1], [0], [0], [1], [0, 0, 1, 1], [], []>} : vector<64x128xf32>, vector<128x128xf32>, vector<64x128xf32> -> vector<64x128xf32>
    %289 = arith.addf %285, %288 : vector<64x128xf32>
    %c0_530 = arith.constant 0 : index
    %c0_531 = arith.constant 0 : index
    %290 = vector.load %arg22[%c0_530, %c0_531] : memref<64x128xf32, #tpu.memory_space<vmem>>, vector<64x128xf32>
    tpu.vector_store %arg22[%c0_530, %c0_531], %289 {strides = array<i32>} : memref<64x128xf32, #tpu.memory_space<vmem>>, vector<64x128xf32>,
    %cst_532 = arith.constant 0.000000e+00 : f32
    %291 = vector.broadcast %cst_532 : f32 to vector<64x128xf32>
    %c0_533 = arith.constant 0 : index
    %c0_534 = arith.constant 0 : index
    %c0_535 = arith.constant 0 : index
    %c0_536 = arith.constant 0 : index
    %292 = vector.load %arg20[%c0_533, %c0_534, %c0_535, %c0_536] : memref<7x26x26x4xf32, #tpu.memory_space<vmem>>, vector<1x8x8x4xf32>
    %293 = vector.shape_cast %292 : vector<1x8x8x4xf32> to vector<8x8x4xf32>
    %c0_537 = arith.constant 0 : index
    %c0_538 = arith.constant 0 : index
    %c0_539 = arith.constant 0 : index
    %294 = vector.load %arg21[%c0_537, %c0_538, %c0_539] : memref<8x8x36xf32, #tpu.memory_space<vmem>>, vector<8x8x4xf32>
    tpu.vector_store %arg21[%c0_537, %c0_538, %c0_539], %293 {strides = array<i32>} : memref<8x8x36xf32, #tpu.memory_space<vmem>>, vector<8x8x4xf32>,
    %c0_540 = arith.constant 0 : index
    %c0_541 = arith.constant 0 : index
    %c9_542 = arith.constant 9 : index
    %c0_543 = arith.constant 0 : index
    %295 = vector.load %arg20[%c0_540, %c0_541, %c9_542, %c0_543] : memref<7x26x26x4xf32, #tpu.memory_space<vmem>>, vector<1x8x8x4xf32>
    %296 = vector.shape_cast %295 : vector<1x8x8x4xf32> to vector<8x8x4xf32>
    %c0_544 = arith.constant 0 : index
    %c0_545 = arith.constant 0 : index
    %c4_546 = arith.constant 4 : index
    %297 = vector.load %arg21[%c0_544, %c0_545, %c4_546] : memref<8x8x36xf32, #tpu.memory_space<vmem>>, vector<8x8x4xf32>
    tpu.vector_store %arg21[%c0_544, %c0_545, %c4_546], %296 {strides = array<i32>} : memref<8x8x36xf32, #tpu.memory_space<vmem>>, vector<8x8x4xf32>,
    %c0_547 = arith.constant 0 : index
    %c0_548 = arith.constant 0 : index
    %c18 = arith.constant 18 : index
    %c0_549 = arith.constant 0 : index
    %298 = vector.load %arg20[%c0_547, %c0_548, %c18, %c0_549] : memref<7x26x26x4xf32, #tpu.memory_space<vmem>>, vector<1x8x8x4xf32>
    %299 = vector.shape_cast %298 : vector<1x8x8x4xf32> to vector<8x8x4xf32>
    %c0_550 = arith.constant 0 : index
    %c0_551 = arith.constant 0 : index
    %c8_552 = arith.constant 8 : index
    %300 = vector.load %arg21[%c0_550, %c0_551, %c8_552] : memref<8x8x36xf32, #tpu.memory_space<vmem>>, vector<8x8x4xf32>
    tpu.vector_store %arg21[%c0_550, %c0_551, %c8_552], %299 {strides = array<i32>} : memref<8x8x36xf32, #tpu.memory_space<vmem>>, vector<8x8x4xf32>,
    %c0_553 = arith.constant 0 : index
    %c9_554 = arith.constant 9 : index
    %c0_555 = arith.constant 0 : index
    %c0_556 = arith.constant 0 : index
    %301 = vector.load %arg20[%c0_553, %c9_554, %c0_555, %c0_556] : memref<7x26x26x4xf32, #tpu.memory_space<vmem>>, vector<1x8x8x4xf32>
    %302 = vector.shape_cast %301 : vector<1x8x8x4xf32> to vector<8x8x4xf32>
    %c0_557 = arith.constant 0 : index
    %c0_558 = arith.constant 0 : index
    %c12_559 = arith.constant 12 : index
    %303 = vector.load %arg21[%c0_557, %c0_558, %c12_559] : memref<8x8x36xf32, #tpu.memory_space<vmem>>, vector<8x8x4xf32>
    tpu.vector_store %arg21[%c0_557, %c0_558, %c12_559], %302 {strides = array<i32>} : memref<8x8x36xf32, #tpu.memory_space<vmem>>, vector<8x8x4xf32>,
    %c0_560 = arith.constant 0 : index
    %c9_561 = arith.constant 9 : index
    %c9_562 = arith.constant 9 : index
    %c0_563 = arith.constant 0 : index
    %304 = vector.load %arg20[%c0_560, %c9_561, %c9_562, %c0_563] : memref<7x26x26x4xf32, #tpu.memory_space<vmem>>, vector<1x8x8x4xf32>
    %305 = vector.shape_cast %304 : vector<1x8x8x4xf32> to vector<8x8x4xf32>
    %c0_564 = arith.constant 0 : index
    %c0_565 = arith.constant 0 : index
    %c16_566 = arith.constant 16 : index
    %306 = vector.load %arg21[%c0_564, %c0_565, %c16_566] : memref<8x8x36xf32, #tpu.memory_space<vmem>>, vector<8x8x4xf32>
    tpu.vector_store %arg21[%c0_564, %c0_565, %c16_566], %305 {strides = array<i32>} : memref<8x8x36xf32, #tpu.memory_space<vmem>>, vector<8x8x4xf32>,
    %c0_567 = arith.constant 0 : index
    %c9_568 = arith.constant 9 : index
    %c18_569 = arith.constant 18 : index
    %c0_570 = arith.constant 0 : index
    %307 = vector.load %arg20[%c0_567, %c9_568, %c18_569, %c0_570] : memref<7x26x26x4xf32, #tpu.memory_space<vmem>>, vector<1x8x8x4xf32>
    %308 = vector.shape_cast %307 : vector<1x8x8x4xf32> to vector<8x8x4xf32>
    %c0_571 = arith.constant 0 : index
    %c0_572 = arith.constant 0 : index
    %c20_573 = arith.constant 20 : index
    %309 = vector.load %arg21[%c0_571, %c0_572, %c20_573] : memref<8x8x36xf32, #tpu.memory_space<vmem>>, vector<8x8x4xf32>
    tpu.vector_store %arg21[%c0_571, %c0_572, %c20_573], %308 {strides = array<i32>} : memref<8x8x36xf32, #tpu.memory_space<vmem>>, vector<8x8x4xf32>,
    %c0_574 = arith.constant 0 : index
    %c18_575 = arith.constant 18 : index
    %c0_576 = arith.constant 0 : index
    %c0_577 = arith.constant 0 : index
    %310 = vector.load %arg20[%c0_574, %c18_575, %c0_576, %c0_577] : memref<7x26x26x4xf32, #tpu.memory_space<vmem>>, vector<1x8x8x4xf32>
    %311 = vector.shape_cast %310 : vector<1x8x8x4xf32> to vector<8x8x4xf32>
    %c0_578 = arith.constant 0 : index
    %c0_579 = arith.constant 0 : index
    %c24_580 = arith.constant 24 : index
    %312 = vector.load %arg21[%c0_578, %c0_579, %c24_580] : memref<8x8x36xf32, #tpu.memory_space<vmem>>, vector<8x8x4xf32>
    tpu.vector_store %arg21[%c0_578, %c0_579, %c24_580], %311 {strides = array<i32>} : memref<8x8x36xf32, #tpu.memory_space<vmem>>, vector<8x8x4xf32>,
    %c0_581 = arith.constant 0 : index
    %c18_582 = arith.constant 18 : index
    %c9_583 = arith.constant 9 : index
    %c0_584 = arith.constant 0 : index
    %313 = vector.load %arg20[%c0_581, %c18_582, %c9_583, %c0_584] : memref<7x26x26x4xf32, #tpu.memory_space<vmem>>, vector<1x8x8x4xf32>
    %314 = vector.shape_cast %313 : vector<1x8x8x4xf32> to vector<8x8x4xf32>
    %c0_585 = arith.constant 0 : index
    %c0_586 = arith.constant 0 : index
    %c28_587 = arith.constant 28 : index
    %315 = vector.load %arg21[%c0_585, %c0_586, %c28_587] : memref<8x8x36xf32, #tpu.memory_space<vmem>>, vector<8x8x4xf32>
    tpu.vector_store %arg21[%c0_585, %c0_586, %c28_587], %314 {strides = array<i32>} : memref<8x8x36xf32, #tpu.memory_space<vmem>>, vector<8x8x4xf32>,
    %c0_588 = arith.constant 0 : index
    %c18_589 = arith.constant 18 : index
    %c18_590 = arith.constant 18 : index
    %c0_591 = arith.constant 0 : index
    %316 = vector.load %arg20[%c0_588, %c18_589, %c18_590, %c0_591] : memref<7x26x26x4xf32, #tpu.memory_space<vmem>>, vector<1x8x8x4xf32>
    %317 = vector.shape_cast %316 : vector<1x8x8x4xf32> to vector<8x8x4xf32>
    %c0_592 = arith.constant 0 : index
    %c0_593 = arith.constant 0 : index
    %c32_594 = arith.constant 32 : index
    %318 = vector.load %arg21[%c0_592, %c0_593, %c32_594] : memref<8x8x36xf32, #tpu.memory_space<vmem>>, vector<8x8x4xf32>
    tpu.vector_store %arg21[%c0_592, %c0_593, %c32_594], %317 {strides = array<i32>} : memref<8x8x36xf32, #tpu.memory_space<vmem>>, vector<8x8x4xf32>,
    %c0_595 = arith.constant 0 : index
    %c0_596 = arith.constant 0 : index
    %c0_597 = arith.constant 0 : index
    %319 = vector.load %arg21[%c0_595, %c0_596, %c0_597] : memref<8x8x36xf32, #tpu.memory_space<vmem>>, vector<8x8x36xf32>
    %320 = vector.shape_cast %319 : vector<8x8x36xf32> to vector<64x36xf32>
    %c2_598 = arith.constant 2 : index
    %c0_599 = arith.constant 0 : index
    %c0_600 = arith.constant 0 : index
    %c0_601 = arith.constant 0 : index
    %321 = vector.load %arg9[%c2_598, %c0_599, %c0_600, %c0_601] : memref<3x3x36x128xf32, #tpu.memory_space<vmem>>, vector<1x1x36x128xf32>
    %322 = vector.shape_cast %321 : vector<1x1x36x128xf32> to vector<36x128xf32>
    %cst_602 = arith.constant dense<0.000000e+00> : vector<64x128xf32>
    %323 = tpu.matmul %320, %322, %cst_602 {dimension_numbers = #tpu.dot_dimension_numbers<[1], [0], [0], [1], [0, 0, 1, 1], [], []>} : vector<64x36xf32>, vector<36x128xf32>, vector<64x128xf32> -> vector<64x128xf32>
    %324 = arith.addf %291, %323 : vector<64x128xf32>
    %c3_603 = arith.constant 3 : index
    %c0_604 = arith.constant 0 : index
    %c0_605 = arith.constant 0 : index
    %c0_606 = arith.constant 0 : index
    %325 = vector.load %arg20[%c3_603, %c0_604, %c0_605, %c0_606] : memref<7x26x26x4xf32, #tpu.memory_space<vmem>>, vector<1x8x8x4xf32>
    %326 = vector.shape_cast %325 : vector<1x8x8x4xf32> to vector<8x8x4xf32>
    %c0_607 = arith.constant 0 : index
    %c0_608 = arith.constant 0 : index
    %c0_609 = arith.constant 0 : index
    %327 = vector.load %arg21[%c0_607, %c0_608, %c0_609] : memref<8x8x36xf32, #tpu.memory_space<vmem>>, vector<8x8x4xf32>
    tpu.vector_store %arg21[%c0_607, %c0_608, %c0_609], %326 {strides = array<i32>} : memref<8x8x36xf32, #tpu.memory_space<vmem>>, vector<8x8x4xf32>,
    %c3_610 = arith.constant 3 : index
    %c0_611 = arith.constant 0 : index
    %c9_612 = arith.constant 9 : index
    %c0_613 = arith.constant 0 : index
    %328 = vector.load %arg20[%c3_610, %c0_611, %c9_612, %c0_613] : memref<7x26x26x4xf32, #tpu.memory_space<vmem>>, vector<1x8x8x4xf32>
    %329 = vector.shape_cast %328 : vector<1x8x8x4xf32> to vector<8x8x4xf32>
    %c0_614 = arith.constant 0 : index
    %c0_615 = arith.constant 0 : index
    %c4_616 = arith.constant 4 : index
    %330 = vector.load %arg21[%c0_614, %c0_615, %c4_616] : memref<8x8x36xf32, #tpu.memory_space<vmem>>, vector<8x8x4xf32>
    tpu.vector_store %arg21[%c0_614, %c0_615, %c4_616], %329 {strides = array<i32>} : memref<8x8x36xf32, #tpu.memory_space<vmem>>, vector<8x8x4xf32>,
    %c3_617 = arith.constant 3 : index
    %c0_618 = arith.constant 0 : index
    %c18_619 = arith.constant 18 : index
    %c0_620 = arith.constant 0 : index
    %331 = vector.load %arg20[%c3_617, %c0_618, %c18_619, %c0_620] : memref<7x26x26x4xf32, #tpu.memory_space<vmem>>, vector<1x8x8x4xf32>
    %332 = vector.shape_cast %331 : vector<1x8x8x4xf32> to vector<8x8x4xf32>
    %c0_621 = arith.constant 0 : index
    %c0_622 = arith.constant 0 : index
    %c8_623 = arith.constant 8 : index
    %333 = vector.load %arg21[%c0_621, %c0_622, %c8_623] : memref<8x8x36xf32, #tpu.memory_space<vmem>>, vector<8x8x4xf32>
    tpu.vector_store %arg21[%c0_621, %c0_622, %c8_623], %332 {strides = array<i32>} : memref<8x8x36xf32, #tpu.memory_space<vmem>>, vector<8x8x4xf32>,
    %c3_624 = arith.constant 3 : index
    %c9_625 = arith.constant 9 : index
    %c0_626 = arith.constant 0 : index
    %c0_627 = arith.constant 0 : index
    %334 = vector.load %arg20[%c3_624, %c9_625, %c0_626, %c0_627] : memref<7x26x26x4xf32, #tpu.memory_space<vmem>>, vector<1x8x8x4xf32>
    %335 = vector.shape_cast %334 : vector<1x8x8x4xf32> to vector<8x8x4xf32>
    %c0_628 = arith.constant 0 : index
    %c0_629 = arith.constant 0 : index
    %c12_630 = arith.constant 12 : index
    %336 = vector.load %arg21[%c0_628, %c0_629, %c12_630] : memref<8x8x36xf32, #tpu.memory_space<vmem>>, vector<8x8x4xf32>
    tpu.vector_store %arg21[%c0_628, %c0_629, %c12_630], %335 {strides = array<i32>} : memref<8x8x36xf32, #tpu.memory_space<vmem>>, vector<8x8x4xf32>,
    %c3_631 = arith.constant 3 : index
    %c9_632 = arith.constant 9 : index
    %c9_633 = arith.constant 9 : index
    %c0_634 = arith.constant 0 : index
    %337 = vector.load %arg20[%c3_631, %c9_632, %c9_633, %c0_634] : memref<7x26x26x4xf32, #tpu.memory_space<vmem>>, vector<1x8x8x4xf32>
    %338 = vector.shape_cast %337 : vector<1x8x8x4xf32> to vector<8x8x4xf32>
    %c0_635 = arith.constant 0 : index
    %c0_636 = arith.constant 0 : index
    %c16_637 = arith.constant 16 : index
    %339 = vector.load %arg21[%c0_635, %c0_636, %c16_637] : memref<8x8x36xf32, #tpu.memory_space<vmem>>, vector<8x8x4xf32>
    tpu.vector_store %arg21[%c0_635, %c0_636, %c16_637], %338 {strides = array<i32>} : memref<8x8x36xf32, #tpu.memory_space<vmem>>, vector<8x8x4xf32>,
    %c3_638 = arith.constant 3 : index
    %c9_639 = arith.constant 9 : index
    %c18_640 = arith.constant 18 : index
    %c0_641 = arith.constant 0 : index
    %340 = vector.load %arg20[%c3_638, %c9_639, %c18_640, %c0_641] : memref<7x26x26x4xf32, #tpu.memory_space<vmem>>, vector<1x8x8x4xf32>
    %341 = vector.shape_cast %340 : vector<1x8x8x4xf32> to vector<8x8x4xf32>
    %c0_642 = arith.constant 0 : index
    %c0_643 = arith.constant 0 : index
    %c20_644 = arith.constant 20 : index
    %342 = vector.load %arg21[%c0_642, %c0_643, %c20_644] : memref<8x8x36xf32, #tpu.memory_space<vmem>>, vector<8x8x4xf32>
    tpu.vector_store %arg21[%c0_642, %c0_643, %c20_644], %341 {strides = array<i32>} : memref<8x8x36xf32, #tpu.memory_space<vmem>>, vector<8x8x4xf32>,
    %c3_645 = arith.constant 3 : index
    %c18_646 = arith.constant 18 : index
    %c0_647 = arith.constant 0 : index
    %c0_648 = arith.constant 0 : index
    %343 = vector.load %arg20[%c3_645, %c18_646, %c0_647, %c0_648] : memref<7x26x26x4xf32, #tpu.memory_space<vmem>>, vector<1x8x8x4xf32>
    %344 = vector.shape_cast %343 : vector<1x8x8x4xf32> to vector<8x8x4xf32>
    %c0_649 = arith.constant 0 : index
    %c0_650 = arith.constant 0 : index
    %c24_651 = arith.constant 24 : index
    %345 = vector.load %arg21[%c0_649, %c0_650, %c24_651] : memref<8x8x36xf32, #tpu.memory_space<vmem>>, vector<8x8x4xf32>
    tpu.vector_store %arg21[%c0_649, %c0_650, %c24_651], %344 {strides = array<i32>} : memref<8x8x36xf32, #tpu.memory_space<vmem>>, vector<8x8x4xf32>,
    %c3_652 = arith.constant 3 : index
    %c18_653 = arith.constant 18 : index
    %c9_654 = arith.constant 9 : index
    %c0_655 = arith.constant 0 : index
    %346 = vector.load %arg20[%c3_652, %c18_653, %c9_654, %c0_655] : memref<7x26x26x4xf32, #tpu.memory_space<vmem>>, vector<1x8x8x4xf32>
    %347 = vector.shape_cast %346 : vector<1x8x8x4xf32> to vector<8x8x4xf32>
    %c0_656 = arith.constant 0 : index
    %c0_657 = arith.constant 0 : index
    %c28_658 = arith.constant 28 : index
    %348 = vector.load %arg21[%c0_656, %c0_657, %c28_658] : memref<8x8x36xf32, #tpu.memory_space<vmem>>, vector<8x8x4xf32>
    tpu.vector_store %arg21[%c0_656, %c0_657, %c28_658], %347 {strides = array<i32>} : memref<8x8x36xf32, #tpu.memory_space<vmem>>, vector<8x8x4xf32>,
    %c3_659 = arith.constant 3 : index
    %c18_660 = arith.constant 18 : index
    %c18_661 = arith.constant 18 : index
    %c0_662 = arith.constant 0 : index
    %349 = vector.load %arg20[%c3_659, %c18_660, %c18_661, %c0_662] : memref<7x26x26x4xf32, #tpu.memory_space<vmem>>, vector<1x8x8x4xf32>
    %350 = vector.shape_cast %349 : vector<1x8x8x4xf32> to vector<8x8x4xf32>
    %c0_663 = arith.constant 0 : index
    %c0_664 = arith.constant 0 : index
    %c32_665 = arith.constant 32 : index
    %351 = vector.load %arg21[%c0_663, %c0_664, %c32_665] : memref<8x8x36xf32, #tpu.memory_space<vmem>>, vector<8x8x4xf32>
    tpu.vector_store %arg21[%c0_663, %c0_664, %c32_665], %350 {strides = array<i32>} : memref<8x8x36xf32, #tpu.memory_space<vmem>>, vector<8x8x4xf32>,
    %c0_666 = arith.constant 0 : index
    %c0_667 = arith.constant 0 : index
    %c0_668 = arith.constant 0 : index
    %352 = vector.load %arg21[%c0_666, %c0_667, %c0_668] : memref<8x8x36xf32, #tpu.memory_space<vmem>>, vector<8x8x36xf32>
    %353 = vector.shape_cast %352 : vector<8x8x36xf32> to vector<64x36xf32>
    %c2_669 = arith.constant 2 : index
    %c1_670 = arith.constant 1 : index
    %c0_671 = arith.constant 0 : index
    %c0_672 = arith.constant 0 : index
    %354 = vector.load %arg9[%c2_669, %c1_670, %c0_671, %c0_672] : memref<3x3x36x128xf32, #tpu.memory_space<vmem>>, vector<1x1x36x128xf32>
    %355 = vector.shape_cast %354 : vector<1x1x36x128xf32> to vector<36x128xf32>
    %cst_673 = arith.constant dense<0.000000e+00> : vector<64x128xf32>
    %356 = tpu.matmul %353, %355, %cst_673 {dimension_numbers = #tpu.dot_dimension_numbers<[1], [0], [0], [1], [0, 0, 1, 1], [], []>} : vector<64x36xf32>, vector<36x128xf32>, vector<64x128xf32> -> vector<64x128xf32>
    %357 = arith.addf %324, %356 : vector<64x128xf32>
    %c6_674 = arith.constant 6 : index
    %c0_675 = arith.constant 0 : index
    %c0_676 = arith.constant 0 : index
    %c0_677 = arith.constant 0 : index
    %358 = vector.load %arg20[%c6_674, %c0_675, %c0_676, %c0_677] : memref<7x26x26x4xf32, #tpu.memory_space<vmem>>, vector<1x8x8x4xf32>
    %359 = vector.shape_cast %358 : vector<1x8x8x4xf32> to vector<8x8x4xf32>
    %c0_678 = arith.constant 0 : index
    %c0_679 = arith.constant 0 : index
    %c0_680 = arith.constant 0 : index
    %360 = vector.load %arg21[%c0_678, %c0_679, %c0_680] : memref<8x8x36xf32, #tpu.memory_space<vmem>>, vector<8x8x4xf32>
    tpu.vector_store %arg21[%c0_678, %c0_679, %c0_680], %359 {strides = array<i32>} : memref<8x8x36xf32, #tpu.memory_space<vmem>>, vector<8x8x4xf32>,
    %c6_681 = arith.constant 6 : index
    %c0_682 = arith.constant 0 : index
    %c9_683 = arith.constant 9 : index
    %c0_684 = arith.constant 0 : index
    %361 = vector.load %arg20[%c6_681, %c0_682, %c9_683, %c0_684] : memref<7x26x26x4xf32, #tpu.memory_space<vmem>>, vector<1x8x8x4xf32>
    %362 = vector.shape_cast %361 : vector<1x8x8x4xf32> to vector<8x8x4xf32>
    %c0_685 = arith.constant 0 : index
    %c0_686 = arith.constant 0 : index
    %c4_687 = arith.constant 4 : index
    %363 = vector.load %arg21[%c0_685, %c0_686, %c4_687] : memref<8x8x36xf32, #tpu.memory_space<vmem>>, vector<8x8x4xf32>
    tpu.vector_store %arg21[%c0_685, %c0_686, %c4_687], %362 {strides = array<i32>} : memref<8x8x36xf32, #tpu.memory_space<vmem>>, vector<8x8x4xf32>,
    %c6_688 = arith.constant 6 : index
    %c0_689 = arith.constant 0 : index
    %c18_690 = arith.constant 18 : index
    %c0_691 = arith.constant 0 : index
    %364 = vector.load %arg20[%c6_688, %c0_689, %c18_690, %c0_691] : memref<7x26x26x4xf32, #tpu.memory_space<vmem>>, vector<1x8x8x4xf32>
    %365 = vector.shape_cast %364 : vector<1x8x8x4xf32> to vector<8x8x4xf32>
    %c0_692 = arith.constant 0 : index
    %c0_693 = arith.constant 0 : index
    %c8_694 = arith.constant 8 : index
    %366 = vector.load %arg21[%c0_692, %c0_693, %c8_694] : memref<8x8x36xf32, #tpu.memory_space<vmem>>, vector<8x8x4xf32>
    tpu.vector_store %arg21[%c0_692, %c0_693, %c8_694], %365 {strides = array<i32>} : memref<8x8x36xf32, #tpu.memory_space<vmem>>, vector<8x8x4xf32>,
    %c6_695 = arith.constant 6 : index
    %c9_696 = arith.constant 9 : index
    %c0_697 = arith.constant 0 : index
    %c0_698 = arith.constant 0 : index
    %367 = vector.load %arg20[%c6_695, %c9_696, %c0_697, %c0_698] : memref<7x26x26x4xf32, #tpu.memory_space<vmem>>, vector<1x8x8x4xf32>
    %368 = vector.shape_cast %367 : vector<1x8x8x4xf32> to vector<8x8x4xf32>
    %c0_699 = arith.constant 0 : index
    %c0_700 = arith.constant 0 : index
    %c12_701 = arith.constant 12 : index
    %369 = vector.load %arg21[%c0_699, %c0_700, %c12_701] : memref<8x8x36xf32, #tpu.memory_space<vmem>>, vector<8x8x4xf32>
    tpu.vector_store %arg21[%c0_699, %c0_700, %c12_701], %368 {strides = array<i32>} : memref<8x8x36xf32, #tpu.memory_space<vmem>>, vector<8x8x4xf32>,
    %c6_702 = arith.constant 6 : index
    %c9_703 = arith.constant 9 : index
    %c9_704 = arith.constant 9 : index
    %c0_705 = arith.constant 0 : index
    %370 = vector.load %arg20[%c6_702, %c9_703, %c9_704, %c0_705] : memref<7x26x26x4xf32, #tpu.memory_space<vmem>>, vector<1x8x8x4xf32>
    %371 = vector.shape_cast %370 : vector<1x8x8x4xf32> to vector<8x8x4xf32>
    %c0_706 = arith.constant 0 : index
    %c0_707 = arith.constant 0 : index
    %c16_708 = arith.constant 16 : index
    %372 = vector.load %arg21[%c0_706, %c0_707, %c16_708] : memref<8x8x36xf32, #tpu.memory_space<vmem>>, vector<8x8x4xf32>
    tpu.vector_store %arg21[%c0_706, %c0_707, %c16_708], %371 {strides = array<i32>} : memref<8x8x36xf32, #tpu.memory_space<vmem>>, vector<8x8x4xf32>,
    %c6_709 = arith.constant 6 : index
    %c9_710 = arith.constant 9 : index
    %c18_711 = arith.constant 18 : index
    %c0_712 = arith.constant 0 : index
    %373 = vector.load %arg20[%c6_709, %c9_710, %c18_711, %c0_712] : memref<7x26x26x4xf32, #tpu.memory_space<vmem>>, vector<1x8x8x4xf32>
    %374 = vector.shape_cast %373 : vector<1x8x8x4xf32> to vector<8x8x4xf32>
    %c0_713 = arith.constant 0 : index
    %c0_714 = arith.constant 0 : index
    %c20_715 = arith.constant 20 : index
    %375 = vector.load %arg21[%c0_713, %c0_714, %c20_715] : memref<8x8x36xf32, #tpu.memory_space<vmem>>, vector<8x8x4xf32>
    tpu.vector_store %arg21[%c0_713, %c0_714, %c20_715], %374 {strides = array<i32>} : memref<8x8x36xf32, #tpu.memory_space<vmem>>, vector<8x8x4xf32>,
    %c6_716 = arith.constant 6 : index
    %c18_717 = arith.constant 18 : index
    %c0_718 = arith.constant 0 : index
    %c0_719 = arith.constant 0 : index
    %376 = vector.load %arg20[%c6_716, %c18_717, %c0_718, %c0_719] : memref<7x26x26x4xf32, #tpu.memory_space<vmem>>, vector<1x8x8x4xf32>
    %377 = vector.shape_cast %376 : vector<1x8x8x4xf32> to vector<8x8x4xf32>
    %c0_720 = arith.constant 0 : index
    %c0_721 = arith.constant 0 : index
    %c24_722 = arith.constant 24 : index
    %378 = vector.load %arg21[%c0_720, %c0_721, %c24_722] : memref<8x8x36xf32, #tpu.memory_space<vmem>>, vector<8x8x4xf32>
    tpu.vector_store %arg21[%c0_720, %c0_721, %c24_722], %377 {strides = array<i32>} : memref<8x8x36xf32, #tpu.memory_space<vmem>>, vector<8x8x4xf32>,
    %c6_723 = arith.constant 6 : index
    %c18_724 = arith.constant 18 : index
    %c9_725 = arith.constant 9 : index
    %c0_726 = arith.constant 0 : index
    %379 = vector.load %arg20[%c6_723, %c18_724, %c9_725, %c0_726] : memref<7x26x26x4xf32, #tpu.memory_space<vmem>>, vector<1x8x8x4xf32>
    %380 = vector.shape_cast %379 : vector<1x8x8x4xf32> to vector<8x8x4xf32>
    %c0_727 = arith.constant 0 : index
    %c0_728 = arith.constant 0 : index
    %c28_729 = arith.constant 28 : index
    %381 = vector.load %arg21[%c0_727, %c0_728, %c28_729] : memref<8x8x36xf32, #tpu.memory_space<vmem>>, vector<8x8x4xf32>
    tpu.vector_store %arg21[%c0_727, %c0_728, %c28_729], %380 {strides = array<i32>} : memref<8x8x36xf32, #tpu.memory_space<vmem>>, vector<8x8x4xf32>,
    %c6_730 = arith.constant 6 : index
    %c18_731 = arith.constant 18 : index
    %c18_732 = arith.constant 18 : index
    %c0_733 = arith.constant 0 : index
    %382 = vector.load %arg20[%c6_730, %c18_731, %c18_732, %c0_733] : memref<7x26x26x4xf32, #tpu.memory_space<vmem>>, vector<1x8x8x4xf32>
    %383 = vector.shape_cast %382 : vector<1x8x8x4xf32> to vector<8x8x4xf32>
    %c0_734 = arith.constant 0 : index
    %c0_735 = arith.constant 0 : index
    %c32_736 = arith.constant 32 : index
    %384 = vector.load %arg21[%c0_734, %c0_735, %c32_736] : memref<8x8x36xf32, #tpu.memory_space<vmem>>, vector<8x8x4xf32>
    tpu.vector_store %arg21[%c0_734, %c0_735, %c32_736], %383 {strides = array<i32>} : memref<8x8x36xf32, #tpu.memory_space<vmem>>, vector<8x8x4xf32>,
    %c0_737 = arith.constant 0 : index
    %c0_738 = arith.constant 0 : index
    %c0_739 = arith.constant 0 : index
    %385 = vector.load %arg21[%c0_737, %c0_738, %c0_739] : memref<8x8x36xf32, #tpu.memory_space<vmem>>, vector<8x8x36xf32>
    %386 = vector.shape_cast %385 : vector<8x8x36xf32> to vector<64x36xf32>
    %c2_740 = arith.constant 2 : index
    %c2_741 = arith.constant 2 : index
    %c0_742 = arith.constant 0 : index
    %c0_743 = arith.constant 0 : index
    %387 = vector.load %arg9[%c2_740, %c2_741, %c0_742, %c0_743] : memref<3x3x36x128xf32, #tpu.memory_space<vmem>>, vector<1x1x36x128xf32>
    %388 = vector.shape_cast %387 : vector<1x1x36x128xf32> to vector<36x128xf32>
    %cst_744 = arith.constant dense<0.000000e+00> : vector<64x128xf32>
    %389 = tpu.matmul %386, %388, %cst_744 {dimension_numbers = #tpu.dot_dimension_numbers<[1], [0], [0], [1], [0, 0, 1, 1], [], []>} : vector<64x36xf32>, vector<36x128xf32>, vector<64x128xf32> -> vector<64x128xf32>
    %390 = arith.addf %357, %389 : vector<64x128xf32>
    %c2_745 = arith.constant 2 : index
    %c0_746 = arith.constant 0 : index
    %c0_747 = arith.constant 0 : index
    %391 = vector.load %arg10[%c2_745, %c0_746, %c0_747] : memref<3x1x128xf32, #tpu.memory_space<vmem>>, vector<1x1x128xf32>
    %392 = vector.shape_cast %391 : vector<1x1x128xf32> to vector<1x128xf32>
    %393 = vector.broadcast %392 : vector<1x128xf32> to vector<64x128xf32>
    %394 = arith.addf %390, %393 : vector<64x128xf32>
    %cst_748 = arith.constant 0.000000e+00 : f32
    %395 = vector.broadcast %cst_748 : f32 to vector<64x128xf32>
    %396 = arith.maximumf %394, %395 : vector<64x128xf32>
    %c0_749 = arith.constant 0 : index
    %c0_750 = arith.constant 0 : index
    %397 = vector.load %arg22[%c0_749, %c0_750] : memref<64x128xf32, #tpu.memory_space<vmem>>, vector<64x128xf32>
    %c2_751 = arith.constant 2 : index
    %c0_752 = arith.constant 0 : index
    %c0_753 = arith.constant 0 : index
    %398 = vector.load %arg11[%c2_751, %c0_752, %c0_753] : memref<3x128x128xf32, #tpu.memory_space<vmem>>, vector<1x128x128xf32>
    %399 = vector.shape_cast %398 : vector<1x128x128xf32> to vector<128x128xf32>
    %cst_754 = arith.constant dense<0.000000e+00> : vector<64x128xf32>
    %400 = tpu.matmul %396, %399, %cst_754 {dimension_numbers = #tpu.dot_dimension_numbers<[1], [0], [0], [1], [0, 0, 1, 1], [], []>} : vector<64x128xf32>, vector<128x128xf32>, vector<64x128xf32> -> vector<64x128xf32>
    %401 = arith.addf %397, %400 : vector<64x128xf32>
    %c0_755 = arith.constant 0 : index
    %c0_756 = arith.constant 0 : index
    %402 = vector.load %arg22[%c0_755, %c0_756] : memref<64x128xf32, #tpu.memory_space<vmem>>, vector<64x128xf32>
    tpu.vector_store %arg22[%c0_755, %c0_756], %401 {strides = array<i32>} : memref<64x128xf32, #tpu.memory_space<vmem>>, vector<64x128xf32>,
    %c0_757 = arith.constant 0 : index
    %c0_758 = arith.constant 0 : index
    %403 = vector.load %arg22[%c0_757, %c0_758] : memref<64x128xf32, #tpu.memory_space<vmem>>, vector<64x128xf32>
    %cst_759 = arith.constant 0.000000e+00 : f32
    %404 = vector.broadcast %cst_759 : f32 to vector<64x128xf32>
    %405 = arith.maximumf %403, %404 : vector<64x128xf32>
    %406 = vector.shape_cast %405 : vector<64x128xf32> to vector<1x1x64x128xf32>
    %c0_760 = arith.constant 0 : index
    %c0_761 = arith.constant 0 : index
    %c0_762 = arith.constant 0 : index
    %c0_763 = arith.constant 0 : index
    %407 = vector.load %arg19[%c0_760, %c0_761, %c0_762, %c0_763] : memref<1x1x64x128xf32, #tpu.memory_space<vmem>>, vector<1x1x64x128xf32>
    tpu.vector_store %arg19[%c0_760, %c0_761, %c0_762, %c0_763], %406 {strides = array<i32>} : memref<1x1x64x128xf32, #tpu.memory_space<vmem>>, vector<1x1x64x128xf32>,
    return
  }
  func.func @transform_0(%arg0: i32, %arg1: i32) -> (i32, i32, i32, i32, i32) {
    %c9_i32 = arith.constant 9 : i32
    %0 = arith.addi %arg1, %c9_i32 : i32
    %c-9_i32 = arith.constant -9 : i32
    %1 = arith.addi %0, %c-9_i32 : i32
    %c0_i32 = arith.constant 0 : i32
    %c0_i32_0 = arith.constant 0 : i32
    %c0_i32_1 = arith.constant 0 : i32
    %c0_i32_2 = arith.constant 0 : i32
    return %arg0, %1, %c0_i32, %c0_i32_0, %c0_i32_1 : i32, i32, i32, i32, i32
  }
  func.func @transform_1(%arg0: i32, %arg1: i32) -> (i32, i32, i32, i32, i32) {
    %c9_i32 = arith.constant 9 : i32
    %0 = arith.addi %arg1, %c9_i32 : i32
    %c-6_i32 = arith.constant -6 : i32
    %1 = arith.addi %0, %c-6_i32 : i32
    %c0_i32 = arith.constant 0 : i32
    %c0_i32_0 = arith.constant 0 : i32
    %c0_i32_1 = arith.constant 0 : i32
    %c0_i32_2 = arith.constant 0 : i32
    return %arg0, %1, %c0_i32, %c0_i32_0, %c0_i32_1 : i32, i32, i32, i32, i32
  }
  func.func @transform_2(%arg0: i32, %arg1: i32) -> (i32, i32, i32, i32, i32) {
    %c9_i32 = arith.constant 9 : i32
    %0 = arith.addi %arg1, %c9_i32 : i32
    %c-3_i32 = arith.constant -3 : i32
    %1 = arith.addi %0, %c-3_i32 : i32
    %c0_i32 = arith.constant 0 : i32
    %c0_i32_0 = arith.constant 0 : i32
    %c0_i32_1 = arith.constant 0 : i32
    %c0_i32_2 = arith.constant 0 : i32
    return %arg0, %1, %c0_i32, %c0_i32_0, %c0_i32_1 : i32, i32, i32, i32, i32
  }
  func.func @transform_3(%arg0: i32, %arg1: i32) -> (i32, i32, i32, i32, i32) {
    %c9_i32 = arith.constant 9 : i32
    %0 = arith.addi %arg1, %c9_i32 : i32
    %c0_i32 = arith.constant 0 : i32
    %1 = arith.addi %0, %c0_i32 : i32
    %c0_i32_0 = arith.constant 0 : i32
    %c0_i32_1 = arith.constant 0 : i32
    %c0_i32_2 = arith.constant 0 : i32
    %c0_i32_3 = arith.constant 0 : i32
    return %arg0, %1, %c0_i32_0, %c0_i32_1, %c0_i32_2 : i32, i32, i32, i32, i32
  }
  func.func @transform_4(%arg0: i32, %arg1: i32) -> (i32, i32, i32, i32, i32) {
    %c9_i32 = arith.constant 9 : i32
    %0 = arith.addi %arg1, %c9_i32 : i32
    %c3_i32 = arith.constant 3 : i32
    %1 = arith.addi %0, %c3_i32 : i32
    %c0_i32 = arith.constant 0 : i32
    %c0_i32_0 = arith.constant 0 : i32
    %c0_i32_1 = arith.constant 0 : i32
    %c0_i32_2 = arith.constant 0 : i32
    return %arg0, %1, %c0_i32, %c0_i32_0, %c0_i32_1 : i32, i32, i32, i32, i32
  }
  func.func @transform_5(%arg0: i32, %arg1: i32) -> (i32, i32, i32, i32, i32) {
    %c9_i32 = arith.constant 9 : i32
    %0 = arith.addi %arg1, %c9_i32 : i32
    %c6_i32 = arith.constant 6 : i32
    %1 = arith.addi %0, %c6_i32 : i32
    %c0_i32 = arith.constant 0 : i32
    %c0_i32_0 = arith.constant 0 : i32
    %c0_i32_1 = arith.constant 0 : i32
    %c0_i32_2 = arith.constant 0 : i32
    return %arg0, %1, %c0_i32, %c0_i32_0, %c0_i32_1 : i32, i32, i32, i32, i32
  }
  func.func @transform_6(%arg0: i32, %arg1: i32) -> (i32, i32, i32, i32, i32) {
    %c9_i32 = arith.constant 9 : i32
    %0 = arith.addi %arg1, %c9_i32 : i32
    %c9_i32_0 = arith.constant 9 : i32
    %1 = arith.addi %0, %c9_i32_0 : i32
    %c0_i32 = arith.constant 0 : i32
    %c0_i32_1 = arith.constant 0 : i32
    %c0_i32_2 = arith.constant 0 : i32
    %c0_i32_3 = arith.constant 0 : i32
    return %arg0, %1, %c0_i32, %c0_i32_1, %c0_i32_2 : i32, i32, i32, i32, i32
  }
  func.func @transform_7(%arg0: i32, %arg1: i32) -> (i32, i32, i32, i32) {
    %c0_i32 = arith.constant 0 : i32
    %c0_i32_0 = arith.constant 0 : i32
    %c0_i32_1 = arith.constant 0 : i32
    %c0_i32_2 = arith.constant 0 : i32
    %c0_i32_3 = arith.constant 0 : i32
    return %c0_i32, %c0_i32_0, %c0_i32_1, %c0_i32_2 : i32, i32, i32, i32
  }
  func.func @transform_8(%arg0: i32, %arg1: i32) -> (i32, i32, i32) {
    %c0_i32 = arith.constant 0 : i32
    %c0_i32_0 = arith.constant 0 : i32
    %c0_i32_1 = arith.constant 0 : i32
    %c0_i32_2 = arith.constant 0 : i32
    return %c0_i32, %c0_i32_0, %c0_i32_1 : i32, i32, i32
  }
  func.func @transform_9(%arg0: i32, %arg1: i32) -> (i32, i32, i32) {
    %c0_i32 = arith.constant 0 : i32
    %c0_i32_0 = arith.constant 0 : i32
    %c0_i32_1 = arith.constant 0 : i32
    %c0_i32_2 = arith.constant 0 : i32
    return %c0_i32, %c0_i32_0, %c0_i32_1 : i32, i32, i32
  }
  func.func @transform_10(%arg0: i32, %arg1: i32) -> (i32, i32) {
    %c0_i32 = arith.constant 0 : i32
    %c0_i32_0 = arith.constant 0 : i32
    %c0_i32_1 = arith.constant 0 : i32
    return %c0_i32, %c0_i32_0 : i32, i32
  }
  func.func @transform_11(%arg0: i32, %arg1: i32) -> (i32, i32) {
    %c0_i32 = arith.constant 0 : i32
    %c0_i32_0 = arith.constant 0 : i32
    %c0_i32_1 = arith.constant 0 : i32
    return %c0_i32, %c0_i32_0 : i32, i32
  }
  func.func @transform_12(%arg0: i32, %arg1: i32) -> (i32, i32) {
    %c0_i32 = arith.constant 0 : i32
    %c0_i32_0 = arith.constant 0 : i32
    %c0_i32_1 = arith.constant 0 : i32
    return %c0_i32, %c0_i32_0 : i32, i32
  }
  func.func @transform_13(%arg0: i32, %arg1: i32) -> (i32, i32) {
    %c0_i32 = arith.constant 0 : i32
    %c0_i32_0 = arith.constant 0 : i32
    %c0_i32_1 = arith.constant 0 : i32
    return %c0_i32, %c0_i32_0 : i32, i32
  }
  func.func @transform_14(%arg0: i32, %arg1: i32) -> (i32, i32) {
    %c0_i32 = arith.constant 0 : i32
    %c0_i32_0 = arith.constant 0 : i32
    %c0_i32_1 = arith.constant 0 : i32
    return %c0_i32, %c0_i32_0 : i32, i32
  }
  func.func @transform_15(%arg0: i32, %arg1: i32) -> (i32, i32) {
    %c0_i32 = arith.constant 0 : i32
    %c0_i32_0 = arith.constant 0 : i32
    %c0_i32_1 = arith.constant 0 : i32
    return %c0_i32, %c0_i32_0 : i32, i32
  }
  func.func @transform_16(%arg0: i32, %arg1: i32) -> (i32, i32) {
    %c0_i32 = arith.constant 0 : i32
    %c0_i32_0 = arith.constant 0 : i32
    %c0_i32_1 = arith.constant 0 : i32
    return %c0_i32, %c0_i32_0 : i32, i32
  }
  func.func @transform_17(%arg0: i32, %arg1: i32) -> (i32, i32, i32, i32) {
    %c0_i32 = arith.constant 0 : i32
    %c0_i32_0 = arith.constant 0 : i32
    %c0_i32_1 = arith.constant 0 : i32
    return %arg0, %arg1, %c0_i32, %c0_i32_0 : i32, i32, i32, i32
  }
}

</mosaic_0001>

<llo_original>
// kernel: _aspp_forward_impl.1
$region0: #{_aspp_forward_impl.1}
  #allocation0 [shape = 'u32[]', space=smem, size = 0x4, offset = 0x4, fixed_abs, tag = 'smem constant byte address 0x4 - core index']
  #allocation1 [shape = 'u32[144,128]{1,0:T(1,128)}', space=vmem, size = 0x12000, scoped, tag = 'internal scratch']
  #allocation2 [shape = 'f32[7,26,26,4]{3,2,1,0:T(8,128)}', space=vmem, size = 0x2d8000, scoped, tag = 'scratch operand']
  #allocation3 [shape = 'f32[8,8,36]{2,1,0:T(8,128)}', space=vmem, size = 0x8000, scoped, tag = 'scratch operand']
  #allocation4 [shape = 'f32[64,128]{1,0:T(8,128)}', space=vmem, size = 0x8000, scoped, tag = 'scratch operand']
  %s0 = inlined_call_operand.vmem [shape: f32[2,26,8,8,4], index: 0, kind: input, shape index: {}, may-alias: {0,1,2,3,4,5,6}]
  %s1 = inlined_call_operand.vmem [shape: f32[2,26,8,8,4], index: 1, kind: input, shape index: {}, may-alias: {0,1,2,3,4,5,6}]
  %s2 = inlined_call_operand.vmem [shape: f32[2,26,8,8,4], index: 2, kind: input, shape index: {}, may-alias: {0,1,2,3,4,5,6}]
  %s3 = inlined_call_operand.vmem [shape: f32[2,26,8,8,4], index: 3, kind: input, shape index: {}, may-alias: {0,1,2,3,4,5,6}]
  %s4 = inlined_call_operand.vmem [shape: f32[2,26,8,8,4], index: 4, kind: input, shape index: {}, may-alias: {0,1,2,3,4,5,6}]
  %s5 = inlined_call_operand.vmem [shape: f32[2,26,8,8,4], index: 5, kind: input, shape index: {}, may-alias: {0,1,2,3,4,5,6}]
  %s6 = inlined_call_operand.vmem [shape: f32[2,26,8,8,4], index: 6, kind: input, shape index: {}, may-alias: {0,1,2,3,4,5,6}]
  %s7 = inlined_call_operand.vmem [shape: f32[3,3,36,128], index: 7, kind: input, shape index: {}]
  %s8 = inlined_call_operand.vmem [shape: f32[3,1,128], index: 8, kind: input, shape index: {}]
  %s9 = inlined_call_operand.vmem [shape: f32[3,128,128], index: 9, kind: input, shape index: {}]
  %s10 = inlined_call_operand.vmem [shape: f32[4,128], index: 10, kind: input, shape index: {}]
  %s11 = inlined_call_operand.vmem [shape: f32[1,128], index: 11, kind: input, shape index: {}]
  %s12 = inlined_call_operand.vmem [shape: f32[128,128], index: 12, kind: input, shape index: {}]
  %s13 = inlined_call_operand.vmem [shape: f32[4,128], index: 13, kind: input, shape index: {}]
  %s14 = inlined_call_operand.vmem [shape: f32[1,128], index: 14, kind: input, shape index: {}]
  %s15 = inlined_call_operand.vmem [shape: f32[128,128], index: 15, kind: input, shape index: {}]
  %s16 = inlined_call_operand.vmem [shape: f32[1,128], index: 16, kind: input, shape index: {}]
  %s17 = inlined_call_operand.vmem [shape: f32[2,8,64,128], index: 17, kind: output, shape index: {}]
  %s18 = sld [smem:[#allocation0]]
  $region101: #{_aspp_forward_impl.1} parent=0
    _
  %s20 = ssub.s32 1, %s18
  %s21 = scalar_select 0, %s20, %s18
  loop: start=0, step=1, limit=18
  $region2: #{_aspp_forward_impl.1} parent=0 // loop_pre_header
    _
  $region3: #{_aspp_forward_impl.1} parent=0 // loop_header
    %s23 = sphi 0, %s27
    %p24 = scmp.ge.s32.totalorder %s23, 18
    %s30 = sphi 0, %s42
    %s31 = sphi 0, %s38
    %s32 = sphi 0, %s30
    %s33 = sphi 0, %s31
    %s34 = sphi 0, %s32
    %s35 = sphi 0, %s33
    %s47 = sphi 0, %s49
    %s50 = sphi 0, %s47
    %s51 = sphi 0, %s50
    %s67 = sphi 0, %s51
    %s77 = sphi 0, %s79
    %s80 = sphi 0, %s77
    %s81 = sphi 0, %s80
    %s97 = sphi 0, %s81
    %s107 = sphi 0, %s109
    %s110 = sphi 0, %s107
    %s111 = sphi 0, %s110
    %s127 = sphi 0, %s111
    %s137 = sphi 0, %s139
    %s140 = sphi 0, %s137
    %s141 = sphi 0, %s140
    %s157 = sphi 0, %s141
    %s167 = sphi 0, %s169
    %s170 = sphi 0, %s167
    %s171 = sphi 0, %s170
    %s187 = sphi 0, %s171
    %s197 = sphi 0, %s199
    %s200 = sphi 0, %s197
    %s201 = sphi 0, %s200
    %s217 = sphi 0, %s201
    %s227 = sphi 0, %s229
    %s230 = sphi 0, %s227
    %s231 = sphi 0, %s230
    %s247 = sphi 0, %s231
    %s251 = sphi 0, %s251
    %s253 = sphi 0, %s251
    %s254 = sphi 0, %s253
    %s268 = sphi 0, %s254
    %s272 = sphi 0, %s272
    %s274 = sphi 0, %s272
    %s275 = sphi 0, %s274
    %s289 = sphi 0, %s275
    %s293 = sphi 0, %s293
    %s295 = sphi 0, %s293
    %s296 = sphi 0, %s295
    %s310 = sphi 0, %s296
    %s314 = sphi 0, %s314
    %s316 = sphi 0, %s314
    %s317 = sphi 0, %s316
    %s331 = sphi 0, %s317
    %s335 = sphi 0, %s335
    %s337 = sphi 0, %s335
    %s338 = sphi 0, %s337
    %s352 = sphi 0, %s338
    %s356 = sphi 0, %s356
    %s358 = sphi 0, %s356
    %s359 = sphi 0, %s358
    %s373 = sphi 0, %s359
    %s377 = sphi 0, %s377
    %s379 = sphi 0, %s377
    %s380 = sphi 0, %s379
    %s394 = sphi 0, %s380
    %s398 = sphi 0, %s398
    %s400 = sphi 0, %s398
    %s401 = sphi 0, %s400
    %s415 = sphi 0, %s401
    %s419 = sphi 0, %s419
    %s421 = sphi 0, %s419
    %s422 = sphi 0, %s421
    %s436 = sphi 0, %s422
    %s440 = sphi 0, %s440
    %s442 = sphi 0, %s440
    %s443 = sphi 0, %s442
    %s457 = sphi 0, %s443
    %s465 = sphi 0, %s467
    %s468 = sphi 0, %s465
    %s469 = sphi 0, %s468
    %s485 = sphi 0, %s469
  $region4: #{_aspp_forward_impl.1} parent=0 // loop_header_branch
    %26 = sbr.rel (%p24) target = $region8
  $region5: #{_aspp_forward_impl.1} parent=0 // loop_body
    %s28 = ssub.s32 %s23, 1
    %s29 = ssub.s32 %s23, 2
    %s36 = sadd.s32 1, %s31
    %p37 = scmp.ge.s32.totalorder %s36, 8
    %s38 = scalar_select %p37, 0, %s36
    %s39 = sadd.s32 1, %s30
    %s40 = scalar_select %p37, %s39, %s30
    %p41 = scmp.ge.s32.totalorder %s40, 2
    %s42 = scalar_select %p41, 0, %s40
    %s43 = ssub.s32 %s30, %s42
    %s44 = ssub.s32 %s31, %s38
    %s45 = sor.u32 %s43, %s44
    %p46 = scmp.eq.s32.totalorder %s45, 0
    %s48 = sadd.s32 %s47, 1
    %s49 = scalar_select %p46, %s47, %s48
    %p52 = pneg %p46
    %p53 = scmp.eq.s32.totalorder %s23, 15
    %p54 = por %p52, %p53
    %p55 = scmp.ne.s32.totalorder %s47, %s50
    %p56 = scmp.eq.s32.totalorder %s23, 0
    %p57 = por %p55, %p56
    %p58 = scmp.ne.s32.totalorder %s47, %s50
    %p59 = scmp.eq.s32.totalorder %s28, 15
    %p60 = por %p58, %p59
    %p61 = scmp.ne.s32.totalorder %s50, %s51
    %p62 = scmp.eq.s32.totalorder %s28, 0
    %p63 = por %p61, %p62
    %p64 = scmp.ne.s32.totalorder %s50, %s51
    %p65 = scmp.eq.s32.totalorder %s29, 15
    %p66 = por %p64, %p65
    %p68 = scmp.ne.s32.totalorder %s51, %s67
    %p69 = scmp.eq.s32.totalorder %s29, 0
    %p70 = por %p68, %p69
    %s71 = sadd.s32 %s31, 3
    %s72 = sadd.s32 %s38, 3
    %s73 = ssub.s32 %s30, %s42
    %s74 = ssub.s32 %s71, %s72
    %s75 = sor.u32 %s73, %s74
    %p76 = scmp.eq.s32.totalorder %s75, 0
    %s78 = sadd.s32 %s77, 1
    %s79 = scalar_select %p76, %s77, %s78
    %p82 = pneg %p76
    %p83 = scmp.eq.s32.totalorder %s23, 15
    %p84 = por %p82, %p83
    %p85 = scmp.ne.s32.totalorder %s77, %s80
    %p86 = scmp.eq.s32.totalorder %s23, 0
    %p87 = por %p85, %p86
    %p88 = scmp.ne.s32.totalorder %s77, %s80
    %p89 = scmp.eq.s32.totalorder %s28, 15
    %p90 = por %p88, %p89
    %p91 = scmp.ne.s32.totalorder %s80, %s81
    %p92 = scmp.eq.s32.totalorder %s28, 0
    %p93 = por %p91, %p92
    %p94 = scmp.ne.s32.totalorder %s80, %s81
    %p95 = scmp.eq.s32.totalorder %s29, 15
    %p96 = por %p94, %p95
    %p98 = scmp.ne.s32.totalorder %s81, %s97
    %p99 = scmp.eq.s32.totalorder %s29, 0
    %p100 = por %p98, %p99
    %s101 = sadd.s32 %s31, 6
    %s102 = sadd.s32 %s38, 6
    %s103 = ssub.s32 %s30, %s42
    %s104 = ssub.s32 %s101, %s102
    %s105 = sor.u32 %s103, %s104
    %p106 = scmp.eq.s32.totalorder %s105, 0
    %s108 = sadd.s32 %s107, 1
    %s109 = scalar_select %p106, %s107, %s108
    %p112 = pneg %p106
    %p113 = scmp.eq.s32.totalorder %s23, 15
    %p114 = por %p112, %p113
    %p115 = scmp.ne.s32.totalorder %s107, %s110
    %p116 = scmp.eq.s32.totalorder %s23, 0
    %p117 = por %p115, %p116
    %p118 = scmp.ne.s32.totalorder %s107, %s110
    %p119 = scmp.eq.s32.totalorder %s28, 15
    %p120 = por %p118, %p119
    %p121 = scmp.ne.s32.totalorder %s110, %s111
    %p122 = scmp.eq.s32.totalorder %s28, 0
    %p123 = por %p121, %p122
    %p124 = scmp.ne.s32.totalorder %s110, %s111
    %p125 = scmp.eq.s32.totalorder %s29, 15
    %p126 = por %p124, %p125
    %p128 = scmp.ne.s32.totalorder %s111, %s127
    %p129 = scmp.eq.s32.totalorder %s29, 0
    %p130 = por %p128, %p129
    %s131 = sadd.s32 %s31, 9
    %s132 = sadd.s32 %s38, 9
    %s133 = ssub.s32 %s30, %s42
    %s134 = ssub.s32 %s131, %s132
    %s135 = sor.u32 %s133, %s134
    %p136 = scmp.eq.s32.totalorder %s135, 0
    %s138 = sadd.s32 %s137, 1
    %s139 = scalar_select %p136, %s137, %s138
    %p142 = pneg %p136
    %p143 = scmp.eq.s32.totalorder %s23, 15
    %p144 = por %p142, %p143
    %p145 = scmp.ne.s32.totalorder %s137, %s140
    %p146 = scmp.eq.s32.totalorder %s23, 0
    %p147 = por %p145, %p146
    %p148 = scmp.ne.s32.totalorder %s137, %s140
    %p149 = scmp.eq.s32.totalorder %s28, 15
    %p150 = por %p148, %p149
    %p151 = scmp.ne.s32.totalorder %s140, %s141
    %p152 = scmp.eq.s32.totalorder %s28, 0
    %p153 = por %p151, %p152
    %p154 = scmp.ne.s32.totalorder %s140, %s141
    %p155 = scmp.eq.s32.totalorder %s29, 15
    %p156 = por %p154, %p155
    %p158 = scmp.ne.s32.totalorder %s141, %s157
    %p159 = scmp.eq.s32.totalorder %s29, 0
    %p160 = por %p158, %p159
    %s161 = sadd.s32 %s31, 12
    %s162 = sadd.s32 %s38, 12
    %s163 = ssub.s32 %s30, %s42
    %s164 = ssub.s32 %s161, %s162
    %s165 = sor.u32 %s163, %s164
    %p166 = scmp.eq.s32.totalorder %s165, 0
    %s168 = sadd.s32 %s167, 1
    %s169 = scalar_select %p166, %s167, %s168
    %p172 = pneg %p166
    %p173 = scmp.eq.s32.totalorder %s23, 15
    %p174 = por %p172, %p173
    %p175 = scmp.ne.s32.totalorder %s167, %s170
    %p176 = scmp.eq.s32.totalorder %s23, 0
    %p177 = por %p175, %p176
    %p178 = scmp.ne.s32.totalorder %s167, %s170
    %p179 = scmp.eq.s32.totalorder %s28, 15
    %p180 = por %p178, %p179
    %p181 = scmp.ne.s32.totalorder %s170, %s171
    %p182 = scmp.eq.s32.totalorder %s28, 0
    %p183 = por %p181, %p182
    %p184 = scmp.ne.s32.totalorder %s170, %s171
    %p185 = scmp.eq.s32.totalorder %s29, 15
    %p186 = por %p184, %p185
    %p188 = scmp.ne.s32.totalorder %s171, %s187
    %p189 = scmp.eq.s32.totalorder %s29, 0
    %p190 = por %p188, %p189
    %s191 = sadd.s32 %s31, 15
    %s192 = sadd.s32 %s38, 15
    %s193 = ssub.s32 %s30, %s42
    %s194 = ssub.s32 %s191, %s192
    %s195 = sor.u32 %s193, %s194
    %p196 = scmp.eq.s32.totalorder %s195, 0
    %s198 = sadd.s32 %s197, 1
    %s199 = scalar_select %p196, %s197, %s198
    %p202 = pneg %p196
    %p203 = scmp.eq.s32.totalorder %s23, 15
    %p204 = por %p202, %p203
    %p205 = scmp.ne.s32.totalorder %s197, %s200
    %p206 = scmp.eq.s32.totalorder %s23, 0
    %p207 = por %p205, %p206
    %p208 = scmp.ne.s32.totalorder %s197, %s200
    %p209 = scmp.eq.s32.totalorder %s28, 15
    %p210 = por %p208, %p209
    %p211 = scmp.ne.s32.totalorder %s200, %s201
    %p212 = scmp.eq.s32.totalorder %s28, 0
    %p213 = por %p211, %p212
    %p214 = scmp.ne.s32.totalorder %s200, %s201
    %p215 = scmp.eq.s32.totalorder %s29, 15
    %p216 = por %p214, %p215
    %p218 = scmp.ne.s32.totalorder %s201, %s217
    %p219 = scmp.eq.s32.totalorder %s29, 0
    %p220 = por %p218, %p219
    %s221 = sadd.s32 %s31, 18
    %s222 = sadd.s32 %s38, 18
    %s223 = ssub.s32 %s30, %s42
    %s224 = ssub.s32 %s221, %s222
    %s225 = sor.u32 %s223, %s224
    %p226 = scmp.eq.s32.totalorder %s225, 0
    %s228 = sadd.s32 %s227, 1
    %s229 = scalar_select %p226, %s227, %s228
    %p232 = pneg %p226
    %p233 = scmp.eq.s32.totalorder %s23, 15
    %p234 = por %p232, %p233
    %p235 = scmp.ne.s32.totalorder %s227, %s230
    %p236 = scmp.eq.s32.totalorder %s23, 0
    %p237 = por %p235, %p236
    %p238 = scmp.ne.s32.totalorder %s227, %s230
    %p239 = scmp.eq.s32.totalorder %s28, 15
    %p240 = por %p238, %p239
    %p241 = scmp.ne.s32.totalorder %s230, %s231
    %p242 = scmp.eq.s32.totalorder %s28, 0
    %p243 = por %p241, %p242
    %p244 = scmp.ne.s32.totalorder %s230, %s231
    %p245 = scmp.eq.s32.totalorder %s29, 15
    %p246 = por %p244, %p245
    %p248 = scmp.ne.s32.totalorder %s231, %s247
    %p249 = scmp.eq.s32.totalorder %s29, 0
    %p250 = por %p248, %p249
    %s252 = sadd.s32 %s251, 1
    %p255 = scmp.eq.s32.totalorder %s23, 15
    %p256 = scmp.ne.s32.totalorder %s251, %s253
    %p257 = scmp.eq.s32.totalorder %s23, 0
    %p258 = por %p256, %p257
    %p259 = scmp.ne.s32.totalorder %s251, %s253
    %p260 = scmp.eq.s32.totalorder %s28, 15
    %p261 = por %p259, %p260
    %p262 = scmp.ne.s32.totalorder %s253, %s254
    %p263 = scmp.eq.s32.totalorder %s28, 0
    %p264 = por %p262, %p263
    %p265 = scmp.ne.s32.totalorder %s253, %s254
    %p266 = scmp.eq.s32.totalorder %s29, 15
    %p267 = por %p265, %p266
    %p269 = scmp.ne.s32.totalorder %s254, %s268
    %p270 = scmp.eq.s32.totalorder %s29, 0
    %p271 = por %p269, %p270
    %s273 = sadd.s32 %s272, 1
    %p276 = scmp.eq.s32.totalorder %s23, 15
    %p277 = scmp.ne.s32.totalorder %s272, %s274
    %p278 = scmp.eq.s32.totalorder %s23, 0
    %p279 = por %p277, %p278
    %p280 = scmp.ne.s32.totalorder %s272, %s274
    %p281 = scmp.eq.s32.totalorder %s28, 15
    %p282 = por %p280, %p281
    %p283 = scmp.ne.s32.totalorder %s274, %s275
    %p284 = scmp.eq.s32.totalorder %s28, 0
    %p285 = por %p283, %p284
    %p286 = scmp.ne.s32.totalorder %s274, %s275
    %p287 = scmp.eq.s32.totalorder %s29, 15
    %p288 = por %p286, %p287
    %p290 = scmp.ne.s32.totalorder %s275, %s289
    %p291 = scmp.eq.s32.totalorder %s29, 0
    %p292 = por %p290, %p291
    %s294 = sadd.s32 %s293, 1
    %p297 = scmp.eq.s32.totalorder %s23, 15
    %p298 = scmp.ne.s32.totalorder %s293, %s295
    %p299 = scmp.eq.s32.totalorder %s23, 0
    %p300 = por %p298, %p299
    %p301 = scmp.ne.s32.totalorder %s293, %s295
    %p302 = scmp.eq.s32.totalorder %s28, 15
    %p303 = por %p301, %p302
    %p304 = scmp.ne.s32.totalorder %s295, %s296
    %p305 = scmp.eq.s32.totalorder %s28, 0
    %p306 = por %p304, %p305
    %p307 = scmp.ne.s32.totalorder %s295, %s296
    %p308 = scmp.eq.s32.totalorder %s29, 15
    %p309 = por %p307, %p308
    %p311 = scmp.ne.s32.totalorder %s296, %s310
    %p312 = scmp.eq.s32.totalorder %s29, 0
    %p313 = por %p311, %p312
    %s315 = sadd.s32 %s314, 1
    %p318 = scmp.eq.s32.totalorder %s23, 15
    %p319 = scmp.ne.s32.totalorder %s314, %s316
    %p320 = scmp.eq.s32.totalorder %s23, 0
    %p321 = por %p319, %p320
    %p322 = scmp.ne.s32.totalorder %s314, %s316
    %p323 = scmp.eq.s32.totalorder %s28, 15
    %p324 = por %p322, %p323
    %p325 = scmp.ne.s32.totalorder %s316, %s317
    %p326 = scmp.eq.s32.totalorder %s28, 0
    %p327 = por %p325, %p326
    %p328 = scmp.ne.s32.totalorder %s316, %s317
    %p329 = scmp.eq.s32.totalorder %s29, 15
    %p330 = por %p328, %p329
    %p332 = scmp.ne.s32.totalorder %s317, %s331
    %p333 = scmp.eq.s32.totalorder %s29, 0
    %p334 = por %p332, %p333
    %s336 = sadd.s32 %s335, 1
    %p339 = scmp.eq.s32.totalorder %s23, 15
    %p340 = scmp.ne.s32.totalorder %s335, %s337
    %p341 = scmp.eq.s32.totalorder %s23, 0
    %p342 = por %p340, %p341
    %p343 = scmp.ne.s32.totalorder %s335, %s337
    %p344 = scmp.eq.s32.totalorder %s28, 15
    %p345 = por %p343, %p344
    %p346 = scmp.ne.s32.totalorder %s337, %s338
    %p347 = scmp.eq.s32.totalorder %s28, 0
    %p348 = por %p346, %p347
    %p349 = scmp.ne.s32.totalorder %s337, %s338
    %p350 = scmp.eq.s32.totalorder %s29, 15
    %p351 = por %p349, %p350
    %p353 = scmp.ne.s32.totalorder %s338, %s352
    %p354 = scmp.eq.s32.totalorder %s29, 0
    %p355 = por %p353, %p354
    %s357 = sadd.s32 %s356, 1
    %p360 = scmp.eq.s32.totalorder %s23, 15
    %p361 = scmp.ne.s32.totalorder %s356, %s358
    %p362 = scmp.eq.s32.totalorder %s23, 0
    %p363 = por %p361, %p362
    %p364 = scmp.ne.s32.totalorder %s356, %s358
    %p365 = scmp.eq.s32.totalorder %s28, 15
    %p366 = por %p364, %p365
    %p367 = scmp.ne.s32.totalorder %s358, %s359
    %p368 = scmp.eq.s32.totalorder %s28, 0
    %p369 = por %p367, %p368
    %p370 = scmp.ne.s32.totalorder %s358, %s359
    %p371 = scmp.eq.s32.totalorder %s29, 15
    %p372 = por %p370, %p371
    %p374 = scmp.ne.s32.totalorder %s359, %s373
    %p375 = scmp.eq.s32.totalorder %s29, 0
    %p376 = por %p374, %p375
    %s378 = sadd.s32 %s377, 1
    %p381 = scmp.eq.s32.totalorder %s23, 15
    %p382 = scmp.ne.s32.totalorder %s377, %s379
    %p383 = scmp.eq.s32.totalorder %s23, 0
    %p384 = por %p382, %p383
    %p385 = scmp.ne.s32.totalorder %s377, %s379
    %p386 = scmp.eq.s32.totalorder %s28, 15
    %p387 = por %p385, %p386
    %p388 = scmp.ne.s32.totalorder %s379, %s380
    %p389 = scmp.eq.s32.totalorder %s28, 0
    %p390 = por %p388, %p389
    %p391 = scmp.ne.s32.totalorder %s379, %s380
    %p392 = scmp.eq.s32.totalorder %s29, 15
    %p393 = por %p391, %p392
    %p395 = scmp.ne.s32.totalorder %s380, %s394
    %p396 = scmp.eq.s32.totalorder %s29, 0
    %p397 = por %p395, %p396
    %s399 = sadd.s32 %s398, 1
    %p402 = scmp.eq.s32.totalorder %s23, 15
    %p403 = scmp.ne.s32.totalorder %s398, %s400
    %p404 = scmp.eq.s32.totalorder %s23, 0
    %p405 = por %p403, %p404
    %p406 = scmp.ne.s32.totalorder %s398, %s400
    %p407 = scmp.eq.s32.totalorder %s28, 15
    %p408 = por %p406, %p407
    %p409 = scmp.ne.s32.totalorder %s400, %s401
    %p410 = scmp.eq.s32.totalorder %s28, 0
    %p411 = por %p409, %p410
    %p412 = scmp.ne.s32.totalorder %s400, %s401
    %p413 = scmp.eq.s32.totalorder %s29, 15
    %p414 = por %p412, %p413
    %p416 = scmp.ne.s32.totalorder %s401, %s415
    %p417 = scmp.eq.s32.totalorder %s29, 0
    %p418 = por %p416, %p417
    %s420 = sadd.s32 %s419, 1
    %p423 = scmp.eq.s32.totalorder %s23, 15
    %p424 = scmp.ne.s32.totalorder %s419, %s421
    %p425 = scmp.eq.s32.totalorder %s23, 0
    %p426 = por %p424, %p425
    %p427 = scmp.ne.s32.totalorder %s419, %s421
    %p428 = scmp.eq.s32.totalorder %s28, 15
    %p429 = por %p427, %p428
    %p430 = scmp.ne.s32.totalorder %s421, %s422
    %p431 = scmp.eq.s32.totalorder %s28, 0
    %p432 = por %p430, %p431
    %p433 = scmp.ne.s32.totalorder %s421, %s422
    %p434 = scmp.eq.s32.totalorder %s29, 15
    %p435 = por %p433, %p434
    %p437 = scmp.ne.s32.totalorder %s422, %s436
    %p438 = scmp.eq.s32.totalorder %s29, 0
    %p439 = por %p437, %p438
    %s441 = sadd.s32 %s440, 1
    %p444 = scmp.eq.s32.totalorder %s23, 15
    %p445 = scmp.ne.s32.totalorder %s440, %s442
    %p446 = scmp.eq.s32.totalorder %s23, 0
    %p447 = por %p445, %p446
    %p448 = scmp.ne.s32.totalorder %s440, %s442
    %p449 = scmp.eq.s32.totalorder %s28, 15
    %p450 = por %p448, %p449
    %p451 = scmp.ne.s32.totalorder %s442, %s443
    %p452 = scmp.eq.s32.totalorder %s28, 0
    %p453 = por %p451, %p452
    %p454 = scmp.ne.s32.totalorder %s442, %s443
    %p455 = scmp.eq.s32.totalorder %s29, 15
    %p456 = por %p454, %p455
    %p458 = scmp.ne.s32.totalorder %s443, %s457
    %p459 = scmp.eq.s32.totalorder %s29, 0
    %p460 = por %p458, %p459
    %s461 = ssub.s32 %s30, %s42
    %s462 = ssub.s32 %s31, %s38
    %s463 = sor.u32 %s461, %s462
    %p464 = scmp.eq.s32.totalorder %s463, 0
    %s466 = sadd.s32 %s465, 1
    %s467 = scalar_select %p464, %s465, %s466
    %p470 = pneg %p464
    %p471 = scmp.eq.s32.totalorder %s23, 15
    %p472 = por %p470, %p471
    %p473 = scmp.ne.s32.totalorder %s465, %s468
    %p474 = scmp.eq.s32.totalorder %s23, 0
    %p475 = por %p473, %p474
    %p476 = scmp.ne.s32.totalorder %s465, %s468
    %p477 = scmp.eq.s32.totalorder %s28, 15
    %p478 = por %p476, %p477
    %p479 = scmp.ne.s32.totalorder %s468, %s469
    %p480 = scmp.eq.s32.totalorder %s28, 0
    %p481 = por %p479, %p480
    %p482 = scmp.ne.s32.totalorder %s468, %s469
    %p483 = scmp.eq.s32.totalorder %s29, 15
    %p484 = por %p482, %p483
    %p486 = scmp.ne.s32.totalorder %s469, %s485
    %p487 = scmp.eq.s32.totalorder %s29, 0
    %p488 = por %p486, %p487
    %p489 = scmp.le.s32.totalorder 1, %s23
    %p490 = scmp.lt.s32.totalorder %s23, 17
    %p491 = pnand %p489, %p490
    %p492 = pneg %p491
    // Predicated region
    $region9: #{_aspp_forward_impl.1} parent=5 // pred_check
      _
    $region10: #{_aspp_forward_impl.1} parent=5 // pred_check_branch
      %494 = sbr.rel (%p491) target = $region12
    $region11: #{_aspp_forward_impl.1} parent=5 // pred_region
      %s495 = ssub.s32 %s23, 1
      // Predicated region
      $region13: #{_aspp_forward_impl.1} parent=11 // pred_check
        %p496 = pneg %p264
      $region14: #{_aspp_forward_impl.1} parent=11 // pred_check_branch
        %498 = sbr.rel (%p496) target = $region16
      $region15: #{_aspp_forward_impl.1} parent=11 // pred_region
        _
      $region16: #{_aspp_forward_impl.1} parent=11 // pred_fallthru
        _
      // Predicated region
      $region17: #{_aspp_forward_impl.1} parent=11 // pred_check
        %p499 = pneg %p285
      $region18: #{_aspp_forward_impl.1} parent=11 // pred_check_branch
        %501 = sbr.rel (%p499) target = $region20
      $region19: #{_aspp_forward_impl.1} parent=11 // pred_region
        _
      $region20: #{_aspp_forward_impl.1} parent=11 // pred_fallthru
        _
      // Predicated region
      $region21: #{_aspp_forward_impl.1} parent=11 // pred_check
        %p502 = pneg %p306
      $region22: #{_aspp_forward_impl.1} parent=11 // pred_check_branch
        %504 = sbr.rel (%p502) target = $region24
      $region23: #{_aspp_forward_impl.1} parent=11 // pred_region
        _
      $region24: #{_aspp_forward_impl.1} parent=11 // pred_fallthru
        _
      // Predicated region
      $region25: #{_aspp_forward_impl.1} parent=11 // pred_check
        %p505 = pneg %p327
      $region26: #{_aspp_forward_impl.1} parent=11 // pred_check_branch
        %507 = sbr.rel (%p505) target = $region28
      $region27: #{_aspp_forward_impl.1} parent=11 // pred_region
        _
      $region28: #{_aspp_forward_impl.1} parent=11 // pred_fallthru
        _
      // Predicated region
      $region29: #{_aspp_forward_impl.1} parent=11 // pred_check
        %p508 = pneg %p348
      $region30: #{_aspp_forward_impl.1} parent=11 // pred_check_branch
        %510 = sbr.rel (%p508) target = $region32
      $region31: #{_aspp_forward_impl.1} parent=11 // pred_region
        _
      $region32: #{_aspp_forward_impl.1} parent=11 // pred_fallthru
        _
      // Predicated region
      $region33: #{_aspp_forward_impl.1} parent=11 // pred_check
        %p511 = pneg %p369
      $region34: #{_aspp_forward_impl.1} parent=11 // pred_check_branch
        %513 = sbr.rel (%p511) target = $region36
      $region35: #{_aspp_forward_impl.1} parent=11 // pred_region
        _
      $region36: #{_aspp_forward_impl.1} parent=11 // pred_fallthru
        _
      // Predicated region
      $region37: #{_aspp_forward_impl.1} parent=11 // pred_check
        %p514 = pneg %p390
      $region38: #{_aspp_forward_impl.1} parent=11 // pred_check_branch
        %516 = sbr.rel (%p514) target = $region40
      $region39: #{_aspp_forward_impl.1} parent=11 // pred_region
        _
      $region40: #{_aspp_forward_impl.1} parent=11 // pred_fallthru
        _
      // Predicated region
      $region41: #{_aspp_forward_impl.1} parent=11 // pred_check
        %p517 = pneg %p411
      $region42: #{_aspp_forward_impl.1} parent=11 // pred_check_branch
        %519 = sbr.rel (%p517) target = $region44
      $region43: #{_aspp_forward_impl.1} parent=11 // pred_region
        _
      $region44: #{_aspp_forward_impl.1} parent=11 // pred_fallthru
        _
      // Predicated region
      $region45: #{_aspp_forward_impl.1} parent=11 // pred_check
        %p520 = pneg %p432
      $region46: #{_aspp_forward_impl.1} parent=11 // pred_check_branch
        %522 = sbr.rel (%p520) target = $region48
      $region47: #{_aspp_forward_impl.1} parent=11 // pred_region
        _
      $region48: #{_aspp_forward_impl.1} parent=11 // pred_fallthru
        _
      // Predicated region
      $region49: #{_aspp_forward_impl.1} parent=11 // pred_check
        %p523 = pneg %p453
      $region50: #{_aspp_forward_impl.1} parent=11 // pred_check_branch
        %525 = sbr.rel (%p523) target = $region52
      $region51: #{_aspp_forward_impl.1} parent=11 // pred_region
        _
      $region52: #{_aspp_forward_impl.1} parent=11 // pred_fallthru
        _
    $region12: #{_aspp_forward_impl.1} parent=5 // pred_fallthru
      _
    %p526 = scmp.lt.s32.totalorder %s23, 16
    // Predicated region
    $region53: #{_aspp_forward_impl.1} parent=5 // pred_check
      %p527 = pneg %p526
    $region54: #{_aspp_forward_impl.1} parent=5 // pred_check_branch
      %529 = sbr.rel (%p527) target = $region56
    $region55: #{_aspp_forward_impl.1} parent=5 // pred_region
      // Predicated region
      $region57: #{_aspp_forward_impl.1} parent=55 // pred_check
        %p530 = pneg %p57
      $region58: #{_aspp_forward_impl.1} parent=55 // pred_check_branch
        %532 = sbr.rel (%p530) target = $region60
      $region59: #{_aspp_forward_impl.1} parent=55 // pred_region
        %p533 = scmp.lt.s32.totalorder %s30, 1
        %s534 = scalar_select %p533, %s30, 1
        %p535 = scmp.lt.s32.totalorder %s31, 25
        %s536 = scalar_select %p535, %s31, 25
        %s537 = smul.addr %s536, 8
        %s538 = smul.addr %s534, 208
        %s539 = sadd.s32 %s537, %s538
        %s540 = smul.addr %s539, 8
        %s541 = scalar_lea.vmem %s0, %s540
      $region60: #{_aspp_forward_impl.1} parent=55 // pred_fallthru
        _
      // Predicated region
      $region61: #{_aspp_forward_impl.1} parent=55 // pred_check
        %p542 = pneg %p87
      $region62: #{_aspp_forward_impl.1} parent=55 // pred_check_branch
        %544 = sbr.rel (%p542) target = $region64
      $region63: #{_aspp_forward_impl.1} parent=55 // pred_region
        %s545 = sadd.s32 %s31, 3
        %p546 = scmp.lt.s32.totalorder %s30, 1
        %s547 = scalar_select %p546, %s30, 1
        %p548 = scmp.lt.s32.totalorder %s545, 25
        %s549 = scalar_select %p548, %s545, 25
        %s550 = smul.addr %s549, 8
        %s551 = smul.addr %s547, 208
        %s552 = sadd.s32 %s550, %s551
        %s553 = smul.addr %s552, 8
        %s554 = scalar_lea.vmem %s1, %s553
        %s555 = sadd.s32 %s31, 3
      $region64: #{_aspp_forward_impl.1} parent=55 // pred_fallthru
        _
      // Predicated region
      $region65: #{_aspp_forward_impl.1} parent=55 // pred_check
        %p556 = pneg %p117
      $region66: #{_aspp_forward_impl.1} parent=55 // pred_check_branch
        %558 = sbr.rel (%p556) target = $region68
      $region67: #{_aspp_forward_impl.1} parent=55 // pred_region
        %s559 = sadd.s32 %s31, 6
        %p560 = scmp.lt.s32.totalorder %s30, 1
        %s561 = scalar_select %p560, %s30, 1
        %p562 = scmp.lt.s32.totalorder %s559, 25
        %s563 = scalar_select %p562, %s559, 25
        %s564 = smul.addr %s563, 8
        %s565 = smul.addr %s561, 208
        %s566 = sadd.s32 %s564, %s565
        %s567 = smul.addr %s566, 8
        %s568 = scalar_lea.vmem %s2, %s567
        %s569 = sadd.s32 %s31, 6
      $region68: #{_aspp_forward_impl.1} parent=55 // pred_fallthru
        _
      // Predicated region
      $region69: #{_aspp_forward_impl.1} parent=55 // pred_check
        %p570 = pneg %p147
      $region70: #{_aspp_forward_impl.1} parent=55 // pred_check_branch
        %572 = sbr.rel (%p570) target = $region72
      $region71: #{_aspp_forward_impl.1} parent=55 // pred_region
        %s573 = sadd.s32 %s31, 9
        %p574 = scmp.lt.s32.totalorder %s30, 1
        %s575 = scalar_select %p574, %s30, 1
        %p576 = scmp.lt.s32.totalorder %s573, 25
        %s577 = scalar_select %p576, %s573, 25
        %s578 = smul.addr %s577, 8
        %s579 = smul.addr %s575, 208
        %s580 = sadd.s32 %s578, %s579
        %s581 = smul.addr %s580, 8
        %s582 = scalar_lea.vmem %s3, %s581
        %s583 = sadd.s32 %s31, 9
      $region72: #{_aspp_forward_impl.1} parent=55 // pred_fallthru
        _
      // Predicated region
      $region73: #{_aspp_forward_impl.1} parent=55 // pred_check
        %p584 = pneg %p177
      $region74: #{_aspp_forward_impl.1} parent=55 // pred_check_branch
        %586 = sbr.rel (%p584) target = $region76
      $region75: #{_aspp_forward_impl.1} parent=55 // pred_region
        %s587 = sadd.s32 %s31, 12
        %p588 = scmp.lt.s32.totalorder %s30, 1
        %s589 = scalar_select %p588, %s30, 1
        %p590 = scmp.lt.s32.totalorder %s587, 25
        %s591 = scalar_select %p590, %s587, 25
        %s592 = smul.addr %s591, 8
        %s593 = smul.addr %s589, 208
        %s594 = sadd.s32 %s592, %s593
        %s595 = smul.addr %s594, 8
        %s596 = scalar_lea.vmem %s4, %s595
        %s597 = sadd.s32 %s31, 12
      $region76: #{_aspp_forward_impl.1} parent=55 // pred_fallthru
        _
      // Predicated region
      $region77: #{_aspp_forward_impl.1} parent=55 // pred_check
        %p598 = pneg %p207
      $region78: #{_aspp_forward_impl.1} parent=55 // pred_check_branch
        %600 = sbr.rel (%p598) target = $region80
      $region79: #{_aspp_forward_impl.1} parent=55 // pred_region
        %s601 = sadd.s32 %s31, 15
        %p602 = scmp.lt.s32.totalorder %s30, 1
        %s603 = scalar_select %p602, %s30, 1
        %p604 = scmp.lt.s32.totalorder %s601, 25
        %s605 = scalar_select %p604, %s601, 25
        %s606 = smul.addr %s605, 8
        %s607 = smul.addr %s603, 208
        %s608 = sadd.s32 %s606, %s607
        %s609 = smul.addr %s608, 8
        %s610 = scalar_lea.vmem %s5, %s609
        %s611 = sadd.s32 %s31, 15
      $region80: #{_aspp_forward_impl.1} parent=55 // pred_fallthru
        _
      // Predicated region
      $region81: #{_aspp_forward_impl.1} parent=55 // pred_check
        %p612 = pneg %p237
      $region82: #{_aspp_forward_impl.1} parent=55 // pred_check_branch
        %614 = sbr.rel (%p612) target = $region84
      $region83: #{_aspp_forward_impl.1} parent=55 // pred_region
        %s615 = sadd.s32 %s31, 18
        %p616 = scmp.lt.s32.totalorder %s30, 1
        %s617 = scalar_select %p616, %s30, 1
        %p618 = scmp.lt.s32.totalorder %s615, 25
        %s619 = scalar_select %p618, %s615, 25
        %s620 = smul.addr %s619, 8
        %s621 = smul.addr %s617, 208
        %s622 = sadd.s32 %s620, %s621
        %s623 = smul.addr %s622, 8
        %s624 = scalar_lea.vmem %s6, %s623
        %s625 = sadd.s32 %s31, 18
      $region84: #{_aspp_forward_impl.1} parent=55 // pred_fallthru
        _
    $region56: #{_aspp_forward_impl.1} parent=5 // pred_fallthru
      _
    %p626 = scmp.le.s32.totalorder 1, %s23
    %p627 = scmp.lt.s32.totalorder %s23, 17
    %p628 = pnand %p626, %p627
    %p629 = pneg %p628
    // Predicated region
    $region85: #{_aspp_forward_impl.1} parent=5 // pred_check
      _
    $region86: #{_aspp_forward_impl.1} parent=5 // pred_check_branch
      %631 = sbr.rel (%p628) target = $region88
    $region87: #{_aspp_forward_impl.1} parent=5 // pred_region
      %s632 = ssub.s32 %s23, 1
      %p633 = scmp.lt.s32.totalorder %s32, 1
      %s634 = scalar_select %p633, %s32, 1
      %p635 = scmp.lt.s32.totalorder %s33, 25
      %s636 = scalar_select %p635, %s33, 25
      %s637 = smul.addr %s636, 8
      %s638 = smul.addr %s634, 208
      %s639 = sadd.s32 %s637, %s638
      %s640 = smul.addr %s639, 8
      %s641 = scalar_lea.vmem %s0, %s640
      %p642 = pneg %p63
      %p643 = pneg %p60
      %s644 = sadd.s32 %s33, 3
      %p645 = scmp.lt.s32.totalorder %s32, 1
      %s646 = scalar_select %p645, %s32, 1
      %p647 = scmp.lt.s32.totalorder %s644, 25
      %s648 = scalar_select %p647, %s644, 25
      %s649 = smul.addr %s648, 8
      %s650 = smul.addr %s646, 208
      %s651 = sadd.s32 %s649, %s650
      %s652 = smul.addr %s651, 8
      %s653 = scalar_lea.vmem %s1, %s652
      %p654 = pneg %p93
      %p655 = pneg %p90
      %s656 = sadd.s32 %s33, 6
      %p657 = scmp.lt.s32.totalorder %s32, 1
      %s658 = scalar_select %p657, %s32, 1
      %p659 = scmp.lt.s32.totalorder %s656, 25
      %s660 = scalar_select %p659, %s656, 25
      %s661 = smul.addr %s660, 8
      %s662 = smul.addr %s658, 208
      %s663 = sadd.s32 %s661, %s662
      %s664 = smul.addr %s663, 8
      %s665 = scalar_lea.vmem %s2, %s664
      %p666 = pneg %p123
      %p667 = pneg %p120
      %s668 = sadd.s32 %s33, 9
      %p669 = scmp.lt.s32.totalorder %s32, 1
      %s670 = scalar_select %p669, %s32, 1
      %p671 = scmp.lt.s32.totalorder %s668, 25
      %s672 = scalar_select %p671, %s668, 25
      %s673 = smul.addr %s672, 8
      %s674 = smul.addr %s670, 208
      %s675 = sadd.s32 %s673, %s674
      %s676 = smul.addr %s675, 8
      %s677 = scalar_lea.vmem %s3, %s676
      %p678 = pneg %p153
      %p679 = pneg %p150
      %s680 = sadd.s32 %s33, 12
      %p681 = scmp.lt.s32.totalorder %s32, 1
      %s682 = scalar_select %p681, %s32, 1
      %p683 = scmp.lt.s32.totalorder %s680, 25
      %s684 = scalar_select %p683, %s680, 25
      %s685 = smul.addr %s684, 8
      %s686 = smul.addr %s682, 208
      %s687 = sadd.s32 %s685, %s686
      %s688 = smul.addr %s687, 8
      %s689 = scalar_lea.vmem %s4, %s688
      %p690 = pneg %p183
      %p691 = pneg %p180
      %s692 = sadd.s32 %s33, 15
      %p693 = scmp.lt.s32.totalorder %s32, 1
      %s694 = scalar_select %p693, %s32, 1
      %p695 = scmp.lt.s32.totalorder %s692, 25
      %s696 = scalar_select %p695, %s692, 25
      %s697 = smul.addr %s696, 8
      %s698 = smul.addr %s694, 208
      %s699 = sadd.s32 %s697, %s698
      %s700 = smul.addr %s699, 8
      %s701 = scalar_lea.vmem %s5, %s700
      %p702 = pneg %p213
      %p703 = pneg %p210
      %s704 = sadd.s32 %s33, 18
      %p705 = scmp.lt.s32.totalorder %s32, 1
      %s706 = scalar_select %p705, %s32, 1
      %p707 = scmp.lt.s32.totalorder %s704, 25
      %s708 = scalar_select %p707, %s704, 25
      %s709 = smul.addr %s708, 8
      %s710 = smul.addr %s706, 208
      %s711 = sadd.s32 %s709, %s710
      %s712 = smul.addr %s711, 8
      %s713 = scalar_lea.vmem %s6, %s712
      %p714 = pneg %p243
      %p715 = pneg %p240
      %p716 = pneg %p264
      %p717 = pneg %p261
      %p718 = pneg %p285
      %p719 = pneg %p282
      %p720 = pneg %p306
      %p721 = pneg %p303
      %p722 = pneg %p327
      %p723 = pneg %p324
      %p724 = pneg %p348
      %p725 = pneg %p345
      %p726 = pneg %p369
      %p727 = pneg %p366
      %p728 = pneg %p390
      %p729 = pneg %p387
      %p730 = pneg %p411
      %p731 = pneg %p408
      %p732 = pneg %p432
      %p733 = pneg %p429
      %p734 = pneg %p453
      %p735 = pneg %p450
      %p736 = pneg %p481
      %p737 = pneg %p478
      %p738 = scmp.lt.s32.totalorder %s32, 1
      %s739 = scalar_select %p738, %s32, 1
      %p740 = scmp.lt.s32.totalorder %s33, 7
      %s741 = scalar_select %p740, %s33, 7
      %s742 = smul.addr %s741, 8
      %s743 = smul.addr %s739, 64
      %s744 = sadd.s32 %s742, %s743
      %s745 = smul.addr %s744, 8
      %s746 = scalar_lea.vmem %s17, %s745
      %p747 = scmp.lt.s32.totalorder %s32, 1
      %s748 = scalar_select %p747, %s32, 1
      %p749 = scmp.lt.s32.totalorder %s33, 25
      %s750 = scalar_select %p749, %s33, 25
      %s751 = smul.addr %s750, 8
      %s752 = smul.addr %s748, 208
      %s753 = sadd.s32 %s751, %s752
      %s754 = smul.addr %s753, 8
      %s755 = scalar_lea.vmem %s0, %s754
      %s756 = sadd.s32 %s33, 3
      %p757 = scmp.lt.s32.totalorder %s32, 1
      %s758 = scalar_select %p757, %s32, 1
      %p759 = scmp.lt.s32.totalorder %s756, 25
      %s760 = scalar_select %p759, %s756, 25
      %s761 = smul.addr %s760, 8
      %s762 = smul.addr %s758, 208
      %s763 = sadd.s32 %s761, %s762
      %s764 = smul.addr %s763, 8
      %s765 = scalar_lea.vmem %s1, %s764
      %s766 = sadd.s32 %s33, 3
      %s767 = sadd.s32 %s33, 6
      %p768 = scmp.lt.s32.totalorder %s32, 1
      %s769 = scalar_select %p768, %s32, 1
      %p770 = scmp.lt.s32.totalorder %s767, 25
      %s771 = scalar_select %p770, %s767, 25
      %s772 = smul.addr %s771, 8
      %s773 = smul.addr %s769, 208
      %s774 = sadd.s32 %s772, %s773
      %s775 = smul.addr %s774, 8
      %s776 = scalar_lea.vmem %s2, %s775
      %s777 = sadd.s32 %s33, 6
      %s778 = sadd.s32 %s33, 9
      %p779 = scmp.lt.s32.totalorder %s32, 1
      %s780 = scalar_select %p779, %s32, 1
      %p781 = scmp.lt.s32.totalorder %s778, 25
      %s782 = scalar_select %p781, %s778, 25
      %s783 = smul.addr %s782, 8
      %s784 = smul.addr %s780, 208
      %s785 = sadd.s32 %s783, %s784
      %s786 = smul.addr %s785, 8
      %s787 = scalar_lea.vmem %s3, %s786
      %s788 = sadd.s32 %s33, 9
      %s789 = sadd.s32 %s33, 12
      %p790 = scmp.lt.s32.totalorder %s32, 1
      %s791 = scalar_select %p790, %s32, 1
      %p792 = scmp.lt.s32.totalorder %s789, 25
      %s793 = scalar_select %p792, %s789, 25
      %s794 = smul.addr %s793, 8
      %s795 = smul.addr %s791, 208
      %s796 = sadd.s32 %s794, %s795
      %s797 = smul.addr %s796, 8
      %s798 = scalar_lea.vmem %s4, %s797
      %s799 = sadd.s32 %s33, 12
      %s800 = sadd.s32 %s33, 15
      %p801 = scmp.lt.s32.totalorder %s32, 1
      %s802 = scalar_select %p801, %s32, 1
      %p803 = scmp.lt.s32.totalorder %s800, 25
      %s804 = scalar_select %p803, %s800, 25
      %s805 = smul.addr %s804, 8
      %s806 = smul.addr %s802, 208
      %s807 = sadd.s32 %s805, %s806
      %s808 = smul.addr %s807, 8
      %s809 = scalar_lea.vmem %s5, %s808
      %s810 = sadd.s32 %s33, 15
      %s811 = sadd.s32 %s33, 18
      %p812 = scmp.lt.s32.totalorder %s32, 1
      %s813 = scalar_select %p812, %s32, 1
      %p814 = scmp.lt.s32.totalorder %s811, 25
      %s815 = scalar_select %p814, %s811, 25
      %s816 = smul.addr %s815, 8
      %s817 = smul.addr %s813, 208
      %s818 = sadd.s32 %s816, %s817
      %s819 = smul.addr %s818, 8
      %s820 = scalar_lea.vmem %s6, %s819
      %s821 = sadd.s32 %s33, 18
      %p822 = scmp.lt.s32.totalorder %s32, 1
      %s823 = scalar_select %p822, %s32, 1
      %p824 = scmp.lt.s32.totalorder %s33, 7
      %s825 = scalar_select %p824, %s33, 7
      %s826 = smul.addr %s825, 8
      %s827 = smul.addr %s823, 64
      %s828 = sadd.s32 %s826, %s827
      %s829 = smul.addr %s828, 8
      %s830 = scalar_lea.vmem %s17, %s829
      %vm831 = vcmask 31744
      %832 = vst.msk [vmem:[#allocation2] sm:$0xff] %vm831, 0.0
      %833 = vst.msk [vmem:[#allocation2 + $0x8] sm:$0xff] %vm831, 0.0
      %834 = vst.msk [vmem:[#allocation2 + $0x10] sm:$0xff] %vm831, 0.0
      %vm835 = vcmask 25600
      %836 = vst.msk [vmem:[#allocation2 + $0x18] sm:$0x3] %vm835, 0.0
      %837 = vst.msk [vmem:[#allocation2 + $0x20] sm:$0xff] %vm831, 0.0
      %838 = vst.msk [vmem:[#allocation2 + $0x28] sm:$0xff] %vm831, 0.0
      %839 = vst.msk [vmem:[#allocation2 + $0x30] sm:$0xff] %vm831, 0.0
      %840 = vst.msk [vmem:[#allocation2 + $0x38] sm:$0x3] %vm835, 0.0
      %841 = vst.msk [vmem:[#allocation2 + $0x40] sm:$0xff] %vm831, 0.0
      %842 = vst.msk [vmem:[#allocation2 + $0x48] sm:$0xff] %vm831, 0.0
      %843 = vst.msk [vmem:[#allocation2 + $0x50] sm:$0xff] %vm831, 0.0
      %844 = vst.msk [vmem:[#allocation2 + $0x58] sm:$0x3] %vm835, 0.0
      %845 = vst.msk [vmem:[#allocation2 + $0x60] sm:$0xff] %vm831, 0.0
      %846 = vst.msk [vmem:[#allocation2 + $0x68] sm:$0xff] %vm831, 0.0
      %847 = vst.msk [vmem:[#allocation2 + $0x70] sm:$0xff] %vm831, 0.0
      %848 = vst.msk [vmem:[#allocation2 + $0x78] sm:$0x3] %vm835, 0.0
      %849 = vst.msk [vmem:[#allocation2 + $0x80] sm:$0xff] %vm831, 0.0
      %850 = vst.msk [vmem:[#allocation2 + $0x88] sm:$0xff] %vm831, 0.0
      %851 = vst.msk [vmem:[#allocation2 + $0x90] sm:$0xff] %vm831, 0.0
      %852 = vst.msk [vmem:[#allocation2 + $0x98] sm:$0x3] %vm835, 0.0
      %853 = vst.msk [vmem:[#allocation2 + $0xa0] sm:$0xff] %vm831, 0.0
      %854 = vst.msk [vmem:[#allocation2 + $0xa8] sm:$0xff] %vm831, 0.0
      %855 = vst.msk [vmem:[#allocation2 + $0xb0] sm:$0xff] %vm831, 0.0
      %856 = vst.msk [vmem:[#allocation2 + $0xb8] sm:$0x3] %vm835, 0.0
      %857 = vst.msk [vmem:[#allocation2 + $0xc0] sm:$0xff] %vm831, 0.0
      %858 = vst.msk [vmem:[#allocation2 + $0xc8] sm:$0xff] %vm831, 0.0
      %859 = vst.msk [vmem:[#allocation2 + $0xd0] sm:$0xff] %vm831, 0.0
      %860 = vst.msk [vmem:[#allocation2 + $0xd8] sm:$0x3] %vm835, 0.0
      %861 = vst.msk [vmem:[#allocation2 + $0xe0] sm:$0xff] %vm831, 0.0
      %862 = vst.msk [vmem:[#allocation2 + $0xe8] sm:$0xff] %vm831, 0.0
      %863 = vst.msk [vmem:[#allocation2 + $0xf0] sm:$0xff] %vm831, 0.0
      %864 = vst.msk [vmem:[#allocation2 + $0xf8] sm:$0x3] %vm835, 0.0
      %865 = vst.msk [vmem:[#allocation2 + $0x100] sm:$0xff] %vm831, 0.0
      %866 = vst.msk [vmem:[#allocation2 + $0x108] sm:$0xff] %vm831, 0.0
      %867 = vst.msk [vmem:[#allocation2 + $0x110] sm:$0xff] %vm831, 0.0
      %868 = vst.msk [vmem:[#allocation2 + $0x118] sm:$0x3] %vm835, 0.0
      %869 = vst.msk [vmem:[#allocation2 + $0x120] sm:$0xff] %vm831, 0.0
      %870 = vst.msk [vmem:[#allocation2 + $0x128] sm:$0xff] %vm831, 0.0
      %871 = vst.msk [vmem:[#allocation2 + $0x130] sm:$0xff] %vm831, 0.0
      %872 = vst.msk [vmem:[#allocation2 + $0x138] sm:$0x3] %vm835, 0.0
      %873 = vst.msk [vmem:[#allocation2 + $0x140] sm:$0xff] %vm831, 0.0
      %874 = vst.msk [vmem:[#allocation2 + $0x148] sm:$0xff] %vm831, 0.0
      %875 = vst.msk [vmem:[#allocation2 + $0x150] sm:$0xff] %vm831, 0.0
      %876 = vst.msk [vmem:[#allocation2 + $0x158] sm:$0x3] %vm835, 0.0
      %877 = vst.msk [vmem:[#allocation2 + $0x160] sm:$0xff] %vm831, 0.0
      %878 = vst.msk [vmem:[#allocation2 + $0x168] sm:$0xff] %vm831, 0.0
      %879 = vst.msk [vmem:[#allocation2 + $0x170] sm:$0xff] %vm831, 0.0
      %880 = vst.msk [vmem:[#allocation2 + $0x178] sm:$0x3] %vm835, 0.0
      %881 = vst.msk [vmem:[#allocation2 + $0x180] sm:$0xff] %vm831, 0.0
      %882 = vst.msk [vmem:[#allocation2 + $0x188] sm:$0xff] %vm831, 0.0
      %883 = vst.msk [vmem:[#allocation2 + $0x190] sm:$0xff] %vm831, 0.0
      %884 = vst.msk [vmem:[#allocation2 + $0x198] sm:$0x3] %vm835, 0.0
      %885 = vst.msk [vmem:[#allocation2 + $0x1a0] sm:$0xff] %vm831, 0.0
      %886 = vst.msk [vmem:[#allocation2 + $0x1a8] sm:$0xff] %vm831, 0.0
      %887 = vst.msk [vmem:[#allocation2 + $0x1b0] sm:$0xff] %vm831, 0.0
      %888 = vst.msk [vmem:[#allocation2 + $0x1b8] sm:$0x3] %vm835, 0.0
      %889 = vst.msk [vmem:[#allocation2 + $0x1c0] sm:$0xff] %vm831, 0.0
      %890 = vst.msk [vmem:[#allocation2 + $0x1c8] sm:$0xff] %vm831, 0.0
      %891 = vst.msk [vmem:[#allocation2 + $0x1d0] sm:$0xff] %vm831, 0.0
      %892 = vst.msk [vmem:[#allocation2 + $0x1d8] sm:$0x3] %vm835, 0.0
      %893 = vst.msk [vmem:[#allocation2 + $0x1e0] sm:$0xff] %vm831, 0.0
      %894 = vst.msk [vmem:[#allocation2 + $0x1e8] sm:$0xff] %vm831, 0.0
      %895 = vst.msk [vmem:[#allocation2 + $0x1f0] sm:$0xff] %vm831, 0.0
      %896 = vst.msk [vmem:[#allocation2 + $0x1f8] sm:$0x3] %vm835, 0.0
      %897 = vst.msk [vmem:[#allocation2 + $0x200] sm:$0xff] %vm831, 0.0
      %898 = vst.msk [vmem:[#allocation2 + $0x208] sm:$0xff] %vm831, 0.0
      %899 = vst.msk [vmem:[#allocation2 + $0x210] sm:$0xff] %vm831, 0.0
      %900 = vst.msk [vmem:[#allocation2 + $0x218] sm:$0x3] %vm835, 0.0
      %901 = vst.msk [vmem:[#allocation2 + $0x220] sm:$0xff] %vm831, 0.0
      %902 = vst.msk [vmem:[#allocation2 + $0x228] sm:$0xff] %vm831, 0.0
      %903 = vst.msk [vmem:[#allocation2 + $0x230] sm:$0xff] %vm831, 0.0
      %904 = vst.msk [vmem:[#allocation2 + $0x238] sm:$0x3] %vm835, 0.0
      %905 = vst.msk [vmem:[#allocation2 + $0x240] sm:$0xff] %vm831, 0.0
      %906 = vst.msk [vmem:[#allocation2 + $0x248] sm:$0xff] %vm831, 0.0
      %907 = vst.msk [vmem:[#allocation2 + $0x250] sm:$0xff] %vm831, 0.0
      %908 = vst.msk [vmem:[#allocation2 + $0x258] sm:$0x3] %vm835, 0.0
      %909 = vst.msk [vmem:[#allocation2 + $0x260] sm:$0xff] %vm831, 0.0
      %910 = vst.msk [vmem:[#allocation2 + $0x268] sm:$0xff] %vm831, 0.0
      %911 = vst.msk [vmem:[#allocation2 + $0x270] sm:$0xff] %vm831, 0.0
      %912 = vst.msk [vmem:[#allocation2 + $0x278] sm:$0x3] %vm835, 0.0
      %913 = vst.msk [vmem:[#allocation2 + $0x280] sm:$0xff] %vm831, 0.0
      %914 = vst.msk [vmem:[#allocation2 + $0x288] sm:$0xff] %vm831, 0.0
      %915 = vst.msk [vmem:[#allocation2 + $0x290] sm:$0xff] %vm831, 0.0
      %916 = vst.msk [vmem:[#allocation2 + $0x298] sm:$0x3] %vm835, 0.0
      %917 = vst.msk [vmem:[#allocation2 + $0x2a0] sm:$0xff] %vm831, 0.0
      %918 = vst.msk [vmem:[#allocation2 + $0x2a8] sm:$0xff] %vm831, 0.0
      %919 = vst.msk [vmem:[#allocation2 + $0x2b0] sm:$0xff] %vm831, 0.0
      %920 = vst.msk [vmem:[#allocation2 + $0x2b8] sm:$0x3] %vm835, 0.0
      %921 = vst.msk [vmem:[#allocation2 + $0x2c0] sm:$0xff] %vm831, 0.0
      %922 = vst.msk [vmem:[#allocation2 + $0x2c8] sm:$0xff] %vm831, 0.0
      %923 = vst.msk [vmem:[#allocation2 + $0x2d0] sm:$0xff] %vm831, 0.0
      %924 = vst.msk [vmem:[#allocation2 + $0x2d8] sm:$0x3] %vm835, 0.0
      %925 = vst.msk [vmem:[#allocation2 + $0x2e0] sm:$0xff] %vm831, 0.0
      %926 = vst.msk [vmem:[#allocation2 + $0x2e8] sm:$0xff] %vm831, 0.0
      %927 = vst.msk [vmem:[#allocation2 + $0x2f0] sm:$0xff] %vm831, 0.0
      %928 = vst.msk [vmem:[#allocation2 + $0x2f8] sm:$0x3] %vm835, 0.0
      %929 = vst.msk [vmem:[#allocation2 + $0x300] sm:$0xff] %vm831, 0.0
      %930 = vst.msk [vmem:[#allocation2 + $0x308] sm:$0xff] %vm831, 0.0
      %931 = vst.msk [vmem:[#allocation2 + $0x310] sm:$0xff] %vm831, 0.0
      %932 = vst.msk [vmem:[#allocation2 + $0x318] sm:$0x3] %vm835, 0.0
      %933 = vst.msk [vmem:[#allocation2 + $0x320] sm:$0xff] %vm831, 0.0
      %934 = vst.msk [vmem:[#allocation2 + $0x328] sm:$0xff] %vm831, 0.0
      %935 = vst.msk [vmem:[#allocation2 + $0x330] sm:$0xff] %vm831, 0.0
      %936 = vst.msk [vmem:[#allocation2 + $0x338] sm:$0x3] %vm835, 0.0
      %937 = vst.msk [vmem:[#allocation2 + $0x340] sm:$0xff] %vm831, 0.0
      %938 = vst.msk [vmem:[#allocation2 + $0x348] sm:$0xff] %vm831, 0.0
      %939 = vst.msk [vmem:[#allocation2 + $0x350] sm:$0xff] %vm831, 0.0
      %940 = vst.msk [vmem:[#allocation2 + $0x358] sm:$0x3] %vm835, 0.0
      %941 = vst.msk [vmem:[#allocation2 + $0x360] sm:$0xff] %vm831, 0.0
      %942 = vst.msk [vmem:[#allocation2 + $0x368] sm:$0xff] %vm831, 0.0
      %943 = vst.msk [vmem:[#allocation2 + $0x370] sm:$0xff] %vm831, 0.0
      %944 = vst.msk [vmem:[#allocation2 + $0x378] sm:$0x3] %vm835, 0.0
      %945 = vst.msk [vmem:[#allocation2 + $0x380] sm:$0xff] %vm831, 0.0
      %946 = vst.msk [vmem:[#allocation2 + $0x388] sm:$0xff] %vm831, 0.0
      %947 = vst.msk [vmem:[#allocation2 + $0x390] sm:$0xff] %vm831, 0.0
      %948 = vst.msk [vmem:[#allocation2 + $0x398] sm:$0x3] %vm835, 0.0
      %949 = vst.msk [vmem:[#allocation2 + $0x3a0] sm:$0xff] %vm831, 0.0
      %950 = vst.msk [vmem:[#allocation2 + $0x3a8] sm:$0xff] %vm831, 0.0
      %951 = vst.msk [vmem:[#allocation2 + $0x3b0] sm:$0xff] %vm831, 0.0
      %952 = vst.msk [vmem:[#allocation2 + $0x3b8] sm:$0x3] %vm835, 0.0
      %953 = vst.msk [vmem:[#allocation2 + $0x3c0] sm:$0xff] %vm831, 0.0
      %954 = vst.msk [vmem:[#allocation2 + $0x3c8] sm:$0xff] %vm831, 0.0
      %955 = vst.msk [vmem:[#allocation2 + $0x3d0] sm:$0xff] %vm831, 0.0
      %956 = vst.msk [vmem:[#allocation2 + $0x3d8] sm:$0x3] %vm835, 0.0
      %957 = vst.msk [vmem:[#allocation2 + $0x3e0] sm:$0xff] %vm831, 0.0
      %958 = vst.msk [vmem:[#allocation2 + $0x3e8] sm:$0xff] %vm831, 0.0
      %959 = vst.msk [vmem:[#allocation2 + $0x3f0] sm:$0xff] %vm831, 0.0
      %960 = vst.msk [vmem:[#allocation2 + $0x3f8] sm:$0x3] %vm835, 0.0
      %961 = vst.msk [vmem:[#allocation2 + $0x400] sm:$0xff] %vm831, 0.0
      %962 = vst.msk [vmem:[#allocation2 + $0x408] sm:$0xff] %vm831, 0.0
      %963 = vst.msk [vmem:[#allocation2 + $0x410] sm:$0xff] %vm831, 0.0
      %964 = vst.msk [vmem:[#allocation2 + $0x418] sm:$0x3] %vm835, 0.0
      %965 = vst.msk [vmem:[#allocation2 + $0x420] sm:$0xff] %vm831, 0.0
      %966 = vst.msk [vmem:[#allocation2 + $0x428] sm:$0xff] %vm831, 0.0
      %967 = vst.msk [vmem:[#allocation2 + $0x430] sm:$0xff] %vm831, 0.0
      %968 = vst.msk [vmem:[#allocation2 + $0x438] sm:$0x3] %vm835, 0.0
      %969 = vst.msk [vmem:[#allocation2 + $0x440] sm:$0xff] %vm831, 0.0
      %970 = vst.msk [vmem:[#allocation2 + $0x448] sm:$0xff] %vm831, 0.0
      %971 = vst.msk [vmem:[#allocation2 + $0x450] sm:$0xff] %vm831, 0.0
      %972 = vst.msk [vmem:[#allocation2 + $0x458] sm:$0x3] %vm835, 0.0
      %973 = vst.msk [vmem:[#allocation2 + $0x460] sm:$0xff] %vm831, 0.0
      %974 = vst.msk [vmem:[#allocation2 + $0x468] sm:$0xff] %vm831, 0.0
      %975 = vst.msk [vmem:[#allocation2 + $0x470] sm:$0xff] %vm831, 0.0
      %976 = vst.msk [vmem:[#allocation2 + $0x478] sm:$0x3] %vm835, 0.0
      %977 = vst.msk [vmem:[#allocation2 + $0x480] sm:$0xff] %vm831, 0.0
      %978 = vst.msk [vmem:[#allocation2 + $0x488] sm:$0xff] %vm831, 0.0
      %979 = vst.msk [vmem:[#allocation2 + $0x490] sm:$0xff] %vm831, 0.0
      %980 = vst.msk [vmem:[#allocation2 + $0x498] sm:$0x3] %vm835, 0.0
      %981 = vst.msk [vmem:[#allocation2 + $0x4a0] sm:$0xff] %vm831, 0.0
      %982 = vst.msk [vmem:[#allocation2 + $0x4a8] sm:$0xff] %vm831, 0.0
      %983 = vst.msk [vmem:[#allocation2 + $0x4b0] sm:$0xff] %vm831, 0.0
      %984 = vst.msk [vmem:[#allocation2 + $0x4b8] sm:$0x3] %vm835, 0.0
      %985 = vst.msk [vmem:[#allocation2 + $0x4c0] sm:$0xff] %vm831, 0.0
      %986 = vst.msk [vmem:[#allocation2 + $0x4c8] sm:$0xff] %vm831, 0.0
      %987 = vst.msk [vmem:[#allocation2 + $0x4d0] sm:$0xff] %vm831, 0.0
      %988 = vst.msk [vmem:[#allocation2 + $0x4d8] sm:$0x3] %vm835, 0.0
      %989 = vst.msk [vmem:[#allocation2 + $0x4e0] sm:$0xff] %vm831, 0.0
      %990 = vst.msk [vmem:[#allocation2 + $0x4e8] sm:$0xff] %vm831, 0.0
      %991 = vst.msk [vmem:[#allocation2 + $0x4f0] sm:$0xff] %vm831, 0.0
      %992 = vst.msk [vmem:[#allocation2 + $0x4f8] sm:$0x3] %vm835, 0.0
      %993 = vst.msk [vmem:[#allocation2 + $0x500] sm:$0xff] %vm831, 0.0
      %994 = vst.msk [vmem:[#allocation2 + $0x508] sm:$0xff] %vm831, 0.0
      %995 = vst.msk [vmem:[#allocation2 + $0x510] sm:$0xff] %vm831, 0.0
      %996 = vst.msk [vmem:[#allocation2 + $0x518] sm:$0x3] %vm835, 0.0
      %997 = vst.msk [vmem:[#allocation2 + $0x520] sm:$0xff] %vm831, 0.0
      %998 = vst.msk [vmem:[#allocation2 + $0x528] sm:$0xff] %vm831, 0.0
      %999 = vst.msk [vmem:[#allocation2 + $0x530] sm:$0xff] %vm831, 0.0
      %1000 = vst.msk [vmem:[#allocation2 + $0x538] sm:$0x3] %vm835, 0.0
      %1001 = vst.msk [vmem:[#allocation2 + $0x540] sm:$0xff] %vm831, 0.0
      %1002 = vst.msk [vmem:[#allocation2 + $0x548] sm:$0xff] %vm831, 0.0
      %1003 = vst.msk [vmem:[#allocation2 + $0x550] sm:$0xff] %vm831, 0.0
      %1004 = vst.msk [vmem:[#allocation2 + $0x558] sm:$0x3] %vm835, 0.0
      %1005 = vst.msk [vmem:[#allocation2 + $0x560] sm:$0xff] %vm831, 0.0
      %1006 = vst.msk [vmem:[#allocation2 + $0x568] sm:$0xff] %vm831, 0.0
      %1007 = vst.msk [vmem:[#allocation2 + $0x570] sm:$0xff] %vm831, 0.0
      %1008 = vst.msk [vmem:[#allocation2 + $0x578] sm:$0x3] %vm835, 0.0
      %1009 = vst.msk [vmem:[#allocation2 + $0x580] sm:$0xff] %vm831, 0.0
      %1010 = vst.msk [vmem:[#allocation2 + $0x588] sm:$0xff] %vm831, 0.0
      %1011 = vst.msk [vmem:[#allocation2 + $0x590] sm:$0xff] %vm831, 0.0
      %1012 = vst.msk [vmem:[#allocation2 + $0x598] sm:$0x3] %vm835, 0.0
      %1013 = vst.msk [vmem:[#allocation2 + $0x5a0] sm:$0xff] %vm831, 0.0
      %1014 = vst.msk [vmem:[#allocation2 + $0x5a8] sm:$0xff] %vm831, 0.0
      %1015 = vst.msk [vmem:[#allocation2 + $0x5b0] sm:$0xff] %vm831, 0.0
      %1016 = vst.msk [vmem:[#allocation2 + $0x5b8] sm:$0x3] %vm835, 0.0
      %1017 = vst.msk [vmem:[#allocation2 + $0x5c0] sm:$0xff] %vm831, 0.0
      %1018 = vst.msk [vmem:[#allocation2 + $0x5c8] sm:$0xff] %vm831, 0.0
      %1019 = vst.msk [vmem:[#allocation2 + $0x5d0] sm:$0xff] %vm831, 0.0
      %1020 = vst.msk [vmem:[#allocation2 + $0x5d8] sm:$0x3] %vm835, 0.0
      %1021 = vst.msk [vmem:[#allocation2 + $0x5e0] sm:$0xff] %vm831, 0.0
      %1022 = vst.msk [vmem:[#allocation2 + $0x5e8] sm:$0xff] %vm831, 0.0
      %1023 = vst.msk [vmem:[#allocation2 + $0x5f0] sm:$0xff] %vm831, 0.0
      %1024 = vst.msk [vmem:[#allocation2 + $0x5f8] sm:$0x3] %vm835, 0.0
      %1025 = vst.msk [vmem:[#allocation2 + $0x600] sm:$0xff] %vm831, 0.0
      %1026 = vst.msk [vmem:[#allocation2 + $0x608] sm:$0xff] %vm831, 0.0
      %1027 = vst.msk [vmem:[#allocation2 + $0x610] sm:$0xff] %vm831, 0.0
      %1028 = vst.msk [vmem:[#allocation2 + $0x618] sm:$0x3] %vm835, 0.0
      %1029 = vst.msk [vmem:[#allocation2 + $0x620] sm:$0xff] %vm831, 0.0
      %1030 = vst.msk [vmem:[#allocation2 + $0x628] sm:$0xff] %vm831, 0.0
      %1031 = vst.msk [vmem:[#allocation2 + $0x630] sm:$0xff] %vm831, 0.0
      %1032 = vst.msk [vmem:[#allocation2 + $0x638] sm:$0x3] %vm835, 0.0
      %1033 = vst.msk [vmem:[#allocation2 + $0x640] sm:$0xff] %vm831, 0.0
      %1034 = vst.msk [vmem:[#allocation2 + $0x648] sm:$0xff] %vm831, 0.0
      %1035 = vst.msk [vmem:[#allocation2 + $0x650] sm:$0xff] %vm831, 0.0
      %1036 = vst.msk [vmem:[#allocation2 + $0x658] sm:$0x3] %vm835, 0.0
      %1037 = vst.msk [vmem:[#allocation2 + $0x660] sm:$0xff] %vm831, 0.0
      %1038 = vst.msk [vmem:[#allocation2 + $0x668] sm:$0xff] %vm831, 0.0
      %1039 = vst.msk [vmem:[#allocation2 + $0x670] sm:$0xff] %vm831, 0.0
      %1040 = vst.msk [vmem:[#allocation2 + $0x678] sm:$0x3] %vm835, 0.0
      %1041 = vst.msk [vmem:[#allocation2 + $0x680] sm:$0xff] %vm831, 0.0
      %1042 = vst.msk [vmem:[#allocation2 + $0x688] sm:$0xff] %vm831, 0.0
      %1043 = vst.msk [vmem:[#allocation2 + $0x690] sm:$0xff] %vm831, 0.0
      %1044 = vst.msk [vmem:[#allocation2 + $0x698] sm:$0x3] %vm835, 0.0
      %1045 = vst.msk [vmem:[#allocation2 + $0x6a0] sm:$0xff] %vm831, 0.0
      %1046 = vst.msk [vmem:[#allocation2 + $0x6a8] sm:$0xff] %vm831, 0.0
      %1047 = vst.msk [vmem:[#allocation2 + $0x6b0] sm:$0xff] %vm831, 0.0
      %1048 = vst.msk [vmem:[#allocation2 + $0x6b8] sm:$0x3] %vm835, 0.0
      %1049 = vst.msk [vmem:[#allocation2 + $0x6c0] sm:$0xff] %vm831, 0.0
      %1050 = vst.msk [vmem:[#allocation2 + $0x6c8] sm:$0xff] %vm831, 0.0
      %1051 = vst.msk [vmem:[#allocation2 + $0x6d0] sm:$0xff] %vm831, 0.0
      %1052 = vst.msk [vmem:[#allocation2 + $0x6d8] sm:$0x3] %vm835, 0.0
      %1053 = vst.msk [vmem:[#allocation2 + $0x6e0] sm:$0xff] %vm831, 0.0
      %1054 = vst.msk [vmem:[#allocation2 + $0x6e8] sm:$0xff] %vm831, 0.0
      %1055 = vst.msk [vmem:[#allocation2 + $0x6f0] sm:$0xff] %vm831, 0.0
      %1056 = vst.msk [vmem:[#allocation2 + $0x6f8] sm:$0x3] %vm835, 0.0
      %1057 = vst.msk [vmem:[#allocation2 + $0x700] sm:$0xff] %vm831, 0.0
      %1058 = vst.msk [vmem:[#allocation2 + $0x708] sm:$0xff] %vm831, 0.0
      %1059 = vst.msk [vmem:[#allocation2 + $0x710] sm:$0xff] %vm831, 0.0
      %1060 = vst.msk [vmem:[#allocation2 + $0x718] sm:$0x3] %vm835, 0.0
      %1061 = vst.msk [vmem:[#allocation2 + $0x720] sm:$0xff] %vm831, 0.0
      %1062 = vst.msk [vmem:[#allocation2 + $0x728] sm:$0xff] %vm831, 0.0
      %1063 = vst.msk [vmem:[#allocation2 + $0x730] sm:$0xff] %vm831, 0.0
      %1064 = vst.msk [vmem:[#allocation2 + $0x738] sm:$0x3] %vm835, 0.0
      %1065 = vst.msk [vmem:[#allocation2 + $0x740] sm:$0xff] %vm831, 0.0
      %1066 = vst.msk [vmem:[#allocation2 + $0x748] sm:$0xff] %vm831, 0.0
      %1067 = vst.msk [vmem:[#allocation2 + $0x750] sm:$0xff] %vm831, 0.0
      %1068 = vst.msk [vmem:[#allocation2 + $0x758] sm:$0x3] %vm835, 0.0
      %1069 = vst.msk [vmem:[#allocation2 + $0x760] sm:$0xff] %vm831, 0.0
      %1070 = vst.msk [vmem:[#allocation2 + $0x768] sm:$0xff] %vm831, 0.0
      %1071 = vst.msk [vmem:[#allocation2 + $0x770] sm:$0xff] %vm831, 0.0
      %1072 = vst.msk [vmem:[#allocation2 + $0x778] sm:$0x3] %vm835, 0.0
      %1073 = vst.msk [vmem:[#allocation2 + $0x780] sm:$0xff] %vm831, 0.0
      %1074 = vst.msk [vmem:[#allocation2 + $0x788] sm:$0xff] %vm831, 0.0
      %1075 = vst.msk [vmem:[#allocation2 + $0x790] sm:$0xff] %vm831, 0.0
      %1076 = vst.msk [vmem:[#allocation2 + $0x798] sm:$0x3] %vm835, 0.0
      %1077 = vst.msk [vmem:[#allocation2 + $0x7a0] sm:$0xff] %vm831, 0.0
      %1078 = vst.msk [vmem:[#allocation2 + $0x7a8] sm:$0xff] %vm831, 0.0
      %1079 = vst.msk [vmem:[#allocation2 + $0x7b0] sm:$0xff] %vm831, 0.0
      %1080 = vst.msk [vmem:[#allocation2 + $0x7b8] sm:$0x3] %vm835, 0.0
      %1081 = vst.msk [vmem:[#allocation2 + $0x7c0] sm:$0xff] %vm831, 0.0
      %1082 = vst.msk [vmem:[#allocation2 + $0x7c8] sm:$0xff] %vm831, 0.0
      %1083 = vst.msk [vmem:[#allocation2 + $0x7d0] sm:$0xff] %vm831, 0.0
      %1084 = vst.msk [vmem:[#allocation2 + $0x7d8] sm:$0x3] %vm835, 0.0
      %1085 = vst.msk [vmem:[#allocation2 + $0x7e0] sm:$0xff] %vm831, 0.0
      %1086 = vst.msk [vmem:[#allocation2 + $0x7e8] sm:$0xff] %vm831, 0.0
      %1087 = vst.msk [vmem:[#allocation2 + $0x7f0] sm:$0xff] %vm831, 0.0
      %1088 = vst.msk [vmem:[#allocation2 + $0x7f8] sm:$0x3] %vm835, 0.0
      %1089 = vst.msk [vmem:[#allocation2 + $0x800] sm:$0xff] %vm831, 0.0
      %1090 = vst.msk [vmem:[#allocation2 + $0x808] sm:$0xff] %vm831, 0.0
      %1091 = vst.msk [vmem:[#allocation2 + $0x810] sm:$0xff] %vm831, 0.0
      %1092 = vst.msk [vmem:[#allocation2 + $0x818] sm:$0x3] %vm835, 0.0
      %1093 = vst.msk [vmem:[#allocation2 + $0x820] sm:$0xff] %vm831, 0.0
      %1094 = vst.msk [vmem:[#allocation2 + $0x828] sm:$0xff] %vm831, 0.0
      %1095 = vst.msk [vmem:[#allocation2 + $0x830] sm:$0xff] %vm831, 0.0
      %1096 = vst.msk [vmem:[#allocation2 + $0x838] sm:$0x3] %vm835, 0.0
      %1097 = vst.msk [vmem:[#allocation2 + $0x840] sm:$0xff] %vm831, 0.0
      %1098 = vst.msk [vmem:[#allocation2 + $0x848] sm:$0xff] %vm831, 0.0
      %1099 = vst.msk [vmem:[#allocation2 + $0x850] sm:$0xff] %vm831, 0.0
      %1100 = vst.msk [vmem:[#allocation2 + $0x858] sm:$0x3] %vm835, 0.0
      %1101 = vst.msk [vmem:[#allocation2 + $0x860] sm:$0xff] %vm831, 0.0
      %1102 = vst.msk [vmem:[#allocation2 + $0x868] sm:$0xff] %vm831, 0.0
      %1103 = vst.msk [vmem:[#allocation2 + $0x870] sm:$0xff] %vm831, 0.0
      %1104 = vst.msk [vmem:[#allocation2 + $0x878] sm:$0x3] %vm835, 0.0
      %1105 = vst.msk [vmem:[#allocation2 + $0x880] sm:$0xff] %vm831, 0.0
      %1106 = vst.msk [vmem:[#allocation2 + $0x888] sm:$0xff] %vm831, 0.0
      %1107 = vst.msk [vmem:[#allocation2 + $0x890] sm:$0xff] %vm831, 0.0
      %1108 = vst.msk [vmem:[#allocation2 + $0x898] sm:$0x3] %vm835, 0.0
      %1109 = vst.msk [vmem:[#allocation2 + $0x8a0] sm:$0xff] %vm831, 0.0
      %1110 = vst.msk [vmem:[#allocation2 + $0x8a8] sm:$0xff] %vm831, 0.0
      %1111 = vst.msk [vmem:[#allocation2 + $0x8b0] sm:$0xff] %vm831, 0.0
      %1112 = vst.msk [vmem:[#allocation2 + $0x8b8] sm:$0x3] %vm835, 0.0
      %1113 = vst.msk [vmem:[#allocation2 + $0x8c0] sm:$0xff] %vm831, 0.0
      %1114 = vst.msk [vmem:[#allocation2 + $0x8c8] sm:$0xff] %vm831, 0.0
      %1115 = vst.msk [vmem:[#allocation2 + $0x8d0] sm:$0xff] %vm831, 0.0
      %1116 = vst.msk [vmem:[#allocation2 + $0x8d8] sm:$0x3] %vm835, 0.0
      %1117 = vst.msk [vmem:[#allocation2 + $0x8e0] sm:$0xff] %vm831, 0.0
      %1118 = vst.msk [vmem:[#allocation2 + $0x8e8] sm:$0xff] %vm831, 0.0
      %1119 = vst.msk [vmem:[#allocation2 + $0x8f0] sm:$0xff] %vm831, 0.0
      %1120 = vst.msk [vmem:[#allocation2 + $0x8f8] sm:$0x3] %vm835, 0.0
      %1121 = vst.msk [vmem:[#allocation2 + $0x900] sm:$0xff] %vm831, 0.0
      %1122 = vst.msk [vmem:[#allocation2 + $0x908] sm:$0xff] %vm831, 0.0
      %1123 = vst.msk [vmem:[#allocation2 + $0x910] sm:$0xff] %vm831, 0.0
      %1124 = vst.msk [vmem:[#allocation2 + $0x918] sm:$0x3] %vm835, 0.0
      %1125 = vst.msk [vmem:[#allocation2 + $0x920] sm:$0xff] %vm831, 0.0
      %1126 = vst.msk [vmem:[#allocation2 + $0x928] sm:$0xff] %vm831, 0.0
      %1127 = vst.msk [vmem:[#allocation2 + $0x930] sm:$0xff] %vm831, 0.0
      %1128 = vst.msk [vmem:[#allocation2 + $0x938] sm:$0x3] %vm835, 0.0
      %1129 = vst.msk [vmem:[#allocation2 + $0x940] sm:$0xff] %vm831, 0.0
      %1130 = vst.msk [vmem:[#allocation2 + $0x948] sm:$0xff] %vm831, 0.0
      %1131 = vst.msk [vmem:[#allocation2 + $0x950] sm:$0xff] %vm831, 0.0
      %1132 = vst.msk [vmem:[#allocation2 + $0x958] sm:$0x3] %vm835, 0.0
      %1133 = vst.msk [vmem:[#allocation2 + $0x960] sm:$0xff] %vm831, 0.0
      %1134 = vst.msk [vmem:[#allocation2 + $0x968] sm:$0xff] %vm831, 0.0
      %1135 = vst.msk [vmem:[#allocation2 + $0x970] sm:$0xff] %vm831, 0.0
      %1136 = vst.msk [vmem:[#allocation2 + $0x978] sm:$0x3] %vm835, 0.0
      %1137 = vst.msk [vmem:[#allocation2 + $0x980] sm:$0xff] %vm831, 0.0
      %1138 = vst.msk [vmem:[#allocation2 + $0x988] sm:$0xff] %vm831, 0.0
      %1139 = vst.msk [vmem:[#allocation2 + $0x990] sm:$0xff] %vm831, 0.0
      %1140 = vst.msk [vmem:[#allocation2 + $0x998] sm:$0x3] %vm835, 0.0
      %1141 = vst.msk [vmem:[#allocation2 + $0x9a0] sm:$0xff] %vm831, 0.0
      %1142 = vst.msk [vmem:[#allocation2 + $0x9a8] sm:$0xff] %vm831, 0.0
      %1143 = vst.msk [vmem:[#allocation2 + $0x9b0] sm:$0xff] %vm831, 0.0
      %1144 = vst.msk [vmem:[#allocation2 + $0x9b8] sm:$0x3] %vm835, 0.0
      %1145 = vst.msk [vmem:[#allocation2 + $0x9c0] sm:$0xff] %vm831, 0.0
      %1146 = vst.msk [vmem:[#allocation2 + $0x9c8] sm:$0xff] %vm831, 0.0
      %1147 = vst.msk [vmem:[#allocation2 + $0x9d0] sm:$0xff] %vm831, 0.0
      %1148 = vst.msk [vmem:[#allocation2 + $0x9d8] sm:$0x3] %vm835, 0.0
      %1149 = vst.msk [vmem:[#allocation2 + $0x9e0] sm:$0xff] %vm831, 0.0
      %1150 = vst.msk [vmem:[#allocation2 + $0x9e8] sm:$0xff] %vm831, 0.0
      %1151 = vst.msk [vmem:[#allocation2 + $0x9f0] sm:$0xff] %vm831, 0.0
      %1152 = vst.msk [vmem:[#allocation2 + $0x9f8] sm:$0x3] %vm835, 0.0
      %1153 = vst.msk [vmem:[#allocation2 + $0xa00] sm:$0xff] %vm831, 0.0
      %1154 = vst.msk [vmem:[#allocation2 + $0xa08] sm:$0xff] %vm831, 0.0
      %1155 = vst.msk [vmem:[#allocation2 + $0xa10] sm:$0xff] %vm831, 0.0
      %1156 = vst.msk [vmem:[#allocation2 + $0xa18] sm:$0x3] %vm835, 0.0
      %1157 = vst.msk [vmem:[#allocation2 + $0xa20] sm:$0xff] %vm831, 0.0
      %1158 = vst.msk [vmem:[#allocation2 + $0xa28] sm:$0xff] %vm831, 0.0
      %1159 = vst.msk [vmem:[#allocation2 + $0xa30] sm:$0xff] %vm831, 0.0
      %1160 = vst.msk [vmem:[#allocation2 + $0xa38] sm:$0x3] %vm835, 0.0
      %1161 = vst.msk [vmem:[#allocation2 + $0xa40] sm:$0xff] %vm831, 0.0
      %1162 = vst.msk [vmem:[#allocation2 + $0xa48] sm:$0xff] %vm831, 0.0
      %1163 = vst.msk [vmem:[#allocation2 + $0xa50] sm:$0xff] %vm831, 0.0
      %1164 = vst.msk [vmem:[#allocation2 + $0xa58] sm:$0x3] %vm835, 0.0
      %1165 = vst.msk [vmem:[#allocation2 + $0xa60] sm:$0xff] %vm831, 0.0
      %1166 = vst.msk [vmem:[#allocation2 + $0xa68] sm:$0xff] %vm831, 0.0
      %1167 = vst.msk [vmem:[#allocation2 + $0xa70] sm:$0xff] %vm831, 0.0
      %1168 = vst.msk [vmem:[#allocation2 + $0xa78] sm:$0x3] %vm835, 0.0
      %1169 = vst.msk [vmem:[#allocation2 + $0xa80] sm:$0xff] %vm831, 0.0
      %1170 = vst.msk [vmem:[#allocation2 + $0xa88] sm:$0xff] %vm831, 0.0
      %1171 = vst.msk [vmem:[#allocation2 + $0xa90] sm:$0xff] %vm831, 0.0
      %1172 = vst.msk [vmem:[#allocation2 + $0xa98] sm:$0x3] %vm835, 0.0
      %1173 = vst.msk [vmem:[#allocation2 + $0xaa0] sm:$0xff] %vm831, 0.0
      %1174 = vst.msk [vmem:[#allocation2 + $0xaa8] sm:$0xff] %vm831, 0.0
      %1175 = vst.msk [vmem:[#allocation2 + $0xab0] sm:$0xff] %vm831, 0.0
      %1176 = vst.msk [vmem:[#allocation2 + $0xab8] sm:$0x3] %vm835, 0.0
      %1177 = vst.msk [vmem:[#allocation2 + $0xac0] sm:$0xff] %vm831, 0.0
      %1178 = vst.msk [vmem:[#allocation2 + $0xac8] sm:$0xff] %vm831, 0.0
      %1179 = vst.msk [vmem:[#allocation2 + $0xad0] sm:$0xff] %vm831, 0.0
      %1180 = vst.msk [vmem:[#allocation2 + $0xad8] sm:$0x3] %vm835, 0.0
      %1181 = vst.msk [vmem:[#allocation2 + $0xae0] sm:$0xff] %vm831, 0.0
      %1182 = vst.msk [vmem:[#allocation2 + $0xae8] sm:$0xff] %vm831, 0.0
      %1183 = vst.msk [vmem:[#allocation2 + $0xaf0] sm:$0xff] %vm831, 0.0
      %1184 = vst.msk [vmem:[#allocation2 + $0xaf8] sm:$0x3] %vm835, 0.0
      %1185 = vst.msk [vmem:[#allocation2 + $0xb00] sm:$0xff] %vm831, 0.0
      %1186 = vst.msk [vmem:[#allocation2 + $0xb08] sm:$0xff] %vm831, 0.0
      %1187 = vst.msk [vmem:[#allocation2 + $0xb10] sm:$0xff] %vm831, 0.0
      %1188 = vst.msk [vmem:[#allocation2 + $0xb18] sm:$0x3] %vm835, 0.0
      %1189 = vst.msk [vmem:[#allocation2 + $0xb20] sm:$0xff] %vm831, 0.0
      %1190 = vst.msk [vmem:[#allocation2 + $0xb28] sm:$0xff] %vm831, 0.0
      %1191 = vst.msk [vmem:[#allocation2 + $0xb30] sm:$0xff] %vm831, 0.0
      %1192 = vst.msk [vmem:[#allocation2 + $0xb38] sm:$0x3] %vm835, 0.0
      %1193 = vst.msk [vmem:[#allocation2 + $0xb40] sm:$0xff] %vm831, 0.0
      %1194 = vst.msk [vmem:[#allocation2 + $0xb48] sm:$0xff] %vm831, 0.0
      %1195 = vst.msk [vmem:[#allocation2 + $0xb50] sm:$0xff] %vm831, 0.0
      %1196 = vst.msk [vmem:[#allocation2 + $0xb58] sm:$0x3] %vm835, 0.0
      %1197 = vst.msk [vmem:[#allocation2 + $0xb60] sm:$0xff] %vm831, 0.0
      %1198 = vst.msk [vmem:[#allocation2 + $0xb68] sm:$0xff] %vm831, 0.0
      %1199 = vst.msk [vmem:[#allocation2 + $0xb70] sm:$0xff] %vm831, 0.0
      %1200 = vst.msk [vmem:[#allocation2 + $0xb78] sm:$0x3] %vm835, 0.0
      %1201 = vst.msk [vmem:[#allocation2 + $0xb80] sm:$0xff] %vm831, 0.0
      %1202 = vst.msk [vmem:[#allocation2 + $0xb88] sm:$0xff] %vm831, 0.0
      %1203 = vst.msk [vmem:[#allocation2 + $0xb90] sm:$0xff] %vm831, 0.0
      %1204 = vst.msk [vmem:[#allocation2 + $0xb98] sm:$0x3] %vm835, 0.0
      %1205 = vst.msk [vmem:[#allocation2 + $0xba0] sm:$0xff] %vm831, 0.0
      %1206 = vst.msk [vmem:[#allocation2 + $0xba8] sm:$0xff] %vm831, 0.0
      %1207 = vst.msk [vmem:[#allocation2 + $0xbb0] sm:$0xff] %vm831, 0.0
      %1208 = vst.msk [vmem:[#allocation2 + $0xbb8] sm:$0x3] %vm835, 0.0
      %1209 = vst.msk [vmem:[#allocation2 + $0xbc0] sm:$0xff] %vm831, 0.0
      %1210 = vst.msk [vmem:[#allocation2 + $0xbc8] sm:$0xff] %vm831, 0.0
      %1211 = vst.msk [vmem:[#allocation2 + $0xbd0] sm:$0xff] %vm831, 0.0
      %1212 = vst.msk [vmem:[#allocation2 + $0xbd8] sm:$0x3] %vm835, 0.0
      %1213 = vst.msk [vmem:[#allocation2 + $0xbe0] sm:$0xff] %vm831, 0.0
      %1214 = vst.msk [vmem:[#allocation2 + $0xbe8] sm:$0xff] %vm831, 0.0
      %1215 = vst.msk [vmem:[#allocation2 + $0xbf0] sm:$0xff] %vm831, 0.0
      %1216 = vst.msk [vmem:[#allocation2 + $0xbf8] sm:$0x3] %vm835, 0.0
      %1217 = vst.msk [vmem:[#allocation2 + $0xc00] sm:$0xff] %vm831, 0.0
      %1218 = vst.msk [vmem:[#allocation2 + $0xc08] sm:$0xff] %vm831, 0.0
      %1219 = vst.msk [vmem:[#allocation2 + $0xc10] sm:$0xff] %vm831, 0.0
      %1220 = vst.msk [vmem:[#allocation2 + $0xc18] sm:$0x3] %vm835, 0.0
      %1221 = vst.msk [vmem:[#allocation2 + $0xc20] sm:$0xff] %vm831, 0.0
      %1222 = vst.msk [vmem:[#allocation2 + $0xc28] sm:$0xff] %vm831, 0.0
      %1223 = vst.msk [vmem:[#allocation2 + $0xc30] sm:$0xff] %vm831, 0.0
      %1224 = vst.msk [vmem:[#allocation2 + $0xc38] sm:$0x3] %vm835, 0.0
      %1225 = vst.msk [vmem:[#allocation2 + $0xc40] sm:$0xff] %vm831, 0.0
      %1226 = vst.msk [vmem:[#allocation2 + $0xc48] sm:$0xff] %vm831, 0.0
      %1227 = vst.msk [vmem:[#allocation2 + $0xc50] sm:$0xff] %vm831, 0.0
      %1228 = vst.msk [vmem:[#allocation2 + $0xc58] sm:$0x3] %vm835, 0.0
      %1229 = vst.msk [vmem:[#allocation2 + $0xc60] sm:$0xff] %vm831, 0.0
      %1230 = vst.msk [vmem:[#allocation2 + $0xc68] sm:$0xff] %vm831, 0.0
      %1231 = vst.msk [vmem:[#allocation2 + $0xc70] sm:$0xff] %vm831, 0.0
      %1232 = vst.msk [vmem:[#allocation2 + $0xc78] sm:$0x3] %vm835, 0.0
      %1233 = vst.msk [vmem:[#allocation2 + $0xc80] sm:$0xff] %vm831, 0.0
      %1234 = vst.msk [vmem:[#allocation2 + $0xc88] sm:$0xff] %vm831, 0.0
      %1235 = vst.msk [vmem:[#allocation2 + $0xc90] sm:$0xff] %vm831, 0.0
      %1236 = vst.msk [vmem:[#allocation2 + $0xc98] sm:$0x3] %vm835, 0.0
      %1237 = vst.msk [vmem:[#allocation2 + $0xca0] sm:$0xff] %vm831, 0.0
      %1238 = vst.msk [vmem:[#allocation2 + $0xca8] sm:$0xff] %vm831, 0.0
      %1239 = vst.msk [vmem:[#allocation2 + $0xcb0] sm:$0xff] %vm831, 0.0
      %1240 = vst.msk [vmem:[#allocation2 + $0xcb8] sm:$0x3] %vm835, 0.0
      %1241 = vst.msk [vmem:[#allocation2 + $0xcc0] sm:$0xff] %vm831, 0.0
      %1242 = vst.msk [vmem:[#allocation2 + $0xcc8] sm:$0xff] %vm831, 0.0
      %1243 = vst.msk [vmem:[#allocation2 + $0xcd0] sm:$0xff] %vm831, 0.0
      %1244 = vst.msk [vmem:[#allocation2 + $0xcd8] sm:$0x3] %vm835, 0.0
      %1245 = vst.msk [vmem:[#allocation2 + $0xce0] sm:$0xff] %vm831, 0.0
      %1246 = vst.msk [vmem:[#allocation2 + $0xce8] sm:$0xff] %vm831, 0.0
      %1247 = vst.msk [vmem:[#allocation2 + $0xcf0] sm:$0xff] %vm831, 0.0
      %1248 = vst.msk [vmem:[#allocation2 + $0xcf8] sm:$0x3] %vm835, 0.0
      %1249 = vst.msk [vmem:[#allocation2 + $0xd00] sm:$0xff] %vm831, 0.0
      %1250 = vst.msk [vmem:[#allocation2 + $0xd08] sm:$0xff] %vm831, 0.0
      %1251 = vst.msk [vmem:[#allocation2 + $0xd10] sm:$0xff] %vm831, 0.0
      %1252 = vst.msk [vmem:[#allocation2 + $0xd18] sm:$0x3] %vm835, 0.0
      %1253 = vst.msk [vmem:[#allocation2 + $0xd20] sm:$0xff] %vm831, 0.0
      %1254 = vst.msk [vmem:[#allocation2 + $0xd28] sm:$0xff] %vm831, 0.0
      %1255 = vst.msk [vmem:[#allocation2 + $0xd30] sm:$0xff] %vm831, 0.0
      %1256 = vst.msk [vmem:[#allocation2 + $0xd38] sm:$0x3] %vm835, 0.0
      %1257 = vst.msk [vmem:[#allocation2 + $0xd40] sm:$0xff] %vm831, 0.0
      %1258 = vst.msk [vmem:[#allocation2 + $0xd48] sm:$0xff] %vm831, 0.0
      %1259 = vst.msk [vmem:[#allocation2 + $0xd50] sm:$0xff] %vm831, 0.0
      %1260 = vst.msk [vmem:[#allocation2 + $0xd58] sm:$0x3] %vm835, 0.0
      %1261 = vst.msk [vmem:[#allocation2 + $0xd60] sm:$0xff] %vm831, 0.0
      %1262 = vst.msk [vmem:[#allocation2 + $0xd68] sm:$0xff] %vm831, 0.0
      %1263 = vst.msk [vmem:[#allocation2 + $0xd70] sm:$0xff] %vm831, 0.0
      %1264 = vst.msk [vmem:[#allocation2 + $0xd78] sm:$0x3] %vm835, 0.0
      %1265 = vst.msk [vmem:[#allocation2 + $0xd80] sm:$0xff] %vm831, 0.0
      %1266 = vst.msk [vmem:[#allocation2 + $0xd88] sm:$0xff] %vm831, 0.0
      %1267 = vst.msk [vmem:[#allocation2 + $0xd90] sm:$0xff] %vm831, 0.0
      %1268 = vst.msk [vmem:[#allocation2 + $0xd98] sm:$0x3] %vm835, 0.0
      %1269 = vst.msk [vmem:[#allocation2 + $0xda0] sm:$0xff] %vm831, 0.0
      %1270 = vst.msk [vmem:[#allocation2 + $0xda8] sm:$0xff] %vm831, 0.0
      %1271 = vst.msk [vmem:[#allocation2 + $0xdb0] sm:$0xff] %vm831, 0.0
      %1272 = vst.msk [vmem:[#allocation2 + $0xdb8] sm:$0x3] %vm835, 0.0
      %1273 = vst.msk [vmem:[#allocation2 + $0xdc0] sm:$0xff] %vm831, 0.0
      %1274 = vst.msk [vmem:[#allocation2 + $0xdc8] sm:$0xff] %vm831, 0.0
      %1275 = vst.msk [vmem:[#allocation2 + $0xdd0] sm:$0xff] %vm831, 0.0
      %1276 = vst.msk [vmem:[#allocation2 + $0xdd8] sm:$0x3] %vm835, 0.0
      %1277 = vst.msk [vmem:[#allocation2 + $0xde0] sm:$0xff] %vm831, 0.0
      %1278 = vst.msk [vmem:[#allocation2 + $0xde8] sm:$0xff] %vm831, 0.0
      %1279 = vst.msk [vmem:[#allocation2 + $0xdf0] sm:$0xff] %vm831, 0.0
      %1280 = vst.msk [vmem:[#allocation2 + $0xdf8] sm:$0x3] %vm835, 0.0
      %1281 = vst.msk [vmem:[#allocation2 + $0xe00] sm:$0xff] %vm831, 0.0
      %1282 = vst.msk [vmem:[#allocation2 + $0xe08] sm:$0xff] %vm831, 0.0
      %1283 = vst.msk [vmem:[#allocation2 + $0xe10] sm:$0xff] %vm831, 0.0
      %1284 = vst.msk [vmem:[#allocation2 + $0xe18] sm:$0x3] %vm835, 0.0
      %1285 = vst.msk [vmem:[#allocation2 + $0xe20] sm:$0xff] %vm831, 0.0
      %1286 = vst.msk [vmem:[#allocation2 + $0xe28] sm:$0xff] %vm831, 0.0
      %1287 = vst.msk [vmem:[#allocation2 + $0xe30] sm:$0xff] %vm831, 0.0
      %1288 = vst.msk [vmem:[#allocation2 + $0xe38] sm:$0x3] %vm835, 0.0
      %1289 = vst.msk [vmem:[#allocation2 + $0xe40] sm:$0xff] %vm831, 0.0
      %1290 = vst.msk [vmem:[#allocation2 + $0xe48] sm:$0xff] %vm831, 0.0
      %1291 = vst.msk [vmem:[#allocation2 + $0xe50] sm:$0xff] %vm831, 0.0
      %1292 = vst.msk [vmem:[#allocation2 + $0xe58] sm:$0x3] %vm835, 0.0
      %1293 = vst.msk [vmem:[#allocation2 + $0xe60] sm:$0xff] %vm831, 0.0
      %1294 = vst.msk [vmem:[#allocation2 + $0xe68] sm:$0xff] %vm831, 0.0
      %1295 = vst.msk [vmem:[#allocation2 + $0xe70] sm:$0xff] %vm831, 0.0
      %1296 = vst.msk [vmem:[#allocation2 + $0xe78] sm:$0x3] %vm835, 0.0
      %1297 = vst.msk [vmem:[#allocation2 + $0xe80] sm:$0xff] %vm831, 0.0
      %1298 = vst.msk [vmem:[#allocation2 + $0xe88] sm:$0xff] %vm831, 0.0
      %1299 = vst.msk [vmem:[#allocation2 + $0xe90] sm:$0xff] %vm831, 0.0
      %1300 = vst.msk [vmem:[#allocation2 + $0xe98] sm:$0x3] %vm835, 0.0
      %1301 = vst.msk [vmem:[#allocation2 + $0xea0] sm:$0xff] %vm831, 0.0
      %1302 = vst.msk [vmem:[#allocation2 + $0xea8] sm:$0xff] %vm831, 0.0
      %1303 = vst.msk [vmem:[#allocation2 + $0xeb0] sm:$0xff] %vm831, 0.0
      %1304 = vst.msk [vmem:[#allocation2 + $0xeb8] sm:$0x3] %vm835, 0.0
      %1305 = vst.msk [vmem:[#allocation2 + $0xec0] sm:$0xff] %vm831, 0.0
      %1306 = vst.msk [vmem:[#allocation2 + $0xec8] sm:$0xff] %vm831, 0.0
      %1307 = vst.msk [vmem:[#allocation2 + $0xed0] sm:$0xff] %vm831, 0.0
      %1308 = vst.msk [vmem:[#allocation2 + $0xed8] sm:$0x3] %vm835, 0.0
      %1309 = vst.msk [vmem:[#allocation2 + $0xee0] sm:$0xff] %vm831, 0.0
      %1310 = vst.msk [vmem:[#allocation2 + $0xee8] sm:$0xff] %vm831, 0.0
      %1311 = vst.msk [vmem:[#allocation2 + $0xef0] sm:$0xff] %vm831, 0.0
      %1312 = vst.msk [vmem:[#allocation2 + $0xef8] sm:$0x3] %vm835, 0.0
      %1313 = vst.msk [vmem:[#allocation2 + $0xf00] sm:$0xff] %vm831, 0.0
      %1314 = vst.msk [vmem:[#allocation2 + $0xf08] sm:$0xff] %vm831, 0.0
      %1315 = vst.msk [vmem:[#allocation2 + $0xf10] sm:$0xff] %vm831, 0.0
      %1316 = vst.msk [vmem:[#allocation2 + $0xf18] sm:$0x3] %vm835, 0.0
      %1317 = vst.msk [vmem:[#allocation2 + $0xf20] sm:$0xff] %vm831, 0.0
      %1318 = vst.msk [vmem:[#allocation2 + $0xf28] sm:$0xff] %vm831, 0.0
      %1319 = vst.msk [vmem:[#allocation2 + $0xf30] sm:$0xff] %vm831, 0.0
      %1320 = vst.msk [vmem:[#allocation2 + $0xf38] sm:$0x3] %vm835, 0.0
      %1321 = vst.msk [vmem:[#allocation2 + $0xf40] sm:$0xff] %vm831, 0.0
      %1322 = vst.msk [vmem:[#allocation2 + $0xf48] sm:$0xff] %vm831, 0.0
      %1323 = vst.msk [vmem:[#allocation2 + $0xf50] sm:$0xff] %vm831, 0.0
      %1324 = vst.msk [vmem:[#allocation2 + $0xf58] sm:$0x3] %vm835, 0.0
      %1325 = vst.msk [vmem:[#allocation2 + $0xf60] sm:$0xff] %vm831, 0.0
      %1326 = vst.msk [vmem:[#allocation2 + $0xf68] sm:$0xff] %vm831, 0.0
      %1327 = vst.msk [vmem:[#allocation2 + $0xf70] sm:$0xff] %vm831, 0.0
      %1328 = vst.msk [vmem:[#allocation2 + $0xf78] sm:$0x3] %vm835, 0.0
      %1329 = vst.msk [vmem:[#allocation2 + $0xf80] sm:$0xff] %vm831, 0.0
      %1330 = vst.msk [vmem:[#allocation2 + $0xf88] sm:$0xff] %vm831, 0.0
      %1331 = vst.msk [vmem:[#allocation2 + $0xf90] sm:$0xff] %vm831, 0.0
      %1332 = vst.msk [vmem:[#allocation2 + $0xf98] sm:$0x3] %vm835, 0.0
      %1333 = vst.msk [vmem:[#allocation2 + $0xfa0] sm:$0xff] %vm831, 0.0
      %1334 = vst.msk [vmem:[#allocation2 + $0xfa8] sm:$0xff] %vm831, 0.0
      %1335 = vst.msk [vmem:[#allocation2 + $0xfb0] sm:$0xff] %vm831, 0.0
      %1336 = vst.msk [vmem:[#allocation2 + $0xfb8] sm:$0x3] %vm835, 0.0
      %1337 = vst.msk [vmem:[#allocation2 + $0xfc0] sm:$0xff] %vm831, 0.0
      %1338 = vst.msk [vmem:[#allocation2 + $0xfc8] sm:$0xff] %vm831, 0.0
      %1339 = vst.msk [vmem:[#allocation2 + $0xfd0] sm:$0xff] %vm831, 0.0
      %1340 = vst.msk [vmem:[#allocation2 + $0xfd8] sm:$0x3] %vm835, 0.0
      %1341 = vst.msk [vmem:[#allocation2 + $0xfe0] sm:$0xff] %vm831, 0.0
      %1342 = vst.msk [vmem:[#allocation2 + $0xfe8] sm:$0xff] %vm831, 0.0
      %1343 = vst.msk [vmem:[#allocation2 + $0xff0] sm:$0xff] %vm831, 0.0
      %1344 = vst.msk [vmem:[#allocation2 + $0xff8] sm:$0x3] %vm835, 0.0
      %1345 = vst.msk [vmem:[#allocation2 + $0x1000] sm:$0xff] %vm831, 0.0
      %1346 = vst.msk [vmem:[#allocation2 + $0x1008] sm:$0xff] %vm831, 0.0
      %1347 = vst.msk [vmem:[#allocation2 + $0x1010] sm:$0xff] %vm831, 0.0
      %1348 = vst.msk [vmem:[#allocation2 + $0x1018] sm:$0x3] %vm835, 0.0
      %1349 = vst.msk [vmem:[#allocation2 + $0x1020] sm:$0xff] %vm831, 0.0
      %1350 = vst.msk [vmem:[#allocation2 + $0x1028] sm:$0xff] %vm831, 0.0
      %1351 = vst.msk [vmem:[#allocation2 + $0x1030] sm:$0xff] %vm831, 0.0
      %1352 = vst.msk [vmem:[#allocation2 + $0x1038] sm:$0x3] %vm835, 0.0
      %1353 = vst.msk [vmem:[#allocation2 + $0x1040] sm:$0xff] %vm831, 0.0
      %1354 = vst.msk [vmem:[#allocation2 + $0x1048] sm:$0xff] %vm831, 0.0
      %1355 = vst.msk [vmem:[#allocation2 + $0x1050] sm:$0xff] %vm831, 0.0
      %1356 = vst.msk [vmem:[#allocation2 + $0x1058] sm:$0x3] %vm835, 0.0
      %1357 = vst.msk [vmem:[#allocation2 + $0x1060] sm:$0xff] %vm831, 0.0
      %1358 = vst.msk [vmem:[#allocation2 + $0x1068] sm:$0xff] %vm831, 0.0
      %1359 = vst.msk [vmem:[#allocation2 + $0x1070] sm:$0xff] %vm831, 0.0
      %1360 = vst.msk [vmem:[#allocation2 + $0x1078] sm:$0x3] %vm835, 0.0
      %1361 = vst.msk [vmem:[#allocation2 + $0x1080] sm:$0xff] %vm831, 0.0
      %1362 = vst.msk [vmem:[#allocation2 + $0x1088] sm:$0xff] %vm831, 0.0
      %1363 = vst.msk [vmem:[#allocation2 + $0x1090] sm:$0xff] %vm831, 0.0
      %1364 = vst.msk [vmem:[#allocation2 + $0x1098] sm:$0x3] %vm835, 0.0
      %1365 = vst.msk [vmem:[#allocation2 + $0x10a0] sm:$0xff] %vm831, 0.0
      %1366 = vst.msk [vmem:[#allocation2 + $0x10a8] sm:$0xff] %vm831, 0.0
      %1367 = vst.msk [vmem:[#allocation2 + $0x10b0] sm:$0xff] %vm831, 0.0
      %1368 = vst.msk [vmem:[#allocation2 + $0x10b8] sm:$0x3] %vm835, 0.0
      %1369 = vst.msk [vmem:[#allocation2 + $0x10c0] sm:$0xff] %vm831, 0.0
      %1370 = vst.msk [vmem:[#allocation2 + $0x10c8] sm:$0xff] %vm831, 0.0
      %1371 = vst.msk [vmem:[#allocation2 + $0x10d0] sm:$0xff] %vm831, 0.0
      %1372 = vst.msk [vmem:[#allocation2 + $0x10d8] sm:$0x3] %vm835, 0.0
      %1373 = vst.msk [vmem:[#allocation2 + $0x10e0] sm:$0xff] %vm831, 0.0
      %1374 = vst.msk [vmem:[#allocation2 + $0x10e8] sm:$0xff] %vm831, 0.0
      %1375 = vst.msk [vmem:[#allocation2 + $0x10f0] sm:$0xff] %vm831, 0.0
      %1376 = vst.msk [vmem:[#allocation2 + $0x10f8] sm:$0x3] %vm835, 0.0
      %1377 = vst.msk [vmem:[#allocation2 + $0x1100] sm:$0xff] %vm831, 0.0
      %1378 = vst.msk [vmem:[#allocation2 + $0x1108] sm:$0xff] %vm831, 0.0
      %1379 = vst.msk [vmem:[#allocation2 + $0x1110] sm:$0xff] %vm831, 0.0
      %1380 = vst.msk [vmem:[#allocation2 + $0x1118] sm:$0x3] %vm835, 0.0
      %1381 = vst.msk [vmem:[#allocation2 + $0x1120] sm:$0xff] %vm831, 0.0
      %1382 = vst.msk [vmem:[#allocation2 + $0x1128] sm:$0xff] %vm831, 0.0
      %1383 = vst.msk [vmem:[#allocation2 + $0x1130] sm:$0xff] %vm831, 0.0
      %1384 = vst.msk [vmem:[#allocation2 + $0x1138] sm:$0x3] %vm835, 0.0
      %1385 = vst.msk [vmem:[#allocation2 + $0x1140] sm:$0xff] %vm831, 0.0
      %1386 = vst.msk [vmem:[#allocation2 + $0x1148] sm:$0xff] %vm831, 0.0
      %1387 = vst.msk [vmem:[#allocation2 + $0x1150] sm:$0xff] %vm831, 0.0
      %1388 = vst.msk [vmem:[#allocation2 + $0x1158] sm:$0x3] %vm835, 0.0
      %1389 = vst.msk [vmem:[#allocation2 + $0x1160] sm:$0xff] %vm831, 0.0
      %1390 = vst.msk [vmem:[#allocation2 + $0x1168] sm:$0xff] %vm831, 0.0
      %1391 = vst.msk [vmem:[#allocation2 + $0x1170] sm:$0xff] %vm831, 0.0
      %1392 = vst.msk [vmem:[#allocation2 + $0x1178] sm:$0x3] %vm835, 0.0
      %1393 = vst.msk [vmem:[#allocation2 + $0x1180] sm:$0xff] %vm831, 0.0
      %1394 = vst.msk [vmem:[#allocation2 + $0x1188] sm:$0xff] %vm831, 0.0
      %1395 = vst.msk [vmem:[#allocation2 + $0x1190] sm:$0xff] %vm831, 0.0
      %1396 = vst.msk [vmem:[#allocation2 + $0x1198] sm:$0x3] %vm835, 0.0
      %1397 = vst.msk [vmem:[#allocation2 + $0x11a0] sm:$0xff] %vm831, 0.0
      %1398 = vst.msk [vmem:[#allocation2 + $0x11a8] sm:$0xff] %vm831, 0.0
      %1399 = vst.msk [vmem:[#allocation2 + $0x11b0] sm:$0xff] %vm831, 0.0
      %1400 = vst.msk [vmem:[#allocation2 + $0x11b8] sm:$0x3] %vm835, 0.0
      %1401 = vst.msk [vmem:[#allocation2 + $0x11c0] sm:$0xff] %vm831, 0.0
      %1402 = vst.msk [vmem:[#allocation2 + $0x11c8] sm:$0xff] %vm831, 0.0
      %1403 = vst.msk [vmem:[#allocation2 + $0x11d0] sm:$0xff] %vm831, 0.0
      %1404 = vst.msk [vmem:[#allocation2 + $0x11d8] sm:$0x3] %vm835, 0.0
      %1405 = vst.msk [vmem:[#allocation2 + $0x11e0] sm:$0xff] %vm831, 0.0
      %1406 = vst.msk [vmem:[#allocation2 + $0x11e8] sm:$0xff] %vm831, 0.0
      %1407 = vst.msk [vmem:[#allocation2 + $0x11f0] sm:$0xff] %vm831, 0.0
      %1408 = vst.msk [vmem:[#allocation2 + $0x11f8] sm:$0x3] %vm835, 0.0
      %1409 = vst.msk [vmem:[#allocation2 + $0x1200] sm:$0xff] %vm831, 0.0
      %1410 = vst.msk [vmem:[#allocation2 + $0x1208] sm:$0xff] %vm831, 0.0
      %1411 = vst.msk [vmem:[#allocation2 + $0x1210] sm:$0xff] %vm831, 0.0
      %1412 = vst.msk [vmem:[#allocation2 + $0x1218] sm:$0x3] %vm835, 0.0
      %1413 = vst.msk [vmem:[#allocation2 + $0x1220] sm:$0xff] %vm831, 0.0
      %1414 = vst.msk [vmem:[#allocation2 + $0x1228] sm:$0xff] %vm831, 0.0
      %1415 = vst.msk [vmem:[#allocation2 + $0x1230] sm:$0xff] %vm831, 0.0
      %1416 = vst.msk [vmem:[#allocation2 + $0x1238] sm:$0x3] %vm835, 0.0
      %1417 = vst.msk [vmem:[#allocation2 + $0x1240] sm:$0xff] %vm831, 0.0
      %1418 = vst.msk [vmem:[#allocation2 + $0x1248] sm:$0xff] %vm831, 0.0
      %1419 = vst.msk [vmem:[#allocation2 + $0x1250] sm:$0xff] %vm831, 0.0
      %1420 = vst.msk [vmem:[#allocation2 + $0x1258] sm:$0x3] %vm835, 0.0
      %1421 = vst.msk [vmem:[#allocation2 + $0x1260] sm:$0xff] %vm831, 0.0
      %1422 = vst.msk [vmem:[#allocation2 + $0x1268] sm:$0xff] %vm831, 0.0
      %1423 = vst.msk [vmem:[#allocation2 + $0x1270] sm:$0xff] %vm831, 0.0
      %1424 = vst.msk [vmem:[#allocation2 + $0x1278] sm:$0x3] %vm835, 0.0
      %1425 = vst.msk [vmem:[#allocation2 + $0x1280] sm:$0xff] %vm831, 0.0
      %1426 = vst.msk [vmem:[#allocation2 + $0x1288] sm:$0xff] %vm831, 0.0
      %1427 = vst.msk [vmem:[#allocation2 + $0x1290] sm:$0xff] %vm831, 0.0
      %1428 = vst.msk [vmem:[#allocation2 + $0x1298] sm:$0x3] %vm835, 0.0
      %1429 = vst.msk [vmem:[#allocation2 + $0x12a0] sm:$0xff] %vm831, 0.0
      %1430 = vst.msk [vmem:[#allocation2 + $0x12a8] sm:$0xff] %vm831, 0.0
      %1431 = vst.msk [vmem:[#allocation2 + $0x12b0] sm:$0xff] %vm831, 0.0
      %1432 = vst.msk [vmem:[#allocation2 + $0x12b8] sm:$0x3] %vm835, 0.0
      %1433 = vst.msk [vmem:[#allocation2 + $0x12c0] sm:$0xff] %vm831, 0.0
      %1434 = vst.msk [vmem:[#allocation2 + $0x12c8] sm:$0xff] %vm831, 0.0
      %1435 = vst.msk [vmem:[#allocation2 + $0x12d0] sm:$0xff] %vm831, 0.0
      %1436 = vst.msk [vmem:[#allocation2 + $0x12d8] sm:$0x3] %vm835, 0.0
      %1437 = vst.msk [vmem:[#allocation2 + $0x12e0] sm:$0xff] %vm831, 0.0
      %1438 = vst.msk [vmem:[#allocation2 + $0x12e8] sm:$0xff] %vm831, 0.0
      %1439 = vst.msk [vmem:[#allocation2 + $0x12f0] sm:$0xff] %vm831, 0.0
      %1440 = vst.msk [vmem:[#allocation2 + $0x12f8] sm:$0x3] %vm835, 0.0
      %1441 = vst.msk [vmem:[#allocation2 + $0x1300] sm:$0xff] %vm831, 0.0
      %1442 = vst.msk [vmem:[#allocation2 + $0x1308] sm:$0xff] %vm831, 0.0
      %1443 = vst.msk [vmem:[#allocation2 + $0x1310] sm:$0xff] %vm831, 0.0
      %1444 = vst.msk [vmem:[#allocation2 + $0x1318] sm:$0x3] %vm835, 0.0
      %1445 = vst.msk [vmem:[#allocation2 + $0x1320] sm:$0xff] %vm831, 0.0
      %1446 = vst.msk [vmem:[#allocation2 + $0x1328] sm:$0xff] %vm831, 0.0
      %1447 = vst.msk [vmem:[#allocation2 + $0x1330] sm:$0xff] %vm831, 0.0
      %1448 = vst.msk [vmem:[#allocation2 + $0x1338] sm:$0x3] %vm835, 0.0
      %1449 = vst.msk [vmem:[#allocation2 + $0x1340] sm:$0xff] %vm831, 0.0
      %1450 = vst.msk [vmem:[#allocation2 + $0x1348] sm:$0xff] %vm831, 0.0
      %1451 = vst.msk [vmem:[#allocation2 + $0x1350] sm:$0xff] %vm831, 0.0
      %1452 = vst.msk [vmem:[#allocation2 + $0x1358] sm:$0x3] %vm835, 0.0
      %1453 = vst.msk [vmem:[#allocation2 + $0x1360] sm:$0xff] %vm831, 0.0
      %1454 = vst.msk [vmem:[#allocation2 + $0x1368] sm:$0xff] %vm831, 0.0
      %1455 = vst.msk [vmem:[#allocation2 + $0x1370] sm:$0xff] %vm831, 0.0
      %1456 = vst.msk [vmem:[#allocation2 + $0x1378] sm:$0x3] %vm835, 0.0
      %1457 = vst.msk [vmem:[#allocation2 + $0x1380] sm:$0xff] %vm831, 0.0
      %1458 = vst.msk [vmem:[#allocation2 + $0x1388] sm:$0xff] %vm831, 0.0
      %1459 = vst.msk [vmem:[#allocation2 + $0x1390] sm:$0xff] %vm831, 0.0
      %1460 = vst.msk [vmem:[#allocation2 + $0x1398] sm:$0x3] %vm835, 0.0
      %1461 = vst.msk [vmem:[#allocation2 + $0x13a0] sm:$0xff] %vm831, 0.0
      %1462 = vst.msk [vmem:[#allocation2 + $0x13a8] sm:$0xff] %vm831, 0.0
      %1463 = vst.msk [vmem:[#allocation2 + $0x13b0] sm:$0xff] %vm831, 0.0
      %1464 = vst.msk [vmem:[#allocation2 + $0x13b8] sm:$0x3] %vm835, 0.0
      %1465 = vst.msk [vmem:[#allocation2 + $0x13c0] sm:$0xff] %vm831, 0.0
      %1466 = vst.msk [vmem:[#allocation2 + $0x13c8] sm:$0xff] %vm831, 0.0
      %1467 = vst.msk [vmem:[#allocation2 + $0x13d0] sm:$0xff] %vm831, 0.0
      %1468 = vst.msk [vmem:[#allocation2 + $0x13d8] sm:$0x3] %vm835, 0.0
      %1469 = vst.msk [vmem:[#allocation2 + $0x13e0] sm:$0xff] %vm831, 0.0
      %1470 = vst.msk [vmem:[#allocation2 + $0x13e8] sm:$0xff] %vm831, 0.0
      %1471 = vst.msk [vmem:[#allocation2 + $0x13f0] sm:$0xff] %vm831, 0.0
      %1472 = vst.msk [vmem:[#allocation2 + $0x13f8] sm:$0x3] %vm835, 0.0
      %1473 = vst.msk [vmem:[#allocation2 + $0x1400] sm:$0xff] %vm831, 0.0
      %1474 = vst.msk [vmem:[#allocation2 + $0x1408] sm:$0xff] %vm831, 0.0
      %1475 = vst.msk [vmem:[#allocation2 + $0x1410] sm:$0xff] %vm831, 0.0
      %1476 = vst.msk [vmem:[#allocation2 + $0x1418] sm:$0x3] %vm835, 0.0
      %1477 = vst.msk [vmem:[#allocation2 + $0x1420] sm:$0xff] %vm831, 0.0
      %1478 = vst.msk [vmem:[#allocation2 + $0x1428] sm:$0xff] %vm831, 0.0
      %1479 = vst.msk [vmem:[#allocation2 + $0x1430] sm:$0xff] %vm831, 0.0
      %1480 = vst.msk [vmem:[#allocation2 + $0x1438] sm:$0x3] %vm835, 0.0
      %1481 = vst.msk [vmem:[#allocation2 + $0x1440] sm:$0xff] %vm831, 0.0
      %1482 = vst.msk [vmem:[#allocation2 + $0x1448] sm:$0xff] %vm831, 0.0
      %1483 = vst.msk [vmem:[#allocation2 + $0x1450] sm:$0xff] %vm831, 0.0
      %1484 = vst.msk [vmem:[#allocation2 + $0x1458] sm:$0x3] %vm835, 0.0
      %1485 = vst.msk [vmem:[#allocation2 + $0x1460] sm:$0xff] %vm831, 0.0
      %1486 = vst.msk [vmem:[#allocation2 + $0x1468] sm:$0xff] %vm831, 0.0
      %1487 = vst.msk [vmem:[#allocation2 + $0x1470] sm:$0xff] %vm831, 0.0
      %1488 = vst.msk [vmem:[#allocation2 + $0x1478] sm:$0x3] %vm835, 0.0
      %1489 = vst.msk [vmem:[#allocation2 + $0x1480] sm:$0xff] %vm831, 0.0
      %1490 = vst.msk [vmem:[#allocation2 + $0x1488] sm:$0xff] %vm831, 0.0
      %1491 = vst.msk [vmem:[#allocation2 + $0x1490] sm:$0xff] %vm831, 0.0
      %1492 = vst.msk [vmem:[#allocation2 + $0x1498] sm:$0x3] %vm835, 0.0
      %1493 = vst.msk [vmem:[#allocation2 + $0x14a0] sm:$0xff] %vm831, 0.0
      %1494 = vst.msk [vmem:[#allocation2 + $0x14a8] sm:$0xff] %vm831, 0.0
      %1495 = vst.msk [vmem:[#allocation2 + $0x14b0] sm:$0xff] %vm831, 0.0
      %1496 = vst.msk [vmem:[#allocation2 + $0x14b8] sm:$0x3] %vm835, 0.0
      %1497 = vst.msk [vmem:[#allocation2 + $0x14c0] sm:$0xff] %vm831, 0.0
      %1498 = vst.msk [vmem:[#allocation2 + $0x14c8] sm:$0xff] %vm831, 0.0
      %1499 = vst.msk [vmem:[#allocation2 + $0x14d0] sm:$0xff] %vm831, 0.0
      %1500 = vst.msk [vmem:[#allocation2 + $0x14d8] sm:$0x3] %vm835, 0.0
      %1501 = vst.msk [vmem:[#allocation2 + $0x14e0] sm:$0xff] %vm831, 0.0
      %1502 = vst.msk [vmem:[#allocation2 + $0x14e8] sm:$0xff] %vm831, 0.0
      %1503 = vst.msk [vmem:[#allocation2 + $0x14f0] sm:$0xff] %vm831, 0.0
      %1504 = vst.msk [vmem:[#allocation2 + $0x14f8] sm:$0x3] %vm835, 0.0
      %1505 = vst.msk [vmem:[#allocation2 + $0x1500] sm:$0xff] %vm831, 0.0
      %1506 = vst.msk [vmem:[#allocation2 + $0x1508] sm:$0xff] %vm831, 0.0
      %1507 = vst.msk [vmem:[#allocation2 + $0x1510] sm:$0xff] %vm831, 0.0
      %1508 = vst.msk [vmem:[#allocation2 + $0x1518] sm:$0x3] %vm835, 0.0
      %1509 = vst.msk [vmem:[#allocation2 + $0x1520] sm:$0xff] %vm831, 0.0
      %1510 = vst.msk [vmem:[#allocation2 + $0x1528] sm:$0xff] %vm831, 0.0
      %1511 = vst.msk [vmem:[#allocation2 + $0x1530] sm:$0xff] %vm831, 0.0
      %1512 = vst.msk [vmem:[#allocation2 + $0x1538] sm:$0x3] %vm835, 0.0
      %1513 = vst.msk [vmem:[#allocation2 + $0x1540] sm:$0xff] %vm831, 0.0
      %1514 = vst.msk [vmem:[#allocation2 + $0x1548] sm:$0xff] %vm831, 0.0
      %1515 = vst.msk [vmem:[#allocation2 + $0x1550] sm:$0xff] %vm831, 0.0
      %1516 = vst.msk [vmem:[#allocation2 + $0x1558] sm:$0x3] %vm835, 0.0
      %1517 = vst.msk [vmem:[#allocation2 + $0x1560] sm:$0xff] %vm831, 0.0
      %1518 = vst.msk [vmem:[#allocation2 + $0x1568] sm:$0xff] %vm831, 0.0
      %1519 = vst.msk [vmem:[#allocation2 + $0x1570] sm:$0xff] %vm831, 0.0
      %1520 = vst.msk [vmem:[#allocation2 + $0x1578] sm:$0x3] %vm835, 0.0
      %1521 = vst.msk [vmem:[#allocation2 + $0x1580] sm:$0xff] %vm831, 0.0
      %1522 = vst.msk [vmem:[#allocation2 + $0x1588] sm:$0xff] %vm831, 0.0
      %1523 = vst.msk [vmem:[#allocation2 + $0x1590] sm:$0xff] %vm831, 0.0
      %1524 = vst.msk [vmem:[#allocation2 + $0x1598] sm:$0x3] %vm835, 0.0
      %1525 = vst.msk [vmem:[#allocation2 + $0x15a0] sm:$0xff] %vm831, 0.0
      %1526 = vst.msk [vmem:[#allocation2 + $0x15a8] sm:$0xff] %vm831, 0.0
      %1527 = vst.msk [vmem:[#allocation2 + $0x15b0] sm:$0xff] %vm831, 0.0
      %1528 = vst.msk [vmem:[#allocation2 + $0x15b8] sm:$0x3] %vm835, 0.0
      %1529 = vst.msk [vmem:[#allocation2 + $0x15c0] sm:$0xff] %vm831, 0.0
      %1530 = vst.msk [vmem:[#allocation2 + $0x15c8] sm:$0xff] %vm831, 0.0
      %1531 = vst.msk [vmem:[#allocation2 + $0x15d0] sm:$0xff] %vm831, 0.0
      %1532 = vst.msk [vmem:[#allocation2 + $0x15d8] sm:$0x3] %vm835, 0.0
      %1533 = vst.msk [vmem:[#allocation2 + $0x15e0] sm:$0xff] %vm831, 0.0
      %1534 = vst.msk [vmem:[#allocation2 + $0x15e8] sm:$0xff] %vm831, 0.0
      %1535 = vst.msk [vmem:[#allocation2 + $0x15f0] sm:$0xff] %vm831, 0.0
      %1536 = vst.msk [vmem:[#allocation2 + $0x15f8] sm:$0x3] %vm835, 0.0
      %1537 = vst.msk [vmem:[#allocation2 + $0x1600] sm:$0xff] %vm831, 0.0
      %1538 = vst.msk [vmem:[#allocation2 + $0x1608] sm:$0xff] %vm831, 0.0
      %1539 = vst.msk [vmem:[#allocation2 + $0x1610] sm:$0xff] %vm831, 0.0
      %1540 = vst.msk [vmem:[#allocation2 + $0x1618] sm:$0x3] %vm835, 0.0
      %1541 = vst.msk [vmem:[#allocation2 + $0x1620] sm:$0xff] %vm831, 0.0
      %1542 = vst.msk [vmem:[#allocation2 + $0x1628] sm:$0xff] %vm831, 0.0
      %1543 = vst.msk [vmem:[#allocation2 + $0x1630] sm:$0xff] %vm831, 0.0
      %1544 = vst.msk [vmem:[#allocation2 + $0x1638] sm:$0x3] %vm835, 0.0
      %1545 = vst.msk [vmem:[#allocation2 + $0x1640] sm:$0xff] %vm831, 0.0
      %1546 = vst.msk [vmem:[#allocation2 + $0x1648] sm:$0xff] %vm831, 0.0
      %1547 = vst.msk [vmem:[#allocation2 + $0x1650] sm:$0xff] %vm831, 0.0
      %1548 = vst.msk [vmem:[#allocation2 + $0x1658] sm:$0x3] %vm835, 0.0
      %1549 = vst.msk [vmem:[#allocation2 + $0x1660] sm:$0xff] %vm831, 0.0
      %1550 = vst.msk [vmem:[#allocation2 + $0x1668] sm:$0xff] %vm831, 0.0
      %1551 = vst.msk [vmem:[#allocation2 + $0x1670] sm:$0xff] %vm831, 0.0
      %1552 = vst.msk [vmem:[#allocation2 + $0x1678] sm:$0x3] %vm835, 0.0
      %1553 = vst.msk [vmem:[#allocation2 + $0x1680] sm:$0xff] %vm831, 0.0
      %1554 = vst.msk [vmem:[#allocation2 + $0x1688] sm:$0xff] %vm831, 0.0
      %1555 = vst.msk [vmem:[#allocation2 + $0x1690] sm:$0xff] %vm831, 0.0
      %1556 = vst.msk [vmem:[#allocation2 + $0x1698] sm:$0x3] %vm835, 0.0
      %1557 = vst.msk [vmem:[#allocation2 + $0x16a0] sm:$0xff] %vm831, 0.0
      %1558 = vst.msk [vmem:[#allocation2 + $0x16a8] sm:$0xff] %vm831, 0.0
      %1559 = vst.msk [vmem:[#allocation2 + $0x16b0] sm:$0xff] %vm831, 0.0
      %1560 = vst.msk [vmem:[#allocation2 + $0x16b8] sm:$0x3] %vm835, 0.0
      %v1561 = vld [vmem:[%s755] sm:$0xff]
      %v1562 = vld [vmem:[%s755 + $0x8] sm:$0xff]
      %v1563 = vld [vmem:[%s755 + $0x10] sm:$0xff]
      %v1564 = vld [vmem:[%s755 + $0x18] sm:$0xff]
      %v1565 = vld [vmem:[%s755 + $0x20] sm:$0xff]
      %v1566 = vld [vmem:[%s755 + $0x28] sm:$0xff]
      %v1567 = vld [vmem:[%s755 + $0x30] sm:$0xff]
      %v1568 = vld [vmem:[%s755 + $0x38] sm:$0xff]
      %s1569 = scalar_lea.vmem [#allocation2], 288
      %1570 = vst.msk [vmem:[%s1569 + $0x9] sm:$0xff] %vm831, %v1561
      %1571 = vst.msk [vmem:[%s1569 + $0x29] sm:$0xff] %vm831, %v1562
      %1572 = vst.msk [vmem:[%s1569 + $0x49] sm:$0xff] %vm831, %v1563
      %1573 = vst.msk [vmem:[%s1569 + $0x69] sm:$0xff] %vm831, %v1564
      %1574 = vst.msk [vmem:[%s1569 + $0x89] sm:$0xff] %vm831, %v1565
      %1575 = vst.msk [vmem:[%s1569 + $0xa9] sm:$0xff] %vm831, %v1566
      %1576 = vst.msk [vmem:[%s1569 + $0xc9] sm:$0xff] %vm831, %v1567
      %1577 = vst.msk [vmem:[%s1569 + $0xe9] sm:$0xff] %vm831, %v1568
      %v1578 = vld [vmem:[%s765] sm:$0xff]
      %v1579 = vld [vmem:[%s765 + $0x8] sm:$0xff]
      %v1580 = vld [vmem:[%s765 + $0x10] sm:$0xff]
      %v1581 = vld [vmem:[%s765 + $0x18] sm:$0xff]
      %v1582 = vld [vmem:[%s765 + $0x20] sm:$0xff]
      %v1583 = vld [vmem:[%s765 + $0x28] sm:$0xff]
      %v1584 = vld [vmem:[%s765 + $0x30] sm:$0xff]
      %v1585 = vld [vmem:[%s765 + $0x38] sm:$0xff]
      %s1586 = scalar_lea.vmem [#allocation2], 1120
      %1587 = vst.msk [vmem:[%s1586 + $0x9] sm:$0xff] %vm831, %v1578
      %1588 = vst.msk [vmem:[%s1586 + $0x29] sm:$0xff] %vm831, %v1579
      %1589 = vst.msk [vmem:[%s1586 + $0x49] sm:$0xff] %vm831, %v1580
      %1590 = vst.msk [vmem:[%s1586 + $0x69] sm:$0xff] %vm831, %v1581
      %1591 = vst.msk [vmem:[%s1586 + $0x89] sm:$0xff] %vm831, %v1582
      %1592 = vst.msk [vmem:[%s1586 + $0xa9] sm:$0xff] %vm831, %v1583
      %1593 = vst.msk [vmem:[%s1586 + $0xc9] sm:$0xff] %vm831, %v1584
      %1594 = vst.msk [vmem:[%s1586 + $0xe9] sm:$0xff] %vm831, %v1585
      %v1595 = vld [vmem:[%s776] sm:$0xff]
      %v1596 = vld [vmem:[%s776 + $0x8] sm:$0xff]
      %v1597 = vld [vmem:[%s776 + $0x10] sm:$0xff]
      %v1598 = vld [vmem:[%s776 + $0x18] sm:$0xff]
      %v1599 = vld [vmem:[%s776 + $0x20] sm:$0xff]
      %v1600 = vld [vmem:[%s776 + $0x28] sm:$0xff]
      %v1601 = vld [vmem:[%s776 + $0x30] sm:$0xff]
      %v1602 = vld [vmem:[%s776 + $0x38] sm:$0xff]
      %s1603 = scalar_lea.vmem [#allocation2], 1952
      %1604 = vst.msk [vmem:[%s1603 + $0x9] sm:$0xff] %vm831, %v1595
      %1605 = vst.msk [vmem:[%s1603 + $0x29] sm:$0xff] %vm831, %v1596
      %1606 = vst.msk [vmem:[%s1603 + $0x49] sm:$0xff] %vm831, %v1597
      %1607 = vst.msk [vmem:[%s1603 + $0x69] sm:$0xff] %vm831, %v1598
      %1608 = vst.msk [vmem:[%s1603 + $0x89] sm:$0xff] %vm831, %v1599
      %1609 = vst.msk [vmem:[%s1603 + $0xa9] sm:$0xff] %vm831, %v1600
      %1610 = vst.msk [vmem:[%s1603 + $0xc9] sm:$0xff] %vm831, %v1601
      %1611 = vst.msk [vmem:[%s1603 + $0xe9] sm:$0xff] %vm831, %v1602
      %v1612 = vld [vmem:[%s787] sm:$0xff]
      %v1613 = vld [vmem:[%s787 + $0x8] sm:$0xff]
      %v1614 = vld [vmem:[%s787 + $0x10] sm:$0xff]
      %v1615 = vld [vmem:[%s787 + $0x18] sm:$0xff]
      %v1616 = vld [vmem:[%s787 + $0x20] sm:$0xff]
      %v1617 = vld [vmem:[%s787 + $0x28] sm:$0xff]
      %v1618 = vld [vmem:[%s787 + $0x30] sm:$0xff]
      %v1619 = vld [vmem:[%s787 + $0x38] sm:$0xff]
      %s1620 = scalar_lea.vmem [#allocation2], 2784
      %1621 = vst.msk [vmem:[%s1620 + $0x9] sm:$0xff] %vm831, %v1612
      %1622 = vst.msk [vmem:[%s1620 + $0x29] sm:$0xff] %vm831, %v1613
      %1623 = vst.msk [vmem:[%s1620 + $0x49] sm:$0xff] %vm831, %v1614
      %1624 = vst.msk [vmem:[%s1620 + $0x69] sm:$0xff] %vm831, %v1615
      %1625 = vst.msk [vmem:[%s1620 + $0x89] sm:$0xff] %vm831, %v1616
      %1626 = vst.msk [vmem:[%s1620 + $0xa9] sm:$0xff] %vm831, %v1617
      %1627 = vst.msk [vmem:[%s1620 + $0xc9] sm:$0xff] %vm831, %v1618
      %1628 = vst.msk [vmem:[%s1620 + $0xe9] sm:$0xff] %vm831, %v1619
      %v1629 = vld [vmem:[%s798] sm:$0xff]
      %v1630 = vld [vmem:[%s798 + $0x8] sm:$0xff]
      %v1631 = vld [vmem:[%s798 + $0x10] sm:$0xff]
      %v1632 = vld [vmem:[%s798 + $0x18] sm:$0xff]
      %v1633 = vld [vmem:[%s798 + $0x20] sm:$0xff]
      %v1634 = vld [vmem:[%s798 + $0x28] sm:$0xff]
      %v1635 = vld [vmem:[%s798 + $0x30] sm:$0xff]
      %v1636 = vld [vmem:[%s798 + $0x38] sm:$0xff]
      %s1637 = scalar_lea.vmem [#allocation2], 3616
      %1638 = vst.msk [vmem:[%s1637 + $0x9] sm:$0xff] %vm831, %v1629
      %1639 = vst.msk [vmem:[%s1637 + $0x29] sm:$0xff] %vm831, %v1630
      %1640 = vst.msk [vmem:[%s1637 + $0x49] sm:$0xff] %vm831, %v1631
      %1641 = vst.msk [vmem:[%s1637 + $0x69] sm:$0xff] %vm831, %v1632
      %1642 = vst.msk [vmem:[%s1637 + $0x89] sm:$0xff] %vm831, %v1633
      %1643 = vst.msk [vmem:[%s1637 + $0xa9] sm:$0xff] %vm831, %v1634
      %1644 = vst.msk [vmem:[%s1637 + $0xc9] sm:$0xff] %vm831, %v1635
      %1645 = vst.msk [vmem:[%s1637 + $0xe9] sm:$0xff] %vm831, %v1636
      %v1646 = vld [vmem:[%s809] sm:$0xff]
      %v1647 = vld [vmem:[%s809 + $0x8] sm:$0xff]
      %v1648 = vld [vmem:[%s809 + $0x10] sm:$0xff]
      %v1649 = vld [vmem:[%s809 + $0x18] sm:$0xff]
      %v1650 = vld [vmem:[%s809 + $0x20] sm:$0xff]
      %v1651 = vld [vmem:[%s809 + $0x28] sm:$0xff]
      %v1652 = vld [vmem:[%s809 + $0x30] sm:$0xff]
      %v1653 = vld [vmem:[%s809 + $0x38] sm:$0xff]
      %s1654 = scalar_lea.vmem [#allocation2], 4448
      %1655 = vst.msk [vmem:[%s1654 + $0x9] sm:$0xff] %vm831, %v1646
      %1656 = vst.msk [vmem:[%s1654 + $0x29] sm:$0xff] %vm831, %v1647
      %1657 = vst.msk [vmem:[%s1654 + $0x49] sm:$0xff] %vm831, %v1648
      %1658 = vst.msk [vmem:[%s1654 + $0x69] sm:$0xff] %vm831, %v1649
      %1659 = vst.msk [vmem:[%s1654 + $0x89] sm:$0xff] %vm831, %v1650
      %1660 = vst.msk [vmem:[%s1654 + $0xa9] sm:$0xff] %vm831, %v1651
      %1661 = vst.msk [vmem:[%s1654 + $0xc9] sm:$0xff] %vm831, %v1652
      %1662 = vst.msk [vmem:[%s1654 + $0xe9] sm:$0xff] %vm831, %v1653
      %v1663 = vld [vmem:[%s820] sm:$0xff]
      %v1664 = vld [vmem:[%s820 + $0x8] sm:$0xff]
      %v1665 = vld [vmem:[%s820 + $0x10] sm:$0xff]
      %v1666 = vld [vmem:[%s820 + $0x18] sm:$0xff]
      %v1667 = vld [vmem:[%s820 + $0x20] sm:$0xff]
      %v1668 = vld [vmem:[%s820 + $0x28] sm:$0xff]
      %v1669 = vld [vmem:[%s820 + $0x30] sm:$0xff]
      %v1670 = vld [vmem:[%s820 + $0x38] sm:$0xff]
      %s1671 = scalar_lea.vmem [#allocation2], 5280
      %1672 = vst.msk [vmem:[%s1671 + $0x9] sm:$0xff] %vm831, %v1663
      %1673 = vst.msk [vmem:[%s1671 + $0x29] sm:$0xff] %vm831, %v1664
      %1674 = vst.msk [vmem:[%s1671 + $0x49] sm:$0xff] %vm831, %v1665
      %1675 = vst.msk [vmem:[%s1671 + $0x69] sm:$0xff] %vm831, %v1666
      %1676 = vst.msk [vmem:[%s1671 + $0x89] sm:$0xff] %vm831, %v1667
      %1677 = vst.msk [vmem:[%s1671 + $0xa9] sm:$0xff] %vm831, %v1668
      %1678 = vst.msk [vmem:[%s1671 + $0xc9] sm:$0xff] %vm831, %v1669
      %1679 = vst.msk [vmem:[%s1671 + $0xe9] sm:$0xff] %vm831, %v1670
      %v1680 = vld [vmem:[%s787] sm:$0xff]
      %v1681 = vld [vmem:[%s787 + $0x8] sm:$0xff]
      %v1682 = vld [vmem:[%s787 + $0x10] sm:$0xff]
      %v1683 = vld [vmem:[%s787 + $0x18] sm:$0xff]
      %v1684 = vld [vmem:[%s787 + $0x20] sm:$0xff]
      %v1685 = vld [vmem:[%s787 + $0x28] sm:$0xff]
      %v1686 = vld [vmem:[%s787 + $0x30] sm:$0xff]
      %v1687 = vld [vmem:[%s787 + $0x38] sm:$0xff]
      %v1688 = vld [vmem:[%s10] sm:$0xf]
      %v1689 = vld [vmem:[%s11] sm:$0x1]
      %v1691 = vlaneseq
      %v1692 = vshrl.u32 %v1691, 7
      %v1693 = vsub.s32 0, %v1692
      %v1694 = vrot.slane %v1689, %v1693
      %v1697 = vsel %vm831, %v1680, 0
      %v1700 = vsel %vm831, %v1681, 0
      %v1703 = vsel %vm831, %v1682, 0
      %v1706 = vsel %vm831, %v1683, 0
      %v1709 = vsel %vm831, %v1684, 0
      %v1712 = vsel %vm831, %v1685, 0
      %v1715 = vsel %vm831, %v1686, 0
      %v1718 = vsel %vm831, %v1687, 0
      %vm1720 = vcmask 1043456
      %v1722 = vsel %vm1720, %v1688, 0
      %1724 = vmatprep.subr.mxu0 0.0
      %1725 = vmatpush1.msra.mxu0 %v1722
      %1726 = vmatprep.subr.mxu0 0.0
      %1727 = vmatpush1.msra.mxu0 0.0
      %1728 = vmatprep.subr.mxu0 0.0
      %1729 = vmatpush1.msra.mxu0 0.0
      %1730 = vmatprep.subr.mxu0 0.0
      %1731 = vmatpush1.msra.mxu0 0.0
      %1732 = vmatprep.subr.mxu0 0.0
      %1733 = vmatpush1.msra.mxu0 0.0
      %1734 = vmatprep.subr.mxu0 0.0
      %1735 = vmatpush1.msra.mxu0 0.0
      %1736 = vmatprep.subr.mxu0 0.0
      %1737 = vmatpush1.msra.mxu0 0.0
      %1738 = vmatprep.subr.mxu0 0.0
      %1739 = vmatpush1.msra.mxu0 0.0
      %1740 = vmatprep.subr.mxu0 0.0
      %1741 = vmatpush1.msra.mxu0 0.0
      %1742 = vmatprep.subr.mxu0 0.0
      %1743 = vmatpush1.msra.mxu0 0.0
      %1744 = vmatprep.subr.mxu0 0.0
      %1745 = vmatpush1.msra.mxu0 0.0
      %1746 = vmatprep.subr.mxu0 0.0
      %1747 = vmatpush1.msra.mxu0 0.0
      %1748 = vmatprep.subr.mxu0 0.0
      %1749 = vmatpush1.msra.mxu0 0.0
      %1750 = vmatprep.subr.mxu0 0.0
      %1751 = vmatpush1.msra.mxu0 0.0
      %1752 = vmatprep.subr.mxu0 0.0
      %1753 = vmatpush1.msra.mxu0 0.0
      %1754 = vmatprep.subr.mxu0 0.0
      %1755 = vmatpush1.msra.mxu0 0.0
      %1756 = vmatprep.subr.mxu0 0.0
      %1757 = vmatpush1.msra.mxu0 0.0
      %1758 = vmatprep.subr.mxu0 0.0
      %1759 = vmatpush1.msra.mxu0 0.0
      %1760 = vmatprep.subr.mxu0 0.0
      %1761 = vmatpush1.msra.mxu0 0.0
      %1762 = vmatprep.subr.mxu0 0.0
      %1763 = vmatpush1.msra.mxu0 0.0
      %1764 = vmatprep.subr.mxu0 0.0
      %1765 = vmatpush1.msra.mxu0 0.0
      %1766 = vmatprep.subr.mxu0 0.0
      %1767 = vmatpush1.msra.mxu0 0.0
      %1768 = vmatprep.subr.mxu0 0.0
      %1769 = vmatpush1.msra.mxu0 0.0
      %1770 = vmatprep.subr.mxu0 0.0
      %1771 = vmatpush1.msra.mxu0 0.0
      %1772 = vmatprep.subr.mxu0 0.0
      %1773 = vmatpush1.msra.mxu0 0.0
      %1774 = vmatprep.subr.mxu0 0.0
      %1775 = vmatpush1.msra.mxu0 0.0
      %1776 = vmatprep.subr.mxu0 0.0
      %1777 = vmatpush1.msra.mxu0 0.0
      %1778 = vmatprep.subr.mxu0 0.0
      %1779 = vmatpush1.msra.mxu0 0.0
      %1780 = vmatprep.subr.mxu0 0.0
      %1781 = vmatpush1.msra.mxu0 0.0
      %1782 = vmatprep.subr.mxu0 0.0
      %1783 = vmatpush1.msra.mxu0 0.0
      %1784 = vmatprep.subr.mxu0 0.0
      %1785 = vmatpush1.msra.mxu0 0.0
      %1786 = vmatprep.subr.mxu0 0.0
      %1787 = vmatpush1.msra.mxu0 0.0
      %1788 = vmatprep.mubr.f32.mxu0 0.0
      %1789 = vmatmul.mubr.f32.gmra.mrb[0].mxu0 %v1697
      %v1790 = vpop.f32.mrb[0].mxu0
      %v1791 = vadd.f32 %v1694, %v1790
      %v1792 = vpop.f32.mrb[0].mxu0
      %1793 = vmatprep.mubr.f32.mxu0 0.0
      %1794 = vmatmul.mubr.f32.gmra.mrb[0].mxu0 %v1700
      %v1795 = vpop.f32.mrb[0].mxu0
      %v1796 = vadd.f32 %v1694, %v1795
      %v1797 = vpop.f32.mrb[0].mxu0
      %1798 = vmatprep.mubr.f32.mxu0 0.0
      %1799 = vmatmul.mubr.f32.gmra.mrb[0].mxu0 %v1703
      %v1800 = vpop.f32.mrb[0].mxu0
      %v1801 = vadd.f32 %v1694, %v1800
      %v1802 = vpop.f32.mrb[0].mxu0
      %1803 = vmatprep.mubr.f32.mxu0 0.0
      %1804 = vmatmul.mubr.f32.gmra.mrb[0].mxu0 %v1706
      %v1805 = vpop.f32.mrb[0].mxu0
      %v1806 = vadd.f32 %v1694, %v1805
      %v1807 = vpop.f32.mrb[0].mxu0
      %1808 = vmatprep.mubr.f32.mxu0 0.0
      %1809 = vmatmul.mubr.f32.gmra.mrb[0].mxu0 %v1709
      %v1810 = vpop.f32.mrb[0].mxu0
      %v1811 = vadd.f32 %v1694, %v1810
      %v1812 = vpop.f32.mrb[0].mxu0
      %1813 = vmatprep.mubr.f32.mxu0 0.0
      %1814 = vmatmul.mubr.f32.gmra.mrb[0].mxu0 %v1712
      %v1815 = vpop.f32.mrb[0].mxu0
      %v1816 = vadd.f32 %v1694, %v1815
      %v1817 = vpop.f32.mrb[0].mxu0
      %1818 = vmatprep.mubr.f32.mxu0 0.0
      %1819 = vmatmul.mubr.f32.gmra.mrb[0].mxu0 %v1715
      %v1820 = vpop.f32.mrb[0].mxu0
      %v1821 = vadd.f32 %v1694, %v1820
      %v1822 = vpop.f32.mrb[0].mxu0
      %1823 = vmatprep.mubr.f32.mxu0 0.0
      %1824 = vmatmul.mubr.f32.gmra.mrb[0].mxu0 %v1718
      %v1825 = vpop.f32.mrb[0].mxu0
      %v1826 = vadd.f32 %v1694, %v1825
      %v1827 = vpop.f32.mrb[0].mxu0
      %1828 = vdwg.mxu0
      %v1829 = vmax.f32 %v1791, 0.0
      %v1830 = vmax.f32 %v1796, 0.0
      %v1831 = vmax.f32 %v1801, 0.0
      %v1832 = vmax.f32 %v1806, 0.0
      %v1833 = vmax.f32 %v1811, 0.0
      %v1834 = vmax.f32 %v1816, 0.0
      %v1835 = vmax.f32 %v1821, 0.0
      %v1836 = vmax.f32 %v1826, 0.0
      %v1837 = vsel %vm831, %v1680, 0.0
      %v1838 = vsel %vm831, %v1681, 0.0
      %v1839 = vadd.f32 %v1837, %v1838
      %v1840 = vsel %vm831, %v1682, 0.0
      %v1841 = vadd.f32 %v1839, %v1840
      %v1842 = vsel %vm831, %v1683, 0.0
      %v1843 = vadd.f32 %v1841, %v1842
      %v1844 = vsel %vm831, %v1684, 0.0
      %v1845 = vadd.f32 %v1843, %v1844
      %v1846 = vsel %vm831, %v1685, 0.0
      %v1847 = vadd.f32 %v1845, %v1846
      %v1848 = vsel %vm831, %v1686, 0.0
      %v1849 = vadd.f32 %v1847, %v1848
      %v1850 = vsel %vm831, %v1687, 0.0
      %v1851 = vadd.f32 %v1849, %v1850
      %v1852 = vrot.slane %v1851, 4
      %v1853 = vadd.f32 %v1851, %v1852
      %v1854 = vrot.slane %v1853, 2
      %v1855 = vadd.f32 %v1853, %v1854
      %v1856 = vrot.slane %v1855, 1
      %v1857 = vadd.f32 %v1855, %v1856
      %v1858 = vrcp.pop 64.0
      %v1859 = vmul.f32 %v1857, %v1858
      %v1860 = vld [vmem:[%s13] sm:$0xf]
      %v1861 = vld [vmem:[%s14] sm:$0x1]
      %v1863 = vsel %vm831, %v1859, 0
      %v1866 = vsel %vm1720, %v1860, 0
      %1868 = vmatprep.subr.mxu0 0.0
      %1869 = vmatpush1.msra.mxu0 %v1866
      %1870 = vmatprep.subr.mxu0 0.0
      %1871 = vmatpush1.msra.mxu0 0.0
      %1872 = vmatprep.subr.mxu0 0.0
      %1873 = vmatpush1.msra.mxu0 0.0
      %1874 = vmatprep.subr.mxu0 0.0
      %1875 = vmatpush1.msra.mxu0 0.0
      %1876 = vmatprep.subr.mxu0 0.0
      %1877 = vmatpush1.msra.mxu0 0.0
      %1878 = vmatprep.subr.mxu0 0.0
      %1879 = vmatpush1.msra.mxu0 0.0
      %1880 = vmatprep.subr.mxu0 0.0
      %1881 = vmatpush1.msra.mxu0 0.0
      %1882 = vmatprep.subr.mxu0 0.0
      %1883 = vmatpush1.msra.mxu0 0.0
      %1884 = vmatprep.subr.mxu0 0.0
      %1885 = vmatpush1.msra.mxu0 0.0
      %1886 = vmatprep.subr.mxu0 0.0
      %1887 = vmatpush1.msra.mxu0 0.0
      %1888 = vmatprep.subr.mxu0 0.0
      %1889 = vmatpush1.msra.mxu0 0.0
      %1890 = vmatprep.subr.mxu0 0.0
      %1891 = vmatpush1.msra.mxu0 0.0
      %1892 = vmatprep.subr.mxu0 0.0
      %1893 = vmatpush1.msra.mxu0 0.0
      %1894 = vmatprep.subr.mxu0 0.0
      %1895 = vmatpush1.msra.mxu0 0.0
      %1896 = vmatprep.subr.mxu0 0.0
      %1897 = vmatpush1.msra.mxu0 0.0
      %1898 = vmatprep.subr.mxu0 0.0
      %1899 = vmatpush1.msra.mxu0 0.0
      %1900 = vmatprep.subr.mxu0 0.0
      %1901 = vmatpush1.msra.mxu0 0.0
      %1902 = vmatprep.subr.mxu0 0.0
      %1903 = vmatpush1.msra.mxu0 0.0
      %1904 = vmatprep.subr.mxu0 0.0
      %1905 = vmatpush1.msra.mxu0 0.0
      %1906 = vmatprep.subr.mxu0 0.0
      %1907 = vmatpush1.msra.mxu0 0.0
      %1908 = vmatprep.subr.mxu0 0.0
      %1909 = vmatpush1.msra.mxu0 0.0
      %1910 = vmatprep.subr.mxu0 0.0
      %1911 = vmatpush1.msra.mxu0 0.0
      %1912 = vmatprep.subr.mxu0 0.0
      %1913 = vmatpush1.msra.mxu0 0.0
      %1914 = vmatprep.subr.mxu0 0.0
      %1915 = vmatpush1.msra.mxu0 0.0
      %1916 = vmatprep.subr.mxu0 0.0
      %1917 = vmatpush1.msra.mxu0 0.0
      %1918 = vmatprep.subr.mxu0 0.0
      %1919 = vmatpush1.msra.mxu0 0.0
      %1920 = vmatprep.subr.mxu0 0.0
      %1921 = vmatpush1.msra.mxu0 0.0
      %1922 = vmatprep.subr.mxu0 0.0
      %1923 = vmatpush1.msra.mxu0 0.0
      %1924 = vmatprep.subr.mxu0 0.0
      %1925 = vmatpush1.msra.mxu0 0.0
      %1926 = vmatprep.subr.mxu0 0.0
      %1927 = vmatpush1.msra.mxu0 0.0
      %1928 = vmatprep.subr.mxu0 0.0
      %1929 = vmatpush1.msra.mxu0 0.0
      %1930 = vmatprep.subr.mxu0 0.0
      %1931 = vmatpush1.msra.mxu0 0.0
      %1932 = vmatprep.mubr.f32.mxu0 0.0
      %1933 = vmatmul.mubr.f32.gmra.mrb[0].mxu0 %v1863
      %v1934 = vpop.f32.mrb[0].mxu0
      %v1935 = vadd.f32 %v1861, %v1934
      %v1936 = vpop.f32.mrb[0].mxu0
      %1937 = vdwg.mxu0
      %v1938 = vmax.f32 %v1935, 0.0
      %v1939 = vld [vmem:[%s16] sm:$0x1]
      %v1940 = vld [vmem:[%s12] sm:$0xff]
      %v1941 = vld [vmem:[%s12 + $0x8] sm:$0xff]
      %v1942 = vld [vmem:[%s12 + $0x10] sm:$0xff]
      %v1943 = vld [vmem:[%s12 + $0x18] sm:$0xff]
      %v1944 = vld [vmem:[%s12 + $0x20] sm:$0xff]
      %v1945 = vld [vmem:[%s12 + $0x28] sm:$0xff]
      %v1946 = vld [vmem:[%s12 + $0x30] sm:$0xff]
      %v1947 = vld [vmem:[%s12 + $0x38] sm:$0xff]
      %v1948 = vld [vmem:[%s12 + $0x40] sm:$0xff]
      %v1949 = vld [vmem:[%s12 + $0x48] sm:$0xff]
      %v1950 = vld [vmem:[%s12 + $0x50] sm:$0xff]
      %v1951 = vld [vmem:[%s12 + $0x58] sm:$0xff]
      %v1952 = vld [vmem:[%s12 + $0x60] sm:$0xff]
      %v1953 = vld [vmem:[%s12 + $0x68] sm:$0xff]
      %v1954 = vld [vmem:[%s12 + $0x70] sm:$0xff]
      %v1955 = vld [vmem:[%s12 + $0x78] sm:$0xff]
      %1956 = vmatprep.subr.mxu0 0.0
      %1957 = vmatpush1.msra.mxu0 %v1940
      %1958 = vmatprep.subr.mxu0 0.0
      %1959 = vmatpush1.msra.mxu0 %v1941
      %1960 = vmatprep.subr.mxu0 0.0
      %1961 = vmatpush1.msra.mxu0 %v1942
      %1962 = vmatprep.subr.mxu0 0.0
      %1963 = vmatpush1.msra.mxu0 %v1943
      %1964 = vmatprep.subr.mxu0 0.0
      %1965 = vmatpush1.msra.mxu0 %v1944
      %1966 = vmatprep.subr.mxu0 0.0
      %1967 = vmatpush1.msra.mxu0 %v1945
      %1968 = vmatprep.subr.mxu0 0.0
      %1969 = vmatpush1.msra.mxu0 %v1946
      %1970 = vmatprep.subr.mxu0 0.0
      %1971 = vmatpush1.msra.mxu0 %v1947
      %1972 = vmatprep.subr.mxu0 0.0
      %1973 = vmatpush1.msra.mxu0 %v1948
      %1974 = vmatprep.subr.mxu0 0.0
      %1975 = vmatpush1.msra.mxu0 %v1949
      %1976 = vmatprep.subr.mxu0 0.0
      %1977 = vmatpush1.msra.mxu0 %v1950
      %1978 = vmatprep.subr.mxu0 0.0
      %1979 = vmatpush1.msra.mxu0 %v1951
      %1980 = vmatprep.subr.mxu0 0.0
      %1981 = vmatpush1.msra.mxu0 %v1952
      %1982 = vmatprep.subr.mxu0 0.0
      %1983 = vmatpush1.msra.mxu0 %v1953
      %1984 = vmatprep.subr.mxu0 0.0
      %1985 = vmatpush1.msra.mxu0 %v1954
      %1986 = vmatprep.subr.mxu0 0.0
      %1987 = vmatpush1.msra.mxu0 %v1955
      %1988 = vmatprep.subr.mxu0 0.0
      %1989 = vmatpush1.msra.mxu0 0.0
      %1990 = vmatprep.subr.mxu0 0.0
      %1991 = vmatpush1.msra.mxu0 0.0
      %1992 = vmatprep.subr.mxu0 0.0
      %1993 = vmatpush1.msra.mxu0 0.0
      %1994 = vmatprep.subr.mxu0 0.0
      %1995 = vmatpush1.msra.mxu0 0.0
      %1996 = vmatprep.subr.mxu0 0.0
      %1997 = vmatpush1.msra.mxu0 0.0
      %1998 = vmatprep.subr.mxu0 0.0
      %1999 = vmatpush1.msra.mxu0 0.0
      %2000 = vmatprep.subr.mxu0 0.0
      %2001 = vmatpush1.msra.mxu0 0.0
      %2002 = vmatprep.subr.mxu0 0.0
      %2003 = vmatpush1.msra.mxu0 0.0
      %2004 = vmatprep.subr.mxu0 0.0
      %2005 = vmatpush1.msra.mxu0 0.0
      %2006 = vmatprep.subr.mxu0 0.0
      %2007 = vmatpush1.msra.mxu0 0.0
      %2008 = vmatprep.subr.mxu0 0.0
      %2009 = vmatpush1.msra.mxu0 0.0
      %2010 = vmatprep.subr.mxu0 0.0
      %2011 = vmatpush1.msra.mxu0 0.0
      %2012 = vmatprep.subr.mxu0 0.0
      %2013 = vmatpush1.msra.mxu0 0.0
      %2014 = vmatprep.subr.mxu0 0.0
      %2015 = vmatpush1.msra.mxu0 0.0
      %2016 = vmatprep.subr.mxu0 0.0
      %2017 = vmatpush1.msra.mxu0 0.0
      %2018 = vmatprep.subr.mxu0 0.0
      %2019 = vmatpush1.msra.mxu0 0.0
      %2020 = vmatprep.mubr.f32.mxu0 0.0
      %2021 = vmatmul.mubr.f32.gmra.mrb[0].mxu0 %v1829
      %v2022 = vpop.f32.mrb[0].mxu0
      %v2023 = vadd.f32 0.0, %v2022
      %v2024 = vpop.f32.mrb[0].mxu0
      %2025 = vmatprep.mubr.f32.mxu0 0.0
      %2026 = vmatmul.mubr.f32.gmra.mrb[0].mxu0 %v1830
      %v2027 = vpop.f32.mrb[0].mxu0
      %v2028 = vadd.f32 0.0, %v2027
      %v2029 = vpop.f32.mrb[0].mxu0
      %2030 = vmatprep.mubr.f32.mxu0 0.0
      %2031 = vmatmul.mubr.f32.gmra.mrb[0].mxu0 %v1831
      %v2032 = vpop.f32.mrb[0].mxu0
      %v2033 = vadd.f32 0.0, %v2032
      %v2034 = vpop.f32.mrb[0].mxu0
      %2035 = vmatprep.mubr.f32.mxu0 0.0
      %2036 = vmatmul.mubr.f32.gmra.mrb[0].mxu0 %v1832
      %v2037 = vpop.f32.mrb[0].mxu0
      %v2038 = vadd.f32 0.0, %v2037
      %v2039 = vpop.f32.mrb[0].mxu0
      %2040 = vmatprep.mubr.f32.mxu0 0.0
      %2041 = vmatmul.mubr.f32.gmra.mrb[0].mxu0 %v1833
      %v2042 = vpop.f32.mrb[0].mxu0
      %v2043 = vadd.f32 0.0, %v2042
      %v2044 = vpop.f32.mrb[0].mxu0
      %2045 = vmatprep.mubr.f32.mxu0 0.0
      %2046 = vmatmul.mubr.f32.gmra.mrb[0].mxu0 %v1834
      %v2047 = vpop.f32.mrb[0].mxu0
      %v2048 = vadd.f32 0.0, %v2047
      %v2049 = vpop.f32.mrb[0].mxu0
      %2050 = vmatprep.mubr.f32.mxu0 0.0
      %2051 = vmatmul.mubr.f32.gmra.mrb[0].mxu0 %v1835
      %v2052 = vpop.f32.mrb[0].mxu0
      %v2053 = vadd.f32 0.0, %v2052
      %v2054 = vpop.f32.mrb[0].mxu0
      %2055 = vmatprep.mubr.f32.mxu0 0.0
      %2056 = vmatmul.mubr.f32.gmra.mrb[0].mxu0 %v1836
      %v2057 = vpop.f32.mrb[0].mxu0
      %v2058 = vadd.f32 0.0, %v2057
      %v2059 = vpop.f32.mrb[0].mxu0
      %2060 = vdwg.mxu0
      %v2062 = vlaneseq
      %v2063 = vshrl.u32 %v2062, 7
      %v2064 = vsub.s32 0, %v2063
      %v2065 = vrot.slane %v1939, %v2064
      %v2067 = vadd.f32 %v2065, %v2023
      %v2068 = vadd.f32 %v2065, %v2028
      %v2069 = vadd.f32 %v2065, %v2033
      %v2070 = vadd.f32 %v2065, %v2038
      %v2071 = vadd.f32 %v2065, %v2043
      %v2072 = vadd.f32 %v2065, %v2048
      %v2073 = vadd.f32 %v2065, %v2053
      %v2074 = vadd.f32 %v2065, %v2058
      %v2075 = vld [vmem:[%s15] sm:$0xff]
      %v2076 = vld [vmem:[%s15 + $0x8] sm:$0xff]
      %v2077 = vld [vmem:[%s15 + $0x10] sm:$0xff]
      %v2078 = vld [vmem:[%s15 + $0x18] sm:$0xff]
      %v2079 = vld [vmem:[%s15 + $0x20] sm:$0xff]
      %v2080 = vld [vmem:[%s15 + $0x28] sm:$0xff]
      %v2081 = vld [vmem:[%s15 + $0x30] sm:$0xff]
      %v2082 = vld [vmem:[%s15 + $0x38] sm:$0xff]
      %v2083 = vld [vmem:[%s15 + $0x40] sm:$0xff]
      %v2084 = vld [vmem:[%s15 + $0x48] sm:$0xff]
      %v2085 = vld [vmem:[%s15 + $0x50] sm:$0xff]
      %v2086 = vld [vmem:[%s15 + $0x58] sm:$0xff]
      %v2087 = vld [vmem:[%s15 + $0x60] sm:$0xff]
      %v2088 = vld [vmem:[%s15 + $0x68] sm:$0xff]
      %v2089 = vld [vmem:[%s15 + $0x70] sm:$0xff]
      %v2090 = vld [vmem:[%s15 + $0x78] sm:$0xff]
      %2091 = vmatprep.subr.mxu0 0.0
      %2092 = vmatpush1.msra.mxu0 %v2075
      %2093 = vmatprep.subr.mxu0 0.0
      %2094 = vmatpush1.msra.mxu0 %v2076
      %2095 = vmatprep.subr.mxu0 0.0
      %2096 = vmatpush1.msra.mxu0 %v2077
      %2097 = vmatprep.subr.mxu0 0.0
      %2098 = vmatpush1.msra.mxu0 %v2078
      %2099 = vmatprep.subr.mxu0 0.0
      %2100 = vmatpush1.msra.mxu0 %v2079
      %2101 = vmatprep.subr.mxu0 0.0
      %2102 = vmatpush1.msra.mxu0 %v2080
      %2103 = vmatprep.subr.mxu0 0.0
      %2104 = vmatpush1.msra.mxu0 %v2081
      %2105 = vmatprep.subr.mxu0 0.0
      %2106 = vmatpush1.msra.mxu0 %v2082
      %2107 = vmatprep.subr.mxu0 0.0
      %2108 = vmatpush1.msra.mxu0 %v2083
      %2109 = vmatprep.subr.mxu0 0.0
      %2110 = vmatpush1.msra.mxu0 %v2084
      %2111 = vmatprep.subr.mxu0 0.0
      %2112 = vmatpush1.msra.mxu0 %v2085
      %2113 = vmatprep.subr.mxu0 0.0
      %2114 = vmatpush1.msra.mxu0 %v2086
      %2115 = vmatprep.subr.mxu0 0.0
      %2116 = vmatpush1.msra.mxu0 %v2087
      %2117 = vmatprep.subr.mxu0 0.0
      %2118 = vmatpush1.msra.mxu0 %v2088
      %2119 = vmatprep.subr.mxu0 0.0
      %2120 = vmatpush1.msra.mxu0 %v2089
      %2121 = vmatprep.subr.mxu0 0.0
      %2122 = vmatpush1.msra.mxu0 %v2090
      %2123 = vmatprep.subr.mxu0 0.0
      %2124 = vmatpush1.msra.mxu0 0.0
      %2125 = vmatprep.subr.mxu0 0.0
      %2126 = vmatpush1.msra.mxu0 0.0
      %2127 = vmatprep.subr.mxu0 0.0
      %2128 = vmatpush1.msra.mxu0 0.0
      %2129 = vmatprep.subr.mxu0 0.0
      %2130 = vmatpush1.msra.mxu0 0.0
      %2131 = vmatprep.subr.mxu0 0.0
      %2132 = vmatpush1.msra.mxu0 0.0
      %2133 = vmatprep.subr.mxu0 0.0
      %2134 = vmatpush1.msra.mxu0 0.0
      %2135 = vmatprep.subr.mxu0 0.0
      %2136 = vmatpush1.msra.mxu0 0.0
      %2137 = vmatprep.subr.mxu0 0.0
      %2138 = vmatpush1.msra.mxu0 0.0
      %2139 = vmatprep.subr.mxu0 0.0
      %2140 = vmatpush1.msra.mxu0 0.0
      %2141 = vmatprep.subr.mxu0 0.0
      %2142 = vmatpush1.msra.mxu0 0.0
      %2143 = vmatprep.subr.mxu0 0.0
      %2144 = vmatpush1.msra.mxu0 0.0
      %2145 = vmatprep.subr.mxu0 0.0
      %2146 = vmatpush1.msra.mxu0 0.0
      %2147 = vmatprep.subr.mxu0 0.0
      %2148 = vmatpush1.msra.mxu0 0.0
      %2149 = vmatprep.subr.mxu0 0.0
      %2150 = vmatpush1.msra.mxu0 0.0
      %2151 = vmatprep.subr.mxu0 0.0
      %2152 = vmatpush1.msra.mxu0 0.0
      %2153 = vmatprep.subr.mxu0 0.0
      %2154 = vmatpush1.msra.mxu0 0.0
      %2155 = vmatprep.mubr.f32.mxu0 0.0
      %2156 = vmatmul.mubr.f32.gmra.mrb[0].mxu0 %v1938
      %v2157 = vpop.f32.mrb[0].mxu0
      %v2158 = vadd.f32 0.0, %v2157
      %v2159 = vpop.f32.mrb[0].mxu0
      %2160 = vdwg.mxu0
      %v2161 = vlaneseq
      %v2162 = vshrl.u32 %v2161, 7
      %v2163 = vsub.s32 0, %v2162
      %v2164 = vrot.slane %v2158, %v2163
      %v2165 = vadd.f32 %v2067, %v2164
      %v2166 = vadd.f32 %v2068, %v2164
      %v2167 = vadd.f32 %v2069, %v2164
      %v2168 = vadd.f32 %v2070, %v2164
      %v2169 = vadd.f32 %v2071, %v2164
      %v2170 = vadd.f32 %v2072, %v2164
      %v2171 = vadd.f32 %v2073, %v2164
      %v2172 = vadd.f32 %v2074, %v2164
      %2173 = vst [vmem:[#allocation4] sm:$0xff] %v2165
      %2174 = vst [vmem:[#allocation4 + $0x8] sm:$0xff] %v2166
      %2175 = vst [vmem:[#allocation4 + $0x10] sm:$0xff] %v2167
      %2176 = vst [vmem:[#allocation4 + $0x18] sm:$0xff] %v2168
      %2177 = vst [vmem:[#allocation4 + $0x20] sm:$0xff] %v2169
      %2178 = vst [vmem:[#allocation4 + $0x28] sm:$0xff] %v2170
      %2179 = vst [vmem:[#allocation4 + $0x30] sm:$0xff] %v2171
      %2180 = vst [vmem:[#allocation4 + $0x38] sm:$0xff] %v2172
      %s2181 = scalar_lea.vmem [#allocation2], 1856
      %v2182 = vld [vmem:[%s2181 + $0x6] sm:$0xff]
      %v2183 = vld [vmem:[%s2181 + $0x26] sm:$0xff]
      %v2184 = vld [vmem:[%s2181 + $0x46] sm:$0xff]
      %v2185 = vld [vmem:[%s2181 + $0x66] sm:$0xff]
      %v2186 = vld [vmem:[%s2181 + $0x86] sm:$0xff]
      %v2187 = vld [vmem:[%s2181 + $0xa6] sm:$0xff]
      %v2188 = vld [vmem:[%s2181 + $0xc6] sm:$0xff]
      %v2189 = vld [vmem:[%s2181 + $0xe6] sm:$0xff]
      %2190 = vst.msk [vmem:[#allocation3] sm:$0xff] %vm831, %v2182
      %2191 = vst.msk [vmem:[#allocation3 + $0x8] sm:$0xff] %vm831, %v2183
      %2192 = vst.msk [vmem:[#allocation3 + $0x10] sm:$0xff] %vm831, %v2184
      %2193 = vst.msk [vmem:[#allocation3 + $0x18] sm:$0xff] %vm831, %v2185
      %2194 = vst.msk [vmem:[#allocation3 + $0x20] sm:$0xff] %vm831, %v2186
      %2195 = vst.msk [vmem:[#allocation3 + $0x28] sm:$0xff] %vm831, %v2187
      %2196 = vst.msk [vmem:[#allocation3 + $0x30] sm:$0xff] %vm831, %v2188
      %2197 = vst.msk [vmem:[#allocation3 + $0x38] sm:$0xff] %vm831, %v2189
      %v2198 = vld [vmem:[%s2181 + $0x9] sm:$0xff]
      %v2199 = vld [vmem:[%s2181 + $0x29] sm:$0xff]
      %v2200 = vld [vmem:[%s2181 + $0x49] sm:$0xff]
      %v2201 = vld [vmem:[%s2181 + $0x69] sm:$0xff]
      %v2202 = vld [vmem:[%s2181 + $0x89] sm:$0xff]
      %v2203 = vld [vmem:[%s2181 + $0xa9] sm:$0xff]
      %v2204 = vld [vmem:[%s2181 + $0xc9] sm:$0xff]
      %v2205 = vld [vmem:[%s2181 + $0xe9] sm:$0xff]
      %2214 = vrot.lane.b32.xlu0 %v2198, 4
      %v2215 = vpop.permute.xlu0 %2214
      %2216 = vrot.lane.b32.xlu0 %v2199, 4
      %v2217 = vpop.permute.xlu0 %2216
      %2218 = vrot.lane.b32.xlu0 %v2200, 4
      %v2219 = vpop.permute.xlu0 %2218
      %2220 = vrot.lane.b32.xlu0 %v2201, 4
      %v2221 = vpop.permute.xlu0 %2220
      %2222 = vrot.lane.b32.xlu0 %v2202, 4
      %v2223 = vpop.permute.xlu0 %2222
      %2224 = vrot.lane.b32.xlu0 %v2203, 4
      %v2225 = vpop.permute.xlu0 %2224
      %2226 = vrot.lane.b32.xlu0 %v2204, 4
      %v2227 = vpop.permute.xlu0 %2226
      %2228 = vrot.lane.b32.xlu0 %v2205, 4
      %v2229 = vpop.permute.xlu0 %2228
      %vm2238 = vcmask 64544
      %2239 = vst.msk [vmem:[#allocation3] sm:$0xff] %vm2238, %v2215
      %2240 = vst.msk [vmem:[#allocation3 + $0x8] sm:$0xff] %vm2238, %v2217
      %2241 = vst.msk [vmem:[#allocation3 + $0x10] sm:$0xff] %vm2238, %v2219
      %2242 = vst.msk [vmem:[#allocation3 + $0x18] sm:$0xff] %vm2238, %v2221
      %2243 = vst.msk [vmem:[#allocation3 + $0x20] sm:$0xff] %vm2238, %v2223
      %2244 = vst.msk [vmem:[#allocation3 + $0x28] sm:$0xff] %vm2238, %v2225
      %2245 = vst.msk [vmem:[#allocation3 + $0x30] sm:$0xff] %vm2238, %v2227
      %2246 = vst.msk [vmem:[#allocation3 + $0x38] sm:$0xff] %vm2238, %v2229
      %v2247 = vld [vmem:[%s2181 + $0xc] sm:$0xff]
      %v2248 = vld [vmem:[%s2181 + $0x2c] sm:$0xff]
      %v2249 = vld [vmem:[%s2181 + $0x4c] sm:$0xff]
      %v2250 = vld [vmem:[%s2181 + $0x6c] sm:$0xff]
      %v2251 = vld [vmem:[%s2181 + $0x8c] sm:$0xff]
      %v2252 = vld [vmem:[%s2181 + $0xac] sm:$0xff]
      %v2253 = vld [vmem:[%s2181 + $0xcc] sm:$0xff]
      %v2254 = vld [vmem:[%s2181 + $0xec] sm:$0xff]
      %2263 = vrot.lane.b32.xlu0 %v2247, 8
      %v2264 = vpop.permute.xlu0 %2263
      %2265 = vrot.lane.b32.xlu0 %v2248, 8
      %v2266 = vpop.permute.xlu0 %2265
      %2267 = vrot.lane.b32.xlu0 %v2249, 8
      %v2268 = vpop.permute.xlu0 %2267
      %2269 = vrot.lane.b32.xlu0 %v2250, 8
      %v2270 = vpop.permute.xlu0 %2269
      %2271 = vrot.lane.b32.xlu0 %v2251, 8
      %v2272 = vpop.permute.xlu0 %2271
      %2273 = vrot.lane.b32.xlu0 %v2252, 8
      %v2274 = vpop.permute.xlu0 %2273
      %2275 = vrot.lane.b32.xlu0 %v2253, 8
      %v2276 = vpop.permute.xlu0 %2275
      %2277 = vrot.lane.b32.xlu0 %v2254, 8
      %v2278 = vpop.permute.xlu0 %2277
      %vm2287 = vcmask 97344
      %2288 = vst.msk [vmem:[#allocation3] sm:$0xff] %vm2287, %v2264
      %2289 = vst.msk [vmem:[#allocation3 + $0x8] sm:$0xff] %vm2287, %v2266
      %2290 = vst.msk [vmem:[#allocation3 + $0x10] sm:$0xff] %vm2287, %v2268
      %2291 = vst.msk [vmem:[#allocation3 + $0x18] sm:$0xff] %vm2287, %v2270
      %2292 = vst.msk [vmem:[#allocation3 + $0x20] sm:$0xff] %vm2287, %v2272
      %2293 = vst.msk [vmem:[#allocation3 + $0x28] sm:$0xff] %vm2287, %v2274
      %2294 = vst.msk [vmem:[#allocation3 + $0x30] sm:$0xff] %vm2287, %v2276
      %2295 = vst.msk [vmem:[#allocation3 + $0x38] sm:$0xff] %vm2287, %v2278
      %v2296 = vld [vmem:[%s1603 + $0x6] sm:$0xff]
      %v2297 = vld [vmem:[%s1603 + $0x26] sm:$0xff]
      %v2298 = vld [vmem:[%s1603 + $0x46] sm:$0xff]
      %v2299 = vld [vmem:[%s1603 + $0x66] sm:$0xff]
      %v2300 = vld [vmem:[%s1603 + $0x86] sm:$0xff]
      %v2301 = vld [vmem:[%s1603 + $0xa6] sm:$0xff]
      %v2302 = vld [vmem:[%s1603 + $0xc6] sm:$0xff]
      %v2303 = vld [vmem:[%s1603 + $0xe6] sm:$0xff]
      %2312 = vrot.lane.b32.xlu0 %v2296, 12
      %v2313 = vpop.permute.xlu0 %2312
      %2314 = vrot.lane.b32.xlu0 %v2297, 12
      %v2315 = vpop.permute.xlu0 %2314
      %2316 = vrot.lane.b32.xlu0 %v2298, 12
      %v2317 = vpop.permute.xlu0 %2316
      %2318 = vrot.lane.b32.xlu0 %v2299, 12
      %v2319 = vpop.permute.xlu0 %2318
      %2320 = vrot.lane.b32.xlu0 %v2300, 12
      %v2321 = vpop.permute.xlu0 %2320
      %2322 = vrot.lane.b32.xlu0 %v2301, 12
      %v2323 = vpop.permute.xlu0 %2322
      %2324 = vrot.lane.b32.xlu0 %v2302, 12
      %v2325 = vpop.permute.xlu0 %2324
      %2326 = vrot.lane.b32.xlu0 %v2303, 12
      %v2327 = vpop.permute.xlu0 %2326
      %vm2336 = vcmask 130144
      %2337 = vst.msk [vmem:[#allocation3] sm:$0xff] %vm2336, %v2313
      %2338 = vst.msk [vmem:[#allocation3 + $0x8] sm:$0xff] %vm2336, %v2315
      %2339 = vst.msk [vmem:[#allocation3 + $0x10] sm:$0xff] %vm2336, %v2317
      %2340 = vst.msk [vmem:[#allocation3 + $0x18] sm:$0xff] %vm2336, %v2319
      %2341 = vst.msk [vmem:[#allocation3 + $0x20] sm:$0xff] %vm2336, %v2321
      %2342 = vst.msk [vmem:[#allocation3 + $0x28] sm:$0xff] %vm2336, %v2323
      %2343 = vst.msk [vmem:[#allocation3 + $0x30] sm:$0xff] %vm2336, %v2325
      %2344 = vst.msk [vmem:[#allocation3 + $0x38] sm:$0xff] %vm2336, %v2327
      %v2345 = vld [vmem:[%s1603 + $0x9] sm:$0xff]
      %v2346 = vld [vmem:[%s1603 + $0x29] sm:$0xff]
      %v2347 = vld [vmem:[%s1603 + $0x49] sm:$0xff]
      %v2348 = vld [vmem:[%s1603 + $0x69] sm:$0xff]
      %v2349 = vld [vmem:[%s1603 + $0x89] sm:$0xff]
      %v2350 = vld [vmem:[%s1603 + $0xa9] sm:$0xff]
      %v2351 = vld [vmem:[%s1603 + $0xc9] sm:$0xff]
      %v2352 = vld [vmem:[%s1603 + $0xe9] sm:$0xff]
      %2361 = vrot.lane.b32.xlu0 %v2345, 16
      %v2362 = vpop.permute.xlu0 %2361
      %2363 = vrot.lane.b32.xlu0 %v2346, 16
      %v2364 = vpop.permute.xlu0 %2363
      %2365 = vrot.lane.b32.xlu0 %v2347, 16
      %v2366 = vpop.permute.xlu0 %2365
      %2367 = vrot.lane.b32.xlu0 %v2348, 16
      %v2368 = vpop.permute.xlu0 %2367
      %2369 = vrot.lane.b32.xlu0 %v2349, 16
      %v2370 = vpop.permute.xlu0 %2369
      %2371 = vrot.lane.b32.xlu0 %v2350, 16
      %v2372 = vpop.permute.xlu0 %2371
      %2373 = vrot.lane.b32.xlu0 %v2351, 16
      %v2374 = vpop.permute.xlu0 %2373
      %2375 = vrot.lane.b32.xlu0 %v2352, 16
      %v2376 = vpop.permute.xlu0 %2375
      %vm2385 = vcmask 162944
      %2386 = vst.msk [vmem:[#allocation3] sm:$0xff] %vm2385, %v2362
      %2387 = vst.msk [vmem:[#allocation3 + $0x8] sm:$0xff] %vm2385, %v2364
      %2388 = vst.msk [vmem:[#allocation3 + $0x10] sm:$0xff] %vm2385, %v2366
      %2389 = vst.msk [vmem:[#allocation3 + $0x18] sm:$0xff] %vm2385, %v2368
      %2390 = vst.msk [vmem:[#allocation3 + $0x20] sm:$0xff] %vm2385, %v2370
      %2391 = vst.msk [vmem:[#allocation3 + $0x28] sm:$0xff] %vm2385, %v2372
      %2392 = vst.msk [vmem:[#allocation3 + $0x30] sm:$0xff] %vm2385, %v2374
      %2393 = vst.msk [vmem:[#allocation3 + $0x38] sm:$0xff] %vm2385, %v2376
      %v2394 = vld [vmem:[%s1603 + $0xc] sm:$0xff]
      %v2395 = vld [vmem:[%s1603 + $0x2c] sm:$0xff]
      %v2396 = vld [vmem:[%s1603 + $0x4c] sm:$0xff]
      %v2397 = vld [vmem:[%s1603 + $0x6c] sm:$0xff]
      %v2398 = vld [vmem:[%s1603 + $0x8c] sm:$0xff]
      %v2399 = vld [vmem:[%s1603 + $0xac] sm:$0xff]
      %v2400 = vld [vmem:[%s1603 + $0xcc] sm:$0xff]
      %v2401 = vld [vmem:[%s1603 + $0xec] sm:$0xff]
      %2410 = vrot.lane.b32.xlu0 %v2394, 20
      %v2411 = vpop.permute.xlu0 %2410
      %2412 = vrot.lane.b32.xlu0 %v2395, 20
      %v2413 = vpop.permute.xlu0 %2412
      %2414 = vrot.lane.b32.xlu0 %v2396, 20
      %v2415 = vpop.permute.xlu0 %2414
      %2416 = vrot.lane.b32.xlu0 %v2397, 20
      %v2417 = vpop.permute.xlu0 %2416
      %2418 = vrot.lane.b32.xlu0 %v2398, 20
      %v2419 = vpop.permute.xlu0 %2418
      %2420 = vrot.lane.b32.xlu0 %v2399, 20
      %v2421 = vpop.permute.xlu0 %2420
      %2422 = vrot.lane.b32.xlu0 %v2400, 20
      %v2423 = vpop.permute.xlu0 %2422
      %2424 = vrot.lane.b32.xlu0 %v2401, 20
      %v2425 = vpop.permute.xlu0 %2424
      %vm2434 = vcmask 195744
      %2435 = vst.msk [vmem:[#allocation3] sm:$0xff] %vm2434, %v2411
      %2436 = vst.msk [vmem:[#allocation3 + $0x8] sm:$0xff] %vm2434, %v2413
      %2437 = vst.msk [vmem:[#allocation3 + $0x10] sm:$0xff] %vm2434, %v2415
      %2438 = vst.msk [vmem:[#allocation3 + $0x18] sm:$0xff] %vm2434, %v2417
      %2439 = vst.msk [vmem:[#allocation3 + $0x20] sm:$0xff] %vm2434, %v2419
      %2440 = vst.msk [vmem:[#allocation3 + $0x28] sm:$0xff] %vm2434, %v2421
      %2441 = vst.msk [vmem:[#allocation3 + $0x30] sm:$0xff] %vm2434, %v2423
      %2442 = vst.msk [vmem:[#allocation3 + $0x38] sm:$0xff] %vm2434, %v2425
      %s2443 = scalar_lea.vmem [#allocation2], 2048
      %v2444 = vld [vmem:[%s2443 + $0x6] sm:$0xff]
      %v2445 = vld [vmem:[%s2443 + $0x26] sm:$0xff]
      %v2446 = vld [vmem:[%s2443 + $0x46] sm:$0xff]
      %v2447 = vld [vmem:[%s2443 + $0x66] sm:$0xff]
      %v2448 = vld [vmem:[%s2443 + $0x86] sm:$0xff]
      %v2449 = vld [vmem:[%s2443 + $0xa6] sm:$0xff]
      %v2450 = vld [vmem:[%s2443 + $0xc6] sm:$0xff]
      %v2451 = vld [vmem:[%s2443 + $0xe6] sm:$0xff]
      %2460 = vrot.lane.b32.xlu0 %v2444, 24
      %v2461 = vpop.permute.xlu0 %2460
      %2462 = vrot.lane.b32.xlu0 %v2445, 24
      %v2463 = vpop.permute.xlu0 %2462
      %2464 = vrot.lane.b32.xlu0 %v2446, 24
      %v2465 = vpop.permute.xlu0 %2464
      %2466 = vrot.lane.b32.xlu0 %v2447, 24
      %v2467 = vpop.permute.xlu0 %2466
      %2468 = vrot.lane.b32.xlu0 %v2448, 24
      %v2469 = vpop.permute.xlu0 %2468
      %2470 = vrot.lane.b32.xlu0 %v2449, 24
      %v2471 = vpop.permute.xlu0 %2470
      %2472 = vrot.lane.b32.xlu0 %v2450, 24
      %v2473 = vpop.permute.xlu0 %2472
      %2474 = vrot.lane.b32.xlu0 %v2451, 24
      %v2475 = vpop.permute.xlu0 %2474
      %vm2484 = vcmask 228544
      %2485 = vst.msk [vmem:[#allocation3] sm:$0xff] %vm2484, %v2461
      %2486 = vst.msk [vmem:[#allocation3 + $0x8] sm:$0xff] %vm2484, %v2463
      %2487 = vst.msk [vmem:[#allocation3 + $0x10] sm:$0xff] %vm2484, %v2465
      %2488 = vst.msk [vmem:[#allocation3 + $0x18] sm:$0xff] %vm2484, %v2467
      %2489 = vst.msk [vmem:[#allocation3 + $0x20] sm:$0xff] %vm2484, %v2469
      %2490 = vst.msk [vmem:[#allocation3 + $0x28] sm:$0xff] %vm2484, %v2471
      %2491 = vst.msk [vmem:[#allocation3 + $0x30] sm:$0xff] %vm2484, %v2473
      %2492 = vst.msk [vmem:[#allocation3 + $0x38] sm:$0xff] %vm2484, %v2475
      %v2493 = vld [vmem:[%s2443 + $0x9] sm:$0xff]
      %v2494 = vld [vmem:[%s2443 + $0x29] sm:$0xff]
      %v2495 = vld [vmem:[%s2443 + $0x49] sm:$0xff]
      %v2496 = vld [vmem:[%s2443 + $0x69] sm:$0xff]
      %v2497 = vld [vmem:[%s2443 + $0x89] sm:$0xff]
      %v2498 = vld [vmem:[%s2443 + $0xa9] sm:$0xff]
      %v2499 = vld [vmem:[%s2443 + $0xc9] sm:$0xff]
      %v2500 = vld [vmem:[%s2443 + $0xe9] sm:$0xff]
      %2509 = vrot.lane.b32.xlu0 %v2493, 28
      %v2510 = vpop.permute.xlu0 %2509
      %2511 = vrot.lane.b32.xlu0 %v2494, 28
      %v2512 = vpop.permute.xlu0 %2511
      %2513 = vrot.lane.b32.xlu0 %v2495, 28
      %v2514 = vpop.permute.xlu0 %2513
      %2515 = vrot.lane.b32.xlu0 %v2496, 28
      %v2516 = vpop.permute.xlu0 %2515
      %2517 = vrot.lane.b32.xlu0 %v2497, 28
      %v2518 = vpop.permute.xlu0 %2517
      %2519 = vrot.lane.b32.xlu0 %v2498, 28
      %v2520 = vpop.permute.xlu0 %2519
      %2521 = vrot.lane.b32.xlu0 %v2499, 28
      %v2522 = vpop.permute.xlu0 %2521
      %2523 = vrot.lane.b32.xlu0 %v2500, 28
      %v2524 = vpop.permute.xlu0 %2523
      %vm2533 = vcmask 261344
      %2534 = vst.msk [vmem:[#allocation3] sm:$0xff] %vm2533, %v2510
      %2535 = vst.msk [vmem:[#allocation3 + $0x8] sm:$0xff] %vm2533, %v2512
      %2536 = vst.msk [vmem:[#allocation3 + $0x10] sm:$0xff] %vm2533, %v2514
      %2537 = vst.msk [vmem:[#allocation3 + $0x18] sm:$0xff] %vm2533, %v2516
      %2538 = vst.msk [vmem:[#allocation3 + $0x20] sm:$0xff] %vm2533, %v2518
      %2539 = vst.msk [vmem:[#allocation3 + $0x28] sm:$0xff] %vm2533, %v2520
      %2540 = vst.msk [vmem:[#allocation3 + $0x30] sm:$0xff] %vm2533, %v2522
      %2541 = vst.msk [vmem:[#allocation3 + $0x38] sm:$0xff] %vm2533, %v2524
      %v2542 = vld [vmem:[%s2443 + $0xc] sm:$0xff]
      %v2543 = vld [vmem:[%s2443 + $0x2c] sm:$0xff]
      %v2544 = vld [vmem:[%s2443 + $0x4c] sm:$0xff]
      %v2545 = vld [vmem:[%s2443 + $0x6c] sm:$0xff]
      %v2546 = vld [vmem:[%s2443 + $0x8c] sm:$0xff]
      %v2547 = vld [vmem:[%s2443 + $0xac] sm:$0xff]
      %v2548 = vld [vmem:[%s2443 + $0xcc] sm:$0xff]
      %v2549 = vld [vmem:[%s2443 + $0xec] sm:$0xff]
      %2558 = vrot.lane.b32.xlu0 %v2542, 32
      %v2559 = vpop.permute.xlu0 %2558
      %2560 = vrot.lane.b32.xlu0 %v2543, 32
      %v2561 = vpop.permute.xlu0 %2560
      %2562 = vrot.lane.b32.xlu0 %v2544, 32
      %v2563 = vpop.permute.xlu0 %2562
      %2564 = vrot.lane.b32.xlu0 %v2545, 32
      %v2565 = vpop.permute.xlu0 %2564
      %2566 = vrot.lane.b32.xlu0 %v2546, 32
      %v2567 = vpop.permute.xlu0 %2566
      %2568 = vrot.lane.b32.xlu0 %v2547, 32
      %v2569 = vpop.permute.xlu0 %2568
      %2570 = vrot.lane.b32.xlu0 %v2548, 32
      %v2571 = vpop.permute.xlu0 %2570
      %2572 = vrot.lane.b32.xlu0 %v2549, 32
      %v2573 = vpop.permute.xlu0 %2572
      %vm2582 = vcmask 294144
      %2583 = vst.msk [vmem:[#allocation3] sm:$0xff] %vm2582, %v2559
      %2584 = vst.msk [vmem:[#allocation3 + $0x8] sm:$0xff] %vm2582, %v2561
      %2585 = vst.msk [vmem:[#allocation3 + $0x10] sm:$0xff] %vm2582, %v2563
      %2586 = vst.msk [vmem:[#allocation3 + $0x18] sm:$0xff] %vm2582, %v2565
      %2587 = vst.msk [vmem:[#allocation3 + $0x20] sm:$0xff] %vm2582, %v2567
      %2588 = vst.msk [vmem:[#allocation3 + $0x28] sm:$0xff] %vm2582, %v2569
      %2589 = vst.msk [vmem:[#allocation3 + $0x30] sm:$0xff] %vm2582, %v2571
      %2590 = vst.msk [vmem:[#allocation3 + $0x38] sm:$0xff] %vm2582, %v2573
      %v2591 = vld [vmem:[#allocation3] sm:$0xff]
      %v2592 = vld [vmem:[#allocation3 + $0x8] sm:$0xff]
      %v2593 = vld [vmem:[#allocation3 + $0x10] sm:$0xff]
      %v2594 = vld [vmem:[#allocation3 + $0x18] sm:$0xff]
      %v2595 = vld [vmem:[#allocation3 + $0x20] sm:$0xff]
      %v2596 = vld [vmem:[#allocation3 + $0x28] sm:$0xff]
      %v2597 = vld [vmem:[#allocation3 + $0x30] sm:$0xff]
      %v2598 = vld [vmem:[#allocation3 + $0x38] sm:$0xff]
      %v2599 = vld [vmem:[%s7] sm:$0xff]
      %v2600 = vld [vmem:[%s7 + $0x8] sm:$0xff]
      %v2601 = vld [vmem:[%s7 + $0x10] sm:$0xff]
      %v2602 = vld [vmem:[%s7 + $0x18] sm:$0xff]
      %v2603 = vld [vmem:[%s7 + $0x20] sm:$0xf]
      %s2604 = scalar_lea.vmem [#allocation2], 2688
      %v2605 = vld [vmem:[%s2604 + $0x6] sm:$0xff]
      %v2606 = vld [vmem:[%s2604 + $0x26] sm:$0xff]
      %v2607 = vld [vmem:[%s2604 + $0x46] sm:$0xff]
      %v2608 = vld [vmem:[%s2604 + $0x66] sm:$0xff]
      %v2609 = vld [vmem:[%s2604 + $0x86] sm:$0xff]
      %v2610 = vld [vmem:[%s2604 + $0xa6] sm:$0xff]
      %v2611 = vld [vmem:[%s2604 + $0xc6] sm:$0xff]
      %v2612 = vld [vmem:[%s2604 + $0xe6] sm:$0xff]
      %2613 = vst.msk [vmem:[#allocation3] sm:$0xff] %vm831, %v2605
      %2614 = vst.msk [vmem:[#allocation3 + $0x8] sm:$0xff] %vm831, %v2606
      %2615 = vst.msk [vmem:[#allocation3 + $0x10] sm:$0xff] %vm831, %v2607
      %2616 = vst.msk [vmem:[#allocation3 + $0x18] sm:$0xff] %vm831, %v2608
      %2617 = vst.msk [vmem:[#allocation3 + $0x20] sm:$0xff] %vm831, %v2609
      %2618 = vst.msk [vmem:[#allocation3 + $0x28] sm:$0xff] %vm831, %v2610
      %2619 = vst.msk [vmem:[#allocation3 + $0x30] sm:$0xff] %vm831, %v2611
      %2620 = vst.msk [vmem:[#allocation3 + $0x38] sm:$0xff] %vm831, %v2612
      %v2621 = vld [vmem:[%s2604 + $0x9] sm:$0xff]
      %v2622 = vld [vmem:[%s2604 + $0x29] sm:$0xff]
      %v2623 = vld [vmem:[%s2604 + $0x49] sm:$0xff]
      %v2624 = vld [vmem:[%s2604 + $0x69] sm:$0xff]
      %v2625 = vld [vmem:[%s2604 + $0x89] sm:$0xff]
      %v2626 = vld [vmem:[%s2604 + $0xa9] sm:$0xff]
      %v2627 = vld [vmem:[%s2604 + $0xc9] sm:$0xff]
      %v2628 = vld [vmem:[%s2604 + $0xe9] sm:$0xff]
      %2637 = vrot.lane.b32.xlu0 %v2621, 4
      %v2638 = vpop.permute.xlu0 %2637
      %2639 = vrot.lane.b32.xlu0 %v2622, 4
      %v2640 = vpop.permute.xlu0 %2639
      %2641 = vrot.lane.b32.xlu0 %v2623, 4
      %v2642 = vpop.permute.xlu0 %2641
      %2643 = vrot.lane.b32.xlu0 %v2624, 4
      %v2644 = vpop.permute.xlu0 %2643
      %2645 = vrot.lane.b32.xlu0 %v2625, 4
      %v2646 = vpop.permute.xlu0 %2645
      %2647 = vrot.lane.b32.xlu0 %v2626, 4
      %v2648 = vpop.permute.xlu0 %2647
      %2649 = vrot.lane.b32.xlu0 %v2627, 4
      %v2650 = vpop.permute.xlu0 %2649
      %2651 = vrot.lane.b32.xlu0 %v2628, 4
      %v2652 = vpop.permute.xlu0 %2651
      %2661 = vst.msk [vmem:[#allocation3] sm:$0xff] %vm2238, %v2638
      %2662 = vst.msk [vmem:[#allocation3 + $0x8] sm:$0xff] %vm2238, %v2640
      %2663 = vst.msk [vmem:[#allocation3 + $0x10] sm:$0xff] %vm2238, %v2642
      %2664 = vst.msk [vmem:[#allocation3 + $0x18] sm:$0xff] %vm2238, %v2644
      %2665 = vst.msk [vmem:[#allocation3 + $0x20] sm:$0xff] %vm2238, %v2646
      %2666 = vst.msk [vmem:[#allocation3 + $0x28] sm:$0xff] %vm2238, %v2648
      %2667 = vst.msk [vmem:[#allocation3 + $0x30] sm:$0xff] %vm2238, %v2650
      %2668 = vst.msk [vmem:[#allocation3 + $0x38] sm:$0xff] %vm2238, %v2652
      %v2669 = vld [vmem:[%s2604 + $0xc] sm:$0xff]
      %v2670 = vld [vmem:[%s2604 + $0x2c] sm:$0xff]
      %v2671 = vld [vmem:[%s2604 + $0x4c] sm:$0xff]
      %v2672 = vld [vmem:[%s2604 + $0x6c] sm:$0xff]
      %v2673 = vld [vmem:[%s2604 + $0x8c] sm:$0xff]
      %v2674 = vld [vmem:[%s2604 + $0xac] sm:$0xff]
      %v2675 = vld [vmem:[%s2604 + $0xcc] sm:$0xff]
      %v2676 = vld [vmem:[%s2604 + $0xec] sm:$0xff]
      %2685 = vrot.lane.b32.xlu0 %v2669, 8
      %v2686 = vpop.permute.xlu0 %2685
      %2687 = vrot.lane.b32.xlu0 %v2670, 8
      %v2688 = vpop.permute.xlu0 %2687
      %2689 = vrot.lane.b32.xlu0 %v2671, 8
      %v2690 = vpop.permute.xlu0 %2689
      %2691 = vrot.lane.b32.xlu0 %v2672, 8
      %v2692 = vpop.permute.xlu0 %2691
      %2693 = vrot.lane.b32.xlu0 %v2673, 8
      %v2694 = vpop.permute.xlu0 %2693
      %2695 = vrot.lane.b32.xlu0 %v2674, 8
      %v2696 = vpop.permute.xlu0 %2695
      %2697 = vrot.lane.b32.xlu0 %v2675, 8
      %v2698 = vpop.permute.xlu0 %2697
      %2699 = vrot.lane.b32.xlu0 %v2676, 8
      %v2700 = vpop.permute.xlu0 %2699
      %2709 = vst.msk [vmem:[#allocation3] sm:$0xff] %vm2287, %v2686
      %2710 = vst.msk [vmem:[#allocation3 + $0x8] sm:$0xff] %vm2287, %v2688
      %2711 = vst.msk [vmem:[#allocation3 + $0x10] sm:$0xff] %vm2287, %v2690
      %2712 = vst.msk [vmem:[#allocation3 + $0x18] sm:$0xff] %vm2287, %v2692
      %2713 = vst.msk [vmem:[#allocation3 + $0x20] sm:$0xff] %vm2287, %v2694
      %2714 = vst.msk [vmem:[#allocation3 + $0x28] sm:$0xff] %vm2287, %v2696
      %2715 = vst.msk [vmem:[#allocation3 + $0x30] sm:$0xff] %vm2287, %v2698
      %2716 = vst.msk [vmem:[#allocation3 + $0x38] sm:$0xff] %vm2287, %v2700
      %v2717 = vld [vmem:[%s1620 + $0x6] sm:$0xff]
      %v2718 = vld [vmem:[%s1620 + $0x26] sm:$0xff]
      %v2719 = vld [vmem:[%s1620 + $0x46] sm:$0xff]
      %v2720 = vld [vmem:[%s1620 + $0x66] sm:$0xff]
      %v2721 = vld [vmem:[%s1620 + $0x86] sm:$0xff]
      %v2722 = vld [vmem:[%s1620 + $0xa6] sm:$0xff]
      %v2723 = vld [vmem:[%s1620 + $0xc6] sm:$0xff]
      %v2724 = vld [vmem:[%s1620 + $0xe6] sm:$0xff]
      %2733 = vrot.lane.b32.xlu0 %v2717, 12
      %v2734 = vpop.permute.xlu0 %2733
      %2735 = vrot.lane.b32.xlu0 %v2718, 12
      %v2736 = vpop.permute.xlu0 %2735
      %2737 = vrot.lane.b32.xlu0 %v2719, 12
      %v2738 = vpop.permute.xlu0 %2737
      %2739 = vrot.lane.b32.xlu0 %v2720, 12
      %v2740 = vpop.permute.xlu0 %2739
      %2741 = vrot.lane.b32.xlu0 %v2721, 12
      %v2742 = vpop.permute.xlu0 %2741
      %2743 = vrot.lane.b32.xlu0 %v2722, 12
      %v2744 = vpop.permute.xlu0 %2743
      %2745 = vrot.lane.b32.xlu0 %v2723, 12
      %v2746 = vpop.permute.xlu0 %2745
      %2747 = vrot.lane.b32.xlu0 %v2724, 12
      %v2748 = vpop.permute.xlu0 %2747
      %2757 = vst.msk [vmem:[#allocation3] sm:$0xff] %vm2336, %v2734
      %2758 = vst.msk [vmem:[#allocation3 + $0x8] sm:$0xff] %vm2336, %v2736
      %2759 = vst.msk [vmem:[#allocation3 + $0x10] sm:$0xff] %vm2336, %v2738
      %2760 = vst.msk [vmem:[#allocation3 + $0x18] sm:$0xff] %vm2336, %v2740
      %2761 = vst.msk [vmem:[#allocation3 + $0x20] sm:$0xff] %vm2336, %v2742
      %2762 = vst.msk [vmem:[#allocation3 + $0x28] sm:$0xff] %vm2336, %v2744
      %2763 = vst.msk [vmem:[#allocation3 + $0x30] sm:$0xff] %vm2336, %v2746
      %2764 = vst.msk [vmem:[#allocation3 + $0x38] sm:$0xff] %vm2336, %v2748
      %v2765 = vld [vmem:[%s1620 + $0x9] sm:$0xff]
      %v2766 = vld [vmem:[%s1620 + $0x29] sm:$0xff]
      %v2767 = vld [vmem:[%s1620 + $0x49] sm:$0xff]
      %v2768 = vld [vmem:[%s1620 + $0x69] sm:$0xff]
      %v2769 = vld [vmem:[%s1620 + $0x89] sm:$0xff]
      %v2770 = vld [vmem:[%s1620 + $0xa9] sm:$0xff]
      %v2771 = vld [vmem:[%s1620 + $0xc9] sm:$0xff]
      %v2772 = vld [vmem:[%s1620 + $0xe9] sm:$0xff]
      %2781 = vrot.lane.b32.xlu0 %v2765, 16
      %v2782 = vpop.permute.xlu0 %2781
      %2783 = vrot.lane.b32.xlu0 %v2766, 16
      %v2784 = vpop.permute.xlu0 %2783
      %2785 = vrot.lane.b32.xlu0 %v2767, 16
      %v2786 = vpop.permute.xlu0 %2785
      %2787 = vrot.lane.b32.xlu0 %v2768, 16
      %v2788 = vpop.permute.xlu0 %2787
      %2789 = vrot.lane.b32.xlu0 %v2769, 16
      %v2790 = vpop.permute.xlu0 %2789
      %2791 = vrot.lane.b32.xlu0 %v2770, 16
      %v2792 = vpop.permute.xlu0 %2791
      %2793 = vrot.lane.b32.xlu0 %v2771, 16
      %v2794 = vpop.permute.xlu0 %2793
      %2795 = vrot.lane.b32.xlu0 %v2772, 16
      %v2796 = vpop.permute.xlu0 %2795
      %2805 = vst.msk [vmem:[#allocation3] sm:$0xff] %vm2385, %v2782
      %2806 = vst.msk [vmem:[#allocation3 + $0x8] sm:$0xff] %vm2385, %v2784
      %2807 = vst.msk [vmem:[#allocation3 + $0x10] sm:$0xff] %vm2385, %v2786
      %2808 = vst.msk [vmem:[#allocation3 + $0x18] sm:$0xff] %vm2385, %v2788
      %2809 = vst.msk [vmem:[#allocation3 + $0x20] sm:$0xff] %vm2385, %v2790
      %2810 = vst.msk [vmem:[#allocation3 + $0x28] sm:$0xff] %vm2385, %v2792
      %2811 = vst.msk [vmem:[#allocation3 + $0x30] sm:$0xff] %vm2385, %v2794
      %2812 = vst.msk [vmem:[#allocation3 + $0x38] sm:$0xff] %vm2385, %v2796
      %v2813 = vld [vmem:[%s1620 + $0xc] sm:$0xff]
      %v2814 = vld [vmem:[%s1620 + $0x2c] sm:$0xff]
      %v2815 = vld [vmem:[%s1620 + $0x4c] sm:$0xff]
      %v2816 = vld [vmem:[%s1620 + $0x6c] sm:$0xff]
      %v2817 = vld [vmem:[%s1620 + $0x8c] sm:$0xff]
      %v2818 = vld [vmem:[%s1620 + $0xac] sm:$0xff]
      %v2819 = vld [vmem:[%s1620 + $0xcc] sm:$0xff]
      %v2820 = vld [vmem:[%s1620 + $0xec] sm:$0xff]
      %2829 = vrot.lane.b32.xlu0 %v2813, 20
      %v2830 = vpop.permute.xlu0 %2829
      %2831 = vrot.lane.b32.xlu0 %v2814, 20
      %v2832 = vpop.permute.xlu0 %2831
      %2833 = vrot.lane.b32.xlu0 %v2815, 20
      %v2834 = vpop.permute.xlu0 %2833
      %2835 = vrot.lane.b32.xlu0 %v2816, 20
      %v2836 = vpop.permute.xlu0 %2835
      %2837 = vrot.lane.b32.xlu0 %v2817, 20
      %v2838 = vpop.permute.xlu0 %2837
      %2839 = vrot.lane.b32.xlu0 %v2818, 20
      %v2840 = vpop.permute.xlu0 %2839
      %2841 = vrot.lane.b32.xlu0 %v2819, 20
      %v2842 = vpop.permute.xlu0 %2841
      %2843 = vrot.lane.b32.xlu0 %v2820, 20
      %v2844 = vpop.permute.xlu0 %2843
      %2853 = vst.msk [vmem:[#allocation3] sm:$0xff] %vm2434, %v2830
      %2854 = vst.msk [vmem:[#allocation3 + $0x8] sm:$0xff] %vm2434, %v2832
      %2855 = vst.msk [vmem:[#allocation3 + $0x10] sm:$0xff] %vm2434, %v2834
      %2856 = vst.msk [vmem:[#allocation3 + $0x18] sm:$0xff] %vm2434, %v2836
      %2857 = vst.msk [vmem:[#allocation3 + $0x20] sm:$0xff] %vm2434, %v2838
      %2858 = vst.msk [vmem:[#allocation3 + $0x28] sm:$0xff] %vm2434, %v2840
      %2859 = vst.msk [vmem:[#allocation3 + $0x30] sm:$0xff] %vm2434, %v2842
      %2860 = vst.msk [vmem:[#allocation3 + $0x38] sm:$0xff] %vm2434, %v2844
      %s2861 = scalar_lea.vmem [#allocation2], 2880
      %v2862 = vld [vmem:[%s2861 + $0x6] sm:$0xff]
      %v2863 = vld [vmem:[%s2861 + $0x26] sm:$0xff]
      %v2864 = vld [vmem:[%s2861 + $0x46] sm:$0xff]
      %v2865 = vld [vmem:[%s2861 + $0x66] sm:$0xff]
      %v2866 = vld [vmem:[%s2861 + $0x86] sm:$0xff]
      %v2867 = vld [vmem:[%s2861 + $0xa6] sm:$0xff]
      %v2868 = vld [vmem:[%s2861 + $0xc6] sm:$0xff]
      %v2869 = vld [vmem:[%s2861 + $0xe6] sm:$0xff]
      %2878 = vrot.lane.b32.xlu0 %v2862, 24
      %v2879 = vpop.permute.xlu0 %2878
      %2880 = vrot.lane.b32.xlu0 %v2863, 24
      %v2881 = vpop.permute.xlu0 %2880
      %2882 = vrot.lane.b32.xlu0 %v2864, 24
      %v2883 = vpop.permute.xlu0 %2882
      %2884 = vrot.lane.b32.xlu0 %v2865, 24
      %v2885 = vpop.permute.xlu0 %2884
      %2886 = vrot.lane.b32.xlu0 %v2866, 24
      %v2887 = vpop.permute.xlu0 %2886
      %2888 = vrot.lane.b32.xlu0 %v2867, 24
      %v2889 = vpop.permute.xlu0 %2888
      %2890 = vrot.lane.b32.xlu0 %v2868, 24
      %v2891 = vpop.permute.xlu0 %2890
      %2892 = vrot.lane.b32.xlu0 %v2869, 24
      %v2893 = vpop.permute.xlu0 %2892
      %2902 = vst.msk [vmem:[#allocation3] sm:$0xff] %vm2484, %v2879
      %2903 = vst.msk [vmem:[#allocation3 + $0x8] sm:$0xff] %vm2484, %v2881
      %2904 = vst.msk [vmem:[#allocation3 + $0x10] sm:$0xff] %vm2484, %v2883
      %2905 = vst.msk [vmem:[#allocation3 + $0x18] sm:$0xff] %vm2484, %v2885
      %2906 = vst.msk [vmem:[#allocation3 + $0x20] sm:$0xff] %vm2484, %v2887
      %2907 = vst.msk [vmem:[#allocation3 + $0x28] sm:$0xff] %vm2484, %v2889
      %2908 = vst.msk [vmem:[#allocation3 + $0x30] sm:$0xff] %vm2484, %v2891
      %2909 = vst.msk [vmem:[#allocation3 + $0x38] sm:$0xff] %vm2484, %v2893
      %v2910 = vld [vmem:[%s2861 + $0x9] sm:$0xff]
      %v2911 = vld [vmem:[%s2861 + $0x29] sm:$0xff]
      %v2912 = vld [vmem:[%s2861 + $0x49] sm:$0xff]
      %v2913 = vld [vmem:[%s2861 + $0x69] sm:$0xff]
      %v2914 = vld [vmem:[%s2861 + $0x89] sm:$0xff]
      %v2915 = vld [vmem:[%s2861 + $0xa9] sm:$0xff]
      %v2916 = vld [vmem:[%s2861 + $0xc9] sm:$0xff]
      %v2917 = vld [vmem:[%s2861 + $0xe9] sm:$0xff]
      %2926 = vrot.lane.b32.xlu0 %v2910, 28
      %v2927 = vpop.permute.xlu0 %2926
      %2928 = vrot.lane.b32.xlu0 %v2911, 28
      %v2929 = vpop.permute.xlu0 %2928
      %2930 = vrot.lane.b32.xlu0 %v2912, 28
      %v2931 = vpop.permute.xlu0 %2930
      %2932 = vrot.lane.b32.xlu0 %v2913, 28
      %v2933 = vpop.permute.xlu0 %2932
      %2934 = vrot.lane.b32.xlu0 %v2914, 28
      %v2935 = vpop.permute.xlu0 %2934
      %2936 = vrot.lane.b32.xlu0 %v2915, 28
      %v2937 = vpop.permute.xlu0 %2936
      %2938 = vrot.lane.b32.xlu0 %v2916, 28
      %v2939 = vpop.permute.xlu0 %2938
      %2940 = vrot.lane.b32.xlu0 %v2917, 28
      %v2941 = vpop.permute.xlu0 %2940
      %2950 = vst.msk [vmem:[#allocation3] sm:$0xff] %vm2533, %v2927
      %2951 = vst.msk [vmem:[#allocation3 + $0x8] sm:$0xff] %vm2533, %v2929
      %2952 = vst.msk [vmem:[#allocation3 + $0x10] sm:$0xff] %vm2533, %v2931
      %2953 = vst.msk [vmem:[#allocation3 + $0x18] sm:$0xff] %vm2533, %v2933
      %2954 = vst.msk [vmem:[#allocation3 + $0x20] sm:$0xff] %vm2533, %v2935
      %2955 = vst.msk [vmem:[#allocation3 + $0x28] sm:$0xff] %vm2533, %v2937
      %2956 = vst.msk [vmem:[#allocation3 + $0x30] sm:$0xff] %vm2533, %v2939
      %2957 = vst.msk [vmem:[#allocation3 + $0x38] sm:$0xff] %vm2533, %v2941
      %v2958 = vld [vmem:[%s2861 + $0xc] sm:$0xff]
      %v2959 = vld [vmem:[%s2861 + $0x2c] sm:$0xff]
      %v2960 = vld [vmem:[%s2861 + $0x4c] sm:$0xff]
      %v2961 = vld [vmem:[%s2861 + $0x6c] sm:$0xff]
      %v2962 = vld [vmem:[%s2861 + $0x8c] sm:$0xff]
      %v2963 = vld [vmem:[%s2861 + $0xac] sm:$0xff]
      %v2964 = vld [vmem:[%s2861 + $0xcc] sm:$0xff]
      %v2965 = vld [vmem:[%s2861 + $0xec] sm:$0xff]
      %2974 = vrot.lane.b32.xlu0 %v2958, 32
      %v2975 = vpop.permute.xlu0 %2974
      %2976 = vrot.lane.b32.xlu0 %v2959, 32
      %v2977 = vpop.permute.xlu0 %2976
      %2978 = vrot.lane.b32.xlu0 %v2960, 32
      %v2979 = vpop.permute.xlu0 %2978
      %2980 = vrot.lane.b32.xlu0 %v2961, 32
      %v2981 = vpop.permute.xlu0 %2980
      %2982 = vrot.lane.b32.xlu0 %v2962, 32
      %v2983 = vpop.permute.xlu0 %2982
      %2984 = vrot.lane.b32.xlu0 %v2963, 32
      %v2985 = vpop.permute.xlu0 %2984
      %2986 = vrot.lane.b32.xlu0 %v2964, 32
      %v2987 = vpop.permute.xlu0 %2986
      %2988 = vrot.lane.b32.xlu0 %v2965, 32
      %v2989 = vpop.permute.xlu0 %2988
      %2998 = vst.msk [vmem:[#allocation3] sm:$0xff] %vm2582, %v2975
      %2999 = vst.msk [vmem:[#allocation3 + $0x8] sm:$0xff] %vm2582, %v2977
      %3000 = vst.msk [vmem:[#allocation3 + $0x10] sm:$0xff] %vm2582, %v2979
      %3001 = vst.msk [vmem:[#allocation3 + $0x18] sm:$0xff] %vm2582, %v2981
      %3002 = vst.msk [vmem:[#allocation3 + $0x20] sm:$0xff] %vm2582, %v2983
      %3003 = vst.msk [vmem:[#allocation3 + $0x28] sm:$0xff] %vm2582, %v2985
      %3004 = vst.msk [vmem:[#allocation3 + $0x30] sm:$0xff] %vm2582, %v2987
      %3005 = vst.msk [vmem:[#allocation3 + $0x38] sm:$0xff] %vm2582, %v2989
      %v3006 = vld [vmem:[#allocation3] sm:$0xff]
      %v3007 = vld [vmem:[#allocation3 + $0x8] sm:$0xff]
      %v3008 = vld [vmem:[#allocation3 + $0x10] sm:$0xff]
      %v3009 = vld [vmem:[#allocation3 + $0x18] sm:$0xff]
      %v3010 = vld [vmem:[#allocation3 + $0x20] sm:$0xff]
      %v3011 = vld [vmem:[#allocation3 + $0x28] sm:$0xff]
      %v3012 = vld [vmem:[#allocation3 + $0x30] sm:$0xff]
      %v3013 = vld [vmem:[#allocation3 + $0x38] sm:$0xff]
      %s3014 = scalar_lea.vmem %s7, 40
      %v3015 = vld [vmem:[%s3014] sm:$0xff]
      %v3016 = vld [vmem:[%s3014 + $0x8] sm:$0xff]
      %v3017 = vld [vmem:[%s3014 + $0x10] sm:$0xff]
      %v3018 = vld [vmem:[%s3014 + $0x18] sm:$0xff]
      %v3019 = vld [vmem:[%s3014 + $0x20] sm:$0xf]
      %vm3020 = vcmask 293888
      %v3022 = vsel %vm3020, %v3006, 0
      %v3025 = vsel %vm3020, %v3007, 0
      %v3028 = vsel %vm3020, %v3008, 0
      %v3031 = vsel %vm3020, %v3009, 0
      %v3034 = vsel %vm3020, %v3010, 0
      %v3037 = vsel %vm3020, %v3011, 0
      %v3040 = vsel %vm3020, %v3012, 0
      %v3043 = vsel %vm3020, %v3013, 0
      %v3046 = vsel %vm1720, %v3019, 0
      %3048 = vmatprep.subr.mxu0 0.0
      %3049 = vmatpush1.msra.mxu0 %v3015
      %3050 = vmatprep.subr.mxu0 0.0
      %3051 = vmatpush1.msra.mxu0 %v3016
      %3052 = vmatprep.subr.mxu0 0.0
      %3053 = vmatpush1.msra.mxu0 %v3017
      %3054 = vmatprep.subr.mxu0 0.0
      %3055 = vmatpush1.msra.mxu0 %v3018
      %3056 = vmatprep.subr.mxu0 0.0
      %3057 = vmatpush1.msra.mxu0 %v3046
      %3058 = vmatprep.subr.mxu0 0.0
      %3059 = vmatpush1.msra.mxu0 0.0
      %3060 = vmatprep.subr.mxu0 0.0
      %3061 = vmatpush1.msra.mxu0 0.0
      %3062 = vmatprep.subr.mxu0 0.0
      %3063 = vmatpush1.msra.mxu0 0.0
      %3064 = vmatprep.subr.mxu0 0.0
      %3065 = vmatpush1.msra.mxu0 0.0
      %3066 = vmatprep.subr.mxu0 0.0
      %3067 = vmatpush1.msra.mxu0 0.0
      %3068 = vmatprep.subr.mxu0 0.0
      %3069 = vmatpush1.msra.mxu0 0.0
      %3070 = vmatprep.subr.mxu0 0.0
      %3071 = vmatpush1.msra.mxu0 0.0
      %3072 = vmatprep.subr.mxu0 0.0
      %3073 = vmatpush1.msra.mxu0 0.0
      %3074 = vmatprep.subr.mxu0 0.0
      %3075 = vmatpush1.msra.mxu0 0.0
      %3076 = vmatprep.subr.mxu0 0.0
      %3077 = vmatpush1.msra.mxu0 0.0
      %3078 = vmatprep.subr.mxu0 0.0
      %3079 = vmatpush1.msra.mxu0 0.0
      %3080 = vmatprep.subr.mxu0 0.0
      %3081 = vmatpush1.msra.mxu0 0.0
      %3082 = vmatprep.subr.mxu0 0.0
      %3083 = vmatpush1.msra.mxu0 0.0
      %3084 = vmatprep.subr.mxu0 0.0
      %3085 = vmatpush1.msra.mxu0 0.0
      %3086 = vmatprep.subr.mxu0 0.0
      %3087 = vmatpush1.msra.mxu0 0.0
      %3088 = vmatprep.subr.mxu0 0.0
      %3089 = vmatpush1.msra.mxu0 0.0
      %3090 = vmatprep.subr.mxu0 0.0
      %3091 = vmatpush1.msra.mxu0 0.0
      %3092 = vmatprep.subr.mxu0 0.0
      %3093 = vmatpush1.msra.mxu0 0.0
      %3094 = vmatprep.subr.mxu0 0.0
      %3095 = vmatpush1.msra.mxu0 0.0
      %3096 = vmatprep.subr.mxu0 0.0
      %3097 = vmatpush1.msra.mxu0 0.0
      %3098 = vmatprep.subr.mxu0 0.0
      %3099 = vmatpush1.msra.mxu0 0.0
      %3100 = vmatprep.subr.mxu0 0.0
      %3101 = vmatpush1.msra.mxu0 0.0
      %3102 = vmatprep.subr.mxu0 0.0
      %3103 = vmatpush1.msra.mxu0 0.0
      %3104 = vmatprep.subr.mxu0 0.0
      %3105 = vmatpush1.msra.mxu0 0.0
      %3106 = vmatprep.subr.mxu0 0.0
      %3107 = vmatpush1.msra.mxu0 0.0
      %3108 = vmatprep.subr.mxu0 0.0
      %3109 = vmatpush1.msra.mxu0 0.0
      %3110 = vmatprep.subr.mxu0 0.0
      %3111 = vmatpush1.msra.mxu0 0.0
      %3112 = vmatprep.mubr.f32.mxu0 0.0
      %3113 = vmatmul.mubr.f32.gmra.mrb[0].mxu0 %v3022
      %v3114 = vpop.f32.mrb[0].mxu0
      %v3115 = vadd.f32 0.0, %v3114
      %v3116 = vpop.f32.mrb[0].mxu0
      %3117 = vmatprep.mubr.f32.mxu0 0.0
      %3118 = vmatmul.mubr.f32.gmra.mrb[0].mxu0 %v3025
      %v3119 = vpop.f32.mrb[0].mxu0
      %v3120 = vadd.f32 0.0, %v3119
      %v3121 = vpop.f32.mrb[0].mxu0
      %3122 = vmatprep.mubr.f32.mxu0 0.0
      %3123 = vmatmul.mubr.f32.gmra.mrb[0].mxu0 %v3028
      %v3124 = vpop.f32.mrb[0].mxu0
      %v3125 = vadd.f32 0.0, %v3124
      %v3126 = vpop.f32.mrb[0].mxu0
      %3127 = vmatprep.mubr.f32.mxu0 0.0
      %3128 = vmatmul.mubr.f32.gmra.mrb[0].mxu0 %v3031
      %v3129 = vpop.f32.mrb[0].mxu0
      %v3130 = vadd.f32 0.0, %v3129
      %v3131 = vpop.f32.mrb[0].mxu0
      %3132 = vmatprep.mubr.f32.mxu0 0.0
      %3133 = vmatmul.mubr.f32.gmra.mrb[0].mxu0 %v3034
      %v3134 = vpop.f32.mrb[0].mxu0
      %v3135 = vadd.f32 0.0, %v3134
      %v3136 = vpop.f32.mrb[0].mxu0
      %3137 = vmatprep.mubr.f32.mxu0 0.0
      %3138 = vmatmul.mubr.f32.gmra.mrb[0].mxu0 %v3037
      %v3139 = vpop.f32.mrb[0].mxu0
      %v3140 = vadd.f32 0.0, %v3139
      %v3141 = vpop.f32.mrb[0].mxu0
      %3142 = vmatprep.mubr.f32.mxu0 0.0
      %3143 = vmatmul.mubr.f32.gmra.mrb[0].mxu0 %v3040
      %v3144 = vpop.f32.mrb[0].mxu0
      %v3145 = vadd.f32 0.0, %v3144
      %v3146 = vpop.f32.mrb[0].mxu0
      %3147 = vmatprep.mubr.f32.mxu0 0.0
      %3148 = vmatmul.mubr.f32.gmra.mrb[0].mxu0 %v3043
      %v3149 = vpop.f32.mrb[0].mxu0
      %v3150 = vadd.f32 0.0, %v3149
      %v3151 = vpop.f32.mrb[0].mxu0
      %3152 = vdwg.mxu0
      %v3154 = vsel %vm3020, %v2591, 0
      %v3157 = vsel %vm3020, %v2592, 0
      %v3160 = vsel %vm3020, %v2593, 0
      %v3163 = vsel %vm3020, %v2594, 0
      %v3166 = vsel %vm3020, %v2595, 0
      %v3169 = vsel %vm3020, %v2596, 0
      %v3172 = vsel %vm3020, %v2597, 0
      %v3175 = vsel %vm3020, %v2598, 0
      %v3178 = vsel %vm1720, %v2603, 0
      %3180 = vmatprep.subr.mxu0 0.0
      %3181 = vmatpush1.msra.mxu0 %v2599
      %3182 = vmatprep.subr.mxu0 0.0
      %3183 = vmatpush1.msra.mxu0 %v2600
      %3184 = vmatprep.subr.mxu0 0.0
      %3185 = vmatpush1.msra.mxu0 %v2601
      %3186 = vmatprep.subr.mxu0 0.0
      %3187 = vmatpush1.msra.mxu0 %v2602
      %3188 = vmatprep.subr.mxu0 0.0
      %3189 = vmatpush1.msra.mxu0 %v3178
      %3190 = vmatprep.subr.mxu0 0.0
      %3191 = vmatpush1.msra.mxu0 0.0
      %3192 = vmatprep.subr.mxu0 0.0
      %3193 = vmatpush1.msra.mxu0 0.0
      %3194 = vmatprep.subr.mxu0 0.0
      %3195 = vmatpush1.msra.mxu0 0.0
      %3196 = vmatprep.subr.mxu0 0.0
      %3197 = vmatpush1.msra.mxu0 0.0
      %3198 = vmatprep.subr.mxu0 0.0
      %3199 = vmatpush1.msra.mxu0 0.0
      %3200 = vmatprep.subr.mxu0 0.0
      %3201 = vmatpush1.msra.mxu0 0.0
      %3202 = vmatprep.subr.mxu0 0.0
      %3203 = vmatpush1.msra.mxu0 0.0
      %3204 = vmatprep.subr.mxu0 0.0
      %3205 = vmatpush1.msra.mxu0 0.0
      %3206 = vmatprep.subr.mxu0 0.0
      %3207 = vmatpush1.msra.mxu0 0.0
      %3208 = vmatprep.subr.mxu0 0.0
      %3209 = vmatpush1.msra.mxu0 0.0
      %3210 = vmatprep.subr.mxu0 0.0
      %3211 = vmatpush1.msra.mxu0 0.0
      %3212 = vmatprep.subr.mxu0 0.0
      %3213 = vmatpush1.msra.mxu0 0.0
      %3214 = vmatprep.subr.mxu0 0.0
      %3215 = vmatpush1.msra.mxu0 0.0
      %3216 = vmatprep.subr.mxu0 0.0
      %3217 = vmatpush1.msra.mxu0 0.0
      %3218 = vmatprep.subr.mxu0 0.0
      %3219 = vmatpush1.msra.mxu0 0.0
      %3220 = vmatprep.subr.mxu0 0.0
      %3221 = vmatpush1.msra.mxu0 0.0
      %3222 = vmatprep.subr.mxu0 0.0
      %3223 = vmatpush1.msra.mxu0 0.0
      %3224 = vmatprep.subr.mxu0 0.0
      %3225 = vmatpush1.msra.mxu0 0.0
      %3226 = vmatprep.subr.mxu0 0.0
      %3227 = vmatpush1.msra.mxu0 0.0
      %3228 = vmatprep.subr.mxu0 0.0
      %3229 = vmatpush1.msra.mxu0 0.0
      %3230 = vmatprep.subr.mxu0 0.0
      %3231 = vmatpush1.msra.mxu0 0.0
      %3232 = vmatprep.subr.mxu0 0.0
      %3233 = vmatpush1.msra.mxu0 0.0
      %3234 = vmatprep.subr.mxu0 0.0
      %3235 = vmatpush1.msra.mxu0 0.0
      %3236 = vmatprep.subr.mxu0 0.0
      %3237 = vmatpush1.msra.mxu0 0.0
      %3238 = vmatprep.subr.mxu0 0.0
      %3239 = vmatpush1.msra.mxu0 0.0
      %3240 = vmatprep.subr.mxu0 0.0
      %3241 = vmatpush1.msra.mxu0 0.0
      %3242 = vmatprep.subr.mxu0 0.0
      %3243 = vmatpush1.msra.mxu0 0.0
      %3244 = vmatprep.mubr.f32.mxu0 0.0
      %3245 = vmatmul.mubr.f32.gmra.mrb[0].mxu0 %v3154
      %v3246 = vpop.f32.mrb[0].mxu0
      %v3247 = vadd.f32 %v3115, %v3246
      %v3248 = vpop.f32.mrb[0].mxu0
      %3249 = vmatprep.mubr.f32.mxu0 0.0
      %3250 = vmatmul.mubr.f32.gmra.mrb[0].mxu0 %v3157
      %v3251 = vpop.f32.mrb[0].mxu0
      %v3252 = vadd.f32 %v3120, %v3251
      %v3253 = vpop.f32.mrb[0].mxu0
      %3254 = vmatprep.mubr.f32.mxu0 0.0
      %3255 = vmatmul.mubr.f32.gmra.mrb[0].mxu0 %v3160
      %v3256 = vpop.f32.mrb[0].mxu0
      %v3257 = vadd.f32 %v3125, %v3256
      %v3258 = vpop.f32.mrb[0].mxu0
      %3259 = vmatprep.mubr.f32.mxu0 0.0
      %3260 = vmatmul.mubr.f32.gmra.mrb[0].mxu0 %v3163
      %v3261 = vpop.f32.mrb[0].mxu0
      %v3262 = vadd.f32 %v3130, %v3261
      %v3263 = vpop.f32.mrb[0].mxu0
      %3264 = vmatprep.mubr.f32.mxu0 0.0
      %3265 = vmatmul.mubr.f32.gmra.mrb[0].mxu0 %v3166
      %v3266 = vpop.f32.mrb[0].mxu0
      %v3267 = vadd.f32 %v3135, %v3266
      %v3268 = vpop.f32.mrb[0].mxu0
      %3269 = vmatprep.mubr.f32.mxu0 0.0
      %3270 = vmatmul.mubr.f32.gmra.mrb[0].mxu0 %v3169
      %v3271 = vpop.f32.mrb[0].mxu0
      %v3272 = vadd.f32 %v3140, %v3271
      %v3273 = vpop.f32.mrb[0].mxu0
      %3274 = vmatprep.mubr.f32.mxu0 0.0
      %3275 = vmatmul.mubr.f32.gmra.mrb[0].mxu0 %v3172
      %v3276 = vpop.f32.mrb[0].mxu0
      %v3277 = vadd.f32 %v3145, %v3276
      %v3278 = vpop.f32.mrb[0].mxu0
      %3279 = vmatprep.mubr.f32.mxu0 0.0
      %3280 = vmatmul.mubr.f32.gmra.mrb[0].mxu0 %v3175
      %v3281 = vpop.f32.mrb[0].mxu0
      %v3282 = vadd.f32 %v3150, %v3281
      %v3283 = vpop.f32.mrb[0].mxu0
      %3284 = vdwg.mxu0
      %s3285 = scalar_lea.vmem [#allocation2], 3520
      %v3286 = vld [vmem:[%s3285 + $0x6] sm:$0xff]
      %v3287 = vld [vmem:[%s3285 + $0x26] sm:$0xff]
      %v3288 = vld [vmem:[%s3285 + $0x46] sm:$0xff]
      %v3289 = vld [vmem:[%s3285 + $0x66] sm:$0xff]
      %v3290 = vld [vmem:[%s3285 + $0x86] sm:$0xff]
      %v3291 = vld [vmem:[%s3285 + $0xa6] sm:$0xff]
      %v3292 = vld [vmem:[%s3285 + $0xc6] sm:$0xff]
      %v3293 = vld [vmem:[%s3285 + $0xe6] sm:$0xff]
      %3294 = vst.msk [vmem:[#allocation3] sm:$0xff] %vm831, %v3286
      %3295 = vst.msk [vmem:[#allocation3 + $0x8] sm:$0xff] %vm831, %v3287
      %3296 = vst.msk [vmem:[#allocation3 + $0x10] sm:$0xff] %vm831, %v3288
      %3297 = vst.msk [vmem:[#allocation3 + $0x18] sm:$0xff] %vm831, %v3289
      %3298 = vst.msk [vmem:[#allocation3 + $0x20] sm:$0xff] %vm831, %v3290
      %3299 = vst.msk [vmem:[#allocation3 + $0x28] sm:$0xff] %vm831, %v3291
      %3300 = vst.msk [vmem:[#allocation3 + $0x30] sm:$0xff] %vm831, %v3292
      %3301 = vst.msk [vmem:[#allocation3 + $0x38] sm:$0xff] %vm831, %v3293
      %v3302 = vld [vmem:[%s3285 + $0x9] sm:$0xff]
      %v3303 = vld [vmem:[%s3285 + $0x29] sm:$0xff]
      %v3304 = vld [vmem:[%s3285 + $0x49] sm:$0xff]
      %v3305 = vld [vmem:[%s3285 + $0x69] sm:$0xff]
      %v3306 = vld [vmem:[%s3285 + $0x89] sm:$0xff]
      %v3307 = vld [vmem:[%s3285 + $0xa9] sm:$0xff]
      %v3308 = vld [vmem:[%s3285 + $0xc9] sm:$0xff]
      %v3309 = vld [vmem:[%s3285 + $0xe9] sm:$0xff]
      %3318 = vrot.lane.b32.xlu0 %v3302, 4
      %v3319 = vpop.permute.xlu0 %3318
      %3320 = vrot.lane.b32.xlu0 %v3303, 4
      %v3321 = vpop.permute.xlu0 %3320
      %3322 = vrot.lane.b32.xlu0 %v3304, 4
      %v3323 = vpop.permute.xlu0 %3322
      %3324 = vrot.lane.b32.xlu0 %v3305, 4
      %v3325 = vpop.permute.xlu0 %3324
      %3326 = vrot.lane.b32.xlu0 %v3306, 4
      %v3327 = vpop.permute.xlu0 %3326
      %3328 = vrot.lane.b32.xlu0 %v3307, 4
      %v3329 = vpop.permute.xlu0 %3328
      %3330 = vrot.lane.b32.xlu0 %v3308, 4
      %v3331 = vpop.permute.xlu0 %3330
      %3332 = vrot.lane.b32.xlu0 %v3309, 4
      %v3333 = vpop.permute.xlu0 %3332
      %3342 = vst.msk [vmem:[#allocation3] sm:$0xff] %vm2238, %v3319
      %3343 = vst.msk [vmem:[#allocation3 + $0x8] sm:$0xff] %vm2238, %v3321
      %3344 = vst.msk [vmem:[#allocation3 + $0x10] sm:$0xff] %vm2238, %v3323
      %3345 = vst.msk [vmem:[#allocation3 + $0x18] sm:$0xff] %vm2238, %v3325
      %3346 = vst.msk [vmem:[#allocation3 + $0x20] sm:$0xff] %vm2238, %v3327
      %3347 = vst.msk [vmem:[#allocation3 + $0x28] sm:$0xff] %vm2238, %v3329
      %3348 = vst.msk [vmem:[#allocation3 + $0x30] sm:$0xff] %vm2238, %v3331
      %3349 = vst.msk [vmem:[#allocation3 + $0x38] sm:$0xff] %vm2238, %v3333
      %v3350 = vld [vmem:[%s3285 + $0xc] sm:$0xff]
      %v3351 = vld [vmem:[%s3285 + $0x2c] sm:$0xff]
      %v3352 = vld [vmem:[%s3285 + $0x4c] sm:$0xff]
      %v3353 = vld [vmem:[%s3285 + $0x6c] sm:$0xff]
      %v3354 = vld [vmem:[%s3285 + $0x8c] sm:$0xff]
      %v3355 = vld [vmem:[%s3285 + $0xac] sm:$0xff]
      %v3356 = vld [vmem:[%s3285 + $0xcc] sm:$0xff]
      %v3357 = vld [vmem:[%s3285 + $0xec] sm:$0xff]
      %3366 = vrot.lane.b32.xlu0 %v3350, 8
      %v3367 = vpop.permute.xlu0 %3366
      %3368 = vrot.lane.b32.xlu0 %v3351, 8
      %v3369 = vpop.permute.xlu0 %3368
      %3370 = vrot.lane.b32.xlu0 %v3352, 8
      %v3371 = vpop.permute.xlu0 %3370
      %3372 = vrot.lane.b32.xlu0 %v3353, 8
      %v3373 = vpop.permute.xlu0 %3372
      %3374 = vrot.lane.b32.xlu0 %v3354, 8
      %v3375 = vpop.permute.xlu0 %3374
      %3376 = vrot.lane.b32.xlu0 %v3355, 8
      %v3377 = vpop.permute.xlu0 %3376
      %3378 = vrot.lane.b32.xlu0 %v3356, 8
      %v3379 = vpop.permute.xlu0 %3378
      %3380 = vrot.lane.b32.xlu0 %v3357, 8
      %v3381 = vpop.permute.xlu0 %3380
      %3390 = vst.msk [vmem:[#allocation3] sm:$0xff] %vm2287, %v3367
      %3391 = vst.msk [vmem:[#allocation3 + $0x8] sm:$0xff] %vm2287, %v3369
      %3392 = vst.msk [vmem:[#allocation3 + $0x10] sm:$0xff] %vm2287, %v3371
      %3393 = vst.msk [vmem:[#allocation3 + $0x18] sm:$0xff] %vm2287, %v3373
      %3394 = vst.msk [vmem:[#allocation3 + $0x20] sm:$0xff] %vm2287, %v3375
      %3395 = vst.msk [vmem:[#allocation3 + $0x28] sm:$0xff] %vm2287, %v3377
      %3396 = vst.msk [vmem:[#allocation3 + $0x30] sm:$0xff] %vm2287, %v3379
      %3397 = vst.msk [vmem:[#allocation3 + $0x38] sm:$0xff] %vm2287, %v3381
      %v3398 = vld [vmem:[%s1637 + $0x6] sm:$0xff]
      %v3399 = vld [vmem:[%s1637 + $0x26] sm:$0xff]
      %v3400 = vld [vmem:[%s1637 + $0x46] sm:$0xff]
      %v3401 = vld [vmem:[%s1637 + $0x66] sm:$0xff]
      %v3402 = vld [vmem:[%s1637 + $0x86] sm:$0xff]
      %v3403 = vld [vmem:[%s1637 + $0xa6] sm:$0xff]
      %v3404 = vld [vmem:[%s1637 + $0xc6] sm:$0xff]
      %v3405 = vld [vmem:[%s1637 + $0xe6] sm:$0xff]
      %3414 = vrot.lane.b32.xlu0 %v3398, 12
      %v3415 = vpop.permute.xlu0 %3414
      %3416 = vrot.lane.b32.xlu0 %v3399, 12
      %v3417 = vpop.permute.xlu0 %3416
      %3418 = vrot.lane.b32.xlu0 %v3400, 12
      %v3419 = vpop.permute.xlu0 %3418
      %3420 = vrot.lane.b32.xlu0 %v3401, 12
      %v3421 = vpop.permute.xlu0 %3420
      %3422 = vrot.lane.b32.xlu0 %v3402, 12
      %v3423 = vpop.permute.xlu0 %3422
      %3424 = vrot.lane.b32.xlu0 %v3403, 12
      %v3425 = vpop.permute.xlu0 %3424
      %3426 = vrot.lane.b32.xlu0 %v3404, 12
      %v3427 = vpop.permute.xlu0 %3426
      %3428 = vrot.lane.b32.xlu0 %v3405, 12
      %v3429 = vpop.permute.xlu0 %3428
      %3438 = vst.msk [vmem:[#allocation3] sm:$0xff] %vm2336, %v3415
      %3439 = vst.msk [vmem:[#allocation3 + $0x8] sm:$0xff] %vm2336, %v3417
      %3440 = vst.msk [vmem:[#allocation3 + $0x10] sm:$0xff] %vm2336, %v3419
      %3441 = vst.msk [vmem:[#allocation3 + $0x18] sm:$0xff] %vm2336, %v3421
      %3442 = vst.msk [vmem:[#allocation3 + $0x20] sm:$0xff] %vm2336, %v3423
      %3443 = vst.msk [vmem:[#allocation3 + $0x28] sm:$0xff] %vm2336, %v3425
      %3444 = vst.msk [vmem:[#allocation3 + $0x30] sm:$0xff] %vm2336, %v3427
      %3445 = vst.msk [vmem:[#allocation3 + $0x38] sm:$0xff] %vm2336, %v3429
      %v3446 = vld [vmem:[%s1637 + $0x9] sm:$0xff]
      %v3447 = vld [vmem:[%s1637 + $0x29] sm:$0xff]
      %v3448 = vld [vmem:[%s1637 + $0x49] sm:$0xff]
      %v3449 = vld [vmem:[%s1637 + $0x69] sm:$0xff]
      %v3450 = vld [vmem:[%s1637 + $0x89] sm:$0xff]
      %v3451 = vld [vmem:[%s1637 + $0xa9] sm:$0xff]
      %v3452 = vld [vmem:[%s1637 + $0xc9] sm:$0xff]
      %v3453 = vld [vmem:[%s1637 + $0xe9] sm:$0xff]
      %3462 = vrot.lane.b32.xlu0 %v3446, 16
      %v3463 = vpop.permute.xlu0 %3462
      %3464 = vrot.lane.b32.xlu0 %v3447, 16
      %v3465 = vpop.permute.xlu0 %3464
      %3466 = vrot.lane.b32.xlu0 %v3448, 16
      %v3467 = vpop.permute.xlu0 %3466
      %3468 = vrot.lane.b32.xlu0 %v3449, 16
      %v3469 = vpop.permute.xlu0 %3468
      %3470 = vrot.lane.b32.xlu0 %v3450, 16
      %v3471 = vpop.permute.xlu0 %3470
      %3472 = vrot.lane.b32.xlu0 %v3451, 16
      %v3473 = vpop.permute.xlu0 %3472
      %3474 = vrot.lane.b32.xlu0 %v3452, 16
      %v3475 = vpop.permute.xlu0 %3474
      %3476 = vrot.lane.b32.xlu0 %v3453, 16
      %v3477 = vpop.permute.xlu0 %3476
      %3486 = vst.msk [vmem:[#allocation3] sm:$0xff] %vm2385, %v3463
      %3487 = vst.msk [vmem:[#allocation3 + $0x8] sm:$0xff] %vm2385, %v3465
      %3488 = vst.msk [vmem:[#allocation3 + $0x10] sm:$0xff] %vm2385, %v3467
      %3489 = vst.msk [vmem:[#allocation3 + $0x18] sm:$0xff] %vm2385, %v3469
      %3490 = vst.msk [vmem:[#allocation3 + $0x20] sm:$0xff] %vm2385, %v3471
      %3491 = vst.msk [vmem:[#allocation3 + $0x28] sm:$0xff] %vm2385, %v3473
      %3492 = vst.msk [vmem:[#allocation3 + $0x30] sm:$0xff] %vm2385, %v3475
      %3493 = vst.msk [vmem:[#allocation3 + $0x38] sm:$0xff] %vm2385, %v3477
      %v3494 = vld [vmem:[%s1637 + $0xc] sm:$0xff]
      %v3495 = vld [vmem:[%s1637 + $0x2c] sm:$0xff]
      %v3496 = vld [vmem:[%s1637 + $0x4c] sm:$0xff]
      %v3497 = vld [vmem:[%s1637 + $0x6c] sm:$0xff]
      %v3498 = vld [vmem:[%s1637 + $0x8c] sm:$0xff]
      %v3499 = vld [vmem:[%s1637 + $0xac] sm:$0xff]
      %v3500 = vld [vmem:[%s1637 + $0xcc] sm:$0xff]
      %v3501 = vld [vmem:[%s1637 + $0xec] sm:$0xff]
      %3510 = vrot.lane.b32.xlu0 %v3494, 20
      %v3511 = vpop.permute.xlu0 %3510
      %3512 = vrot.lane.b32.xlu0 %v3495, 20
      %v3513 = vpop.permute.xlu0 %3512
      %3514 = vrot.lane.b32.xlu0 %v3496, 20
      %v3515 = vpop.permute.xlu0 %3514
      %3516 = vrot.lane.b32.xlu0 %v3497, 20
      %v3517 = vpop.permute.xlu0 %3516
      %3518 = vrot.lane.b32.xlu0 %v3498, 20
      %v3519 = vpop.permute.xlu0 %3518
      %3520 = vrot.lane.b32.xlu0 %v3499, 20
      %v3521 = vpop.permute.xlu0 %3520
      %3522 = vrot.lane.b32.xlu0 %v3500, 20
      %v3523 = vpop.permute.xlu0 %3522
      %3524 = vrot.lane.b32.xlu0 %v3501, 20
      %v3525 = vpop.permute.xlu0 %3524
      %3534 = vst.msk [vmem:[#allocation3] sm:$0xff] %vm2434, %v3511
      %3535 = vst.msk [vmem:[#allocation3 + $0x8] sm:$0xff] %vm2434, %v3513
      %3536 = vst.msk [vmem:[#allocation3 + $0x10] sm:$0xff] %vm2434, %v3515
      %3537 = vst.msk [vmem:[#allocation3 + $0x18] sm:$0xff] %vm2434, %v3517
      %3538 = vst.msk [vmem:[#allocation3 + $0x20] sm:$0xff] %vm2434, %v3519
      %3539 = vst.msk [vmem:[#allocation3 + $0x28] sm:$0xff] %vm2434, %v3521
      %3540 = vst.msk [vmem:[#allocation3 + $0x30] sm:$0xff] %vm2434, %v3523
      %3541 = vst.msk [vmem:[#allocation3 + $0x38] sm:$0xff] %vm2434, %v3525
      %s3542 = scalar_lea.vmem [#allocation2], 3712
      %v3543 = vld [vmem:[%s3542 + $0x6] sm:$0xff]
      %v3544 = vld [vmem:[%s3542 + $0x26] sm:$0xff]
      %v3545 = vld [vmem:[%s3542 + $0x46] sm:$0xff]
      %v3546 = vld [vmem:[%s3542 + $0x66] sm:$0xff]
      %v3547 = vld [vmem:[%s3542 + $0x86] sm:$0xff]
      %v3548 = vld [vmem:[%s3542 + $0xa6] sm:$0xff]
      %v3549 = vld [vmem:[%s3542 + $0xc6] sm:$0xff]
      %v3550 = vld [vmem:[%s3542 + $0xe6] sm:$0xff]
      %3559 = vrot.lane.b32.xlu0 %v3543, 24
      %v3560 = vpop.permute.xlu0 %3559
      %3561 = vrot.lane.b32.xlu0 %v3544, 24
      %v3562 = vpop.permute.xlu0 %3561
      %3563 = vrot.lane.b32.xlu0 %v3545, 24
      %v3564 = vpop.permute.xlu0 %3563
      %3565 = vrot.lane.b32.xlu0 %v3546, 24
      %v3566 = vpop.permute.xlu0 %3565
      %3567 = vrot.lane.b32.xlu0 %v3547, 24
      %v3568 = vpop.permute.xlu0 %3567
      %3569 = vrot.lane.b32.xlu0 %v3548, 24
      %v3570 = vpop.permute.xlu0 %3569
      %3571 = vrot.lane.b32.xlu0 %v3549, 24
      %v3572 = vpop.permute.xlu0 %3571
      %3573 = vrot.lane.b32.xlu0 %v3550, 24
      %v3574 = vpop.permute.xlu0 %3573
      %3583 = vst.msk [vmem:[#allocation3] sm:$0xff] %vm2484, %v3560
      %3584 = vst.msk [vmem:[#allocation3 + $0x8] sm:$0xff] %vm2484, %v3562
      %3585 = vst.msk [vmem:[#allocation3 + $0x10] sm:$0xff] %vm2484, %v3564
      %3586 = vst.msk [vmem:[#allocation3 + $0x18] sm:$0xff] %vm2484, %v3566
      %3587 = vst.msk [vmem:[#allocation3 + $0x20] sm:$0xff] %vm2484, %v3568
      %3588 = vst.msk [vmem:[#allocation3 + $0x28] sm:$0xff] %vm2484, %v3570
      %3589 = vst.msk [vmem:[#allocation3 + $0x30] sm:$0xff] %vm2484, %v3572
      %3590 = vst.msk [vmem:[#allocation3 + $0x38] sm:$0xff] %vm2484, %v3574
      %v3591 = vld [vmem:[%s3542 + $0x9] sm:$0xff]
      %v3592 = vld [vmem:[%s3542 + $0x29] sm:$0xff]
      %v3593 = vld [vmem:[%s3542 + $0x49] sm:$0xff]
      %v3594 = vld [vmem:[%s3542 + $0x69] sm:$0xff]
      %v3595 = vld [vmem:[%s3542 + $0x89] sm:$0xff]
      %v3596 = vld [vmem:[%s3542 + $0xa9] sm:$0xff]
      %v3597 = vld [vmem:[%s3542 + $0xc9] sm:$0xff]
      %v3598 = vld [vmem:[%s3542 + $0xe9] sm:$0xff]
      %3607 = vrot.lane.b32.xlu0 %v3591, 28
      %v3608 = vpop.permute.xlu0 %3607
      %3609 = vrot.lane.b32.xlu0 %v3592, 28
      %v3610 = vpop.permute.xlu0 %3609
      %3611 = vrot.lane.b32.xlu0 %v3593, 28
      %v3612 = vpop.permute.xlu0 %3611
      %3613 = vrot.lane.b32.xlu0 %v3594, 28
      %v3614 = vpop.permute.xlu0 %3613
      %3615 = vrot.lane.b32.xlu0 %v3595, 28
      %v3616 = vpop.permute.xlu0 %3615
      %3617 = vrot.lane.b32.xlu0 %v3596, 28
      %v3618 = vpop.permute.xlu0 %3617
      %3619 = vrot.lane.b32.xlu0 %v3597, 28
      %v3620 = vpop.permute.xlu0 %3619
      %3621 = vrot.lane.b32.xlu0 %v3598, 28
      %v3622 = vpop.permute.xlu0 %3621
      %3631 = vst.msk [vmem:[#allocation3] sm:$0xff] %vm2533, %v3608
      %3632 = vst.msk [vmem:[#allocation3 + $0x8] sm:$0xff] %vm2533, %v3610
      %3633 = vst.msk [vmem:[#allocation3 + $0x10] sm:$0xff] %vm2533, %v3612
      %3634 = vst.msk [vmem:[#allocation3 + $0x18] sm:$0xff] %vm2533, %v3614
      %3635 = vst.msk [vmem:[#allocation3 + $0x20] sm:$0xff] %vm2533, %v3616
      %3636 = vst.msk [vmem:[#allocation3 + $0x28] sm:$0xff] %vm2533, %v3618
      %3637 = vst.msk [vmem:[#allocation3 + $0x30] sm:$0xff] %vm2533, %v3620
      %3638 = vst.msk [vmem:[#allocation3 + $0x38] sm:$0xff] %vm2533, %v3622
      %v3639 = vld [vmem:[%s3542 + $0xc] sm:$0xff]
      %v3640 = vld [vmem:[%s3542 + $0x2c] sm:$0xff]
      %v3641 = vld [vmem:[%s3542 + $0x4c] sm:$0xff]
      %v3642 = vld [vmem:[%s3542 + $0x6c] sm:$0xff]
      %v3643 = vld [vmem:[%s3542 + $0x8c] sm:$0xff]
      %v3644 = vld [vmem:[%s3542 + $0xac] sm:$0xff]
      %v3645 = vld [vmem:[%s3542 + $0xcc] sm:$0xff]
      %v3646 = vld [vmem:[%s3542 + $0xec] sm:$0xff]
      %3655 = vrot.lane.b32.xlu0 %v3639, 32
      %v3656 = vpop.permute.xlu0 %3655
      %3657 = vrot.lane.b32.xlu0 %v3640, 32
      %v3658 = vpop.permute.xlu0 %3657
      %3659 = vrot.lane.b32.xlu0 %v3641, 32
      %v3660 = vpop.permute.xlu0 %3659
      %3661 = vrot.lane.b32.xlu0 %v3642, 32
      %v3662 = vpop.permute.xlu0 %3661
      %3663 = vrot.lane.b32.xlu0 %v3643, 32
      %v3664 = vpop.permute.xlu0 %3663
      %3665 = vrot.lane.b32.xlu0 %v3644, 32
      %v3666 = vpop.permute.xlu0 %3665
      %3667 = vrot.lane.b32.xlu0 %v3645, 32
      %v3668 = vpop.permute.xlu0 %3667
      %3669 = vrot.lane.b32.xlu0 %v3646, 32
      %v3670 = vpop.permute.xlu0 %3669
      %3679 = vst.msk [vmem:[#allocation3] sm:$0xff] %vm2582, %v3656
      %3680 = vst.msk [vmem:[#allocation3 + $0x8] sm:$0xff] %vm2582, %v3658
      %3681 = vst.msk [vmem:[#allocation3 + $0x10] sm:$0xff] %vm2582, %v3660
      %3682 = vst.msk [vmem:[#allocation3 + $0x18] sm:$0xff] %vm2582, %v3662
      %3683 = vst.msk [vmem:[#allocation3 + $0x20] sm:$0xff] %vm2582, %v3664
      %3684 = vst.msk [vmem:[#allocation3 + $0x28] sm:$0xff] %vm2582, %v3666
      %3685 = vst.msk [vmem:[#allocation3 + $0x30] sm:$0xff] %vm2582, %v3668
      %3686 = vst.msk [vmem:[#allocation3 + $0x38] sm:$0xff] %vm2582, %v3670
      %v3687 = vld [vmem:[#allocation3] sm:$0xff]
      %v3688 = vld [vmem:[#allocation3 + $0x8] sm:$0xff]
      %v3689 = vld [vmem:[#allocation3 + $0x10] sm:$0xff]
      %v3690 = vld [vmem:[#allocation3 + $0x18] sm:$0xff]
      %v3691 = vld [vmem:[#allocation3 + $0x20] sm:$0xff]
      %v3692 = vld [vmem:[#allocation3 + $0x28] sm:$0xff]
      %v3693 = vld [vmem:[#allocation3 + $0x30] sm:$0xff]
      %v3694 = vld [vmem:[#allocation3 + $0x38] sm:$0xff]
      %s3695 = scalar_lea.vmem %s7, 80
      %v3696 = vld [vmem:[%s3695] sm:$0xff]
      %v3697 = vld [vmem:[%s3695 + $0x8] sm:$0xff]
      %v3698 = vld [vmem:[%s3695 + $0x10] sm:$0xff]
      %v3699 = vld [vmem:[%s3695 + $0x18] sm:$0xff]
      %v3700 = vld [vmem:[%s3695 + $0x20] sm:$0xf]
      %v3702 = vsel %vm3020, %v3687, 0
      %v3705 = vsel %vm3020, %v3688, 0
      %v3708 = vsel %vm3020, %v3689, 0
      %v3711 = vsel %vm3020, %v3690, 0
      %v3714 = vsel %vm3020, %v3691, 0
      %v3717 = vsel %vm3020, %v3692, 0
      %v3720 = vsel %vm3020, %v3693, 0
      %v3723 = vsel %vm3020, %v3694, 0
      %v3726 = vsel %vm1720, %v3700, 0
      %3728 = vmatprep.subr.mxu0 0.0
      %3729 = vmatpush1.msra.mxu0 %v3696
      %3730 = vmatprep.subr.mxu0 0.0
      %3731 = vmatpush1.msra.mxu0 %v3697
      %3732 = vmatprep.subr.mxu0 0.0
      %3733 = vmatpush1.msra.mxu0 %v3698
      %3734 = vmatprep.subr.mxu0 0.0
      %3735 = vmatpush1.msra.mxu0 %v3699
      %3736 = vmatprep.subr.mxu0 0.0
      %3737 = vmatpush1.msra.mxu0 %v3726
      %3738 = vmatprep.subr.mxu0 0.0
      %3739 = vmatpush1.msra.mxu0 0.0
      %3740 = vmatprep.subr.mxu0 0.0
      %3741 = vmatpush1.msra.mxu0 0.0
      %3742 = vmatprep.subr.mxu0 0.0
      %3743 = vmatpush1.msra.mxu0 0.0
      %3744 = vmatprep.subr.mxu0 0.0
      %3745 = vmatpush1.msra.mxu0 0.0
      %3746 = vmatprep.subr.mxu0 0.0
      %3747 = vmatpush1.msra.mxu0 0.0
      %3748 = vmatprep.subr.mxu0 0.0
      %3749 = vmatpush1.msra.mxu0 0.0
      %3750 = vmatprep.subr.mxu0 0.0
      %3751 = vmatpush1.msra.mxu0 0.0
      %3752 = vmatprep.subr.mxu0 0.0
      %3753 = vmatpush1.msra.mxu0 0.0
      %3754 = vmatprep.subr.mxu0 0.0
      %3755 = vmatpush1.msra.mxu0 0.0
      %3756 = vmatprep.subr.mxu0 0.0
      %3757 = vmatpush1.msra.mxu0 0.0
      %3758 = vmatprep.subr.mxu0 0.0
      %3759 = vmatpush1.msra.mxu0 0.0
      %3760 = vmatprep.subr.mxu0 0.0
      %3761 = vmatpush1.msra.mxu0 0.0
      %3762 = vmatprep.subr.mxu0 0.0
      %3763 = vmatpush1.msra.mxu0 0.0
      %3764 = vmatprep.subr.mxu0 0.0
      %3765 = vmatpush1.msra.mxu0 0.0
      %3766 = vmatprep.subr.mxu0 0.0
      %3767 = vmatpush1.msra.mxu0 0.0
      %3768 = vmatprep.subr.mxu0 0.0
      %3769 = vmatpush1.msra.mxu0 0.0
      %3770 = vmatprep.subr.mxu0 0.0
      %3771 = vmatpush1.msra.mxu0 0.0
      %3772 = vmatprep.subr.mxu0 0.0
      %3773 = vmatpush1.msra.mxu0 0.0
      %3774 = vmatprep.subr.mxu0 0.0
      %3775 = vmatpush1.msra.mxu0 0.0
      %3776 = vmatprep.subr.mxu0 0.0
      %3777 = vmatpush1.msra.mxu0 0.0
      %3778 = vmatprep.subr.mxu0 0.0
      %3779 = vmatpush1.msra.mxu0 0.0
      %3780 = vmatprep.subr.mxu0 0.0
      %3781 = vmatpush1.msra.mxu0 0.0
      %3782 = vmatprep.subr.mxu0 0.0
      %3783 = vmatpush1.msra.mxu0 0.0
      %3784 = vmatprep.subr.mxu0 0.0
      %3785 = vmatpush1.msra.mxu0 0.0
      %3786 = vmatprep.subr.mxu0 0.0
      %3787 = vmatpush1.msra.mxu0 0.0
      %3788 = vmatprep.subr.mxu0 0.0
      %3789 = vmatpush1.msra.mxu0 0.0
      %3790 = vmatprep.subr.mxu0 0.0
      %3791 = vmatpush1.msra.mxu0 0.0
      %3792 = vmatprep.mubr.f32.mxu0 0.0
      %3793 = vmatmul.mubr.f32.gmra.mrb[0].mxu0 %v3702
      %v3794 = vpop.f32.mrb[0].mxu0
      %v3795 = vadd.f32 0.0, %v3794
      %v3796 = vpop.f32.mrb[0].mxu0
      %3797 = vmatprep.mubr.f32.mxu0 0.0
      %3798 = vmatmul.mubr.f32.gmra.mrb[0].mxu0 %v3705
      %v3799 = vpop.f32.mrb[0].mxu0
      %v3800 = vadd.f32 0.0, %v3799
      %v3801 = vpop.f32.mrb[0].mxu0
      %3802 = vmatprep.mubr.f32.mxu0 0.0
      %3803 = vmatmul.mubr.f32.gmra.mrb[0].mxu0 %v3708
      %v3804 = vpop.f32.mrb[0].mxu0
      %v3805 = vadd.f32 0.0, %v3804
      %v3806 = vpop.f32.mrb[0].mxu0
      %3807 = vmatprep.mubr.f32.mxu0 0.0
      %3808 = vmatmul.mubr.f32.gmra.mrb[0].mxu0 %v3711
      %v3809 = vpop.f32.mrb[0].mxu0
      %v3810 = vadd.f32 0.0, %v3809
      %v3811 = vpop.f32.mrb[0].mxu0
      %3812 = vmatprep.mubr.f32.mxu0 0.0
      %3813 = vmatmul.mubr.f32.gmra.mrb[0].mxu0 %v3714
      %v3814 = vpop.f32.mrb[0].mxu0
      %v3815 = vadd.f32 0.0, %v3814
      %v3816 = vpop.f32.mrb[0].mxu0
      %3817 = vmatprep.mubr.f32.mxu0 0.0
      %3818 = vmatmul.mubr.f32.gmra.mrb[0].mxu0 %v3717
      %v3819 = vpop.f32.mrb[0].mxu0
      %v3820 = vadd.f32 0.0, %v3819
      %v3821 = vpop.f32.mrb[0].mxu0
      %3822 = vmatprep.mubr.f32.mxu0 0.0
      %3823 = vmatmul.mubr.f32.gmra.mrb[0].mxu0 %v3720
      %v3824 = vpop.f32.mrb[0].mxu0
      %v3825 = vadd.f32 0.0, %v3824
      %v3826 = vpop.f32.mrb[0].mxu0
      %3827 = vmatprep.mubr.f32.mxu0 0.0
      %3828 = vmatmul.mubr.f32.gmra.mrb[0].mxu0 %v3723
      %v3829 = vpop.f32.mrb[0].mxu0
      %v3830 = vadd.f32 0.0, %v3829
      %v3831 = vpop.f32.mrb[0].mxu0
      %3832 = vdwg.mxu0
      %v3833 = vadd.f32 %v3247, %v3795
      %v3834 = vadd.f32 %v3252, %v3800
      %v3835 = vadd.f32 %v3257, %v3805
      %v3836 = vadd.f32 %v3262, %v3810
      %v3837 = vadd.f32 %v3267, %v3815
      %v3838 = vadd.f32 %v3272, %v3820
      %v3839 = vadd.f32 %v3277, %v3825
      %v3840 = vadd.f32 %v3282, %v3830
      %v3841 = vld [vmem:[%s8] sm:$0x1]
      %v3843 = vlaneseq
      %v3844 = vshrl.u32 %v3843, 7
      %v3845 = vsub.s32 0, %v3844
      %v3846 = vrot.slane %v3841, %v3845
      %v3848 = vadd.f32 %v3833, %v3846
      %v3849 = vadd.f32 %v3834, %v3846
      %v3850 = vadd.f32 %v3835, %v3846
      %v3851 = vadd.f32 %v3836, %v3846
      %v3852 = vadd.f32 %v3837, %v3846
      %v3853 = vadd.f32 %v3838, %v3846
      %v3854 = vadd.f32 %v3839, %v3846
      %v3855 = vadd.f32 %v3840, %v3846
      %v3856 = vmax.f32 %v3848, 0.0
      %v3857 = vmax.f32 %v3849, 0.0
      %v3858 = vmax.f32 %v3850, 0.0
      %v3859 = vmax.f32 %v3851, 0.0
      %v3860 = vmax.f32 %v3852, 0.0
      %v3861 = vmax.f32 %v3853, 0.0
      %v3862 = vmax.f32 %v3854, 0.0
      %v3863 = vmax.f32 %v3855, 0.0
      %v3864 = vld [vmem:[#allocation4] sm:$0xff]
      %v3865 = vld [vmem:[#allocation4 + $0x8] sm:$0xff]
      %v3866 = vld [vmem:[#allocation4 + $0x10] sm:$0xff]
      %v3867 = vld [vmem:[#allocation4 + $0x18] sm:$0xff]
      %v3868 = vld [vmem:[#allocation4 + $0x20] sm:$0xff]
      %v3869 = vld [vmem:[#allocation4 + $0x28] sm:$0xff]
      %v3870 = vld [vmem:[#allocation4 + $0x30] sm:$0xff]
      %v3871 = vld [vmem:[#allocation4 + $0x38] sm:$0xff]
      %v3872 = vld [vmem:[%s9] sm:$0xff]
      %v3873 = vld [vmem:[%s9 + $0x8] sm:$0xff]
      %v3874 = vld [vmem:[%s9 + $0x10] sm:$0xff]
      %v3875 = vld [vmem:[%s9 + $0x18] sm:$0xff]
      %v3876 = vld [vmem:[%s9 + $0x20] sm:$0xff]
      %v3877 = vld [vmem:[%s9 + $0x28] sm:$0xff]
      %v3878 = vld [vmem:[%s9 + $0x30] sm:$0xff]
      %v3879 = vld [vmem:[%s9 + $0x38] sm:$0xff]
      %v3880 = vld [vmem:[%s9 + $0x40] sm:$0xff]
      %v3881 = vld [vmem:[%s9 + $0x48] sm:$0xff]
      %v3882 = vld [vmem:[%s9 + $0x50] sm:$0xff]
      %v3883 = vld [vmem:[%s9 + $0x58] sm:$0xff]
      %v3884 = vld [vmem:[%s9 + $0x60] sm:$0xff]
      %v3885 = vld [vmem:[%s9 + $0x68] sm:$0xff]
      %v3886 = vld [vmem:[%s9 + $0x70] sm:$0xff]
      %v3887 = vld [vmem:[%s9 + $0x78] sm:$0xff]
      %3888 = vmatprep.subr.mxu0 0.0
      %3889 = vmatpush1.msra.mxu0 %v3872
      %3890 = vmatprep.subr.mxu0 0.0
      %3891 = vmatpush1.msra.mxu0 %v3873
      %3892 = vmatprep.subr.mxu0 0.0
      %3893 = vmatpush1.msra.mxu0 %v3874
      %3894 = vmatprep.subr.mxu0 0.0
      %3895 = vmatpush1.msra.mxu0 %v3875
      %3896 = vmatprep.subr.mxu0 0.0
      %3897 = vmatpush1.msra.mxu0 %v3876
      %3898 = vmatprep.subr.mxu0 0.0
      %3899 = vmatpush1.msra.mxu0 %v3877
      %3900 = vmatprep.subr.mxu0 0.0
      %3901 = vmatpush1.msra.mxu0 %v3878
      %3902 = vmatprep.subr.mxu0 0.0
      %3903 = vmatpush1.msra.mxu0 %v3879
      %3904 = vmatprep.subr.mxu0 0.0
      %3905 = vmatpush1.msra.mxu0 %v3880
      %3906 = vmatprep.subr.mxu0 0.0
      %3907 = vmatpush1.msra.mxu0 %v3881
      %3908 = vmatprep.subr.mxu0 0.0
      %3909 = vmatpush1.msra.mxu0 %v3882
      %3910 = vmatprep.subr.mxu0 0.0
      %3911 = vmatpush1.msra.mxu0 %v3883
      %3912 = vmatprep.subr.mxu0 0.0
      %3913 = vmatpush1.msra.mxu0 %v3884
      %3914 = vmatprep.subr.mxu0 0.0
      %3915 = vmatpush1.msra.mxu0 %v3885
      %3916 = vmatprep.subr.mxu0 0.0
      %3917 = vmatpush1.msra.mxu0 %v3886
      %3918 = vmatprep.subr.mxu0 0.0
      %3919 = vmatpush1.msra.mxu0 %v3887
      %3920 = vmatprep.subr.mxu0 0.0
      %3921 = vmatpush1.msra.mxu0 0.0
      %3922 = vmatprep.subr.mxu0 0.0
      %3923 = vmatpush1.msra.mxu0 0.0
      %3924 = vmatprep.subr.mxu0 0.0
      %3925 = vmatpush1.msra.mxu0 0.0
      %3926 = vmatprep.subr.mxu0 0.0
      %3927 = vmatpush1.msra.mxu0 0.0
      %3928 = vmatprep.subr.mxu0 0.0
      %3929 = vmatpush1.msra.mxu0 0.0
      %3930 = vmatprep.subr.mxu0 0.0
      %3931 = vmatpush1.msra.mxu0 0.0
      %3932 = vmatprep.subr.mxu0 0.0
      %3933 = vmatpush1.msra.mxu0 0.0
      %3934 = vmatprep.subr.mxu0 0.0
      %3935 = vmatpush1.msra.mxu0 0.0
      %3936 = vmatprep.subr.mxu0 0.0
      %3937 = vmatpush1.msra.mxu0 0.0
      %3938 = vmatprep.subr.mxu0 0.0
      %3939 = vmatpush1.msra.mxu0 0.0
      %3940 = vmatprep.subr.mxu0 0.0
      %3941 = vmatpush1.msra.mxu0 0.0
      %3942 = vmatprep.subr.mxu0 0.0
      %3943 = vmatpush1.msra.mxu0 0.0
      %3944 = vmatprep.subr.mxu0 0.0
      %3945 = vmatpush1.msra.mxu0 0.0
      %3946 = vmatprep.subr.mxu0 0.0
      %3947 = vmatpush1.msra.mxu0 0.0
      %3948 = vmatprep.subr.mxu0 0.0
      %3949 = vmatpush1.msra.mxu0 0.0
      %3950 = vmatprep.subr.mxu0 0.0
      %3951 = vmatpush1.msra.mxu0 0.0
      %3952 = vmatprep.mubr.f32.mxu0 0.0
      %3953 = vmatmul.mubr.f32.gmra.mrb[0].mxu0 %v3856
      %v3954 = vpop.f32.mrb[0].mxu0
      %v3955 = vadd.f32 0.0, %v3954
      %v3956 = vpop.f32.mrb[0].mxu0
      %3957 = vmatprep.mubr.f32.mxu0 0.0
      %3958 = vmatmul.mubr.f32.gmra.mrb[0].mxu0 %v3857
      %v3959 = vpop.f32.mrb[0].mxu0
      %v3960 = vadd.f32 0.0, %v3959
      %v3961 = vpop.f32.mrb[0].mxu0
      %3962 = vmatprep.mubr.f32.mxu0 0.0
      %3963 = vmatmul.mubr.f32.gmra.mrb[0].mxu0 %v3858
      %v3964 = vpop.f32.mrb[0].mxu0
      %v3965 = vadd.f32 0.0, %v3964
      %v3966 = vpop.f32.mrb[0].mxu0
      %3967 = vmatprep.mubr.f32.mxu0 0.0
      %3968 = vmatmul.mubr.f32.gmra.mrb[0].mxu0 %v3859
      %v3969 = vpop.f32.mrb[0].mxu0
      %v3970 = vadd.f32 0.0, %v3969
      %v3971 = vpop.f32.mrb[0].mxu0
      %3972 = vmatprep.mubr.f32.mxu0 0.0
      %3973 = vmatmul.mubr.f32.gmra.mrb[0].mxu0 %v3860
      %v3974 = vpop.f32.mrb[0].mxu0
      %v3975 = vadd.f32 0.0, %v3974
      %v3976 = vpop.f32.mrb[0].mxu0
      %3977 = vmatprep.mubr.f32.mxu0 0.0
      %3978 = vmatmul.mubr.f32.gmra.mrb[0].mxu0 %v3861
      %v3979 = vpop.f32.mrb[0].mxu0
      %v3980 = vadd.f32 0.0, %v3979
      %v3981 = vpop.f32.mrb[0].mxu0
      %3982 = vmatprep.mubr.f32.mxu0 0.0
      %3983 = vmatmul.mubr.f32.gmra.mrb[0].mxu0 %v3862
      %v3984 = vpop.f32.mrb[0].mxu0
      %v3985 = vadd.f32 0.0, %v3984
      %v3986 = vpop.f32.mrb[0].mxu0
      %3987 = vmatprep.mubr.f32.mxu0 0.0
      %3988 = vmatmul.mubr.f32.gmra.mrb[0].mxu0 %v3863
      %v3989 = vpop.f32.mrb[0].mxu0
      %v3990 = vadd.f32 0.0, %v3989
      %v3991 = vpop.f32.mrb[0].mxu0
      %3992 = vdwg.mxu0
      %v3993 = vadd.f32 %v3864, %v3955
      %v3994 = vadd.f32 %v3865, %v3960
      %v3995 = vadd.f32 %v3866, %v3965
      %v3996 = vadd.f32 %v3867, %v3970
      %v3997 = vadd.f32 %v3868, %v3975
      %v3998 = vadd.f32 %v3869, %v3980
      %v3999 = vadd.f32 %v3870, %v3985
      %v4000 = vadd.f32 %v3871, %v3990
      %4001 = vst [vmem:[#allocation4] sm:$0xff] %v3993
      %4002 = vst [vmem:[#allocation4 + $0x8] sm:$0xff] %v3994
      %4003 = vst [vmem:[#allocation4 + $0x10] sm:$0xff] %v3995
      %4004 = vst [vmem:[#allocation4 + $0x18] sm:$0xff] %v3996
      %4005 = vst [vmem:[#allocation4 + $0x20] sm:$0xff] %v3997
      %4006 = vst [vmem:[#allocation4 + $0x28] sm:$0xff] %v3998
      %4007 = vst [vmem:[#allocation4 + $0x30] sm:$0xff] %v3999
      %4008 = vst [vmem:[#allocation4 + $0x38] sm:$0xff] %v4000
      %s4009 = scalar_lea.vmem [#allocation2], 928
      %v4010 = vld [vmem:[%s4009 + $0x3] sm:$0xff]
      %v4011 = vld [vmem:[%s4009 + $0x23] sm:$0xff]
      %v4012 = vld [vmem:[%s4009 + $0x43] sm:$0xff]
      %v4013 = vld [vmem:[%s4009 + $0x63] sm:$0xff]
      %v4014 = vld [vmem:[%s4009 + $0x83] sm:$0xff]
      %v4015 = vld [vmem:[%s4009 + $0xa3] sm:$0xff]
      %v4016 = vld [vmem:[%s4009 + $0xc3] sm:$0xff]
      %v4017 = vld [vmem:[%s4009 + $0xe3] sm:$0xff]
      %4018 = vst.msk [vmem:[#allocation3] sm:$0xff] %vm831, %v4010
      %4019 = vst.msk [vmem:[#allocation3 + $0x8] sm:$0xff] %vm831, %v4011
      %4020 = vst.msk [vmem:[#allocation3 + $0x10] sm:$0xff] %vm831, %v4012
      %4021 = vst.msk [vmem:[#allocation3 + $0x18] sm:$0xff] %vm831, %v4013
      %4022 = vst.msk [vmem:[#allocation3 + $0x20] sm:$0xff] %vm831, %v4014
      %4023 = vst.msk [vmem:[#allocation3 + $0x28] sm:$0xff] %vm831, %v4015
      %4024 = vst.msk [vmem:[#allocation3 + $0x30] sm:$0xff] %vm831, %v4016
      %4025 = vst.msk [vmem:[#allocation3 + $0x38] sm:$0xff] %vm831, %v4017
      %v4026 = vld [vmem:[%s4009 + $0x9] sm:$0xff]
      %v4027 = vld [vmem:[%s4009 + $0x29] sm:$0xff]
      %v4028 = vld [vmem:[%s4009 + $0x49] sm:$0xff]
      %v4029 = vld [vmem:[%s4009 + $0x69] sm:$0xff]
      %v4030 = vld [vmem:[%s4009 + $0x89] sm:$0xff]
      %v4031 = vld [vmem:[%s4009 + $0xa9] sm:$0xff]
      %v4032 = vld [vmem:[%s4009 + $0xc9] sm:$0xff]
      %v4033 = vld [vmem:[%s4009 + $0xe9] sm:$0xff]
      %4042 = vrot.lane.b32.xlu0 %v4026, 4
      %v4043 = vpop.permute.xlu0 %4042
      %4044 = vrot.lane.b32.xlu0 %v4027, 4
      %v4045 = vpop.permute.xlu0 %4044
      %4046 = vrot.lane.b32.xlu0 %v4028, 4
      %v4047 = vpop.permute.xlu0 %4046
      %4048 = vrot.lane.b32.xlu0 %v4029, 4
      %v4049 = vpop.permute.xlu0 %4048
      %4050 = vrot.lane.b32.xlu0 %v4030, 4
      %v4051 = vpop.permute.xlu0 %4050
      %4052 = vrot.lane.b32.xlu0 %v4031, 4
      %v4053 = vpop.permute.xlu0 %4052
      %4054 = vrot.lane.b32.xlu0 %v4032, 4
      %v4055 = vpop.permute.xlu0 %4054
      %4056 = vrot.lane.b32.xlu0 %v4033, 4
      %v4057 = vpop.permute.xlu0 %4056
      %4066 = vst.msk [vmem:[#allocation3] sm:$0xff] %vm2238, %v4043
      %4067 = vst.msk [vmem:[#allocation3 + $0x8] sm:$0xff] %vm2238, %v4045
      %4068 = vst.msk [vmem:[#allocation3 + $0x10] sm:$0xff] %vm2238, %v4047
      %4069 = vst.msk [vmem:[#allocation3 + $0x18] sm:$0xff] %vm2238, %v4049
      %4070 = vst.msk [vmem:[#allocation3 + $0x20] sm:$0xff] %vm2238, %v4051
      %4071 = vst.msk [vmem:[#allocation3 + $0x28] sm:$0xff] %vm2238, %v4053
      %4072 = vst.msk [vmem:[#allocation3 + $0x30] sm:$0xff] %vm2238, %v4055
      %4073 = vst.msk [vmem:[#allocation3 + $0x38] sm:$0xff] %vm2238, %v4057
      %v4074 = vld [vmem:[%s4009 + $0xf] sm:$0xff]
      %v4075 = vld [vmem:[%s4009 + $0x2f] sm:$0xff]
      %v4076 = vld [vmem:[%s4009 + $0x4f] sm:$0xff]
      %v4077 = vld [vmem:[%s4009 + $0x6f] sm:$0xff]
      %v4078 = vld [vmem:[%s4009 + $0x8f] sm:$0xff]
      %v4079 = vld [vmem:[%s4009 + $0xaf] sm:$0xff]
      %v4080 = vld [vmem:[%s4009 + $0xcf] sm:$0xff]
      %v4081 = vld [vmem:[%s4009 + $0xef] sm:$0xff]
      %4090 = vrot.lane.b32.xlu0 %v4074, 8
      %v4091 = vpop.permute.xlu0 %4090
      %4092 = vrot.lane.b32.xlu0 %v4075, 8
      %v4093 = vpop.permute.xlu0 %4092
      %4094 = vrot.lane.b32.xlu0 %v4076, 8
      %v4095 = vpop.permute.xlu0 %4094
      %4096 = vrot.lane.b32.xlu0 %v4077, 8
      %v4097 = vpop.permute.xlu0 %4096
      %4098 = vrot.lane.b32.xlu0 %v4078, 8
      %v4099 = vpop.permute.xlu0 %4098
      %4100 = vrot.lane.b32.xlu0 %v4079, 8
      %v4101 = vpop.permute.xlu0 %4100
      %4102 = vrot.lane.b32.xlu0 %v4080, 8
      %v4103 = vpop.permute.xlu0 %4102
      %4104 = vrot.lane.b32.xlu0 %v4081, 8
      %v4105 = vpop.permute.xlu0 %4104
      %4114 = vst.msk [vmem:[#allocation3] sm:$0xff] %vm2287, %v4091
      %4115 = vst.msk [vmem:[#allocation3 + $0x8] sm:$0xff] %vm2287, %v4093
      %4116 = vst.msk [vmem:[#allocation3 + $0x10] sm:$0xff] %vm2287, %v4095
      %4117 = vst.msk [vmem:[#allocation3 + $0x18] sm:$0xff] %vm2287, %v4097
      %4118 = vst.msk [vmem:[#allocation3 + $0x20] sm:$0xff] %vm2287, %v4099
      %4119 = vst.msk [vmem:[#allocation3 + $0x28] sm:$0xff] %vm2287, %v4101
      %4120 = vst.msk [vmem:[#allocation3 + $0x30] sm:$0xff] %vm2287, %v4103
      %4121 = vst.msk [vmem:[#allocation3 + $0x38] sm:$0xff] %vm2287, %v4105
      %v4122 = vld [vmem:[%s1586 + $0x3] sm:$0xff]
      %v4123 = vld [vmem:[%s1586 + $0x23] sm:$0xff]
      %v4124 = vld [vmem:[%s1586 + $0x43] sm:$0xff]
      %v4125 = vld [vmem:[%s1586 + $0x63] sm:$0xff]
      %v4126 = vld [vmem:[%s1586 + $0x83] sm:$0xff]
      %v4127 = vld [vmem:[%s1586 + $0xa3] sm:$0xff]
      %v4128 = vld [vmem:[%s1586 + $0xc3] sm:$0xff]
      %v4129 = vld [vmem:[%s1586 + $0xe3] sm:$0xff]
      %4138 = vrot.lane.b32.xlu0 %v4122, 12
      %v4139 = vpop.permute.xlu0 %4138
      %4140 = vrot.lane.b32.xlu0 %v4123, 12
      %v4141 = vpop.permute.xlu0 %4140
      %4142 = vrot.lane.b32.xlu0 %v4124, 12
      %v4143 = vpop.permute.xlu0 %4142
      %4144 = vrot.lane.b32.xlu0 %v4125, 12
      %v4145 = vpop.permute.xlu0 %4144
      %4146 = vrot.lane.b32.xlu0 %v4126, 12
      %v4147 = vpop.permute.xlu0 %4146
      %4148 = vrot.lane.b32.xlu0 %v4127, 12
      %v4149 = vpop.permute.xlu0 %4148
      %4150 = vrot.lane.b32.xlu0 %v4128, 12
      %v4151 = vpop.permute.xlu0 %4150
      %4152 = vrot.lane.b32.xlu0 %v4129, 12
      %v4153 = vpop.permute.xlu0 %4152
      %4162 = vst.msk [vmem:[#allocation3] sm:$0xff] %vm2336, %v4139
      %4163 = vst.msk [vmem:[#allocation3 + $0x8] sm:$0xff] %vm2336, %v4141
      %4164 = vst.msk [vmem:[#allocation3 + $0x10] sm:$0xff] %vm2336, %v4143
      %4165 = vst.msk [vmem:[#allocation3 + $0x18] sm:$0xff] %vm2336, %v4145
      %4166 = vst.msk [vmem:[#allocation3 + $0x20] sm:$0xff] %vm2336, %v4147
      %4167 = vst.msk [vmem:[#allocation3 + $0x28] sm:$0xff] %vm2336, %v4149
      %4168 = vst.msk [vmem:[#allocation3 + $0x30] sm:$0xff] %vm2336, %v4151
      %4169 = vst.msk [vmem:[#allocation3 + $0x38] sm:$0xff] %vm2336, %v4153
      %v4170 = vld [vmem:[%s1586 + $0x9] sm:$0xff]
      %v4171 = vld [vmem:[%s1586 + $0x29] sm:$0xff]
      %v4172 = vld [vmem:[%s1586 + $0x49] sm:$0xff]
      %v4173 = vld [vmem:[%s1586 + $0x69] sm:$0xff]
      %v4174 = vld [vmem:[%s1586 + $0x89] sm:$0xff]
      %v4175 = vld [vmem:[%s1586 + $0xa9] sm:$0xff]
      %v4176 = vld [vmem:[%s1586 + $0xc9] sm:$0xff]
      %v4177 = vld [vmem:[%s1586 + $0xe9] sm:$0xff]
      %4186 = vrot.lane.b32.xlu0 %v4170, 16
      %v4187 = vpop.permute.xlu0 %4186
      %4188 = vrot.lane.b32.xlu0 %v4171, 16
      %v4189 = vpop.permute.xlu0 %4188
      %4190 = vrot.lane.b32.xlu0 %v4172, 16
      %v4191 = vpop.permute.xlu0 %4190
      %4192 = vrot.lane.b32.xlu0 %v4173, 16
      %v4193 = vpop.permute.xlu0 %4192
      %4194 = vrot.lane.b32.xlu0 %v4174, 16
      %v4195 = vpop.permute.xlu0 %4194
      %4196 = vrot.lane.b32.xlu0 %v4175, 16
      %v4197 = vpop.permute.xlu0 %4196
      %4198 = vrot.lane.b32.xlu0 %v4176, 16
      %v4199 = vpop.permute.xlu0 %4198
      %4200 = vrot.lane.b32.xlu0 %v4177, 16
      %v4201 = vpop.permute.xlu0 %4200
      %4210 = vst.msk [vmem:[#allocation3] sm:$0xff] %vm2385, %v4187
      %4211 = vst.msk [vmem:[#allocation3 + $0x8] sm:$0xff] %vm2385, %v4189
      %4212 = vst.msk [vmem:[#allocation3 + $0x10] sm:$0xff] %vm2385, %v4191
      %4213 = vst.msk [vmem:[#allocation3 + $0x18] sm:$0xff] %vm2385, %v4193
      %4214 = vst.msk [vmem:[#allocation3 + $0x20] sm:$0xff] %vm2385, %v4195
      %4215 = vst.msk [vmem:[#allocation3 + $0x28] sm:$0xff] %vm2385, %v4197
      %4216 = vst.msk [vmem:[#allocation3 + $0x30] sm:$0xff] %vm2385, %v4199
      %4217 = vst.msk [vmem:[#allocation3 + $0x38] sm:$0xff] %vm2385, %v4201
      %v4218 = vld [vmem:[%s1586 + $0xf] sm:$0xff]
      %v4219 = vld [vmem:[%s1586 + $0x2f] sm:$0xff]
      %v4220 = vld [vmem:[%s1586 + $0x4f] sm:$0xff]
      %v4221 = vld [vmem:[%s1586 + $0x6f] sm:$0xff]
      %v4222 = vld [vmem:[%s1586 + $0x8f] sm:$0xff]
      %v4223 = vld [vmem:[%s1586 + $0xaf] sm:$0xff]
      %v4224 = vld [vmem:[%s1586 + $0xcf] sm:$0xff]
      %v4225 = vld [vmem:[%s1586 + $0xef] sm:$0xff]
      %4234 = vrot.lane.b32.xlu0 %v4218, 20
      %v4235 = vpop.permute.xlu0 %4234
      %4236 = vrot.lane.b32.xlu0 %v4219, 20
      %v4237 = vpop.permute.xlu0 %4236
      %4238 = vrot.lane.b32.xlu0 %v4220, 20
      %v4239 = vpop.permute.xlu0 %4238
      %4240 = vrot.lane.b32.xlu0 %v4221, 20
      %v4241 = vpop.permute.xlu0 %4240
      %4242 = vrot.lane.b32.xlu0 %v4222, 20
      %v4243 = vpop.permute.xlu0 %4242
      %4244 = vrot.lane.b32.xlu0 %v4223, 20
      %v4245 = vpop.permute.xlu0 %4244
      %4246 = vrot.lane.b32.xlu0 %v4224, 20
      %v4247 = vpop.permute.xlu0 %4246
      %4248 = vrot.lane.b32.xlu0 %v4225, 20
      %v4249 = vpop.permute.xlu0 %4248
      %4258 = vst.msk [vmem:[#allocation3] sm:$0xff] %vm2434, %v4235
      %4259 = vst.msk [vmem:[#allocation3 + $0x8] sm:$0xff] %vm2434, %v4237
      %4260 = vst.msk [vmem:[#allocation3 + $0x10] sm:$0xff] %vm2434, %v4239
      %4261 = vst.msk [vmem:[#allocation3 + $0x18] sm:$0xff] %vm2434, %v4241
      %4262 = vst.msk [vmem:[#allocation3 + $0x20] sm:$0xff] %vm2434, %v4243
      %4263 = vst.msk [vmem:[#allocation3 + $0x28] sm:$0xff] %vm2434, %v4245
      %4264 = vst.msk [vmem:[#allocation3 + $0x30] sm:$0xff] %vm2434, %v4247
      %4265 = vst.msk [vmem:[#allocation3 + $0x38] sm:$0xff] %vm2434, %v4249
      %s4266 = scalar_lea.vmem [#allocation2], 1312
      %v4267 = vld [vmem:[%s4266 + $0x3] sm:$0xff]
      %v4268 = vld [vmem:[%s4266 + $0x23] sm:$0xff]
      %v4269 = vld [vmem:[%s4266 + $0x43] sm:$0xff]
      %v4270 = vld [vmem:[%s4266 + $0x63] sm:$0xff]
      %v4271 = vld [vmem:[%s4266 + $0x83] sm:$0xff]
      %v4272 = vld [vmem:[%s4266 + $0xa3] sm:$0xff]
      %v4273 = vld [vmem:[%s4266 + $0xc3] sm:$0xff]
      %v4274 = vld [vmem:[%s4266 + $0xe3] sm:$0xff]
      %4283 = vrot.lane.b32.xlu0 %v4267, 24
      %v4284 = vpop.permute.xlu0 %4283
      %4285 = vrot.lane.b32.xlu0 %v4268, 24
      %v4286 = vpop.permute.xlu0 %4285
      %4287 = vrot.lane.b32.xlu0 %v4269, 24
      %v4288 = vpop.permute.xlu0 %4287
      %4289 = vrot.lane.b32.xlu0 %v4270, 24
      %v4290 = vpop.permute.xlu0 %4289
      %4291 = vrot.lane.b32.xlu0 %v4271, 24
      %v4292 = vpop.permute.xlu0 %4291
      %4293 = vrot.lane.b32.xlu0 %v4272, 24
      %v4294 = vpop.permute.xlu0 %4293
      %4295 = vrot.lane.b32.xlu0 %v4273, 24
      %v4296 = vpop.permute.xlu0 %4295
      %4297 = vrot.lane.b32.xlu0 %v4274, 24
      %v4298 = vpop.permute.xlu0 %4297
      %4307 = vst.msk [vmem:[#allocation3] sm:$0xff] %vm2484, %v4284
      %4308 = vst.msk [vmem:[#allocation3 + $0x8] sm:$0xff] %vm2484, %v4286
      %4309 = vst.msk [vmem:[#allocation3 + $0x10] sm:$0xff] %vm2484, %v4288
      %4310 = vst.msk [vmem:[#allocation3 + $0x18] sm:$0xff] %vm2484, %v4290
      %4311 = vst.msk [vmem:[#allocation3 + $0x20] sm:$0xff] %vm2484, %v4292
      %4312 = vst.msk [vmem:[#allocation3 + $0x28] sm:$0xff] %vm2484, %v4294
      %4313 = vst.msk [vmem:[#allocation3 + $0x30] sm:$0xff] %vm2484, %v4296
      %4314 = vst.msk [vmem:[#allocation3 + $0x38] sm:$0xff] %vm2484, %v4298
      %v4315 = vld [vmem:[%s4266 + $0x9] sm:$0xff]
      %v4316 = vld [vmem:[%s4266 + $0x29] sm:$0xff]
      %v4317 = vld [vmem:[%s4266 + $0x49] sm:$0xff]
      %v4318 = vld [vmem:[%s4266 + $0x69] sm:$0xff]
      %v4319 = vld [vmem:[%s4266 + $0x89] sm:$0xff]
      %v4320 = vld [vmem:[%s4266 + $0xa9] sm:$0xff]
      %v4321 = vld [vmem:[%s4266 + $0xc9] sm:$0xff]
      %v4322 = vld [vmem:[%s4266 + $0xe9] sm:$0xff]
      %4331 = vrot.lane.b32.xlu0 %v4315, 28
      %v4332 = vpop.permute.xlu0 %4331
      %4333 = vrot.lane.b32.xlu0 %v4316, 28
      %v4334 = vpop.permute.xlu0 %4333
      %4335 = vrot.lane.b32.xlu0 %v4317, 28
      %v4336 = vpop.permute.xlu0 %4335
      %4337 = vrot.lane.b32.xlu0 %v4318, 28
      %v4338 = vpop.permute.xlu0 %4337
      %4339 = vrot.lane.b32.xlu0 %v4319, 28
      %v4340 = vpop.permute.xlu0 %4339
      %4341 = vrot.lane.b32.xlu0 %v4320, 28
      %v4342 = vpop.permute.xlu0 %4341
      %4343 = vrot.lane.b32.xlu0 %v4321, 28
      %v4344 = vpop.permute.xlu0 %4343
      %4345 = vrot.lane.b32.xlu0 %v4322, 28
      %v4346 = vpop.permute.xlu0 %4345
      %4355 = vst.msk [vmem:[#allocation3] sm:$0xff] %vm2533, %v4332
      %4356 = vst.msk [vmem:[#allocation3 + $0x8] sm:$0xff] %vm2533, %v4334
      %4357 = vst.msk [vmem:[#allocation3 + $0x10] sm:$0xff] %vm2533, %v4336
      %4358 = vst.msk [vmem:[#allocation3 + $0x18] sm:$0xff] %vm2533, %v4338
      %4359 = vst.msk [vmem:[#allocation3 + $0x20] sm:$0xff] %vm2533, %v4340
      %4360 = vst.msk [vmem:[#allocation3 + $0x28] sm:$0xff] %vm2533, %v4342
      %4361 = vst.msk [vmem:[#allocation3 + $0x30] sm:$0xff] %vm2533, %v4344
      %4362 = vst.msk [vmem:[#allocation3 + $0x38] sm:$0xff] %vm2533, %v4346
      %v4363 = vld [vmem:[%s4266 + $0xf] sm:$0xff]
      %v4364 = vld [vmem:[%s4266 + $0x2f] sm:$0xff]
      %v4365 = vld [vmem:[%s4266 + $0x4f] sm:$0xff]
      %v4366 = vld [vmem:[%s4266 + $0x6f] sm:$0xff]
      %v4367 = vld [vmem:[%s4266 + $0x8f] sm:$0xff]
      %v4368 = vld [vmem:[%s4266 + $0xaf] sm:$0xff]
      %v4369 = vld [vmem:[%s4266 + $0xcf] sm:$0xff]
      %v4370 = vld [vmem:[%s4266 + $0xef] sm:$0xff]
      %4379 = vrot.lane.b32.xlu0 %v4363, 32
      %v4380 = vpop.permute.xlu0 %4379
      %4381 = vrot.lane.b32.xlu0 %v4364, 32
      %v4382 = vpop.permute.xlu0 %4381
      %4383 = vrot.lane.b32.xlu0 %v4365, 32
      %v4384 = vpop.permute.xlu0 %4383
      %4385 = vrot.lane.b32.xlu0 %v4366, 32
      %v4386 = vpop.permute.xlu0 %4385
      %4387 = vrot.lane.b32.xlu0 %v4367, 32
      %v4388 = vpop.permute.xlu0 %4387
      %4389 = vrot.lane.b32.xlu0 %v4368, 32
      %v4390 = vpop.permute.xlu0 %4389
      %4391 = vrot.lane.b32.xlu0 %v4369, 32
      %v4392 = vpop.permute.xlu0 %4391
      %4393 = vrot.lane.b32.xlu0 %v4370, 32
      %v4394 = vpop.permute.xlu0 %4393
      %4403 = vst.msk [vmem:[#allocation3] sm:$0xff] %vm2582, %v4380
      %4404 = vst.msk [vmem:[#allocation3 + $0x8] sm:$0xff] %vm2582, %v4382
      %4405 = vst.msk [vmem:[#allocation3 + $0x10] sm:$0xff] %vm2582, %v4384
      %4406 = vst.msk [vmem:[#allocation3 + $0x18] sm:$0xff] %vm2582, %v4386
      %4407 = vst.msk [vmem:[#allocation3 + $0x20] sm:$0xff] %vm2582, %v4388
      %4408 = vst.msk [vmem:[#allocation3 + $0x28] sm:$0xff] %vm2582, %v4390
      %4409 = vst.msk [vmem:[#allocation3 + $0x30] sm:$0xff] %vm2582, %v4392
      %4410 = vst.msk [vmem:[#allocation3 + $0x38] sm:$0xff] %vm2582, %v4394
      %v4411 = vld [vmem:[#allocation3] sm:$0xff]
      %v4412 = vld [vmem:[#allocation3 + $0x8] sm:$0xff]
      %v4413 = vld [vmem:[#allocation3 + $0x10] sm:$0xff]
      %v4414 = vld [vmem:[#allocation3 + $0x18] sm:$0xff]
      %v4415 = vld [vmem:[#allocation3 + $0x20] sm:$0xff]
      %v4416 = vld [vmem:[#allocation3 + $0x28] sm:$0xff]
      %v4417 = vld [vmem:[#allocation3 + $0x30] sm:$0xff]
      %v4418 = vld [vmem:[#allocation3 + $0x38] sm:$0xff]
      %s4419 = scalar_lea.vmem %s7, 120
      %v4420 = vld [vmem:[%s4419] sm:$0xff]
      %v4421 = vld [vmem:[%s4419 + $0x8] sm:$0xff]
      %v4422 = vld [vmem:[%s4419 + $0x10] sm:$0xff]
      %v4423 = vld [vmem:[%s4419 + $0x18] sm:$0xff]
      %v4424 = vld [vmem:[%s4419 + $0x20] sm:$0xf]
      %s4425 = scalar_lea.vmem [#allocation2], 2592
      %v4426 = vld [vmem:[%s4425 + $0x3] sm:$0xff]
      %v4427 = vld [vmem:[%s4425 + $0x23] sm:$0xff]
      %v4428 = vld [vmem:[%s4425 + $0x43] sm:$0xff]
      %v4429 = vld [vmem:[%s4425 + $0x63] sm:$0xff]
      %v4430 = vld [vmem:[%s4425 + $0x83] sm:$0xff]
      %v4431 = vld [vmem:[%s4425 + $0xa3] sm:$0xff]
      %v4432 = vld [vmem:[%s4425 + $0xc3] sm:$0xff]
      %v4433 = vld [vmem:[%s4425 + $0xe3] sm:$0xff]
      %4434 = vst.msk [vmem:[#allocation3] sm:$0xff] %vm831, %v4426
      %4435 = vst.msk [vmem:[#allocation3 + $0x8] sm:$0xff] %vm831, %v4427
      %4436 = vst.msk [vmem:[#allocation3 + $0x10] sm:$0xff] %vm831, %v4428
      %4437 = vst.msk [vmem:[#allocation3 + $0x18] sm:$0xff] %vm831, %v4429
      %4438 = vst.msk [vmem:[#allocation3 + $0x20] sm:$0xff] %vm831, %v4430
      %4439 = vst.msk [vmem:[#allocation3 + $0x28] sm:$0xff] %vm831, %v4431
      %4440 = vst.msk [vmem:[#allocation3 + $0x30] sm:$0xff] %vm831, %v4432
      %4441 = vst.msk [vmem:[#allocation3 + $0x38] sm:$0xff] %vm831, %v4433
      %v4442 = vld [vmem:[%s4425 + $0x9] sm:$0xff]
      %v4443 = vld [vmem:[%s4425 + $0x29] sm:$0xff]
      %v4444 = vld [vmem:[%s4425 + $0x49] sm:$0xff]
      %v4445 = vld [vmem:[%s4425 + $0x69] sm:$0xff]
      %v4446 = vld [vmem:[%s4425 + $0x89] sm:$0xff]
      %v4447 = vld [vmem:[%s4425 + $0xa9] sm:$0xff]
      %v4448 = vld [vmem:[%s4425 + $0xc9] sm:$0xff]
      %v4449 = vld [vmem:[%s4425 + $0xe9] sm:$0xff]
      %4458 = vrot.lane.b32.xlu0 %v4442, 4
      %v4459 = vpop.permute.xlu0 %4458
      %4460 = vrot.lane.b32.xlu0 %v4443, 4
      %v4461 = vpop.permute.xlu0 %4460
      %4462 = vrot.lane.b32.xlu0 %v4444, 4
      %v4463 = vpop.permute.xlu0 %4462
      %4464 = vrot.lane.b32.xlu0 %v4445, 4
      %v4465 = vpop.permute.xlu0 %4464
      %4466 = vrot.lane.b32.xlu0 %v4446, 4
      %v4467 = vpop.permute.xlu0 %4466
      %4468 = vrot.lane.b32.xlu0 %v4447, 4
      %v4469 = vpop.permute.xlu0 %4468
      %4470 = vrot.lane.b32.xlu0 %v4448, 4
      %v4471 = vpop.permute.xlu0 %4470
      %4472 = vrot.lane.b32.xlu0 %v4449, 4
      %v4473 = vpop.permute.xlu0 %4472
      %4482 = vst.msk [vmem:[#allocation3] sm:$0xff] %vm2238, %v4459
      %4483 = vst.msk [vmem:[#allocation3 + $0x8] sm:$0xff] %vm2238, %v4461
      %4484 = vst.msk [vmem:[#allocation3 + $0x10] sm:$0xff] %vm2238, %v4463
      %4485 = vst.msk [vmem:[#allocation3 + $0x18] sm:$0xff] %vm2238, %v4465
      %4486 = vst.msk [vmem:[#allocation3 + $0x20] sm:$0xff] %vm2238, %v4467
      %4487 = vst.msk [vmem:[#allocation3 + $0x28] sm:$0xff] %vm2238, %v4469
      %4488 = vst.msk [vmem:[#allocation3 + $0x30] sm:$0xff] %vm2238, %v4471
      %4489 = vst.msk [vmem:[#allocation3 + $0x38] sm:$0xff] %vm2238, %v4473
      %v4490 = vld [vmem:[%s4425 + $0xf] sm:$0xff]
      %v4491 = vld [vmem:[%s4425 + $0x2f] sm:$0xff]
      %v4492 = vld [vmem:[%s4425 + $0x4f] sm:$0xff]
      %v4493 = vld [vmem:[%s4425 + $0x6f] sm:$0xff]
      %v4494 = vld [vmem:[%s4425 + $0x8f] sm:$0xff]
      %v4495 = vld [vmem:[%s4425 + $0xaf] sm:$0xff]
      %v4496 = vld [vmem:[%s4425 + $0xcf] sm:$0xff]
      %v4497 = vld [vmem:[%s4425 + $0xef] sm:$0xff]
      %4506 = vrot.lane.b32.xlu0 %v4490, 8
      %v4507 = vpop.permute.xlu0 %4506
      %4508 = vrot.lane.b32.xlu0 %v4491, 8
      %v4509 = vpop.permute.xlu0 %4508
      %4510 = vrot.lane.b32.xlu0 %v4492, 8
      %v4511 = vpop.permute.xlu0 %4510
      %4512 = vrot.lane.b32.xlu0 %v4493, 8
      %v4513 = vpop.permute.xlu0 %4512
      %4514 = vrot.lane.b32.xlu0 %v4494, 8
      %v4515 = vpop.permute.xlu0 %4514
      %4516 = vrot.lane.b32.xlu0 %v4495, 8
      %v4517 = vpop.permute.xlu0 %4516
      %4518 = vrot.lane.b32.xlu0 %v4496, 8
      %v4519 = vpop.permute.xlu0 %4518
      %4520 = vrot.lane.b32.xlu0 %v4497, 8
      %v4521 = vpop.permute.xlu0 %4520
      %4530 = vst.msk [vmem:[#allocation3] sm:$0xff] %vm2287, %v4507
      %4531 = vst.msk [vmem:[#allocation3 + $0x8] sm:$0xff] %vm2287, %v4509
      %4532 = vst.msk [vmem:[#allocation3 + $0x10] sm:$0xff] %vm2287, %v4511
      %4533 = vst.msk [vmem:[#allocation3 + $0x18] sm:$0xff] %vm2287, %v4513
      %4534 = vst.msk [vmem:[#allocation3 + $0x20] sm:$0xff] %vm2287, %v4515
      %4535 = vst.msk [vmem:[#allocation3 + $0x28] sm:$0xff] %vm2287, %v4517
      %4536 = vst.msk [vmem:[#allocation3 + $0x30] sm:$0xff] %vm2287, %v4519
      %4537 = vst.msk [vmem:[#allocation3 + $0x38] sm:$0xff] %vm2287, %v4521
      %v4538 = vld [vmem:[%s1620 + $0x3] sm:$0xff]
      %v4539 = vld [vmem:[%s1620 + $0x23] sm:$0xff]
      %v4540 = vld [vmem:[%s1620 + $0x43] sm:$0xff]
      %v4541 = vld [vmem:[%s1620 + $0x63] sm:$0xff]
      %v4542 = vld [vmem:[%s1620 + $0x83] sm:$0xff]
      %v4543 = vld [vmem:[%s1620 + $0xa3] sm:$0xff]
      %v4544 = vld [vmem:[%s1620 + $0xc3] sm:$0xff]
      %v4545 = vld [vmem:[%s1620 + $0xe3] sm:$0xff]
      %4554 = vrot.lane.b32.xlu0 %v4538, 12
      %v4555 = vpop.permute.xlu0 %4554
      %4556 = vrot.lane.b32.xlu0 %v4539, 12
      %v4557 = vpop.permute.xlu0 %4556
      %4558 = vrot.lane.b32.xlu0 %v4540, 12
      %v4559 = vpop.permute.xlu0 %4558
      %4560 = vrot.lane.b32.xlu0 %v4541, 12
      %v4561 = vpop.permute.xlu0 %4560
      %4562 = vrot.lane.b32.xlu0 %v4542, 12
      %v4563 = vpop.permute.xlu0 %4562
      %4564 = vrot.lane.b32.xlu0 %v4543, 12
      %v4565 = vpop.permute.xlu0 %4564
      %4566 = vrot.lane.b32.xlu0 %v4544, 12
      %v4567 = vpop.permute.xlu0 %4566
      %4568 = vrot.lane.b32.xlu0 %v4545, 12
      %v4569 = vpop.permute.xlu0 %4568
      %4578 = vst.msk [vmem:[#allocation3] sm:$0xff] %vm2336, %v4555
      %4579 = vst.msk [vmem:[#allocation3 + $0x8] sm:$0xff] %vm2336, %v4557
      %4580 = vst.msk [vmem:[#allocation3 + $0x10] sm:$0xff] %vm2336, %v4559
      %4581 = vst.msk [vmem:[#allocation3 + $0x18] sm:$0xff] %vm2336, %v4561
      %4582 = vst.msk [vmem:[#allocation3 + $0x20] sm:$0xff] %vm2336, %v4563
      %4583 = vst.msk [vmem:[#allocation3 + $0x28] sm:$0xff] %vm2336, %v4565
      %4584 = vst.msk [vmem:[#allocation3 + $0x30] sm:$0xff] %vm2336, %v4567
      %4585 = vst.msk [vmem:[#allocation3 + $0x38] sm:$0xff] %vm2336, %v4569
      %v4586 = vld [vmem:[%s1620 + $0x9] sm:$0xff]
      %v4587 = vld [vmem:[%s1620 + $0x29] sm:$0xff]
      %v4588 = vld [vmem:[%s1620 + $0x49] sm:$0xff]
      %v4589 = vld [vmem:[%s1620 + $0x69] sm:$0xff]
      %v4590 = vld [vmem:[%s1620 + $0x89] sm:$0xff]
      %v4591 = vld [vmem:[%s1620 + $0xa9] sm:$0xff]
      %v4592 = vld [vmem:[%s1620 + $0xc9] sm:$0xff]
      %v4593 = vld [vmem:[%s1620 + $0xe9] sm:$0xff]
      %4602 = vrot.lane.b32.xlu0 %v4586, 16
      %v4603 = vpop.permute.xlu0 %4602
      %4604 = vrot.lane.b32.xlu0 %v4587, 16
      %v4605 = vpop.permute.xlu0 %4604
      %4606 = vrot.lane.b32.xlu0 %v4588, 16
      %v4607 = vpop.permute.xlu0 %4606
      %4608 = vrot.lane.b32.xlu0 %v4589, 16
      %v4609 = vpop.permute.xlu0 %4608
      %4610 = vrot.lane.b32.xlu0 %v4590, 16
      %v4611 = vpop.permute.xlu0 %4610
      %4612 = vrot.lane.b32.xlu0 %v4591, 16
      %v4613 = vpop.permute.xlu0 %4612
      %4614 = vrot.lane.b32.xlu0 %v4592, 16
      %v4615 = vpop.permute.xlu0 %4614
      %4616 = vrot.lane.b32.xlu0 %v4593, 16
      %v4617 = vpop.permute.xlu0 %4616
      %4626 = vst.msk [vmem:[#allocation3] sm:$0xff] %vm2385, %v4603
      %4627 = vst.msk [vmem:[#allocation3 + $0x8] sm:$0xff] %vm2385, %v4605
      %4628 = vst.msk [vmem:[#allocation3 + $0x10] sm:$0xff] %vm2385, %v4607
      %4629 = vst.msk [vmem:[#allocation3 + $0x18] sm:$0xff] %vm2385, %v4609
      %4630 = vst.msk [vmem:[#allocation3 + $0x20] sm:$0xff] %vm2385, %v4611
      %4631 = vst.msk [vmem:[#allocation3 + $0x28] sm:$0xff] %vm2385, %v4613
      %4632 = vst.msk [vmem:[#allocation3 + $0x30] sm:$0xff] %vm2385, %v4615
      %4633 = vst.msk [vmem:[#allocation3 + $0x38] sm:$0xff] %vm2385, %v4617
      %v4634 = vld [vmem:[%s1620 + $0xf] sm:$0xff]
      %v4635 = vld [vmem:[%s1620 + $0x2f] sm:$0xff]
      %v4636 = vld [vmem:[%s1620 + $0x4f] sm:$0xff]
      %v4637 = vld [vmem:[%s1620 + $0x6f] sm:$0xff]
      %v4638 = vld [vmem:[%s1620 + $0x8f] sm:$0xff]
      %v4639 = vld [vmem:[%s1620 + $0xaf] sm:$0xff]
      %v4640 = vld [vmem:[%s1620 + $0xcf] sm:$0xff]
      %v4641 = vld [vmem:[%s1620 + $0xef] sm:$0xff]
      %4650 = vrot.lane.b32.xlu0 %v4634, 20
      %v4651 = vpop.permute.xlu0 %4650
      %4652 = vrot.lane.b32.xlu0 %v4635, 20
      %v4653 = vpop.permute.xlu0 %4652
      %4654 = vrot.lane.b32.xlu0 %v4636, 20
      %v4655 = vpop.permute.xlu0 %4654
      %4656 = vrot.lane.b32.xlu0 %v4637, 20
      %v4657 = vpop.permute.xlu0 %4656
      %4658 = vrot.lane.b32.xlu0 %v4638, 20
      %v4659 = vpop.permute.xlu0 %4658
      %4660 = vrot.lane.b32.xlu0 %v4639, 20
      %v4661 = vpop.permute.xlu0 %4660
      %4662 = vrot.lane.b32.xlu0 %v4640, 20
      %v4663 = vpop.permute.xlu0 %4662
      %4664 = vrot.lane.b32.xlu0 %v4641, 20
      %v4665 = vpop.permute.xlu0 %4664
      %4674 = vst.msk [vmem:[#allocation3] sm:$0xff] %vm2434, %v4651
      %4675 = vst.msk [vmem:[#allocation3 + $0x8] sm:$0xff] %vm2434, %v4653
      %4676 = vst.msk [vmem:[#allocation3 + $0x10] sm:$0xff] %vm2434, %v4655
      %4677 = vst.msk [vmem:[#allocation3 + $0x18] sm:$0xff] %vm2434, %v4657
      %4678 = vst.msk [vmem:[#allocation3 + $0x20] sm:$0xff] %vm2434, %v4659
      %4679 = vst.msk [vmem:[#allocation3 + $0x28] sm:$0xff] %vm2434, %v4661
      %4680 = vst.msk [vmem:[#allocation3 + $0x30] sm:$0xff] %vm2434, %v4663
      %4681 = vst.msk [vmem:[#allocation3 + $0x38] sm:$0xff] %vm2434, %v4665
      %s4682 = scalar_lea.vmem [#allocation2], 2976
      %v4683 = vld [vmem:[%s4682 + $0x3] sm:$0xff]
      %v4684 = vld [vmem:[%s4682 + $0x23] sm:$0xff]
      %v4685 = vld [vmem:[%s4682 + $0x43] sm:$0xff]
      %v4686 = vld [vmem:[%s4682 + $0x63] sm:$0xff]
      %v4687 = vld [vmem:[%s4682 + $0x83] sm:$0xff]
      %v4688 = vld [vmem:[%s4682 + $0xa3] sm:$0xff]
      %v4689 = vld [vmem:[%s4682 + $0xc3] sm:$0xff]
      %v4690 = vld [vmem:[%s4682 + $0xe3] sm:$0xff]
      %4699 = vrot.lane.b32.xlu0 %v4683, 24
      %v4700 = vpop.permute.xlu0 %4699
      %4701 = vrot.lane.b32.xlu0 %v4684, 24
      %v4702 = vpop.permute.xlu0 %4701
      %4703 = vrot.lane.b32.xlu0 %v4685, 24
      %v4704 = vpop.permute.xlu0 %4703
      %4705 = vrot.lane.b32.xlu0 %v4686, 24
      %v4706 = vpop.permute.xlu0 %4705
      %4707 = vrot.lane.b32.xlu0 %v4687, 24
      %v4708 = vpop.permute.xlu0 %4707
      %4709 = vrot.lane.b32.xlu0 %v4688, 24
      %v4710 = vpop.permute.xlu0 %4709
      %4711 = vrot.lane.b32.xlu0 %v4689, 24
      %v4712 = vpop.permute.xlu0 %4711
      %4713 = vrot.lane.b32.xlu0 %v4690, 24
      %v4714 = vpop.permute.xlu0 %4713
      %4723 = vst.msk [vmem:[#allocation3] sm:$0xff] %vm2484, %v4700
      %4724 = vst.msk [vmem:[#allocation3 + $0x8] sm:$0xff] %vm2484, %v4702
      %4725 = vst.msk [vmem:[#allocation3 + $0x10] sm:$0xff] %vm2484, %v4704
      %4726 = vst.msk [vmem:[#allocation3 + $0x18] sm:$0xff] %vm2484, %v4706
      %4727 = vst.msk [vmem:[#allocation3 + $0x20] sm:$0xff] %vm2484, %v4708
      %4728 = vst.msk [vmem:[#allocation3 + $0x28] sm:$0xff] %vm2484, %v4710
      %4729 = vst.msk [vmem:[#allocation3 + $0x30] sm:$0xff] %vm2484, %v4712
      %4730 = vst.msk [vmem:[#allocation3 + $0x38] sm:$0xff] %vm2484, %v4714
      %v4731 = vld [vmem:[%s4682 + $0x9] sm:$0xff]
      %v4732 = vld [vmem:[%s4682 + $0x29] sm:$0xff]
      %v4733 = vld [vmem:[%s4682 + $0x49] sm:$0xff]
      %v4734 = vld [vmem:[%s4682 + $0x69] sm:$0xff]
      %v4735 = vld [vmem:[%s4682 + $0x89] sm:$0xff]
      %v4736 = vld [vmem:[%s4682 + $0xa9] sm:$0xff]
      %v4737 = vld [vmem:[%s4682 + $0xc9] sm:$0xff]
      %v4738 = vld [vmem:[%s4682 + $0xe9] sm:$0xff]
      %4747 = vrot.lane.b32.xlu0 %v4731, 28
      %v4748 = vpop.permute.xlu0 %4747
      %4749 = vrot.lane.b32.xlu0 %v4732, 28
      %v4750 = vpop.permute.xlu0 %4749
      %4751 = vrot.lane.b32.xlu0 %v4733, 28
      %v4752 = vpop.permute.xlu0 %4751
      %4753 = vrot.lane.b32.xlu0 %v4734, 28
      %v4754 = vpop.permute.xlu0 %4753
      %4755 = vrot.lane.b32.xlu0 %v4735, 28
      %v4756 = vpop.permute.xlu0 %4755
      %4757 = vrot.lane.b32.xlu0 %v4736, 28
      %v4758 = vpop.permute.xlu0 %4757
      %4759 = vrot.lane.b32.xlu0 %v4737, 28
      %v4760 = vpop.permute.xlu0 %4759
      %4761 = vrot.lane.b32.xlu0 %v4738, 28
      %v4762 = vpop.permute.xlu0 %4761
      %4771 = vst.msk [vmem:[#allocation3] sm:$0xff] %vm2533, %v4748
      %4772 = vst.msk [vmem:[#allocation3 + $0x8] sm:$0xff] %vm2533, %v4750
      %4773 = vst.msk [vmem:[#allocation3 + $0x10] sm:$0xff] %vm2533, %v4752
      %4774 = vst.msk [vmem:[#allocation3 + $0x18] sm:$0xff] %vm2533, %v4754
      %4775 = vst.msk [vmem:[#allocation3 + $0x20] sm:$0xff] %vm2533, %v4756
      %4776 = vst.msk [vmem:[#allocation3 + $0x28] sm:$0xff] %vm2533, %v4758
      %4777 = vst.msk [vmem:[#allocation3 + $0x30] sm:$0xff] %vm2533, %v4760
      %4778 = vst.msk [vmem:[#allocation3 + $0x38] sm:$0xff] %vm2533, %v4762
      %v4779 = vld [vmem:[%s4682 + $0xf] sm:$0xff]
      %v4780 = vld [vmem:[%s4682 + $0x2f] sm:$0xff]
      %v4781 = vld [vmem:[%s4682 + $0x4f] sm:$0xff]
      %v4782 = vld [vmem:[%s4682 + $0x6f] sm:$0xff]
      %v4783 = vld [vmem:[%s4682 + $0x8f] sm:$0xff]
      %v4784 = vld [vmem:[%s4682 + $0xaf] sm:$0xff]
      %v4785 = vld [vmem:[%s4682 + $0xcf] sm:$0xff]
      %v4786 = vld [vmem:[%s4682 + $0xef] sm:$0xff]
      %4795 = vrot.lane.b32.xlu0 %v4779, 32
      %v4796 = vpop.permute.xlu0 %4795
      %4797 = vrot.lane.b32.xlu0 %v4780, 32
      %v4798 = vpop.permute.xlu0 %4797
      %4799 = vrot.lane.b32.xlu0 %v4781, 32
      %v4800 = vpop.permute.xlu0 %4799
      %4801 = vrot.lane.b32.xlu0 %v4782, 32
      %v4802 = vpop.permute.xlu0 %4801
      %4803 = vrot.lane.b32.xlu0 %v4783, 32
      %v4804 = vpop.permute.xlu0 %4803
      %4805 = vrot.lane.b32.xlu0 %v4784, 32
      %v4806 = vpop.permute.xlu0 %4805
      %4807 = vrot.lane.b32.xlu0 %v4785, 32
      %v4808 = vpop.permute.xlu0 %4807
      %4809 = vrot.lane.b32.xlu0 %v4786, 32
      %v4810 = vpop.permute.xlu0 %4809
      %4819 = vst.msk [vmem:[#allocation3] sm:$0xff] %vm2582, %v4796
      %4820 = vst.msk [vmem:[#allocation3 + $0x8] sm:$0xff] %vm2582, %v4798
      %4821 = vst.msk [vmem:[#allocation3 + $0x10] sm:$0xff] %vm2582, %v4800
      %4822 = vst.msk [vmem:[#allocation3 + $0x18] sm:$0xff] %vm2582, %v4802
      %4823 = vst.msk [vmem:[#allocation3 + $0x20] sm:$0xff] %vm2582, %v4804
      %4824 = vst.msk [vmem:[#allocation3 + $0x28] sm:$0xff] %vm2582, %v4806
      %4825 = vst.msk [vmem:[#allocation3 + $0x30] sm:$0xff] %vm2582, %v4808
      %4826 = vst.msk [vmem:[#allocation3 + $0x38] sm:$0xff] %vm2582, %v4810
      %v4827 = vld [vmem:[#allocation3] sm:$0xff]
      %v4828 = vld [vmem:[#allocation3 + $0x8] sm:$0xff]
      %v4829 = vld [vmem:[#allocation3 + $0x10] sm:$0xff]
      %v4830 = vld [vmem:[#allocation3 + $0x18] sm:$0xff]
      %v4831 = vld [vmem:[#allocation3 + $0x20] sm:$0xff]
      %v4832 = vld [vmem:[#allocation3 + $0x28] sm:$0xff]
      %v4833 = vld [vmem:[#allocation3 + $0x30] sm:$0xff]
      %v4834 = vld [vmem:[#allocation3 + $0x38] sm:$0xff]
      %s4835 = scalar_lea.vmem %s7, 160
      %v4836 = vld [vmem:[%s4835] sm:$0xff]
      %v4837 = vld [vmem:[%s4835 + $0x8] sm:$0xff]
      %v4838 = vld [vmem:[%s4835 + $0x10] sm:$0xff]
      %v4839 = vld [vmem:[%s4835 + $0x18] sm:$0xff]
      %v4840 = vld [vmem:[%s4835 + $0x20] sm:$0xf]
      %v4842 = vsel %vm3020, %v4827, 0
      %v4845 = vsel %vm3020, %v4828, 0
      %v4848 = vsel %vm3020, %v4829, 0
      %v4851 = vsel %vm3020, %v4830, 0
      %v4854 = vsel %vm3020, %v4831, 0
      %v4857 = vsel %vm3020, %v4832, 0
      %v4860 = vsel %vm3020, %v4833, 0
      %v4863 = vsel %vm3020, %v4834, 0
      %v4866 = vsel %vm1720, %v4840, 0
      %4868 = vmatprep.subr.mxu0 0.0
      %4869 = vmatpush1.msra.mxu0 %v4836
      %4870 = vmatprep.subr.mxu0 0.0
      %4871 = vmatpush1.msra.mxu0 %v4837
      %4872 = vmatprep.subr.mxu0 0.0
      %4873 = vmatpush1.msra.mxu0 %v4838
      %4874 = vmatprep.subr.mxu0 0.0
      %4875 = vmatpush1.msra.mxu0 %v4839
      %4876 = vmatprep.subr.mxu0 0.0
      %4877 = vmatpush1.msra.mxu0 %v4866
      %4878 = vmatprep.subr.mxu0 0.0
      %4879 = vmatpush1.msra.mxu0 0.0
      %4880 = vmatprep.subr.mxu0 0.0
      %4881 = vmatpush1.msra.mxu0 0.0
      %4882 = vmatprep.subr.mxu0 0.0
      %4883 = vmatpush1.msra.mxu0 0.0
      %4884 = vmatprep.subr.mxu0 0.0
      %4885 = vmatpush1.msra.mxu0 0.0
      %4886 = vmatprep.subr.mxu0 0.0
      %4887 = vmatpush1.msra.mxu0 0.0
      %4888 = vmatprep.subr.mxu0 0.0
      %4889 = vmatpush1.msra.mxu0 0.0
      %4890 = vmatprep.subr.mxu0 0.0
      %4891 = vmatpush1.msra.mxu0 0.0
      %4892 = vmatprep.subr.mxu0 0.0
      %4893 = vmatpush1.msra.mxu0 0.0
      %4894 = vmatprep.subr.mxu0 0.0
      %4895 = vmatpush1.msra.mxu0 0.0
      %4896 = vmatprep.subr.mxu0 0.0
      %4897 = vmatpush1.msra.mxu0 0.0
      %4898 = vmatprep.subr.mxu0 0.0
      %4899 = vmatpush1.msra.mxu0 0.0
      %4900 = vmatprep.subr.mxu0 0.0
      %4901 = vmatpush1.msra.mxu0 0.0
      %4902 = vmatprep.subr.mxu0 0.0
      %4903 = vmatpush1.msra.mxu0 0.0
      %4904 = vmatprep.subr.mxu0 0.0
      %4905 = vmatpush1.msra.mxu0 0.0
      %4906 = vmatprep.subr.mxu0 0.0
      %4907 = vmatpush1.msra.mxu0 0.0
      %4908 = vmatprep.subr.mxu0 0.0
      %4909 = vmatpush1.msra.mxu0 0.0
      %4910 = vmatprep.subr.mxu0 0.0
      %4911 = vmatpush1.msra.mxu0 0.0
      %4912 = vmatprep.subr.mxu0 0.0
      %4913 = vmatpush1.msra.mxu0 0.0
      %4914 = vmatprep.subr.mxu0 0.0
      %4915 = vmatpush1.msra.mxu0 0.0
      %4916 = vmatprep.subr.mxu0 0.0
      %4917 = vmatpush1.msra.mxu0 0.0
      %4918 = vmatprep.subr.mxu0 0.0
      %4919 = vmatpush1.msra.mxu0 0.0
      %4920 = vmatprep.subr.mxu0 0.0
      %4921 = vmatpush1.msra.mxu0 0.0
      %4922 = vmatprep.subr.mxu0 0.0
      %4923 = vmatpush1.msra.mxu0 0.0
      %4924 = vmatprep.subr.mxu0 0.0
      %4925 = vmatpush1.msra.mxu0 0.0
      %4926 = vmatprep.subr.mxu0 0.0
      %4927 = vmatpush1.msra.mxu0 0.0
      %4928 = vmatprep.subr.mxu0 0.0
      %4929 = vmatpush1.msra.mxu0 0.0
      %4930 = vmatprep.subr.mxu0 0.0
      %4931 = vmatpush1.msra.mxu0 0.0
      %4932 = vmatprep.mubr.f32.mxu0 0.0
      %4933 = vmatmul.mubr.f32.gmra.mrb[0].mxu0 %v4842
      %v4934 = vpop.f32.mrb[0].mxu0
      %v4935 = vadd.f32 0.0, %v4934
      %v4936 = vpop.f32.mrb[0].mxu0
      %4937 = vmatprep.mubr.f32.mxu0 0.0
      %4938 = vmatmul.mubr.f32.gmra.mrb[0].mxu0 %v4845
      %v4939 = vpop.f32.mrb[0].mxu0
      %v4940 = vadd.f32 0.0, %v4939
      %v4941 = vpop.f32.mrb[0].mxu0
      %4942 = vmatprep.mubr.f32.mxu0 0.0
      %4943 = vmatmul.mubr.f32.gmra.mrb[0].mxu0 %v4848
      %v4944 = vpop.f32.mrb[0].mxu0
      %v4945 = vadd.f32 0.0, %v4944
      %v4946 = vpop.f32.mrb[0].mxu0
      %4947 = vmatprep.mubr.f32.mxu0 0.0
      %4948 = vmatmul.mubr.f32.gmra.mrb[0].mxu0 %v4851
      %v4949 = vpop.f32.mrb[0].mxu0
      %v4950 = vadd.f32 0.0, %v4949
      %v4951 = vpop.f32.mrb[0].mxu0
      %4952 = vmatprep.mubr.f32.mxu0 0.0
      %4953 = vmatmul.mubr.f32.gmra.mrb[0].mxu0 %v4854
      %v4954 = vpop.f32.mrb[0].mxu0
      %v4955 = vadd.f32 0.0, %v4954
      %v4956 = vpop.f32.mrb[0].mxu0
      %4957 = vmatprep.mubr.f32.mxu0 0.0
      %4958 = vmatmul.mubr.f32.gmra.mrb[0].mxu0 %v4857
      %v4959 = vpop.f32.mrb[0].mxu0
      %v4960 = vadd.f32 0.0, %v4959
      %v4961 = vpop.f32.mrb[0].mxu0
      %4962 = vmatprep.mubr.f32.mxu0 0.0
      %4963 = vmatmul.mubr.f32.gmra.mrb[0].mxu0 %v4860
      %v4964 = vpop.f32.mrb[0].mxu0
      %v4965 = vadd.f32 0.0, %v4964
      %v4966 = vpop.f32.mrb[0].mxu0
      %4967 = vmatprep.mubr.f32.mxu0 0.0
      %4968 = vmatmul.mubr.f32.gmra.mrb[0].mxu0 %v4863
      %v4969 = vpop.f32.mrb[0].mxu0
      %v4970 = vadd.f32 0.0, %v4969
      %v4971 = vpop.f32.mrb[0].mxu0
      %4972 = vdwg.mxu0
      %v4974 = vsel %vm3020, %v4411, 0
      %v4977 = vsel %vm3020, %v4412, 0
      %v4980 = vsel %vm3020, %v4413, 0
      %v4983 = vsel %vm3020, %v4414, 0
      %v4986 = vsel %vm3020, %v4415, 0
      %v4989 = vsel %vm3020, %v4416, 0
      %v4992 = vsel %vm3020, %v4417, 0
      %v4995 = vsel %vm3020, %v4418, 0
      %v4998 = vsel %vm1720, %v4424, 0
      %5000 = vmatprep.subr.mxu0 0.0
      %5001 = vmatpush1.msra.mxu0 %v4420
      %5002 = vmatprep.subr.mxu0 0.0
      %5003 = vmatpush1.msra.mxu0 %v4421
      %5004 = vmatprep.subr.mxu0 0.0
      %5005 = vmatpush1.msra.mxu0 %v4422
      %5006 = vmatprep.subr.mxu0 0.0
      %5007 = vmatpush1.msra.mxu0 %v4423
      %5008 = vmatprep.subr.mxu0 0.0
      %5009 = vmatpush1.msra.mxu0 %v4998
      %5010 = vmatprep.subr.mxu0 0.0
      %5011 = vmatpush1.msra.mxu0 0.0
      %5012 = vmatprep.subr.mxu0 0.0
      %5013 = vmatpush1.msra.mxu0 0.0
      %5014 = vmatprep.subr.mxu0 0.0
      %5015 = vmatpush1.msra.mxu0 0.0
      %5016 = vmatprep.subr.mxu0 0.0
      %5017 = vmatpush1.msra.mxu0 0.0
      %5018 = vmatprep.subr.mxu0 0.0
      %5019 = vmatpush1.msra.mxu0 0.0
      %5020 = vmatprep.subr.mxu0 0.0
      %5021 = vmatpush1.msra.mxu0 0.0
      %5022 = vmatprep.subr.mxu0 0.0
      %5023 = vmatpush1.msra.mxu0 0.0
      %5024 = vmatprep.subr.mxu0 0.0
      %5025 = vmatpush1.msra.mxu0 0.0
      %5026 = vmatprep.subr.mxu0 0.0
      %5027 = vmatpush1.msra.mxu0 0.0
      %5028 = vmatprep.subr.mxu0 0.0
      %5029 = vmatpush1.msra.mxu0 0.0
      %5030 = vmatprep.subr.mxu0 0.0
      %5031 = vmatpush1.msra.mxu0 0.0
      %5032 = vmatprep.subr.mxu0 0.0
      %5033 = vmatpush1.msra.mxu0 0.0
      %5034 = vmatprep.subr.mxu0 0.0
      %5035 = vmatpush1.msra.mxu0 0.0
      %5036 = vmatprep.subr.mxu0 0.0
      %5037 = vmatpush1.msra.mxu0 0.0
      %5038 = vmatprep.subr.mxu0 0.0
      %5039 = vmatpush1.msra.mxu0 0.0
      %5040 = vmatprep.subr.mxu0 0.0
      %5041 = vmatpush1.msra.mxu0 0.0
      %5042 = vmatprep.subr.mxu0 0.0
      %5043 = vmatpush1.msra.mxu0 0.0
      %5044 = vmatprep.subr.mxu0 0.0
      %5045 = vmatpush1.msra.mxu0 0.0
      %5046 = vmatprep.subr.mxu0 0.0
      %5047 = vmatpush1.msra.mxu0 0.0
      %5048 = vmatprep.subr.mxu0 0.0
      %5049 = vmatpush1.msra.mxu0 0.0
      %5050 = vmatprep.subr.mxu0 0.0
      %5051 = vmatpush1.msra.mxu0 0.0
      %5052 = vmatprep.subr.mxu0 0.0
      %5053 = vmatpush1.msra.mxu0 0.0
      %5054 = vmatprep.subr.mxu0 0.0
      %5055 = vmatpush1.msra.mxu0 0.0
      %5056 = vmatprep.subr.mxu0 0.0
      %5057 = vmatpush1.msra.mxu0 0.0
      %5058 = vmatprep.subr.mxu0 0.0
      %5059 = vmatpush1.msra.mxu0 0.0
      %5060 = vmatprep.subr.mxu0 0.0
      %5061 = vmatpush1.msra.mxu0 0.0
      %5062 = vmatprep.subr.mxu0 0.0
      %5063 = vmatpush1.msra.mxu0 0.0
      %5064 = vmatprep.mubr.f32.mxu0 0.0
      %5065 = vmatmul.mubr.f32.gmra.mrb[0].mxu0 %v4974
      %v5066 = vpop.f32.mrb[0].mxu0
      %v5067 = vadd.f32 %v4935, %v5066
      %v5068 = vpop.f32.mrb[0].mxu0
      %5069 = vmatprep.mubr.f32.mxu0 0.0
      %5070 = vmatmul.mubr.f32.gmra.mrb[0].mxu0 %v4977
      %v5071 = vpop.f32.mrb[0].mxu0
      %v5072 = vadd.f32 %v4940, %v5071
      %v5073 = vpop.f32.mrb[0].mxu0
      %5074 = vmatprep.mubr.f32.mxu0 0.0
      %5075 = vmatmul.mubr.f32.gmra.mrb[0].mxu0 %v4980
      %v5076 = vpop.f32.mrb[0].mxu0
      %v5077 = vadd.f32 %v4945, %v5076
      %v5078 = vpop.f32.mrb[0].mxu0
      %5079 = vmatprep.mubr.f32.mxu0 0.0
      %5080 = vmatmul.mubr.f32.gmra.mrb[0].mxu0 %v4983
      %v5081 = vpop.f32.mrb[0].mxu0
      %v5082 = vadd.f32 %v4950, %v5081
      %v5083 = vpop.f32.mrb[0].mxu0
      %5084 = vmatprep.mubr.f32.mxu0 0.0
      %5085 = vmatmul.mubr.f32.gmra.mrb[0].mxu0 %v4986
      %v5086 = vpop.f32.mrb[0].mxu0
      %v5087 = vadd.f32 %v4955, %v5086
      %v5088 = vpop.f32.mrb[0].mxu0
      %5089 = vmatprep.mubr.f32.mxu0 0.0
      %5090 = vmatmul.mubr.f32.gmra.mrb[0].mxu0 %v4989
      %v5091 = vpop.f32.mrb[0].mxu0
      %v5092 = vadd.f32 %v4960, %v5091
      %v5093 = vpop.f32.mrb[0].mxu0
      %5094 = vmatprep.mubr.f32.mxu0 0.0
      %5095 = vmatmul.mubr.f32.gmra.mrb[0].mxu0 %v4992
      %v5096 = vpop.f32.mrb[0].mxu0
      %v5097 = vadd.f32 %v4965, %v5096
      %v5098 = vpop.f32.mrb[0].mxu0
      %5099 = vmatprep.mubr.f32.mxu0 0.0
      %5100 = vmatmul.mubr.f32.gmra.mrb[0].mxu0 %v4995
      %v5101 = vpop.f32.mrb[0].mxu0
      %v5102 = vadd.f32 %v4970, %v5101
      %v5103 = vpop.f32.mrb[0].mxu0
      %5104 = vdwg.mxu0
      %s5105 = scalar_lea.vmem [#allocation2], 4256
      %v5106 = vld [vmem:[%s5105 + $0x3] sm:$0xff]
      %v5107 = vld [vmem:[%s5105 + $0x23] sm:$0xff]
      %v5108 = vld [vmem:[%s5105 + $0x43] sm:$0xff]
      %v5109 = vld [vmem:[%s5105 + $0x63] sm:$0xff]
      %v5110 = vld [vmem:[%s5105 + $0x83] sm:$0xff]
      %v5111 = vld [vmem:[%s5105 + $0xa3] sm:$0xff]
      %v5112 = vld [vmem:[%s5105 + $0xc3] sm:$0xff]
      %v5113 = vld [vmem:[%s5105 + $0xe3] sm:$0xff]
      %5114 = vst.msk [vmem:[#allocation3] sm:$0xff] %vm831, %v5106
      %5115 = vst.msk [vmem:[#allocation3 + $0x8] sm:$0xff] %vm831, %v5107
      %5116 = vst.msk [vmem:[#allocation3 + $0x10] sm:$0xff] %vm831, %v5108
      %5117 = vst.msk [vmem:[#allocation3 + $0x18] sm:$0xff] %vm831, %v5109
      %5118 = vst.msk [vmem:[#allocation3 + $0x20] sm:$0xff] %vm831, %v5110
      %5119 = vst.msk [vmem:[#allocation3 + $0x28] sm:$0xff] %vm831, %v5111
      %5120 = vst.msk [vmem:[#allocation3 + $0x30] sm:$0xff] %vm831, %v5112
      %5121 = vst.msk [vmem:[#allocation3 + $0x38] sm:$0xff] %vm831, %v5113
      %v5122 = vld [vmem:[%s5105 + $0x9] sm:$0xff]
      %v5123 = vld [vmem:[%s5105 + $0x29] sm:$0xff]
      %v5124 = vld [vmem:[%s5105 + $0x49] sm:$0xff]
      %v5125 = vld [vmem:[%s5105 + $0x69] sm:$0xff]
      %v5126 = vld [vmem:[%s5105 + $0x89] sm:$0xff]
      %v5127 = vld [vmem:[%s5105 + $0xa9] sm:$0xff]
      %v5128 = vld [vmem:[%s5105 + $0xc9] sm:$0xff]
      %v5129 = vld [vmem:[%s5105 + $0xe9] sm:$0xff]
      %5138 = vrot.lane.b32.xlu0 %v5122, 4
      %v5139 = vpop.permute.xlu0 %5138
      %5140 = vrot.lane.b32.xlu0 %v5123, 4
      %v5141 = vpop.permute.xlu0 %5140
      %5142 = vrot.lane.b32.xlu0 %v5124, 4
      %v5143 = vpop.permute.xlu0 %5142
      %5144 = vrot.lane.b32.xlu0 %v5125, 4
      %v5145 = vpop.permute.xlu0 %5144
      %5146 = vrot.lane.b32.xlu0 %v5126, 4
      %v5147 = vpop.permute.xlu0 %5146
      %5148 = vrot.lane.b32.xlu0 %v5127, 4
      %v5149 = vpop.permute.xlu0 %5148
      %5150 = vrot.lane.b32.xlu0 %v5128, 4
      %v5151 = vpop.permute.xlu0 %5150
      %5152 = vrot.lane.b32.xlu0 %v5129, 4
      %v5153 = vpop.permute.xlu0 %5152
      %5162 = vst.msk [vmem:[#allocation3] sm:$0xff] %vm2238, %v5139
      %5163 = vst.msk [vmem:[#allocation3 + $0x8] sm:$0xff] %vm2238, %v5141
      %5164 = vst.msk [vmem:[#allocation3 + $0x10] sm:$0xff] %vm2238, %v5143
      %5165 = vst.msk [vmem:[#allocation3 + $0x18] sm:$0xff] %vm2238, %v5145
      %5166 = vst.msk [vmem:[#allocation3 + $0x20] sm:$0xff] %vm2238, %v5147
      %5167 = vst.msk [vmem:[#allocation3 + $0x28] sm:$0xff] %vm2238, %v5149
      %5168 = vst.msk [vmem:[#allocation3 + $0x30] sm:$0xff] %vm2238, %v5151
      %5169 = vst.msk [vmem:[#allocation3 + $0x38] sm:$0xff] %vm2238, %v5153
      %v5170 = vld [vmem:[%s5105 + $0xf] sm:$0xff]
      %v5171 = vld [vmem:[%s5105 + $0x2f] sm:$0xff]
      %v5172 = vld [vmem:[%s5105 + $0x4f] sm:$0xff]
      %v5173 = vld [vmem:[%s5105 + $0x6f] sm:$0xff]
      %v5174 = vld [vmem:[%s5105 + $0x8f] sm:$0xff]
      %v5175 = vld [vmem:[%s5105 + $0xaf] sm:$0xff]
      %v5176 = vld [vmem:[%s5105 + $0xcf] sm:$0xff]
      %v5177 = vld [vmem:[%s5105 + $0xef] sm:$0xff]
      %5186 = vrot.lane.b32.xlu0 %v5170, 8
      %v5187 = vpop.permute.xlu0 %5186
      %5188 = vrot.lane.b32.xlu0 %v5171, 8
      %v5189 = vpop.permute.xlu0 %5188
      %5190 = vrot.lane.b32.xlu0 %v5172, 8
      %v5191 = vpop.permute.xlu0 %5190
      %5192 = vrot.lane.b32.xlu0 %v5173, 8
      %v5193 = vpop.permute.xlu0 %5192
      %5194 = vrot.lane.b32.xlu0 %v5174, 8
      %v5195 = vpop.permute.xlu0 %5194
      %5196 = vrot.lane.b32.xlu0 %v5175, 8
      %v5197 = vpop.permute.xlu0 %5196
      %5198 = vrot.lane.b32.xlu0 %v5176, 8
      %v5199 = vpop.permute.xlu0 %5198
      %5200 = vrot.lane.b32.xlu0 %v5177, 8
      %v5201 = vpop.permute.xlu0 %5200
      %5210 = vst.msk [vmem:[#allocation3] sm:$0xff] %vm2287, %v5187
      %5211 = vst.msk [vmem:[#allocation3 + $0x8] sm:$0xff] %vm2287, %v5189
      %5212 = vst.msk [vmem:[#allocation3 + $0x10] sm:$0xff] %vm2287, %v5191
      %5213 = vst.msk [vmem:[#allocation3 + $0x18] sm:$0xff] %vm2287, %v5193
      %5214 = vst.msk [vmem:[#allocation3 + $0x20] sm:$0xff] %vm2287, %v5195
      %5215 = vst.msk [vmem:[#allocation3 + $0x28] sm:$0xff] %vm2287, %v5197
      %5216 = vst.msk [vmem:[#allocation3 + $0x30] sm:$0xff] %vm2287, %v5199
      %5217 = vst.msk [vmem:[#allocation3 + $0x38] sm:$0xff] %vm2287, %v5201
      %v5218 = vld [vmem:[%s1654 + $0x3] sm:$0xff]
      %v5219 = vld [vmem:[%s1654 + $0x23] sm:$0xff]
      %v5220 = vld [vmem:[%s1654 + $0x43] sm:$0xff]
      %v5221 = vld [vmem:[%s1654 + $0x63] sm:$0xff]
      %v5222 = vld [vmem:[%s1654 + $0x83] sm:$0xff]
      %v5223 = vld [vmem:[%s1654 + $0xa3] sm:$0xff]
      %v5224 = vld [vmem:[%s1654 + $0xc3] sm:$0xff]
      %v5225 = vld [vmem:[%s1654 + $0xe3] sm:$0xff]
      %5234 = vrot.lane.b32.xlu0 %v5218, 12
      %v5235 = vpop.permute.xlu0 %5234
      %5236 = vrot.lane.b32.xlu0 %v5219, 12
      %v5237 = vpop.permute.xlu0 %5236
      %5238 = vrot.lane.b32.xlu0 %v5220, 12
      %v5239 = vpop.permute.xlu0 %5238
      %5240 = vrot.lane.b32.xlu0 %v5221, 12
      %v5241 = vpop.permute.xlu0 %5240
      %5242 = vrot.lane.b32.xlu0 %v5222, 12
      %v5243 = vpop.permute.xlu0 %5242
      %5244 = vrot.lane.b32.xlu0 %v5223, 12
      %v5245 = vpop.permute.xlu0 %5244
      %5246 = vrot.lane.b32.xlu0 %v5224, 12
      %v5247 = vpop.permute.xlu0 %5246
      %5248 = vrot.lane.b32.xlu0 %v5225, 12
      %v5249 = vpop.permute.xlu0 %5248
      %5258 = vst.msk [vmem:[#allocation3] sm:$0xff] %vm2336, %v5235
      %5259 = vst.msk [vmem:[#allocation3 + $0x8] sm:$0xff] %vm2336, %v5237
      %5260 = vst.msk [vmem:[#allocation3 + $0x10] sm:$0xff] %vm2336, %v5239
      %5261 = vst.msk [vmem:[#allocation3 + $0x18] sm:$0xff] %vm2336, %v5241
      %5262 = vst.msk [vmem:[#allocation3 + $0x20] sm:$0xff] %vm2336, %v5243
      %5263 = vst.msk [vmem:[#allocation3 + $0x28] sm:$0xff] %vm2336, %v5245
      %5264 = vst.msk [vmem:[#allocation3 + $0x30] sm:$0xff] %vm2336, %v5247
      %5265 = vst.msk [vmem:[#allocation3 + $0x38] sm:$0xff] %vm2336, %v5249
      %v5266 = vld [vmem:[%s1654 + $0x9] sm:$0xff]
      %v5267 = vld [vmem:[%s1654 + $0x29] sm:$0xff]
      %v5268 = vld [vmem:[%s1654 + $0x49] sm:$0xff]
      %v5269 = vld [vmem:[%s1654 + $0x69] sm:$0xff]
      %v5270 = vld [vmem:[%s1654 + $0x89] sm:$0xff]
      %v5271 = vld [vmem:[%s1654 + $0xa9] sm:$0xff]
      %v5272 = vld [vmem:[%s1654 + $0xc9] sm:$0xff]
      %v5273 = vld [vmem:[%s1654 + $0xe9] sm:$0xff]
      %5282 = vrot.lane.b32.xlu0 %v5266, 16
      %v5283 = vpop.permute.xlu0 %5282
      %5284 = vrot.lane.b32.xlu0 %v5267, 16
      %v5285 = vpop.permute.xlu0 %5284
      %5286 = vrot.lane.b32.xlu0 %v5268, 16
      %v5287 = vpop.permute.xlu0 %5286
      %5288 = vrot.lane.b32.xlu0 %v5269, 16
      %v5289 = vpop.permute.xlu0 %5288
      %5290 = vrot.lane.b32.xlu0 %v5270, 16
      %v5291 = vpop.permute.xlu0 %5290
      %5292 = vrot.lane.b32.xlu0 %v5271, 16
      %v5293 = vpop.permute.xlu0 %5292
      %5294 = vrot.lane.b32.xlu0 %v5272, 16
      %v5295 = vpop.permute.xlu0 %5294
      %5296 = vrot.lane.b32.xlu0 %v5273, 16
      %v5297 = vpop.permute.xlu0 %5296
      %5306 = vst.msk [vmem:[#allocation3] sm:$0xff] %vm2385, %v5283
      %5307 = vst.msk [vmem:[#allocation3 + $0x8] sm:$0xff] %vm2385, %v5285
      %5308 = vst.msk [vmem:[#allocation3 + $0x10] sm:$0xff] %vm2385, %v5287
      %5309 = vst.msk [vmem:[#allocation3 + $0x18] sm:$0xff] %vm2385, %v5289
      %5310 = vst.msk [vmem:[#allocation3 + $0x20] sm:$0xff] %vm2385, %v5291
      %5311 = vst.msk [vmem:[#allocation3 + $0x28] sm:$0xff] %vm2385, %v5293
      %5312 = vst.msk [vmem:[#allocation3 + $0x30] sm:$0xff] %vm2385, %v5295
      %5313 = vst.msk [vmem:[#allocation3 + $0x38] sm:$0xff] %vm2385, %v5297
      %v5314 = vld [vmem:[%s1654 + $0xf] sm:$0xff]
      %v5315 = vld [vmem:[%s1654 + $0x2f] sm:$0xff]
      %v5316 = vld [vmem:[%s1654 + $0x4f] sm:$0xff]
      %v5317 = vld [vmem:[%s1654 + $0x6f] sm:$0xff]
      %v5318 = vld [vmem:[%s1654 + $0x8f] sm:$0xff]
      %v5319 = vld [vmem:[%s1654 + $0xaf] sm:$0xff]
      %v5320 = vld [vmem:[%s1654 + $0xcf] sm:$0xff]
      %v5321 = vld [vmem:[%s1654 + $0xef] sm:$0xff]
      %5330 = vrot.lane.b32.xlu0 %v5314, 20
      %v5331 = vpop.permute.xlu0 %5330
      %5332 = vrot.lane.b32.xlu0 %v5315, 20
      %v5333 = vpop.permute.xlu0 %5332
      %5334 = vrot.lane.b32.xlu0 %v5316, 20
      %v5335 = vpop.permute.xlu0 %5334
      %5336 = vrot.lane.b32.xlu0 %v5317, 20
      %v5337 = vpop.permute.xlu0 %5336
      %5338 = vrot.lane.b32.xlu0 %v5318, 20
      %v5339 = vpop.permute.xlu0 %5338
      %5340 = vrot.lane.b32.xlu0 %v5319, 20
      %v5341 = vpop.permute.xlu0 %5340
      %5342 = vrot.lane.b32.xlu0 %v5320, 20
      %v5343 = vpop.permute.xlu0 %5342
      %5344 = vrot.lane.b32.xlu0 %v5321, 20
      %v5345 = vpop.permute.xlu0 %5344
      %5354 = vst.msk [vmem:[#allocation3] sm:$0xff] %vm2434, %v5331
      %5355 = vst.msk [vmem:[#allocation3 + $0x8] sm:$0xff] %vm2434, %v5333
      %5356 = vst.msk [vmem:[#allocation3 + $0x10] sm:$0xff] %vm2434, %v5335
      %5357 = vst.msk [vmem:[#allocation3 + $0x18] sm:$0xff] %vm2434, %v5337
      %5358 = vst.msk [vmem:[#allocation3 + $0x20] sm:$0xff] %vm2434, %v5339
      %5359 = vst.msk [vmem:[#allocation3 + $0x28] sm:$0xff] %vm2434, %v5341
      %5360 = vst.msk [vmem:[#allocation3 + $0x30] sm:$0xff] %vm2434, %v5343
      %5361 = vst.msk [vmem:[#allocation3 + $0x38] sm:$0xff] %vm2434, %v5345
      %s5362 = scalar_lea.vmem [#allocation2], 4640
      %v5363 = vld [vmem:[%s5362 + $0x3] sm:$0xff]
      %v5364 = vld [vmem:[%s5362 + $0x23] sm:$0xff]
      %v5365 = vld [vmem:[%s5362 + $0x43] sm:$0xff]
      %v5366 = vld [vmem:[%s5362 + $0x63] sm:$0xff]
      %v5367 = vld [vmem:[%s5362 + $0x83] sm:$0xff]
      %v5368 = vld [vmem:[%s5362 + $0xa3] sm:$0xff]
      %v5369 = vld [vmem:[%s5362 + $0xc3] sm:$0xff]
      %v5370 = vld [vmem:[%s5362 + $0xe3] sm:$0xff]
      %5379 = vrot.lane.b32.xlu0 %v5363, 24
      %v5380 = vpop.permute.xlu0 %5379
      %5381 = vrot.lane.b32.xlu0 %v5364, 24
      %v5382 = vpop.permute.xlu0 %5381
      %5383 = vrot.lane.b32.xlu0 %v5365, 24
      %v5384 = vpop.permute.xlu0 %5383
      %5385 = vrot.lane.b32.xlu0 %v5366, 24
      %v5386 = vpop.permute.xlu0 %5385
      %5387 = vrot.lane.b32.xlu0 %v5367, 24
      %v5388 = vpop.permute.xlu0 %5387
      %5389 = vrot.lane.b32.xlu0 %v5368, 24
      %v5390 = vpop.permute.xlu0 %5389
      %5391 = vrot.lane.b32.xlu0 %v5369, 24
      %v5392 = vpop.permute.xlu0 %5391
      %5393 = vrot.lane.b32.xlu0 %v5370, 24
      %v5394 = vpop.permute.xlu0 %5393
      %5403 = vst.msk [vmem:[#allocation3] sm:$0xff] %vm2484, %v5380
      %5404 = vst.msk [vmem:[#allocation3 + $0x8] sm:$0xff] %vm2484, %v5382
      %5405 = vst.msk [vmem:[#allocation3 + $0x10] sm:$0xff] %vm2484, %v5384
      %5406 = vst.msk [vmem:[#allocation3 + $0x18] sm:$0xff] %vm2484, %v5386
      %5407 = vst.msk [vmem:[#allocation3 + $0x20] sm:$0xff] %vm2484, %v5388
      %5408 = vst.msk [vmem:[#allocation3 + $0x28] sm:$0xff] %vm2484, %v5390
      %5409 = vst.msk [vmem:[#allocation3 + $0x30] sm:$0xff] %vm2484, %v5392
      %5410 = vst.msk [vmem:[#allocation3 + $0x38] sm:$0xff] %vm2484, %v5394
      %v5411 = vld [vmem:[%s5362 + $0x9] sm:$0xff]
      %v5412 = vld [vmem:[%s5362 + $0x29] sm:$0xff]
      %v5413 = vld [vmem:[%s5362 + $0x49] sm:$0xff]
      %v5414 = vld [vmem:[%s5362 + $0x69] sm:$0xff]
      %v5415 = vld [vmem:[%s5362 + $0x89] sm:$0xff]
      %v5416 = vld [vmem:[%s5362 + $0xa9] sm:$0xff]
      %v5417 = vld [vmem:[%s5362 + $0xc9] sm:$0xff]
      %v5418 = vld [vmem:[%s5362 + $0xe9] sm:$0xff]
      %5427 = vrot.lane.b32.xlu0 %v5411, 28
      %v5428 = vpop.permute.xlu0 %5427
      %5429 = vrot.lane.b32.xlu0 %v5412, 28
      %v5430 = vpop.permute.xlu0 %5429
      %5431 = vrot.lane.b32.xlu0 %v5413, 28
      %v5432 = vpop.permute.xlu0 %5431
      %5433 = vrot.lane.b32.xlu0 %v5414, 28
      %v5434 = vpop.permute.xlu0 %5433
      %5435 = vrot.lane.b32.xlu0 %v5415, 28
      %v5436 = vpop.permute.xlu0 %5435
      %5437 = vrot.lane.b32.xlu0 %v5416, 28
      %v5438 = vpop.permute.xlu0 %5437
      %5439 = vrot.lane.b32.xlu0 %v5417, 28
      %v5440 = vpop.permute.xlu0 %5439
      %5441 = vrot.lane.b32.xlu0 %v5418, 28
      %v5442 = vpop.permute.xlu0 %5441
      %5451 = vst.msk [vmem:[#allocation3] sm:$0xff] %vm2533, %v5428
      %5452 = vst.msk [vmem:[#allocation3 + $0x8] sm:$0xff] %vm2533, %v5430
      %5453 = vst.msk [vmem:[#allocation3 + $0x10] sm:$0xff] %vm2533, %v5432
      %5454 = vst.msk [vmem:[#allocation3 + $0x18] sm:$0xff] %vm2533, %v5434
      %5455 = vst.msk [vmem:[#allocation3 + $0x20] sm:$0xff] %vm2533, %v5436
      %5456 = vst.msk [vmem:[#allocation3 + $0x28] sm:$0xff] %vm2533, %v5438
      %5457 = vst.msk [vmem:[#allocation3 + $0x30] sm:$0xff] %vm2533, %v5440
      %5458 = vst.msk [vmem:[#allocation3 + $0x38] sm:$0xff] %vm2533, %v5442
      %v5459 = vld [vmem:[%s5362 + $0xf] sm:$0xff]
      %v5460 = vld [vmem:[%s5362 + $0x2f] sm:$0xff]
      %v5461 = vld [vmem:[%s5362 + $0x4f] sm:$0xff]
      %v5462 = vld [vmem:[%s5362 + $0x6f] sm:$0xff]
      %v5463 = vld [vmem:[%s5362 + $0x8f] sm:$0xff]
      %v5464 = vld [vmem:[%s5362 + $0xaf] sm:$0xff]
      %v5465 = vld [vmem:[%s5362 + $0xcf] sm:$0xff]
      %v5466 = vld [vmem:[%s5362 + $0xef] sm:$0xff]
      %5475 = vrot.lane.b32.xlu0 %v5459, 32
      %v5476 = vpop.permute.xlu0 %5475
      %5477 = vrot.lane.b32.xlu0 %v5460, 32
      %v5478 = vpop.permute.xlu0 %5477
      %5479 = vrot.lane.b32.xlu0 %v5461, 32
      %v5480 = vpop.permute.xlu0 %5479
      %5481 = vrot.lane.b32.xlu0 %v5462, 32
      %v5482 = vpop.permute.xlu0 %5481
      %5483 = vrot.lane.b32.xlu0 %v5463, 32
      %v5484 = vpop.permute.xlu0 %5483
      %5485 = vrot.lane.b32.xlu0 %v5464, 32
      %v5486 = vpop.permute.xlu0 %5485
      %5487 = vrot.lane.b32.xlu0 %v5465, 32
      %v5488 = vpop.permute.xlu0 %5487
      %5489 = vrot.lane.b32.xlu0 %v5466, 32
      %v5490 = vpop.permute.xlu0 %5489
      %5499 = vst.msk [vmem:[#allocation3] sm:$0xff] %vm2582, %v5476
      %5500 = vst.msk [vmem:[#allocation3 + $0x8] sm:$0xff] %vm2582, %v5478
      %5501 = vst.msk [vmem:[#allocation3 + $0x10] sm:$0xff] %vm2582, %v5480
      %5502 = vst.msk [vmem:[#allocation3 + $0x18] sm:$0xff] %vm2582, %v5482
      %5503 = vst.msk [vmem:[#allocation3 + $0x20] sm:$0xff] %vm2582, %v5484
      %5504 = vst.msk [vmem:[#allocation3 + $0x28] sm:$0xff] %vm2582, %v5486
      %5505 = vst.msk [vmem:[#allocation3 + $0x30] sm:$0xff] %vm2582, %v5488
      %5506 = vst.msk [vmem:[#allocation3 + $0x38] sm:$0xff] %vm2582, %v5490
      %v5507 = vld [vmem:[#allocation3] sm:$0xff]
      %v5508 = vld [vmem:[#allocation3 + $0x8] sm:$0xff]
      %v5509 = vld [vmem:[#allocation3 + $0x10] sm:$0xff]
      %v5510 = vld [vmem:[#allocation3 + $0x18] sm:$0xff]
      %v5511 = vld [vmem:[#allocation3 + $0x20] sm:$0xff]
      %v5512 = vld [vmem:[#allocation3 + $0x28] sm:$0xff]
      %v5513 = vld [vmem:[#allocation3 + $0x30] sm:$0xff]
      %v5514 = vld [vmem:[#allocation3 + $0x38] sm:$0xff]
      %s5515 = scalar_lea.vmem %s7, 200
      %v5516 = vld [vmem:[%s5515] sm:$0xff]
      %v5517 = vld [vmem:[%s5515 + $0x8] sm:$0xff]
      %v5518 = vld [vmem:[%s5515 + $0x10] sm:$0xff]
      %v5519 = vld [vmem:[%s5515 + $0x18] sm:$0xff]
      %v5520 = vld [vmem:[%s5515 + $0x20] sm:$0xf]
      %v5522 = vsel %vm3020, %v5507, 0
      %v5525 = vsel %vm3020, %v5508, 0
      %v5528 = vsel %vm3020, %v5509, 0
      %v5531 = vsel %vm3020, %v5510, 0
      %v5534 = vsel %vm3020, %v5511, 0
      %v5537 = vsel %vm3020, %v5512, 0
      %v5540 = vsel %vm3020, %v5513, 0
      %v5543 = vsel %vm3020, %v5514, 0
      %v5546 = vsel %vm1720, %v5520, 0
      %5548 = vmatprep.subr.mxu0 0.0
      %5549 = vmatpush1.msra.mxu0 %v5516
      %5550 = vmatprep.subr.mxu0 0.0
      %5551 = vmatpush1.msra.mxu0 %v5517
      %5552 = vmatprep.subr.mxu0 0.0
      %5553 = vmatpush1.msra.mxu0 %v5518
      %5554 = vmatprep.subr.mxu0 0.0
      %5555 = vmatpush1.msra.mxu0 %v5519
      %5556 = vmatprep.subr.mxu0 0.0
      %5557 = vmatpush1.msra.mxu0 %v5546
      %5558 = vmatprep.subr.mxu0 0.0
      %5559 = vmatpush1.msra.mxu0 0.0
      %5560 = vmatprep.subr.mxu0 0.0
      %5561 = vmatpush1.msra.mxu0 0.0
      %5562 = vmatprep.subr.mxu0 0.0
      %5563 = vmatpush1.msra.mxu0 0.0
      %5564 = vmatprep.subr.mxu0 0.0
      %5565 = vmatpush1.msra.mxu0 0.0
      %5566 = vmatprep.subr.mxu0 0.0
      %5567 = vmatpush1.msra.mxu0 0.0
      %5568 = vmatprep.subr.mxu0 0.0
      %5569 = vmatpush1.msra.mxu0 0.0
      %5570 = vmatprep.subr.mxu0 0.0
      %5571 = vmatpush1.msra.mxu0 0.0
      %5572 = vmatprep.subr.mxu0 0.0
      %5573 = vmatpush1.msra.mxu0 0.0
      %5574 = vmatprep.subr.mxu0 0.0
      %5575 = vmatpush1.msra.mxu0 0.0
      %5576 = vmatprep.subr.mxu0 0.0
      %5577 = vmatpush1.msra.mxu0 0.0
      %5578 = vmatprep.subr.mxu0 0.0
      %5579 = vmatpush1.msra.mxu0 0.0
      %5580 = vmatprep.subr.mxu0 0.0
      %5581 = vmatpush1.msra.mxu0 0.0
      %5582 = vmatprep.subr.mxu0 0.0
      %5583 = vmatpush1.msra.mxu0 0.0
      %5584 = vmatprep.subr.mxu0 0.0
      %5585 = vmatpush1.msra.mxu0 0.0
      %5586 = vmatprep.subr.mxu0 0.0
      %5587 = vmatpush1.msra.mxu0 0.0
      %5588 = vmatprep.subr.mxu0 0.0
      %5589 = vmatpush1.msra.mxu0 0.0
      %5590 = vmatprep.subr.mxu0 0.0
      %5591 = vmatpush1.msra.mxu0 0.0
      %5592 = vmatprep.subr.mxu0 0.0
      %5593 = vmatpush1.msra.mxu0 0.0
      %5594 = vmatprep.subr.mxu0 0.0
      %5595 = vmatpush1.msra.mxu0 0.0
      %5596 = vmatprep.subr.mxu0 0.0
      %5597 = vmatpush1.msra.mxu0 0.0
      %5598 = vmatprep.subr.mxu0 0.0
      %5599 = vmatpush1.msra.mxu0 0.0
      %5600 = vmatprep.subr.mxu0 0.0
      %5601 = vmatpush1.msra.mxu0 0.0
      %5602 = vmatprep.subr.mxu0 0.0
      %5603 = vmatpush1.msra.mxu0 0.0
      %5604 = vmatprep.subr.mxu0 0.0
      %5605 = vmatpush1.msra.mxu0 0.0
      %5606 = vmatprep.subr.mxu0 0.0
      %5607 = vmatpush1.msra.mxu0 0.0
      %5608 = vmatprep.subr.mxu0 0.0
      %5609 = vmatpush1.msra.mxu0 0.0
      %5610 = vmatprep.subr.mxu0 0.0
      %5611 = vmatpush1.msra.mxu0 0.0
      %5612 = vmatprep.mubr.f32.mxu0 0.0
      %5613 = vmatmul.mubr.f32.gmra.mrb[0].mxu0 %v5522
      %v5614 = vpop.f32.mrb[0].mxu0
      %v5615 = vadd.f32 0.0, %v5614
      %v5616 = vpop.f32.mrb[0].mxu0
      %5617 = vmatprep.mubr.f32.mxu0 0.0
      %5618 = vmatmul.mubr.f32.gmra.mrb[0].mxu0 %v5525
      %v5619 = vpop.f32.mrb[0].mxu0
      %v5620 = vadd.f32 0.0, %v5619
      %v5621 = vpop.f32.mrb[0].mxu0
      %5622 = vmatprep.mubr.f32.mxu0 0.0
      %5623 = vmatmul.mubr.f32.gmra.mrb[0].mxu0 %v5528
      %v5624 = vpop.f32.mrb[0].mxu0
      %v5625 = vadd.f32 0.0, %v5624
      %v5626 = vpop.f32.mrb[0].mxu0
      %5627 = vmatprep.mubr.f32.mxu0 0.0
      %5628 = vmatmul.mubr.f32.gmra.mrb[0].mxu0 %v5531
      %v5629 = vpop.f32.mrb[0].mxu0
      %v5630 = vadd.f32 0.0, %v5629
      %v5631 = vpop.f32.mrb[0].mxu0
      %5632 = vmatprep.mubr.f32.mxu0 0.0
      %5633 = vmatmul.mubr.f32.gmra.mrb[0].mxu0 %v5534
      %v5634 = vpop.f32.mrb[0].mxu0
      %v5635 = vadd.f32 0.0, %v5634
      %v5636 = vpop.f32.mrb[0].mxu0
      %5637 = vmatprep.mubr.f32.mxu0 0.0
      %5638 = vmatmul.mubr.f32.gmra.mrb[0].mxu0 %v5537
      %v5639 = vpop.f32.mrb[0].mxu0
      %v5640 = vadd.f32 0.0, %v5639
      %v5641 = vpop.f32.mrb[0].mxu0
      %5642 = vmatprep.mubr.f32.mxu0 0.0
      %5643 = vmatmul.mubr.f32.gmra.mrb[0].mxu0 %v5540
      %v5644 = vpop.f32.mrb[0].mxu0
      %v5645 = vadd.f32 0.0, %v5644
      %v5646 = vpop.f32.mrb[0].mxu0
      %5647 = vmatprep.mubr.f32.mxu0 0.0
      %5648 = vmatmul.mubr.f32.gmra.mrb[0].mxu0 %v5543
      %v5649 = vpop.f32.mrb[0].mxu0
      %v5650 = vadd.f32 0.0, %v5649
      %v5651 = vpop.f32.mrb[0].mxu0
      %5652 = vdwg.mxu0
      %v5653 = vadd.f32 %v5067, %v5615
      %v5654 = vadd.f32 %v5072, %v5620
      %v5655 = vadd.f32 %v5077, %v5625
      %v5656 = vadd.f32 %v5082, %v5630
      %v5657 = vadd.f32 %v5087, %v5635
      %v5658 = vadd.f32 %v5092, %v5640
      %v5659 = vadd.f32 %v5097, %v5645
      %v5660 = vadd.f32 %v5102, %v5650
      %s5661 = scalar_lea.vmem %s8, 1
      %v5662 = vld [vmem:[%s5661] sm:$0x1]
      %v5664 = vlaneseq
      %v5665 = vshrl.u32 %v5664, 7
      %v5666 = vsub.s32 0, %v5665
      %v5667 = vrot.slane %v5662, %v5666
      %v5669 = vadd.f32 %v5653, %v5667
      %v5670 = vadd.f32 %v5654, %v5667
      %v5671 = vadd.f32 %v5655, %v5667
      %v5672 = vadd.f32 %v5656, %v5667
      %v5673 = vadd.f32 %v5657, %v5667
      %v5674 = vadd.f32 %v5658, %v5667
      %v5675 = vadd.f32 %v5659, %v5667
      %v5676 = vadd.f32 %v5660, %v5667
      %v5677 = vmax.f32 %v5669, 0.0
      %v5678 = vmax.f32 %v5670, 0.0
      %v5679 = vmax.f32 %v5671, 0.0
      %v5680 = vmax.f32 %v5672, 0.0
      %v5681 = vmax.f32 %v5673, 0.0
      %v5682 = vmax.f32 %v5674, 0.0
      %v5683 = vmax.f32 %v5675, 0.0
      %v5684 = vmax.f32 %v5676, 0.0
      %v5685 = vld [vmem:[#allocation4] sm:$0xff]
      %v5686 = vld [vmem:[#allocation4 + $0x8] sm:$0xff]
      %v5687 = vld [vmem:[#allocation4 + $0x10] sm:$0xff]
      %v5688 = vld [vmem:[#allocation4 + $0x18] sm:$0xff]
      %v5689 = vld [vmem:[#allocation4 + $0x20] sm:$0xff]
      %v5690 = vld [vmem:[#allocation4 + $0x28] sm:$0xff]
      %v5691 = vld [vmem:[#allocation4 + $0x30] sm:$0xff]
      %v5692 = vld [vmem:[#allocation4 + $0x38] sm:$0xff]
      %s5693 = scalar_lea.vmem %s9, 128
      %v5694 = vld [vmem:[%s5693] sm:$0xff]
      %v5695 = vld [vmem:[%s5693 + $0x8] sm:$0xff]
      %v5696 = vld [vmem:[%s5693 + $0x10] sm:$0xff]
      %v5697 = vld [vmem:[%s5693 + $0x18] sm:$0xff]
      %v5698 = vld [vmem:[%s5693 + $0x20] sm:$0xff]
      %v5699 = vld [vmem:[%s5693 + $0x28] sm:$0xff]
      %v5700 = vld [vmem:[%s5693 + $0x30] sm:$0xff]
      %v5701 = vld [vmem:[%s5693 + $0x38] sm:$0xff]
      %v5702 = vld [vmem:[%s5693 + $0x40] sm:$0xff]
      %v5703 = vld [vmem:[%s5693 + $0x48] sm:$0xff]
      %v5704 = vld [vmem:[%s5693 + $0x50] sm:$0xff]
      %v5705 = vld [vmem:[%s5693 + $0x58] sm:$0xff]
      %v5706 = vld [vmem:[%s5693 + $0x60] sm:$0xff]
      %v5707 = vld [vmem:[%s5693 + $0x68] sm:$0xff]
      %v5708 = vld [vmem:[%s5693 + $0x70] sm:$0xff]
      %v5709 = vld [vmem:[%s5693 + $0x78] sm:$0xff]
      %5710 = vmatprep.subr.mxu0 0.0
      %5711 = vmatpush1.msra.mxu0 %v5694
      %5712 = vmatprep.subr.mxu0 0.0
      %5713 = vmatpush1.msra.mxu0 %v5695
      %5714 = vmatprep.subr.mxu0 0.0
      %5715 = vmatpush1.msra.mxu0 %v5696
      %5716 = vmatprep.subr.mxu0 0.0
      %5717 = vmatpush1.msra.mxu0 %v5697
      %5718 = vmatprep.subr.mxu0 0.0
      %5719 = vmatpush1.msra.mxu0 %v5698
      %5720 = vmatprep.subr.mxu0 0.0
      %5721 = vmatpush1.msra.mxu0 %v5699
      %5722 = vmatprep.subr.mxu0 0.0
      %5723 = vmatpush1.msra.mxu0 %v5700
      %5724 = vmatprep.subr.mxu0 0.0
      %5725 = vmatpush1.msra.mxu0 %v5701
      %5726 = vmatprep.subr.mxu0 0.0
      %5727 = vmatpush1.msra.mxu0 %v5702
      %5728 = vmatprep.subr.mxu0 0.0
      %5729 = vmatpush1.msra.mxu0 %v5703
      %5730 = vmatprep.subr.mxu0 0.0
      %5731 = vmatpush1.msra.mxu0 %v5704
      %5732 = vmatprep.subr.mxu0 0.0
      %5733 = vmatpush1.msra.mxu0 %v5705
      %5734 = vmatprep.subr.mxu0 0.0
      %5735 = vmatpush1.msra.mxu0 %v5706
      %5736 = vmatprep.subr.mxu0 0.0
      %5737 = vmatpush1.msra.mxu0 %v5707
      %5738 = vmatprep.subr.mxu0 0.0
      %5739 = vmatpush1.msra.mxu0 %v5708
      %5740 = vmatprep.subr.mxu0 0.0
      %5741 = vmatpush1.msra.mxu0 %v5709
      %5742 = vmatprep.subr.mxu0 0.0
      %5743 = vmatpush1.msra.mxu0 0.0
      %5744 = vmatprep.subr.mxu0 0.0
      %5745 = vmatpush1.msra.mxu0 0.0
      %5746 = vmatprep.subr.mxu0 0.0
      %5747 = vmatpush1.msra.mxu0 0.0
      %5748 = vmatprep.subr.mxu0 0.0
      %5749 = vmatpush1.msra.mxu0 0.0
      %5750 = vmatprep.subr.mxu0 0.0
      %5751 = vmatpush1.msra.mxu0 0.0
      %5752 = vmatprep.subr.mxu0 0.0
      %5753 = vmatpush1.msra.mxu0 0.0
      %5754 = vmatprep.subr.mxu0 0.0
      %5755 = vmatpush1.msra.mxu0 0.0
      %5756 = vmatprep.subr.mxu0 0.0
      %5757 = vmatpush1.msra.mxu0 0.0
      %5758 = vmatprep.subr.mxu0 0.0
      %5759 = vmatpush1.msra.mxu0 0.0
      %5760 = vmatprep.subr.mxu0 0.0
      %5761 = vmatpush1.msra.mxu0 0.0
      %5762 = vmatprep.subr.mxu0 0.0
      %5763 = vmatpush1.msra.mxu0 0.0
      %5764 = vmatprep.subr.mxu0 0.0
      %5765 = vmatpush1.msra.mxu0 0.0
      %5766 = vmatprep.subr.mxu0 0.0
      %5767 = vmatpush1.msra.mxu0 0.0
      %5768 = vmatprep.subr.mxu0 0.0
      %5769 = vmatpush1.msra.mxu0 0.0
      %5770 = vmatprep.subr.mxu0 0.0
      %5771 = vmatpush1.msra.mxu0 0.0
      %5772 = vmatprep.subr.mxu0 0.0
      %5773 = vmatpush1.msra.mxu0 0.0
      %5774 = vmatprep.mubr.f32.mxu0 0.0
      %5775 = vmatmul.mubr.f32.gmra.mrb[0].mxu0 %v5677
      %v5776 = vpop.f32.mrb[0].mxu0
      %v5777 = vadd.f32 0.0, %v5776
      %v5778 = vpop.f32.mrb[0].mxu0
      %5779 = vmatprep.mubr.f32.mxu0 0.0
      %5780 = vmatmul.mubr.f32.gmra.mrb[0].mxu0 %v5678
      %v5781 = vpop.f32.mrb[0].mxu0
      %v5782 = vadd.f32 0.0, %v5781
      %v5783 = vpop.f32.mrb[0].mxu0
      %5784 = vmatprep.mubr.f32.mxu0 0.0
      %5785 = vmatmul.mubr.f32.gmra.mrb[0].mxu0 %v5679
      %v5786 = vpop.f32.mrb[0].mxu0
      %v5787 = vadd.f32 0.0, %v5786
      %v5788 = vpop.f32.mrb[0].mxu0
      %5789 = vmatprep.mubr.f32.mxu0 0.0
      %5790 = vmatmul.mubr.f32.gmra.mrb[0].mxu0 %v5680
      %v5791 = vpop.f32.mrb[0].mxu0
      %v5792 = vadd.f32 0.0, %v5791
      %v5793 = vpop.f32.mrb[0].mxu0
      %5794 = vmatprep.mubr.f32.mxu0 0.0
      %5795 = vmatmul.mubr.f32.gmra.mrb[0].mxu0 %v5681
      %v5796 = vpop.f32.mrb[0].mxu0
      %v5797 = vadd.f32 0.0, %v5796
      %v5798 = vpop.f32.mrb[0].mxu0
      %5799 = vmatprep.mubr.f32.mxu0 0.0
      %5800 = vmatmul.mubr.f32.gmra.mrb[0].mxu0 %v5682
      %v5801 = vpop.f32.mrb[0].mxu0
      %v5802 = vadd.f32 0.0, %v5801
      %v5803 = vpop.f32.mrb[0].mxu0
      %5804 = vmatprep.mubr.f32.mxu0 0.0
      %5805 = vmatmul.mubr.f32.gmra.mrb[0].mxu0 %v5683
      %v5806 = vpop.f32.mrb[0].mxu0
      %v5807 = vadd.f32 0.0, %v5806
      %v5808 = vpop.f32.mrb[0].mxu0
      %5809 = vmatprep.mubr.f32.mxu0 0.0
      %5810 = vmatmul.mubr.f32.gmra.mrb[0].mxu0 %v5684
      %v5811 = vpop.f32.mrb[0].mxu0
      %v5812 = vadd.f32 0.0, %v5811
      %v5813 = vpop.f32.mrb[0].mxu0
      %5814 = vdwg.mxu0
      %v5815 = vadd.f32 %v5685, %v5777
      %v5816 = vadd.f32 %v5686, %v5782
      %v5817 = vadd.f32 %v5687, %v5787
      %v5818 = vadd.f32 %v5688, %v5792
      %v5819 = vadd.f32 %v5689, %v5797
      %v5820 = vadd.f32 %v5690, %v5802
      %v5821 = vadd.f32 %v5691, %v5807
      %v5822 = vadd.f32 %v5692, %v5812
      %5823 = vst [vmem:[#allocation4] sm:$0xff] %v5815
      %5824 = vst [vmem:[#allocation4 + $0x8] sm:$0xff] %v5816
      %5825 = vst [vmem:[#allocation4 + $0x10] sm:$0xff] %v5817
      %5826 = vst [vmem:[#allocation4 + $0x18] sm:$0xff] %v5818
      %5827 = vst [vmem:[#allocation4 + $0x20] sm:$0xff] %v5819
      %5828 = vst [vmem:[#allocation4 + $0x28] sm:$0xff] %v5820
      %5829 = vst [vmem:[#allocation4 + $0x30] sm:$0xff] %v5821
      %5830 = vst [vmem:[#allocation4 + $0x38] sm:$0xff] %v5822
      %v5831 = vld [vmem:[#allocation2] sm:$0xff]
      %v5832 = vld [vmem:[#allocation2 + $0x20] sm:$0xff]
      %v5833 = vld [vmem:[#allocation2 + $0x40] sm:$0xff]
      %v5834 = vld [vmem:[#allocation2 + $0x60] sm:$0xff]
      %v5835 = vld [vmem:[#allocation2 + $0x80] sm:$0xff]
      %v5836 = vld [vmem:[#allocation2 + $0xa0] sm:$0xff]
      %v5837 = vld [vmem:[#allocation2 + $0xc0] sm:$0xff]
      %v5838 = vld [vmem:[#allocation2 + $0xe0] sm:$0xff]
      %5839 = vst.msk [vmem:[#allocation3] sm:$0xff] %vm831, %v5831
      %5840 = vst.msk [vmem:[#allocation3 + $0x8] sm:$0xff] %vm831, %v5832
      %5841 = vst.msk [vmem:[#allocation3 + $0x10] sm:$0xff] %vm831, %v5833
      %5842 = vst.msk [vmem:[#allocation3 + $0x18] sm:$0xff] %vm831, %v5834
      %5843 = vst.msk [vmem:[#allocation3 + $0x20] sm:$0xff] %vm831, %v5835
      %5844 = vst.msk [vmem:[#allocation3 + $0x28] sm:$0xff] %vm831, %v5836
      %5845 = vst.msk [vmem:[#allocation3 + $0x30] sm:$0xff] %vm831, %v5837
      %5846 = vst.msk [vmem:[#allocation3 + $0x38] sm:$0xff] %vm831, %v5838
      %v5847 = vld [vmem:[#allocation2 + $0x9] sm:$0xff]
      %v5848 = vld [vmem:[#allocation2 + $0x29] sm:$0xff]
      %v5849 = vld [vmem:[#allocation2 + $0x49] sm:$0xff]
      %v5850 = vld [vmem:[#allocation2 + $0x69] sm:$0xff]
      %v5851 = vld [vmem:[#allocation2 + $0x89] sm:$0xff]
      %v5852 = vld [vmem:[#allocation2 + $0xa9] sm:$0xff]
      %v5853 = vld [vmem:[#allocation2 + $0xc9] sm:$0xff]
      %v5854 = vld [vmem:[#allocation2 + $0xe9] sm:$0xff]
      %5863 = vrot.lane.b32.xlu0 %v5847, 4
      %v5864 = vpop.permute.xlu0 %5863
      %5865 = vrot.lane.b32.xlu0 %v5848, 4
      %v5866 = vpop.permute.xlu0 %5865
      %5867 = vrot.lane.b32.xlu0 %v5849, 4
      %v5868 = vpop.permute.xlu0 %5867
      %5869 = vrot.lane.b32.xlu0 %v5850, 4
      %v5870 = vpop.permute.xlu0 %5869
      %5871 = vrot.lane.b32.xlu0 %v5851, 4
      %v5872 = vpop.permute.xlu0 %5871
      %5873 = vrot.lane.b32.xlu0 %v5852, 4
      %v5874 = vpop.permute.xlu0 %5873
      %5875 = vrot.lane.b32.xlu0 %v5853, 4
      %v5876 = vpop.permute.xlu0 %5875
      %5877 = vrot.lane.b32.xlu0 %v5854, 4
      %v5878 = vpop.permute.xlu0 %5877
      %5887 = vst.msk [vmem:[#allocation3] sm:$0xff] %vm2238, %v5864
      %5888 = vst.msk [vmem:[#allocation3 + $0x8] sm:$0xff] %vm2238, %v5866
      %5889 = vst.msk [vmem:[#allocation3 + $0x10] sm:$0xff] %vm2238, %v5868
      %5890 = vst.msk [vmem:[#allocation3 + $0x18] sm:$0xff] %vm2238, %v5870
      %5891 = vst.msk [vmem:[#allocation3 + $0x20] sm:$0xff] %vm2238, %v5872
      %5892 = vst.msk [vmem:[#allocation3 + $0x28] sm:$0xff] %vm2238, %v5874
      %5893 = vst.msk [vmem:[#allocation3 + $0x30] sm:$0xff] %vm2238, %v5876
      %5894 = vst.msk [vmem:[#allocation3 + $0x38] sm:$0xff] %vm2238, %v5878
      %v5895 = vld [vmem:[#allocation2 + $0x12] sm:$0xff]
      %v5896 = vld [vmem:[#allocation2 + $0x32] sm:$0xff]
      %v5897 = vld [vmem:[#allocation2 + $0x52] sm:$0xff]
      %v5898 = vld [vmem:[#allocation2 + $0x72] sm:$0xff]
      %v5899 = vld [vmem:[#allocation2 + $0x92] sm:$0xff]
      %v5900 = vld [vmem:[#allocation2 + $0xb2] sm:$0xff]
      %v5901 = vld [vmem:[#allocation2 + $0xd2] sm:$0xff]
      %v5902 = vld [vmem:[#allocation2 + $0xf2] sm:$0xff]
      %5911 = vrot.lane.b32.xlu0 %v5895, 8
      %v5912 = vpop.permute.xlu0 %5911
      %5913 = vrot.lane.b32.xlu0 %v5896, 8
      %v5914 = vpop.permute.xlu0 %5913
      %5915 = vrot.lane.b32.xlu0 %v5897, 8
      %v5916 = vpop.permute.xlu0 %5915
      %5917 = vrot.lane.b32.xlu0 %v5898, 8
      %v5918 = vpop.permute.xlu0 %5917
      %5919 = vrot.lane.b32.xlu0 %v5899, 8
      %v5920 = vpop.permute.xlu0 %5919
      %5921 = vrot.lane.b32.xlu0 %v5900, 8
      %v5922 = vpop.permute.xlu0 %5921
      %5923 = vrot.lane.b32.xlu0 %v5901, 8
      %v5924 = vpop.permute.xlu0 %5923
      %5925 = vrot.lane.b32.xlu0 %v5902, 8
      %v5926 = vpop.permute.xlu0 %5925
      %5935 = vst.msk [vmem:[#allocation3] sm:$0xff] %vm2287, %v5912
      %5936 = vst.msk [vmem:[#allocation3 + $0x8] sm:$0xff] %vm2287, %v5914
      %5937 = vst.msk [vmem:[#allocation3 + $0x10] sm:$0xff] %vm2287, %v5916
      %5938 = vst.msk [vmem:[#allocation3 + $0x18] sm:$0xff] %vm2287, %v5918
      %5939 = vst.msk [vmem:[#allocation3 + $0x20] sm:$0xff] %vm2287, %v5920
      %5940 = vst.msk [vmem:[#allocation3 + $0x28] sm:$0xff] %vm2287, %v5922
      %5941 = vst.msk [vmem:[#allocation3 + $0x30] sm:$0xff] %vm2287, %v5924
      %5942 = vst.msk [vmem:[#allocation3 + $0x38] sm:$0xff] %vm2287, %v5926
      %v5943 = vld [vmem:[%s1569] sm:$0xff]
      %v5944 = vld [vmem:[%s1569 + $0x20] sm:$0xff]
      %v5945 = vld [vmem:[%s1569 + $0x40] sm:$0xff]
      %v5946 = vld [vmem:[%s1569 + $0x60] sm:$0xff]
      %v5947 = vld [vmem:[%s1569 + $0x80] sm:$0xff]
      %v5948 = vld [vmem:[%s1569 + $0xa0] sm:$0xff]
      %v5949 = vld [vmem:[%s1569 + $0xc0] sm:$0xff]
      %v5950 = vld [vmem:[%s1569 + $0xe0] sm:$0xff]
      %5959 = vrot.lane.b32.xlu0 %v5943, 12
      %v5960 = vpop.permute.xlu0 %5959
      %5961 = vrot.lane.b32.xlu0 %v5944, 12
      %v5962 = vpop.permute.xlu0 %5961
      %5963 = vrot.lane.b32.xlu0 %v5945, 12
      %v5964 = vpop.permute.xlu0 %5963
      %5965 = vrot.lane.b32.xlu0 %v5946, 12
      %v5966 = vpop.permute.xlu0 %5965
      %5967 = vrot.lane.b32.xlu0 %v5947, 12
      %v5968 = vpop.permute.xlu0 %5967
      %5969 = vrot.lane.b32.xlu0 %v5948, 12
      %v5970 = vpop.permute.xlu0 %5969
      %5971 = vrot.lane.b32.xlu0 %v5949, 12
      %v5972 = vpop.permute.xlu0 %5971
      %5973 = vrot.lane.b32.xlu0 %v5950, 12
      %v5974 = vpop.permute.xlu0 %5973
      %5983 = vst.msk [vmem:[#allocation3] sm:$0xff] %vm2336, %v5960
      %5984 = vst.msk [vmem:[#allocation3 + $0x8] sm:$0xff] %vm2336, %v5962
      %5985 = vst.msk [vmem:[#allocation3 + $0x10] sm:$0xff] %vm2336, %v5964
      %5986 = vst.msk [vmem:[#allocation3 + $0x18] sm:$0xff] %vm2336, %v5966
      %5987 = vst.msk [vmem:[#allocation3 + $0x20] sm:$0xff] %vm2336, %v5968
      %5988 = vst.msk [vmem:[#allocation3 + $0x28] sm:$0xff] %vm2336, %v5970
      %5989 = vst.msk [vmem:[#allocation3 + $0x30] sm:$0xff] %vm2336, %v5972
      %5990 = vst.msk [vmem:[#allocation3 + $0x38] sm:$0xff] %vm2336, %v5974
      %v5991 = vld [vmem:[%s1569 + $0x9] sm:$0xff]
      %v5992 = vld [vmem:[%s1569 + $0x29] sm:$0xff]
      %v5993 = vld [vmem:[%s1569 + $0x49] sm:$0xff]
      %v5994 = vld [vmem:[%s1569 + $0x69] sm:$0xff]
      %v5995 = vld [vmem:[%s1569 + $0x89] sm:$0xff]
      %v5996 = vld [vmem:[%s1569 + $0xa9] sm:$0xff]
      %v5997 = vld [vmem:[%s1569 + $0xc9] sm:$0xff]
      %v5998 = vld [vmem:[%s1569 + $0xe9] sm:$0xff]
      %6007 = vrot.lane.b32.xlu0 %v5991, 16
      %v6008 = vpop.permute.xlu0 %6007
      %6009 = vrot.lane.b32.xlu0 %v5992, 16
      %v6010 = vpop.permute.xlu0 %6009
      %6011 = vrot.lane.b32.xlu0 %v5993, 16
      %v6012 = vpop.permute.xlu0 %6011
      %6013 = vrot.lane.b32.xlu0 %v5994, 16
      %v6014 = vpop.permute.xlu0 %6013
      %6015 = vrot.lane.b32.xlu0 %v5995, 16
      %v6016 = vpop.permute.xlu0 %6015
      %6017 = vrot.lane.b32.xlu0 %v5996, 16
      %v6018 = vpop.permute.xlu0 %6017
      %6019 = vrot.lane.b32.xlu0 %v5997, 16
      %v6020 = vpop.permute.xlu0 %6019
      %6021 = vrot.lane.b32.xlu0 %v5998, 16
      %v6022 = vpop.permute.xlu0 %6021
      %6031 = vst.msk [vmem:[#allocation3] sm:$0xff] %vm2385, %v6008
      %6032 = vst.msk [vmem:[#allocation3 + $0x8] sm:$0xff] %vm2385, %v6010
      %6033 = vst.msk [vmem:[#allocation3 + $0x10] sm:$0xff] %vm2385, %v6012
      %6034 = vst.msk [vmem:[#allocation3 + $0x18] sm:$0xff] %vm2385, %v6014
      %6035 = vst.msk [vmem:[#allocation3 + $0x20] sm:$0xff] %vm2385, %v6016
      %6036 = vst.msk [vmem:[#allocation3 + $0x28] sm:$0xff] %vm2385, %v6018
      %6037 = vst.msk [vmem:[#allocation3 + $0x30] sm:$0xff] %vm2385, %v6020
      %6038 = vst.msk [vmem:[#allocation3 + $0x38] sm:$0xff] %vm2385, %v6022
      %v6039 = vld [vmem:[%s1569 + $0x12] sm:$0xff]
      %v6040 = vld [vmem:[%s1569 + $0x32] sm:$0xff]
      %v6041 = vld [vmem:[%s1569 + $0x52] sm:$0xff]
      %v6042 = vld [vmem:[%s1569 + $0x72] sm:$0xff]
      %v6043 = vld [vmem:[%s1569 + $0x92] sm:$0xff]
      %v6044 = vld [vmem:[%s1569 + $0xb2] sm:$0xff]
      %v6045 = vld [vmem:[%s1569 + $0xd2] sm:$0xff]
      %v6046 = vld [vmem:[%s1569 + $0xf2] sm:$0xff]
      %6055 = vrot.lane.b32.xlu0 %v6039, 20
      %v6056 = vpop.permute.xlu0 %6055
      %6057 = vrot.lane.b32.xlu0 %v6040, 20
      %v6058 = vpop.permute.xlu0 %6057
      %6059 = vrot.lane.b32.xlu0 %v6041, 20
      %v6060 = vpop.permute.xlu0 %6059
      %6061 = vrot.lane.b32.xlu0 %v6042, 20
      %v6062 = vpop.permute.xlu0 %6061
      %6063 = vrot.lane.b32.xlu0 %v6043, 20
      %v6064 = vpop.permute.xlu0 %6063
      %6065 = vrot.lane.b32.xlu0 %v6044, 20
      %v6066 = vpop.permute.xlu0 %6065
      %6067 = vrot.lane.b32.xlu0 %v6045, 20
      %v6068 = vpop.permute.xlu0 %6067
      %6069 = vrot.lane.b32.xlu0 %v6046, 20
      %v6070 = vpop.permute.xlu0 %6069
      %6079 = vst.msk [vmem:[#allocation3] sm:$0xff] %vm2434, %v6056
      %6080 = vst.msk [vmem:[#allocation3 + $0x8] sm:$0xff] %vm2434, %v6058
      %6081 = vst.msk [vmem:[#allocation3 + $0x10] sm:$0xff] %vm2434, %v6060
      %6082 = vst.msk [vmem:[#allocation3 + $0x18] sm:$0xff] %vm2434, %v6062
      %6083 = vst.msk [vmem:[#allocation3 + $0x20] sm:$0xff] %vm2434, %v6064
      %6084 = vst.msk [vmem:[#allocation3 + $0x28] sm:$0xff] %vm2434, %v6066
      %6085 = vst.msk [vmem:[#allocation3 + $0x30] sm:$0xff] %vm2434, %v6068
      %6086 = vst.msk [vmem:[#allocation3 + $0x38] sm:$0xff] %vm2434, %v6070
      %s6087 = scalar_lea.vmem [#allocation2], 576
      %v6088 = vld [vmem:[%s6087] sm:$0xff]
      %v6089 = vld [vmem:[%s6087 + $0x20] sm:$0xff]
      %v6090 = vld [vmem:[%s6087 + $0x40] sm:$0xff]
      %v6091 = vld [vmem:[%s6087 + $0x60] sm:$0xff]
      %v6092 = vld [vmem:[%s6087 + $0x80] sm:$0xff]
      %v6093 = vld [vmem:[%s6087 + $0xa0] sm:$0xff]
      %v6094 = vld [vmem:[%s6087 + $0xc0] sm:$0xff]
      %v6095 = vld [vmem:[%s6087 + $0xe0] sm:$0xff]
      %6104 = vrot.lane.b32.xlu0 %v6088, 24
      %v6105 = vpop.permute.xlu0 %6104
      %6106 = vrot.lane.b32.xlu0 %v6089, 24
      %v6107 = vpop.permute.xlu0 %6106
      %6108 = vrot.lane.b32.xlu0 %v6090, 24
      %v6109 = vpop.permute.xlu0 %6108
      %6110 = vrot.lane.b32.xlu0 %v6091, 24
      %v6111 = vpop.permute.xlu0 %6110
      %6112 = vrot.lane.b32.xlu0 %v6092, 24
      %v6113 = vpop.permute.xlu0 %6112
      %6114 = vrot.lane.b32.xlu0 %v6093, 24
      %v6115 = vpop.permute.xlu0 %6114
      %6116 = vrot.lane.b32.xlu0 %v6094, 24
      %v6117 = vpop.permute.xlu0 %6116
      %6118 = vrot.lane.b32.xlu0 %v6095, 24
      %v6119 = vpop.permute.xlu0 %6118
      %6128 = vst.msk [vmem:[#allocation3] sm:$0xff] %vm2484, %v6105
      %6129 = vst.msk [vmem:[#allocation3 + $0x8] sm:$0xff] %vm2484, %v6107
      %6130 = vst.msk [vmem:[#allocation3 + $0x10] sm:$0xff] %vm2484, %v6109
      %6131 = vst.msk [vmem:[#allocation3 + $0x18] sm:$0xff] %vm2484, %v6111
      %6132 = vst.msk [vmem:[#allocation3 + $0x20] sm:$0xff] %vm2484, %v6113
      %6133 = vst.msk [vmem:[#allocation3 + $0x28] sm:$0xff] %vm2484, %v6115
      %6134 = vst.msk [vmem:[#allocation3 + $0x30] sm:$0xff] %vm2484, %v6117
      %6135 = vst.msk [vmem:[#allocation3 + $0x38] sm:$0xff] %vm2484, %v6119
      %v6136 = vld [vmem:[%s6087 + $0x9] sm:$0xff]
      %v6137 = vld [vmem:[%s6087 + $0x29] sm:$0xff]
      %v6138 = vld [vmem:[%s6087 + $0x49] sm:$0xff]
      %v6139 = vld [vmem:[%s6087 + $0x69] sm:$0xff]
      %v6140 = vld [vmem:[%s6087 + $0x89] sm:$0xff]
      %v6141 = vld [vmem:[%s6087 + $0xa9] sm:$0xff]
      %v6142 = vld [vmem:[%s6087 + $0xc9] sm:$0xff]
      %v6143 = vld [vmem:[%s6087 + $0xe9] sm:$0xff]
      %6152 = vrot.lane.b32.xlu0 %v6136, 28
      %v6153 = vpop.permute.xlu0 %6152
      %6154 = vrot.lane.b32.xlu0 %v6137, 28
      %v6155 = vpop.permute.xlu0 %6154
      %6156 = vrot.lane.b32.xlu0 %v6138, 28
      %v6157 = vpop.permute.xlu0 %6156
      %6158 = vrot.lane.b32.xlu0 %v6139, 28
      %v6159 = vpop.permute.xlu0 %6158
      %6160 = vrot.lane.b32.xlu0 %v6140, 28
      %v6161 = vpop.permute.xlu0 %6160
      %6162 = vrot.lane.b32.xlu0 %v6141, 28
      %v6163 = vpop.permute.xlu0 %6162
      %6164 = vrot.lane.b32.xlu0 %v6142, 28
      %v6165 = vpop.permute.xlu0 %6164
      %6166 = vrot.lane.b32.xlu0 %v6143, 28
      %v6167 = vpop.permute.xlu0 %6166
      %6176 = vst.msk [vmem:[#allocation3] sm:$0xff] %vm2533, %v6153
      %6177 = vst.msk [vmem:[#allocation3 + $0x8] sm:$0xff] %vm2533, %v6155
      %6178 = vst.msk [vmem:[#allocation3 + $0x10] sm:$0xff] %vm2533, %v6157
      %6179 = vst.msk [vmem:[#allocation3 + $0x18] sm:$0xff] %vm2533, %v6159
      %6180 = vst.msk [vmem:[#allocation3 + $0x20] sm:$0xff] %vm2533, %v6161
      %6181 = vst.msk [vmem:[#allocation3 + $0x28] sm:$0xff] %vm2533, %v6163
      %6182 = vst.msk [vmem:[#allocation3 + $0x30] sm:$0xff] %vm2533, %v6165
      %6183 = vst.msk [vmem:[#allocation3 + $0x38] sm:$0xff] %vm2533, %v6167
      %v6184 = vld [vmem:[%s6087 + $0x12] sm:$0xff]
      %v6185 = vld [vmem:[%s6087 + $0x32] sm:$0xff]
      %v6186 = vld [vmem:[%s6087 + $0x52] sm:$0xff]
      %v6187 = vld [vmem:[%s6087 + $0x72] sm:$0xff]
      %v6188 = vld [vmem:[%s6087 + $0x92] sm:$0xff]
      %v6189 = vld [vmem:[%s6087 + $0xb2] sm:$0xff]
      %v6190 = vld [vmem:[%s6087 + $0xd2] sm:$0xff]
      %v6191 = vld [vmem:[%s6087 + $0xf2] sm:$0xff]
      %6200 = vrot.lane.b32.xlu0 %v6184, 32
      %v6201 = vpop.permute.xlu0 %6200
      %6202 = vrot.lane.b32.xlu0 %v6185, 32
      %v6203 = vpop.permute.xlu0 %6202
      %6204 = vrot.lane.b32.xlu0 %v6186, 32
      %v6205 = vpop.permute.xlu0 %6204
      %6206 = vrot.lane.b32.xlu0 %v6187, 32
      %v6207 = vpop.permute.xlu0 %6206
      %6208 = vrot.lane.b32.xlu0 %v6188, 32
      %v6209 = vpop.permute.xlu0 %6208
      %6210 = vrot.lane.b32.xlu0 %v6189, 32
      %v6211 = vpop.permute.xlu0 %6210
      %6212 = vrot.lane.b32.xlu0 %v6190, 32
      %v6213 = vpop.permute.xlu0 %6212
      %6214 = vrot.lane.b32.xlu0 %v6191, 32
      %v6215 = vpop.permute.xlu0 %6214
      %6224 = vst.msk [vmem:[#allocation3] sm:$0xff] %vm2582, %v6201
      %6225 = vst.msk [vmem:[#allocation3 + $0x8] sm:$0xff] %vm2582, %v6203
      %6226 = vst.msk [vmem:[#allocation3 + $0x10] sm:$0xff] %vm2582, %v6205
      %6227 = vst.msk [vmem:[#allocation3 + $0x18] sm:$0xff] %vm2582, %v6207
      %6228 = vst.msk [vmem:[#allocation3 + $0x20] sm:$0xff] %vm2582, %v6209
      %6229 = vst.msk [vmem:[#allocation3 + $0x28] sm:$0xff] %vm2582, %v6211
      %6230 = vst.msk [vmem:[#allocation3 + $0x30] sm:$0xff] %vm2582, %v6213
      %6231 = vst.msk [vmem:[#allocation3 + $0x38] sm:$0xff] %vm2582, %v6215
      %v6232 = vld [vmem:[#allocation3] sm:$0xff]
      %v6233 = vld [vmem:[#allocation3 + $0x8] sm:$0xff]
      %v6234 = vld [vmem:[#allocation3 + $0x10] sm:$0xff]
      %v6235 = vld [vmem:[#allocation3 + $0x18] sm:$0xff]
      %v6236 = vld [vmem:[#allocation3 + $0x20] sm:$0xff]
      %v6237 = vld [vmem:[#allocation3 + $0x28] sm:$0xff]
      %v6238 = vld [vmem:[#allocation3 + $0x30] sm:$0xff]
      %v6239 = vld [vmem:[#allocation3 + $0x38] sm:$0xff]
      %s6240 = scalar_lea.vmem %s7, 240
      %v6241 = vld [vmem:[%s6240] sm:$0xff]
      %v6242 = vld [vmem:[%s6240 + $0x8] sm:$0xff]
      %v6243 = vld [vmem:[%s6240 + $0x10] sm:$0xff]
      %v6244 = vld [vmem:[%s6240 + $0x18] sm:$0xff]
      %v6245 = vld [vmem:[%s6240 + $0x20] sm:$0xf]
      %s6246 = scalar_lea.vmem [#allocation2], 2496
      %v6247 = vld [vmem:[%s6246] sm:$0xff]
      %v6248 = vld [vmem:[%s6246 + $0x20] sm:$0xff]
      %v6249 = vld [vmem:[%s6246 + $0x40] sm:$0xff]
      %v6250 = vld [vmem:[%s6246 + $0x60] sm:$0xff]
      %v6251 = vld [vmem:[%s6246 + $0x80] sm:$0xff]
      %v6252 = vld [vmem:[%s6246 + $0xa0] sm:$0xff]
      %v6253 = vld [vmem:[%s6246 + $0xc0] sm:$0xff]
      %v6254 = vld [vmem:[%s6246 + $0xe0] sm:$0xff]
      %6255 = vst.msk [vmem:[#allocation3] sm:$0xff] %vm831, %v6247
      %6256 = vst.msk [vmem:[#allocation3 + $0x8] sm:$0xff] %vm831, %v6248
      %6257 = vst.msk [vmem:[#allocation3 + $0x10] sm:$0xff] %vm831, %v6249
      %6258 = vst.msk [vmem:[#allocation3 + $0x18] sm:$0xff] %vm831, %v6250
      %6259 = vst.msk [vmem:[#allocation3 + $0x20] sm:$0xff] %vm831, %v6251
      %6260 = vst.msk [vmem:[#allocation3 + $0x28] sm:$0xff] %vm831, %v6252
      %6261 = vst.msk [vmem:[#allocation3 + $0x30] sm:$0xff] %vm831, %v6253
      %6262 = vst.msk [vmem:[#allocation3 + $0x38] sm:$0xff] %vm831, %v6254
      %v6263 = vld [vmem:[%s6246 + $0x9] sm:$0xff]
      %v6264 = vld [vmem:[%s6246 + $0x29] sm:$0xff]
      %v6265 = vld [vmem:[%s6246 + $0x49] sm:$0xff]
      %v6266 = vld [vmem:[%s6246 + $0x69] sm:$0xff]
      %v6267 = vld [vmem:[%s6246 + $0x89] sm:$0xff]
      %v6268 = vld [vmem:[%s6246 + $0xa9] sm:$0xff]
      %v6269 = vld [vmem:[%s6246 + $0xc9] sm:$0xff]
      %v6270 = vld [vmem:[%s6246 + $0xe9] sm:$0xff]
      %6279 = vrot.lane.b32.xlu0 %v6263, 4
      %v6280 = vpop.permute.xlu0 %6279
      %6281 = vrot.lane.b32.xlu0 %v6264, 4
      %v6282 = vpop.permute.xlu0 %6281
      %6283 = vrot.lane.b32.xlu0 %v6265, 4
      %v6284 = vpop.permute.xlu0 %6283
      %6285 = vrot.lane.b32.xlu0 %v6266, 4
      %v6286 = vpop.permute.xlu0 %6285
      %6287 = vrot.lane.b32.xlu0 %v6267, 4
      %v6288 = vpop.permute.xlu0 %6287
      %6289 = vrot.lane.b32.xlu0 %v6268, 4
      %v6290 = vpop.permute.xlu0 %6289
      %6291 = vrot.lane.b32.xlu0 %v6269, 4
      %v6292 = vpop.permute.xlu0 %6291
      %6293 = vrot.lane.b32.xlu0 %v6270, 4
      %v6294 = vpop.permute.xlu0 %6293
      %6303 = vst.msk [vmem:[#allocation3] sm:$0xff] %vm2238, %v6280
      %6304 = vst.msk [vmem:[#allocation3 + $0x8] sm:$0xff] %vm2238, %v6282
      %6305 = vst.msk [vmem:[#allocation3 + $0x10] sm:$0xff] %vm2238, %v6284
      %6306 = vst.msk [vmem:[#allocation3 + $0x18] sm:$0xff] %vm2238, %v6286
      %6307 = vst.msk [vmem:[#allocation3 + $0x20] sm:$0xff] %vm2238, %v6288
      %6308 = vst.msk [vmem:[#allocation3 + $0x28] sm:$0xff] %vm2238, %v6290
      %6309 = vst.msk [vmem:[#allocation3 + $0x30] sm:$0xff] %vm2238, %v6292
      %6310 = vst.msk [vmem:[#allocation3 + $0x38] sm:$0xff] %vm2238, %v6294
      %v6311 = vld [vmem:[%s6246 + $0x12] sm:$0xff]
      %v6312 = vld [vmem:[%s6246 + $0x32] sm:$0xff]
      %v6313 = vld [vmem:[%s6246 + $0x52] sm:$0xff]
      %v6314 = vld [vmem:[%s6246 + $0x72] sm:$0xff]
      %v6315 = vld [vmem:[%s6246 + $0x92] sm:$0xff]
      %v6316 = vld [vmem:[%s6246 + $0xb2] sm:$0xff]
      %v6317 = vld [vmem:[%s6246 + $0xd2] sm:$0xff]
      %v6318 = vld [vmem:[%s6246 + $0xf2] sm:$0xff]
      %6327 = vrot.lane.b32.xlu0 %v6311, 8
      %v6328 = vpop.permute.xlu0 %6327
      %6329 = vrot.lane.b32.xlu0 %v6312, 8
      %v6330 = vpop.permute.xlu0 %6329
      %6331 = vrot.lane.b32.xlu0 %v6313, 8
      %v6332 = vpop.permute.xlu0 %6331
      %6333 = vrot.lane.b32.xlu0 %v6314, 8
      %v6334 = vpop.permute.xlu0 %6333
      %6335 = vrot.lane.b32.xlu0 %v6315, 8
      %v6336 = vpop.permute.xlu0 %6335
      %6337 = vrot.lane.b32.xlu0 %v6316, 8
      %v6338 = vpop.permute.xlu0 %6337
      %6339 = vrot.lane.b32.xlu0 %v6317, 8
      %v6340 = vpop.permute.xlu0 %6339
      %6341 = vrot.lane.b32.xlu0 %v6318, 8
      %v6342 = vpop.permute.xlu0 %6341
      %6351 = vst.msk [vmem:[#allocation3] sm:$0xff] %vm2287, %v6328
      %6352 = vst.msk [vmem:[#allocation3 + $0x8] sm:$0xff] %vm2287, %v6330
      %6353 = vst.msk [vmem:[#allocation3 + $0x10] sm:$0xff] %vm2287, %v6332
      %6354 = vst.msk [vmem:[#allocation3 + $0x18] sm:$0xff] %vm2287, %v6334
      %6355 = vst.msk [vmem:[#allocation3 + $0x20] sm:$0xff] %vm2287, %v6336
      %6356 = vst.msk [vmem:[#allocation3 + $0x28] sm:$0xff] %vm2287, %v6338
      %6357 = vst.msk [vmem:[#allocation3 + $0x30] sm:$0xff] %vm2287, %v6340
      %6358 = vst.msk [vmem:[#allocation3 + $0x38] sm:$0xff] %vm2287, %v6342
      %v6359 = vld [vmem:[%s1620] sm:$0xff]
      %v6360 = vld [vmem:[%s1620 + $0x20] sm:$0xff]
      %v6361 = vld [vmem:[%s1620 + $0x40] sm:$0xff]
      %v6362 = vld [vmem:[%s1620 + $0x60] sm:$0xff]
      %v6363 = vld [vmem:[%s1620 + $0x80] sm:$0xff]
      %v6364 = vld [vmem:[%s1620 + $0xa0] sm:$0xff]
      %v6365 = vld [vmem:[%s1620 + $0xc0] sm:$0xff]
      %v6366 = vld [vmem:[%s1620 + $0xe0] sm:$0xff]
      %6375 = vrot.lane.b32.xlu0 %v6359, 12
      %v6376 = vpop.permute.xlu0 %6375
      %6377 = vrot.lane.b32.xlu0 %v6360, 12
      %v6378 = vpop.permute.xlu0 %6377
      %6379 = vrot.lane.b32.xlu0 %v6361, 12
      %v6380 = vpop.permute.xlu0 %6379
      %6381 = vrot.lane.b32.xlu0 %v6362, 12
      %v6382 = vpop.permute.xlu0 %6381
      %6383 = vrot.lane.b32.xlu0 %v6363, 12
      %v6384 = vpop.permute.xlu0 %6383
      %6385 = vrot.lane.b32.xlu0 %v6364, 12
      %v6386 = vpop.permute.xlu0 %6385
      %6387 = vrot.lane.b32.xlu0 %v6365, 12
      %v6388 = vpop.permute.xlu0 %6387
      %6389 = vrot.lane.b32.xlu0 %v6366, 12
      %v6390 = vpop.permute.xlu0 %6389
      %6399 = vst.msk [vmem:[#allocation3] sm:$0xff] %vm2336, %v6376
      %6400 = vst.msk [vmem:[#allocation3 + $0x8] sm:$0xff] %vm2336, %v6378
      %6401 = vst.msk [vmem:[#allocation3 + $0x10] sm:$0xff] %vm2336, %v6380
      %6402 = vst.msk [vmem:[#allocation3 + $0x18] sm:$0xff] %vm2336, %v6382
      %6403 = vst.msk [vmem:[#allocation3 + $0x20] sm:$0xff] %vm2336, %v6384
      %6404 = vst.msk [vmem:[#allocation3 + $0x28] sm:$0xff] %vm2336, %v6386
      %6405 = vst.msk [vmem:[#allocation3 + $0x30] sm:$0xff] %vm2336, %v6388
      %6406 = vst.msk [vmem:[#allocation3 + $0x38] sm:$0xff] %vm2336, %v6390
      %v6407 = vld [vmem:[%s1620 + $0x9] sm:$0xff]
      %v6408 = vld [vmem:[%s1620 + $0x29] sm:$0xff]
      %v6409 = vld [vmem:[%s1620 + $0x49] sm:$0xff]
      %v6410 = vld [vmem:[%s1620 + $0x69] sm:$0xff]
      %v6411 = vld [vmem:[%s1620 + $0x89] sm:$0xff]
      %v6412 = vld [vmem:[%s1620 + $0xa9] sm:$0xff]
      %v6413 = vld [vmem:[%s1620 + $0xc9] sm:$0xff]
      %v6414 = vld [vmem:[%s1620 + $0xe9] sm:$0xff]
      %6423 = vrot.lane.b32.xlu0 %v6407, 16
      %v6424 = vpop.permute.xlu0 %6423
      %6425 = vrot.lane.b32.xlu0 %v6408, 16
      %v6426 = vpop.permute.xlu0 %6425
      %6427 = vrot.lane.b32.xlu0 %v6409, 16
      %v6428 = vpop.permute.xlu0 %6427
      %6429 = vrot.lane.b32.xlu0 %v6410, 16
      %v6430 = vpop.permute.xlu0 %6429
      %6431 = vrot.lane.b32.xlu0 %v6411, 16
      %v6432 = vpop.permute.xlu0 %6431
      %6433 = vrot.lane.b32.xlu0 %v6412, 16
      %v6434 = vpop.permute.xlu0 %6433
      %6435 = vrot.lane.b32.xlu0 %v6413, 16
      %v6436 = vpop.permute.xlu0 %6435
      %6437 = vrot.lane.b32.xlu0 %v6414, 16
      %v6438 = vpop.permute.xlu0 %6437
      %6447 = vst.msk [vmem:[#allocation3] sm:$0xff] %vm2385, %v6424
      %6448 = vst.msk [vmem:[#allocation3 + $0x8] sm:$0xff] %vm2385, %v6426
      %6449 = vst.msk [vmem:[#allocation3 + $0x10] sm:$0xff] %vm2385, %v6428
      %6450 = vst.msk [vmem:[#allocation3 + $0x18] sm:$0xff] %vm2385, %v6430
      %6451 = vst.msk [vmem:[#allocation3 + $0x20] sm:$0xff] %vm2385, %v6432
      %6452 = vst.msk [vmem:[#allocation3 + $0x28] sm:$0xff] %vm2385, %v6434
      %6453 = vst.msk [vmem:[#allocation3 + $0x30] sm:$0xff] %vm2385, %v6436
      %6454 = vst.msk [vmem:[#allocation3 + $0x38] sm:$0xff] %vm2385, %v6438
      %v6455 = vld [vmem:[%s1620 + $0x12] sm:$0xff]
      %v6456 = vld [vmem:[%s1620 + $0x32] sm:$0xff]
      %v6457 = vld [vmem:[%s1620 + $0x52] sm:$0xff]
      %v6458 = vld [vmem:[%s1620 + $0x72] sm:$0xff]
      %v6459 = vld [vmem:[%s1620 + $0x92] sm:$0xff]
      %v6460 = vld [vmem:[%s1620 + $0xb2] sm:$0xff]
      %v6461 = vld [vmem:[%s1620 + $0xd2] sm:$0xff]
      %v6462 = vld [vmem:[%s1620 + $0xf2] sm:$0xff]
      %6471 = vrot.lane.b32.xlu0 %v6455, 20
      %v6472 = vpop.permute.xlu0 %6471
      %6473 = vrot.lane.b32.xlu0 %v6456, 20
      %v6474 = vpop.permute.xlu0 %6473
      %6475 = vrot.lane.b32.xlu0 %v6457, 20
      %v6476 = vpop.permute.xlu0 %6475
      %6477 = vrot.lane.b32.xlu0 %v6458, 20
      %v6478 = vpop.permute.xlu0 %6477
      %6479 = vrot.lane.b32.xlu0 %v6459, 20
      %v6480 = vpop.permute.xlu0 %6479
      %6481 = vrot.lane.b32.xlu0 %v6460, 20
      %v6482 = vpop.permute.xlu0 %6481
      %6483 = vrot.lane.b32.xlu0 %v6461, 20
      %v6484 = vpop.permute.xlu0 %6483
      %6485 = vrot.lane.b32.xlu0 %v6462, 20
      %v6486 = vpop.permute.xlu0 %6485
      %6495 = vst.msk [vmem:[#allocation3] sm:$0xff] %vm2434, %v6472
      %6496 = vst.msk [vmem:[#allocation3 + $0x8] sm:$0xff] %vm2434, %v6474
      %6497 = vst.msk [vmem:[#allocation3 + $0x10] sm:$0xff] %vm2434, %v6476
      %6498 = vst.msk [vmem:[#allocation3 + $0x18] sm:$0xff] %vm2434, %v6478
      %6499 = vst.msk [vmem:[#allocation3 + $0x20] sm:$0xff] %vm2434, %v6480
      %6500 = vst.msk [vmem:[#allocation3 + $0x28] sm:$0xff] %vm2434, %v6482
      %6501 = vst.msk [vmem:[#allocation3 + $0x30] sm:$0xff] %vm2434, %v6484
      %6502 = vst.msk [vmem:[#allocation3 + $0x38] sm:$0xff] %vm2434, %v6486
      %s6503 = scalar_lea.vmem [#allocation2], 3072
      %v6504 = vld [vmem:[%s6503] sm:$0xff]
      %v6505 = vld [vmem:[%s6503 + $0x20] sm:$0xff]
      %v6506 = vld [vmem:[%s6503 + $0x40] sm:$0xff]
      %v6507 = vld [vmem:[%s6503 + $0x60] sm:$0xff]
      %v6508 = vld [vmem:[%s6503 + $0x80] sm:$0xff]
      %v6509 = vld [vmem:[%s6503 + $0xa0] sm:$0xff]
      %v6510 = vld [vmem:[%s6503 + $0xc0] sm:$0xff]
      %v6511 = vld [vmem:[%s6503 + $0xe0] sm:$0xff]
      %6520 = vrot.lane.b32.xlu0 %v6504, 24
      %v6521 = vpop.permute.xlu0 %6520
      %6522 = vrot.lane.b32.xlu0 %v6505, 24
      %v6523 = vpop.permute.xlu0 %6522
      %6524 = vrot.lane.b32.xlu0 %v6506, 24
      %v6525 = vpop.permute.xlu0 %6524
      %6526 = vrot.lane.b32.xlu0 %v6507, 24
      %v6527 = vpop.permute.xlu0 %6526
      %6528 = vrot.lane.b32.xlu0 %v6508, 24
      %v6529 = vpop.permute.xlu0 %6528
      %6530 = vrot.lane.b32.xlu0 %v6509, 24
      %v6531 = vpop.permute.xlu0 %6530
      %6532 = vrot.lane.b32.xlu0 %v6510, 24
      %v6533 = vpop.permute.xlu0 %6532
      %6534 = vrot.lane.b32.xlu0 %v6511, 24
      %v6535 = vpop.permute.xlu0 %6534
      %6544 = vst.msk [vmem:[#allocation3] sm:$0xff] %vm2484, %v6521
      %6545 = vst.msk [vmem:[#allocation3 + $0x8] sm:$0xff] %vm2484, %v6523
      %6546 = vst.msk [vmem:[#allocation3 + $0x10] sm:$0xff] %vm2484, %v6525
      %6547 = vst.msk [vmem:[#allocation3 + $0x18] sm:$0xff] %vm2484, %v6527
      %6548 = vst.msk [vmem:[#allocation3 + $0x20] sm:$0xff] %vm2484, %v6529
      %6549 = vst.msk [vmem:[#allocation3 + $0x28] sm:$0xff] %vm2484, %v6531
      %6550 = vst.msk [vmem:[#allocation3 + $0x30] sm:$0xff] %vm2484, %v6533
      %6551 = vst.msk [vmem:[#allocation3 + $0x38] sm:$0xff] %vm2484, %v6535
      %v6552 = vld [vmem:[%s6503 + $0x9] sm:$0xff]
      %v6553 = vld [vmem:[%s6503 + $0x29] sm:$0xff]
      %v6554 = vld [vmem:[%s6503 + $0x49] sm:$0xff]
      %v6555 = vld [vmem:[%s6503 + $0x69] sm:$0xff]
      %v6556 = vld [vmem:[%s6503 + $0x89] sm:$0xff]
      %v6557 = vld [vmem:[%s6503 + $0xa9] sm:$0xff]
      %v6558 = vld [vmem:[%s6503 + $0xc9] sm:$0xff]
      %v6559 = vld [vmem:[%s6503 + $0xe9] sm:$0xff]
      %6568 = vrot.lane.b32.xlu0 %v6552, 28
      %v6569 = vpop.permute.xlu0 %6568
      %6570 = vrot.lane.b32.xlu0 %v6553, 28
      %v6571 = vpop.permute.xlu0 %6570
      %6572 = vrot.lane.b32.xlu0 %v6554, 28
      %v6573 = vpop.permute.xlu0 %6572
      %6574 = vrot.lane.b32.xlu0 %v6555, 28
      %v6575 = vpop.permute.xlu0 %6574
      %6576 = vrot.lane.b32.xlu0 %v6556, 28
      %v6577 = vpop.permute.xlu0 %6576
      %6578 = vrot.lane.b32.xlu0 %v6557, 28
      %v6579 = vpop.permute.xlu0 %6578
      %6580 = vrot.lane.b32.xlu0 %v6558, 28
      %v6581 = vpop.permute.xlu0 %6580
      %6582 = vrot.lane.b32.xlu0 %v6559, 28
      %v6583 = vpop.permute.xlu0 %6582
      %6592 = vst.msk [vmem:[#allocation3] sm:$0xff] %vm2533, %v6569
      %6593 = vst.msk [vmem:[#allocation3 + $0x8] sm:$0xff] %vm2533, %v6571
      %6594 = vst.msk [vmem:[#allocation3 + $0x10] sm:$0xff] %vm2533, %v6573
      %6595 = vst.msk [vmem:[#allocation3 + $0x18] sm:$0xff] %vm2533, %v6575
      %6596 = vst.msk [vmem:[#allocation3 + $0x20] sm:$0xff] %vm2533, %v6577
      %6597 = vst.msk [vmem:[#allocation3 + $0x28] sm:$0xff] %vm2533, %v6579
      %6598 = vst.msk [vmem:[#allocation3 + $0x30] sm:$0xff] %vm2533, %v6581
      %6599 = vst.msk [vmem:[#allocation3 + $0x38] sm:$0xff] %vm2533, %v6583
      %v6600 = vld [vmem:[%s6503 + $0x12] sm:$0xff]
      %v6601 = vld [vmem:[%s6503 + $0x32] sm:$0xff]
      %v6602 = vld [vmem:[%s6503 + $0x52] sm:$0xff]
      %v6603 = vld [vmem:[%s6503 + $0x72] sm:$0xff]
      %v6604 = vld [vmem:[%s6503 + $0x92] sm:$0xff]
      %v6605 = vld [vmem:[%s6503 + $0xb2] sm:$0xff]
      %v6606 = vld [vmem:[%s6503 + $0xd2] sm:$0xff]
      %v6607 = vld [vmem:[%s6503 + $0xf2] sm:$0xff]
      %6616 = vrot.lane.b32.xlu0 %v6600, 32
      %v6617 = vpop.permute.xlu0 %6616
      %6618 = vrot.lane.b32.xlu0 %v6601, 32
      %v6619 = vpop.permute.xlu0 %6618
      %6620 = vrot.lane.b32.xlu0 %v6602, 32
      %v6621 = vpop.permute.xlu0 %6620
      %6622 = vrot.lane.b32.xlu0 %v6603, 32
      %v6623 = vpop.permute.xlu0 %6622
      %6624 = vrot.lane.b32.xlu0 %v6604, 32
      %v6625 = vpop.permute.xlu0 %6624
      %6626 = vrot.lane.b32.xlu0 %v6605, 32
      %v6627 = vpop.permute.xlu0 %6626
      %6628 = vrot.lane.b32.xlu0 %v6606, 32
      %v6629 = vpop.permute.xlu0 %6628
      %6630 = vrot.lane.b32.xlu0 %v6607, 32
      %v6631 = vpop.permute.xlu0 %6630
      %6640 = vst.msk [vmem:[#allocation3] sm:$0xff] %vm2582, %v6617
      %6641 = vst.msk [vmem:[#allocation3 + $0x8] sm:$0xff] %vm2582, %v6619
      %6642 = vst.msk [vmem:[#allocation3 + $0x10] sm:$0xff] %vm2582, %v6621
      %6643 = vst.msk [vmem:[#allocation3 + $0x18] sm:$0xff] %vm2582, %v6623
      %6644 = vst.msk [vmem:[#allocation3 + $0x20] sm:$0xff] %vm2582, %v6625
      %6645 = vst.msk [vmem:[#allocation3 + $0x28] sm:$0xff] %vm2582, %v6627
      %6646 = vst.msk [vmem:[#allocation3 + $0x30] sm:$0xff] %vm2582, %v6629
      %6647 = vst.msk [vmem:[#allocation3 + $0x38] sm:$0xff] %vm2582, %v6631
      %v6648 = vld [vmem:[#allocation3] sm:$0xff]
      %v6649 = vld [vmem:[#allocation3 + $0x8] sm:$0xff]
      %v6650 = vld [vmem:[#allocation3 + $0x10] sm:$0xff]
      %v6651 = vld [vmem:[#allocation3 + $0x18] sm:$0xff]
      %v6652 = vld [vmem:[#allocation3 + $0x20] sm:$0xff]
      %v6653 = vld [vmem:[#allocation3 + $0x28] sm:$0xff]
      %v6654 = vld [vmem:[#allocation3 + $0x30] sm:$0xff]
      %v6655 = vld [vmem:[#allocation3 + $0x38] sm:$0xff]
      %s6656 = scalar_lea.vmem %s7, 280
      %v6657 = vld [vmem:[%s6656] sm:$0xff]
      %v6658 = vld [vmem:[%s6656 + $0x8] sm:$0xff]
      %v6659 = vld [vmem:[%s6656 + $0x10] sm:$0xff]
      %v6660 = vld [vmem:[%s6656 + $0x18] sm:$0xff]
      %v6661 = vld [vmem:[%s6656 + $0x20] sm:$0xf]
      %v6663 = vsel %vm3020, %v6648, 0
      %v6666 = vsel %vm3020, %v6649, 0
      %v6669 = vsel %vm3020, %v6650, 0
      %v6672 = vsel %vm3020, %v6651, 0
      %v6675 = vsel %vm3020, %v6652, 0
      %v6678 = vsel %vm3020, %v6653, 0
      %v6681 = vsel %vm3020, %v6654, 0
      %v6684 = vsel %vm3020, %v6655, 0
      %v6687 = vsel %vm1720, %v6661, 0
      %6689 = vmatprep.subr.mxu0 0.0
      %6690 = vmatpush1.msra.mxu0 %v6657
      %6691 = vmatprep.subr.mxu0 0.0
      %6692 = vmatpush1.msra.mxu0 %v6658
      %6693 = vmatprep.subr.mxu0 0.0
      %6694 = vmatpush1.msra.mxu0 %v6659
      %6695 = vmatprep.subr.mxu0 0.0
      %6696 = vmatpush1.msra.mxu0 %v6660
      %6697 = vmatprep.subr.mxu0 0.0
      %6698 = vmatpush1.msra.mxu0 %v6687
      %6699 = vmatprep.subr.mxu0 0.0
      %6700 = vmatpush1.msra.mxu0 0.0
      %6701 = vmatprep.subr.mxu0 0.0
      %6702 = vmatpush1.msra.mxu0 0.0
      %6703 = vmatprep.subr.mxu0 0.0
      %6704 = vmatpush1.msra.mxu0 0.0
      %6705 = vmatprep.subr.mxu0 0.0
      %6706 = vmatpush1.msra.mxu0 0.0
      %6707 = vmatprep.subr.mxu0 0.0
      %6708 = vmatpush1.msra.mxu0 0.0
      %6709 = vmatprep.subr.mxu0 0.0
      %6710 = vmatpush1.msra.mxu0 0.0
      %6711 = vmatprep.subr.mxu0 0.0
      %6712 = vmatpush1.msra.mxu0 0.0
      %6713 = vmatprep.subr.mxu0 0.0
      %6714 = vmatpush1.msra.mxu0 0.0
      %6715 = vmatprep.subr.mxu0 0.0
      %6716 = vmatpush1.msra.mxu0 0.0
      %6717 = vmatprep.subr.mxu0 0.0
      %6718 = vmatpush1.msra.mxu0 0.0
      %6719 = vmatprep.subr.mxu0 0.0
      %6720 = vmatpush1.msra.mxu0 0.0
      %6721 = vmatprep.subr.mxu0 0.0
      %6722 = vmatpush1.msra.mxu0 0.0
      %6723 = vmatprep.subr.mxu0 0.0
      %6724 = vmatpush1.msra.mxu0 0.0
      %6725 = vmatprep.subr.mxu0 0.0
      %6726 = vmatpush1.msra.mxu0 0.0
      %6727 = vmatprep.subr.mxu0 0.0
      %6728 = vmatpush1.msra.mxu0 0.0
      %6729 = vmatprep.subr.mxu0 0.0
      %6730 = vmatpush1.msra.mxu0 0.0
      %6731 = vmatprep.subr.mxu0 0.0
      %6732 = vmatpush1.msra.mxu0 0.0
      %6733 = vmatprep.subr.mxu0 0.0
      %6734 = vmatpush1.msra.mxu0 0.0
      %6735 = vmatprep.subr.mxu0 0.0
      %6736 = vmatpush1.msra.mxu0 0.0
      %6737 = vmatprep.subr.mxu0 0.0
      %6738 = vmatpush1.msra.mxu0 0.0
      %6739 = vmatprep.subr.mxu0 0.0
      %6740 = vmatpush1.msra.mxu0 0.0
      %6741 = vmatprep.subr.mxu0 0.0
      %6742 = vmatpush1.msra.mxu0 0.0
      %6743 = vmatprep.subr.mxu0 0.0
      %6744 = vmatpush1.msra.mxu0 0.0
      %6745 = vmatprep.subr.mxu0 0.0
      %6746 = vmatpush1.msra.mxu0 0.0
      %6747 = vmatprep.subr.mxu0 0.0
      %6748 = vmatpush1.msra.mxu0 0.0
      %6749 = vmatprep.subr.mxu0 0.0
      %6750 = vmatpush1.msra.mxu0 0.0
      %6751 = vmatprep.subr.mxu0 0.0
      %6752 = vmatpush1.msra.mxu0 0.0
      %6753 = vmatprep.mubr.f32.mxu0 0.0
      %6754 = vmatmul.mubr.f32.gmra.mrb[0].mxu0 %v6663
      %v6755 = vpop.f32.mrb[0].mxu0
      %v6756 = vadd.f32 0.0, %v6755
      %v6757 = vpop.f32.mrb[0].mxu0
      %6758 = vmatprep.mubr.f32.mxu0 0.0
      %6759 = vmatmul.mubr.f32.gmra.mrb[0].mxu0 %v6666
      %v6760 = vpop.f32.mrb[0].mxu0
      %v6761 = vadd.f32 0.0, %v6760
      %v6762 = vpop.f32.mrb[0].mxu0
      %6763 = vmatprep.mubr.f32.mxu0 0.0
      %6764 = vmatmul.mubr.f32.gmra.mrb[0].mxu0 %v6669
      %v6765 = vpop.f32.mrb[0].mxu0
      %v6766 = vadd.f32 0.0, %v6765
      %v6767 = vpop.f32.mrb[0].mxu0
      %6768 = vmatprep.mubr.f32.mxu0 0.0
      %6769 = vmatmul.mubr.f32.gmra.mrb[0].mxu0 %v6672
      %v6770 = vpop.f32.mrb[0].mxu0
      %v6771 = vadd.f32 0.0, %v6770
      %v6772 = vpop.f32.mrb[0].mxu0
      %6773 = vmatprep.mubr.f32.mxu0 0.0
      %6774 = vmatmul.mubr.f32.gmra.mrb[0].mxu0 %v6675
      %v6775 = vpop.f32.mrb[0].mxu0
      %v6776 = vadd.f32 0.0, %v6775
      %v6777 = vpop.f32.mrb[0].mxu0
      %6778 = vmatprep.mubr.f32.mxu0 0.0
      %6779 = vmatmul.mubr.f32.gmra.mrb[0].mxu0 %v6678
      %v6780 = vpop.f32.mrb[0].mxu0
      %v6781 = vadd.f32 0.0, %v6780
      %v6782 = vpop.f32.mrb[0].mxu0
      %6783 = vmatprep.mubr.f32.mxu0 0.0
      %6784 = vmatmul.mubr.f32.gmra.mrb[0].mxu0 %v6681
      %v6785 = vpop.f32.mrb[0].mxu0
      %v6786 = vadd.f32 0.0, %v6785
      %v6787 = vpop.f32.mrb[0].mxu0
      %6788 = vmatprep.mubr.f32.mxu0 0.0
      %6789 = vmatmul.mubr.f32.gmra.mrb[0].mxu0 %v6684
      %v6790 = vpop.f32.mrb[0].mxu0
      %v6791 = vadd.f32 0.0, %v6790
      %v6792 = vpop.f32.mrb[0].mxu0
      %6793 = vdwg.mxu0
      %v6795 = vsel %vm3020, %v6232, 0
      %v6798 = vsel %vm3020, %v6233, 0
      %v6801 = vsel %vm3020, %v6234, 0
      %v6804 = vsel %vm3020, %v6235, 0
      %v6807 = vsel %vm3020, %v6236, 0
      %v6810 = vsel %vm3020, %v6237, 0
      %v6813 = vsel %vm3020, %v6238, 0
      %v6816 = vsel %vm3020, %v6239, 0
      %v6819 = vsel %vm1720, %v6245, 0
      %6821 = vmatprep.subr.mxu0 0.0
      %6822 = vmatpush1.msra.mxu0 %v6241
      %6823 = vmatprep.subr.mxu0 0.0
      %6824 = vmatpush1.msra.mxu0 %v6242
      %6825 = vmatprep.subr.mxu0 0.0
      %6826 = vmatpush1.msra.mxu0 %v6243
      %6827 = vmatprep.subr.mxu0 0.0
      %6828 = vmatpush1.msra.mxu0 %v6244
      %6829 = vmatprep.subr.mxu0 0.0
      %6830 = vmatpush1.msra.mxu0 %v6819
      %6831 = vmatprep.subr.mxu0 0.0
      %6832 = vmatpush1.msra.mxu0 0.0
      %6833 = vmatprep.subr.mxu0 0.0
      %6834 = vmatpush1.msra.mxu0 0.0
      %6835 = vmatprep.subr.mxu0 0.0
      %6836 = vmatpush1.msra.mxu0 0.0
      %6837 = vmatprep.subr.mxu0 0.0
      %6838 = vmatpush1.msra.mxu0 0.0
      %6839 = vmatprep.subr.mxu0 0.0
      %6840 = vmatpush1.msra.mxu0 0.0
      %6841 = vmatprep.subr.mxu0 0.0
      %6842 = vmatpush1.msra.mxu0 0.0
      %6843 = vmatprep.subr.mxu0 0.0
      %6844 = vmatpush1.msra.mxu0 0.0
      %6845 = vmatprep.subr.mxu0 0.0
      %6846 = vmatpush1.msra.mxu0 0.0
      %6847 = vmatprep.subr.mxu0 0.0
      %6848 = vmatpush1.msra.mxu0 0.0
      %6849 = vmatprep.subr.mxu0 0.0
      %6850 = vmatpush1.msra.mxu0 0.0
      %6851 = vmatprep.subr.mxu0 0.0
      %6852 = vmatpush1.msra.mxu0 0.0
      %6853 = vmatprep.subr.mxu0 0.0
      %6854 = vmatpush1.msra.mxu0 0.0
      %6855 = vmatprep.subr.mxu0 0.0
      %6856 = vmatpush1.msra.mxu0 0.0
      %6857 = vmatprep.subr.mxu0 0.0
      %6858 = vmatpush1.msra.mxu0 0.0
      %6859 = vmatprep.subr.mxu0 0.0
      %6860 = vmatpush1.msra.mxu0 0.0
      %6861 = vmatprep.subr.mxu0 0.0
      %6862 = vmatpush1.msra.mxu0 0.0
      %6863 = vmatprep.subr.mxu0 0.0
      %6864 = vmatpush1.msra.mxu0 0.0
      %6865 = vmatprep.subr.mxu0 0.0
      %6866 = vmatpush1.msra.mxu0 0.0
      %6867 = vmatprep.subr.mxu0 0.0
      %6868 = vmatpush1.msra.mxu0 0.0
      %6869 = vmatprep.subr.mxu0 0.0
      %6870 = vmatpush1.msra.mxu0 0.0
      %6871 = vmatprep.subr.mxu0 0.0
      %6872 = vmatpush1.msra.mxu0 0.0
      %6873 = vmatprep.subr.mxu0 0.0
      %6874 = vmatpush1.msra.mxu0 0.0
      %6875 = vmatprep.subr.mxu0 0.0
      %6876 = vmatpush1.msra.mxu0 0.0
      %6877 = vmatprep.subr.mxu0 0.0
      %6878 = vmatpush1.msra.mxu0 0.0
      %6879 = vmatprep.subr.mxu0 0.0
      %6880 = vmatpush1.msra.mxu0 0.0
      %6881 = vmatprep.subr.mxu0 0.0
      %6882 = vmatpush1.msra.mxu0 0.0
      %6883 = vmatprep.subr.mxu0 0.0
      %6884 = vmatpush1.msra.mxu0 0.0
      %6885 = vmatprep.mubr.f32.mxu0 0.0
      %6886 = vmatmul.mubr.f32.gmra.mrb[0].mxu0 %v6795
      %v6887 = vpop.f32.mrb[0].mxu0
      %v6888 = vadd.f32 %v6756, %v6887
      %v6889 = vpop.f32.mrb[0].mxu0
      %6890 = vmatprep.mubr.f32.mxu0 0.0
      %6891 = vmatmul.mubr.f32.gmra.mrb[0].mxu0 %v6798
      %v6892 = vpop.f32.mrb[0].mxu0
      %v6893 = vadd.f32 %v6761, %v6892
      %v6894 = vpop.f32.mrb[0].mxu0
      %6895 = vmatprep.mubr.f32.mxu0 0.0
      %6896 = vmatmul.mubr.f32.gmra.mrb[0].mxu0 %v6801
      %v6897 = vpop.f32.mrb[0].mxu0
      %v6898 = vadd.f32 %v6766, %v6897
      %v6899 = vpop.f32.mrb[0].mxu0
      %6900 = vmatprep.mubr.f32.mxu0 0.0
      %6901 = vmatmul.mubr.f32.gmra.mrb[0].mxu0 %v6804
      %v6902 = vpop.f32.mrb[0].mxu0
      %v6903 = vadd.f32 %v6771, %v6902
      %v6904 = vpop.f32.mrb[0].mxu0
      %6905 = vmatprep.mubr.f32.mxu0 0.0
      %6906 = vmatmul.mubr.f32.gmra.mrb[0].mxu0 %v6807
      %v6907 = vpop.f32.mrb[0].mxu0
      %v6908 = vadd.f32 %v6776, %v6907
      %v6909 = vpop.f32.mrb[0].mxu0
      %6910 = vmatprep.mubr.f32.mxu0 0.0
      %6911 = vmatmul.mubr.f32.gmra.mrb[0].mxu0 %v6810
      %v6912 = vpop.f32.mrb[0].mxu0
      %v6913 = vadd.f32 %v6781, %v6912
      %v6914 = vpop.f32.mrb[0].mxu0
      %6915 = vmatprep.mubr.f32.mxu0 0.0
      %6916 = vmatmul.mubr.f32.gmra.mrb[0].mxu0 %v6813
      %v6917 = vpop.f32.mrb[0].mxu0
      %v6918 = vadd.f32 %v6786, %v6917
      %v6919 = vpop.f32.mrb[0].mxu0
      %6920 = vmatprep.mubr.f32.mxu0 0.0
      %6921 = vmatmul.mubr.f32.gmra.mrb[0].mxu0 %v6816
      %v6922 = vpop.f32.mrb[0].mxu0
      %v6923 = vadd.f32 %v6791, %v6922
      %v6924 = vpop.f32.mrb[0].mxu0
      %6925 = vdwg.mxu0
      %s6926 = scalar_lea.vmem [#allocation2], 4992
      %v6927 = vld [vmem:[%s6926] sm:$0xff]
      %v6928 = vld [vmem:[%s6926 + $0x20] sm:$0xff]
      %v6929 = vld [vmem:[%s6926 + $0x40] sm:$0xff]
      %v6930 = vld [vmem:[%s6926 + $0x60] sm:$0xff]
      %v6931 = vld [vmem:[%s6926 + $0x80] sm:$0xff]
      %v6932 = vld [vmem:[%s6926 + $0xa0] sm:$0xff]
      %v6933 = vld [vmem:[%s6926 + $0xc0] sm:$0xff]
      %v6934 = vld [vmem:[%s6926 + $0xe0] sm:$0xff]
      %6935 = vst.msk [vmem:[#allocation3] sm:$0xff] %vm831, %v6927
      %6936 = vst.msk [vmem:[#allocation3 + $0x8] sm:$0xff] %vm831, %v6928
      %6937 = vst.msk [vmem:[#allocation3 + $0x10] sm:$0xff] %vm831, %v6929
      %6938 = vst.msk [vmem:[#allocation3 + $0x18] sm:$0xff] %vm831, %v6930
      %6939 = vst.msk [vmem:[#allocation3 + $0x20] sm:$0xff] %vm831, %v6931
      %6940 = vst.msk [vmem:[#allocation3 + $0x28] sm:$0xff] %vm831, %v6932
      %6941 = vst.msk [vmem:[#allocation3 + $0x30] sm:$0xff] %vm831, %v6933
      %6942 = vst.msk [vmem:[#allocation3 + $0x38] sm:$0xff] %vm831, %v6934
      %v6943 = vld [vmem:[%s6926 + $0x9] sm:$0xff]
      %v6944 = vld [vmem:[%s6926 + $0x29] sm:$0xff]
      %v6945 = vld [vmem:[%s6926 + $0x49] sm:$0xff]
      %v6946 = vld [vmem:[%s6926 + $0x69] sm:$0xff]
      %v6947 = vld [vmem:[%s6926 + $0x89] sm:$0xff]
      %v6948 = vld [vmem:[%s6926 + $0xa9] sm:$0xff]
      %v6949 = vld [vmem:[%s6926 + $0xc9] sm:$0xff]
      %v6950 = vld [vmem:[%s6926 + $0xe9] sm:$0xff]
      %6959 = vrot.lane.b32.xlu0 %v6943, 4
      %v6960 = vpop.permute.xlu0 %6959
      %6961 = vrot.lane.b32.xlu0 %v6944, 4
      %v6962 = vpop.permute.xlu0 %6961
      %6963 = vrot.lane.b32.xlu0 %v6945, 4
      %v6964 = vpop.permute.xlu0 %6963
      %6965 = vrot.lane.b32.xlu0 %v6946, 4
      %v6966 = vpop.permute.xlu0 %6965
      %6967 = vrot.lane.b32.xlu0 %v6947, 4
      %v6968 = vpop.permute.xlu0 %6967
      %6969 = vrot.lane.b32.xlu0 %v6948, 4
      %v6970 = vpop.permute.xlu0 %6969
      %6971 = vrot.lane.b32.xlu0 %v6949, 4
      %v6972 = vpop.permute.xlu0 %6971
      %6973 = vrot.lane.b32.xlu0 %v6950, 4
      %v6974 = vpop.permute.xlu0 %6973
      %6983 = vst.msk [vmem:[#allocation3] sm:$0xff] %vm2238, %v6960
      %6984 = vst.msk [vmem:[#allocation3 + $0x8] sm:$0xff] %vm2238, %v6962
      %6985 = vst.msk [vmem:[#allocation3 + $0x10] sm:$0xff] %vm2238, %v6964
      %6986 = vst.msk [vmem:[#allocation3 + $0x18] sm:$0xff] %vm2238, %v6966
      %6987 = vst.msk [vmem:[#allocation3 + $0x20] sm:$0xff] %vm2238, %v6968
      %6988 = vst.msk [vmem:[#allocation3 + $0x28] sm:$0xff] %vm2238, %v6970
      %6989 = vst.msk [vmem:[#allocation3 + $0x30] sm:$0xff] %vm2238, %v6972
      %6990 = vst.msk [vmem:[#allocation3 + $0x38] sm:$0xff] %vm2238, %v6974
      %v6991 = vld [vmem:[%s6926 + $0x12] sm:$0xff]
      %v6992 = vld [vmem:[%s6926 + $0x32] sm:$0xff]
      %v6993 = vld [vmem:[%s6926 + $0x52] sm:$0xff]
      %v6994 = vld [vmem:[%s6926 + $0x72] sm:$0xff]
      %v6995 = vld [vmem:[%s6926 + $0x92] sm:$0xff]
      %v6996 = vld [vmem:[%s6926 + $0xb2] sm:$0xff]
      %v6997 = vld [vmem:[%s6926 + $0xd2] sm:$0xff]
      %v6998 = vld [vmem:[%s6926 + $0xf2] sm:$0xff]
      %7007 = vrot.lane.b32.xlu0 %v6991, 8
      %v7008 = vpop.permute.xlu0 %7007
      %7009 = vrot.lane.b32.xlu0 %v6992, 8
      %v7010 = vpop.permute.xlu0 %7009
      %7011 = vrot.lane.b32.xlu0 %v6993, 8
      %v7012 = vpop.permute.xlu0 %7011
      %7013 = vrot.lane.b32.xlu0 %v6994, 8
      %v7014 = vpop.permute.xlu0 %7013
      %7015 = vrot.lane.b32.xlu0 %v6995, 8
      %v7016 = vpop.permute.xlu0 %7015
      %7017 = vrot.lane.b32.xlu0 %v6996, 8
      %v7018 = vpop.permute.xlu0 %7017
      %7019 = vrot.lane.b32.xlu0 %v6997, 8
      %v7020 = vpop.permute.xlu0 %7019
      %7021 = vrot.lane.b32.xlu0 %v6998, 8
      %v7022 = vpop.permute.xlu0 %7021
      %7031 = vst.msk [vmem:[#allocation3] sm:$0xff] %vm2287, %v7008
      %7032 = vst.msk [vmem:[#allocation3 + $0x8] sm:$0xff] %vm2287, %v7010
      %7033 = vst.msk [vmem:[#allocation3 + $0x10] sm:$0xff] %vm2287, %v7012
      %7034 = vst.msk [vmem:[#allocation3 + $0x18] sm:$0xff] %vm2287, %v7014
      %7035 = vst.msk [vmem:[#allocation3 + $0x20] sm:$0xff] %vm2287, %v7016
      %7036 = vst.msk [vmem:[#allocation3 + $0x28] sm:$0xff] %vm2287, %v7018
      %7037 = vst.msk [vmem:[#allocation3 + $0x30] sm:$0xff] %vm2287, %v7020
      %7038 = vst.msk [vmem:[#allocation3 + $0x38] sm:$0xff] %vm2287, %v7022
      %v7039 = vld [vmem:[%s1671] sm:$0xff]
      %v7040 = vld [vmem:[%s1671 + $0x20] sm:$0xff]
      %v7041 = vld [vmem:[%s1671 + $0x40] sm:$0xff]
      %v7042 = vld [vmem:[%s1671 + $0x60] sm:$0xff]
      %v7043 = vld [vmem:[%s1671 + $0x80] sm:$0xff]
      %v7044 = vld [vmem:[%s1671 + $0xa0] sm:$0xff]
      %v7045 = vld [vmem:[%s1671 + $0xc0] sm:$0xff]
      %v7046 = vld [vmem:[%s1671 + $0xe0] sm:$0xff]
      %7055 = vrot.lane.b32.xlu0 %v7039, 12
      %v7056 = vpop.permute.xlu0 %7055
      %7057 = vrot.lane.b32.xlu0 %v7040, 12
      %v7058 = vpop.permute.xlu0 %7057
      %7059 = vrot.lane.b32.xlu0 %v7041, 12
      %v7060 = vpop.permute.xlu0 %7059
      %7061 = vrot.lane.b32.xlu0 %v7042, 12
      %v7062 = vpop.permute.xlu0 %7061
      %7063 = vrot.lane.b32.xlu0 %v7043, 12
      %v7064 = vpop.permute.xlu0 %7063
      %7065 = vrot.lane.b32.xlu0 %v7044, 12
      %v7066 = vpop.permute.xlu0 %7065
      %7067 = vrot.lane.b32.xlu0 %v7045, 12
      %v7068 = vpop.permute.xlu0 %7067
      %7069 = vrot.lane.b32.xlu0 %v7046, 12
      %v7070 = vpop.permute.xlu0 %7069
      %7079 = vst.msk [vmem:[#allocation3] sm:$0xff] %vm2336, %v7056
      %7080 = vst.msk [vmem:[#allocation3 + $0x8] sm:$0xff] %vm2336, %v7058
      %7081 = vst.msk [vmem:[#allocation3 + $0x10] sm:$0xff] %vm2336, %v7060
      %7082 = vst.msk [vmem:[#allocation3 + $0x18] sm:$0xff] %vm2336, %v7062
      %7083 = vst.msk [vmem:[#allocation3 + $0x20] sm:$0xff] %vm2336, %v7064
      %7084 = vst.msk [vmem:[#allocation3 + $0x28] sm:$0xff] %vm2336, %v7066
      %7085 = vst.msk [vmem:[#allocation3 + $0x30] sm:$0xff] %vm2336, %v7068
      %7086 = vst.msk [vmem:[#allocation3 + $0x38] sm:$0xff] %vm2336, %v7070
      %v7087 = vld [vmem:[%s1671 + $0x9] sm:$0xff]
      %v7088 = vld [vmem:[%s1671 + $0x29] sm:$0xff]
      %v7089 = vld [vmem:[%s1671 + $0x49] sm:$0xff]
      %v7090 = vld [vmem:[%s1671 + $0x69] sm:$0xff]
      %v7091 = vld [vmem:[%s1671 + $0x89] sm:$0xff]
      %v7092 = vld [vmem:[%s1671 + $0xa9] sm:$0xff]
      %v7093 = vld [vmem:[%s1671 + $0xc9] sm:$0xff]
      %v7094 = vld [vmem:[%s1671 + $0xe9] sm:$0xff]
      %7103 = vrot.lane.b32.xlu0 %v7087, 16
      %v7104 = vpop.permute.xlu0 %7103
      %7105 = vrot.lane.b32.xlu0 %v7088, 16
      %v7106 = vpop.permute.xlu0 %7105
      %7107 = vrot.lane.b32.xlu0 %v7089, 16
      %v7108 = vpop.permute.xlu0 %7107
      %7109 = vrot.lane.b32.xlu0 %v7090, 16
      %v7110 = vpop.permute.xlu0 %7109
      %7111 = vrot.lane.b32.xlu0 %v7091, 16
      %v7112 = vpop.permute.xlu0 %7111
      %7113 = vrot.lane.b32.xlu0 %v7092, 16
      %v7114 = vpop.permute.xlu0 %7113
      %7115 = vrot.lane.b32.xlu0 %v7093, 16
      %v7116 = vpop.permute.xlu0 %7115
      %7117 = vrot.lane.b32.xlu0 %v7094, 16
      %v7118 = vpop.permute.xlu0 %7117
      %7127 = vst.msk [vmem:[#allocation3] sm:$0xff] %vm2385, %v7104
      %7128 = vst.msk [vmem:[#allocation3 + $0x8] sm:$0xff] %vm2385, %v7106
      %7129 = vst.msk [vmem:[#allocation3 + $0x10] sm:$0xff] %vm2385, %v7108
      %7130 = vst.msk [vmem:[#allocation3 + $0x18] sm:$0xff] %vm2385, %v7110
      %7131 = vst.msk [vmem:[#allocation3 + $0x20] sm:$0xff] %vm2385, %v7112
      %7132 = vst.msk [vmem:[#allocation3 + $0x28] sm:$0xff] %vm2385, %v7114
      %7133 = vst.msk [vmem:[#allocation3 + $0x30] sm:$0xff] %vm2385, %v7116
      %7134 = vst.msk [vmem:[#allocation3 + $0x38] sm:$0xff] %vm2385, %v7118
      %v7135 = vld [vmem:[%s1671 + $0x12] sm:$0xff]
      %v7136 = vld [vmem:[%s1671 + $0x32] sm:$0xff]
      %v7137 = vld [vmem:[%s1671 + $0x52] sm:$0xff]
      %v7138 = vld [vmem:[%s1671 + $0x72] sm:$0xff]
      %v7139 = vld [vmem:[%s1671 + $0x92] sm:$0xff]
      %v7140 = vld [vmem:[%s1671 + $0xb2] sm:$0xff]
      %v7141 = vld [vmem:[%s1671 + $0xd2] sm:$0xff]
      %v7142 = vld [vmem:[%s1671 + $0xf2] sm:$0xff]
      %7151 = vrot.lane.b32.xlu0 %v7135, 20
      %v7152 = vpop.permute.xlu0 %7151
      %7153 = vrot.lane.b32.xlu0 %v7136, 20
      %v7154 = vpop.permute.xlu0 %7153
      %7155 = vrot.lane.b32.xlu0 %v7137, 20
      %v7156 = vpop.permute.xlu0 %7155
      %7157 = vrot.lane.b32.xlu0 %v7138, 20
      %v7158 = vpop.permute.xlu0 %7157
      %7159 = vrot.lane.b32.xlu0 %v7139, 20
      %v7160 = vpop.permute.xlu0 %7159
      %7161 = vrot.lane.b32.xlu0 %v7140, 20
      %v7162 = vpop.permute.xlu0 %7161
      %7163 = vrot.lane.b32.xlu0 %v7141, 20
      %v7164 = vpop.permute.xlu0 %7163
      %7165 = vrot.lane.b32.xlu0 %v7142, 20
      %v7166 = vpop.permute.xlu0 %7165
      %7175 = vst.msk [vmem:[#allocation3] sm:$0xff] %vm2434, %v7152
      %7176 = vst.msk [vmem:[#allocation3 + $0x8] sm:$0xff] %vm2434, %v7154
      %7177 = vst.msk [vmem:[#allocation3 + $0x10] sm:$0xff] %vm2434, %v7156
      %7178 = vst.msk [vmem:[#allocation3 + $0x18] sm:$0xff] %vm2434, %v7158
      %7179 = vst.msk [vmem:[#allocation3 + $0x20] sm:$0xff] %vm2434, %v7160
      %7180 = vst.msk [vmem:[#allocation3 + $0x28] sm:$0xff] %vm2434, %v7162
      %7181 = vst.msk [vmem:[#allocation3 + $0x30] sm:$0xff] %vm2434, %v7164
      %7182 = vst.msk [vmem:[#allocation3 + $0x38] sm:$0xff] %vm2434, %v7166
      %s7183 = scalar_lea.vmem [#allocation2], 5568
      %v7184 = vld [vmem:[%s7183] sm:$0xff]
      %v7185 = vld [vmem:[%s7183 + $0x20] sm:$0xff]
      %v7186 = vld [vmem:[%s7183 + $0x40] sm:$0xff]
      %v7187 = vld [vmem:[%s7183 + $0x60] sm:$0xff]
      %v7188 = vld [vmem:[%s7183 + $0x80] sm:$0xff]
      %v7189 = vld [vmem:[%s7183 + $0xa0] sm:$0xff]
      %v7190 = vld [vmem:[%s7183 + $0xc0] sm:$0xff]
      %v7191 = vld [vmem:[%s7183 + $0xe0] sm:$0xff]
      %7200 = vrot.lane.b32.xlu0 %v7184, 24
      %v7201 = vpop.permute.xlu0 %7200
      %7202 = vrot.lane.b32.xlu0 %v7185, 24
      %v7203 = vpop.permute.xlu0 %7202
      %7204 = vrot.lane.b32.xlu0 %v7186, 24
      %v7205 = vpop.permute.xlu0 %7204
      %7206 = vrot.lane.b32.xlu0 %v7187, 24
      %v7207 = vpop.permute.xlu0 %7206
      %7208 = vrot.lane.b32.xlu0 %v7188, 24
      %v7209 = vpop.permute.xlu0 %7208
      %7210 = vrot.lane.b32.xlu0 %v7189, 24
      %v7211 = vpop.permute.xlu0 %7210
      %7212 = vrot.lane.b32.xlu0 %v7190, 24
      %v7213 = vpop.permute.xlu0 %7212
      %7214 = vrot.lane.b32.xlu0 %v7191, 24
      %v7215 = vpop.permute.xlu0 %7214
      %7224 = vst.msk [vmem:[#allocation3] sm:$0xff] %vm2484, %v7201
      %7225 = vst.msk [vmem:[#allocation3 + $0x8] sm:$0xff] %vm2484, %v7203
      %7226 = vst.msk [vmem:[#allocation3 + $0x10] sm:$0xff] %vm2484, %v7205
      %7227 = vst.msk [vmem:[#allocation3 + $0x18] sm:$0xff] %vm2484, %v7207
      %7228 = vst.msk [vmem:[#allocation3 + $0x20] sm:$0xff] %vm2484, %v7209
      %7229 = vst.msk [vmem:[#allocation3 + $0x28] sm:$0xff] %vm2484, %v7211
      %7230 = vst.msk [vmem:[#allocation3 + $0x30] sm:$0xff] %vm2484, %v7213
      %7231 = vst.msk [vmem:[#allocation3 + $0x38] sm:$0xff] %vm2484, %v7215
      %v7232 = vld [vmem:[%s7183 + $0x9] sm:$0xff]
      %v7233 = vld [vmem:[%s7183 + $0x29] sm:$0xff]
      %v7234 = vld [vmem:[%s7183 + $0x49] sm:$0xff]
      %v7235 = vld [vmem:[%s7183 + $0x69] sm:$0xff]
      %v7236 = vld [vmem:[%s7183 + $0x89] sm:$0xff]
      %v7237 = vld [vmem:[%s7183 + $0xa9] sm:$0xff]
      %v7238 = vld [vmem:[%s7183 + $0xc9] sm:$0xff]
      %v7239 = vld [vmem:[%s7183 + $0xe9] sm:$0xff]
      %7248 = vrot.lane.b32.xlu0 %v7232, 28
      %v7249 = vpop.permute.xlu0 %7248
      %7250 = vrot.lane.b32.xlu0 %v7233, 28
      %v7251 = vpop.permute.xlu0 %7250
      %7252 = vrot.lane.b32.xlu0 %v7234, 28
      %v7253 = vpop.permute.xlu0 %7252
      %7254 = vrot.lane.b32.xlu0 %v7235, 28
      %v7255 = vpop.permute.xlu0 %7254
      %7256 = vrot.lane.b32.xlu0 %v7236, 28
      %v7257 = vpop.permute.xlu0 %7256
      %7258 = vrot.lane.b32.xlu0 %v7237, 28
      %v7259 = vpop.permute.xlu0 %7258
      %7260 = vrot.lane.b32.xlu0 %v7238, 28
      %v7261 = vpop.permute.xlu0 %7260
      %7262 = vrot.lane.b32.xlu0 %v7239, 28
      %v7263 = vpop.permute.xlu0 %7262
      %7272 = vst.msk [vmem:[#allocation3] sm:$0xff] %vm2533, %v7249
      %7273 = vst.msk [vmem:[#allocation3 + $0x8] sm:$0xff] %vm2533, %v7251
      %7274 = vst.msk [vmem:[#allocation3 + $0x10] sm:$0xff] %vm2533, %v7253
      %7275 = vst.msk [vmem:[#allocation3 + $0x18] sm:$0xff] %vm2533, %v7255
      %7276 = vst.msk [vmem:[#allocation3 + $0x20] sm:$0xff] %vm2533, %v7257
      %7277 = vst.msk [vmem:[#allocation3 + $0x28] sm:$0xff] %vm2533, %v7259
      %7278 = vst.msk [vmem:[#allocation3 + $0x30] sm:$0xff] %vm2533, %v7261
      %7279 = vst.msk [vmem:[#allocation3 + $0x38] sm:$0xff] %vm2533, %v7263
      %v7280 = vld [vmem:[%s7183 + $0x12] sm:$0xff]
      %v7281 = vld [vmem:[%s7183 + $0x32] sm:$0xff]
      %v7282 = vld [vmem:[%s7183 + $0x52] sm:$0xff]
      %v7283 = vld [vmem:[%s7183 + $0x72] sm:$0xff]
      %v7284 = vld [vmem:[%s7183 + $0x92] sm:$0xff]
      %v7285 = vld [vmem:[%s7183 + $0xb2] sm:$0xff]
      %v7286 = vld [vmem:[%s7183 + $0xd2] sm:$0xff]
      %v7287 = vld [vmem:[%s7183 + $0xf2] sm:$0xff]
      %7296 = vrot.lane.b32.xlu0 %v7280, 32
      %v7297 = vpop.permute.xlu0 %7296
      %7298 = vrot.lane.b32.xlu0 %v7281, 32
      %v7299 = vpop.permute.xlu0 %7298
      %7300 = vrot.lane.b32.xlu0 %v7282, 32
      %v7301 = vpop.permute.xlu0 %7300
      %7302 = vrot.lane.b32.xlu0 %v7283, 32
      %v7303 = vpop.permute.xlu0 %7302
      %7304 = vrot.lane.b32.xlu0 %v7284, 32
      %v7305 = vpop.permute.xlu0 %7304
      %7306 = vrot.lane.b32.xlu0 %v7285, 32
      %v7307 = vpop.permute.xlu0 %7306
      %7308 = vrot.lane.b32.xlu0 %v7286, 32
      %v7309 = vpop.permute.xlu0 %7308
      %7310 = vrot.lane.b32.xlu0 %v7287, 32
      %v7311 = vpop.permute.xlu0 %7310
      %7320 = vst.msk [vmem:[#allocation3] sm:$0xff] %vm2582, %v7297
      %7321 = vst.msk [vmem:[#allocation3 + $0x8] sm:$0xff] %vm2582, %v7299
      %7322 = vst.msk [vmem:[#allocation3 + $0x10] sm:$0xff] %vm2582, %v7301
      %7323 = vst.msk [vmem:[#allocation3 + $0x18] sm:$0xff] %vm2582, %v7303
      %7324 = vst.msk [vmem:[#allocation3 + $0x20] sm:$0xff] %vm2582, %v7305
      %7325 = vst.msk [vmem:[#allocation3 + $0x28] sm:$0xff] %vm2582, %v7307
      %7326 = vst.msk [vmem:[#allocation3 + $0x30] sm:$0xff] %vm2582, %v7309
      %7327 = vst.msk [vmem:[#allocation3 + $0x38] sm:$0xff] %vm2582, %v7311
      %v7328 = vld [vmem:[#allocation3] sm:$0xff]
      %v7329 = vld [vmem:[#allocation3 + $0x8] sm:$0xff]
      %v7330 = vld [vmem:[#allocation3 + $0x10] sm:$0xff]
      %v7331 = vld [vmem:[#allocation3 + $0x18] sm:$0xff]
      %v7332 = vld [vmem:[#allocation3 + $0x20] sm:$0xff]
      %v7333 = vld [vmem:[#allocation3 + $0x28] sm:$0xff]
      %v7334 = vld [vmem:[#allocation3 + $0x30] sm:$0xff]
      %v7335 = vld [vmem:[#allocation3 + $0x38] sm:$0xff]
      %s7336 = scalar_lea.vmem %s7, 320
      %v7337 = vld [vmem:[%s7336] sm:$0xff]
      %v7338 = vld [vmem:[%s7336 + $0x8] sm:$0xff]
      %v7339 = vld [vmem:[%s7336 + $0x10] sm:$0xff]
      %v7340 = vld [vmem:[%s7336 + $0x18] sm:$0xff]
      %v7341 = vld [vmem:[%s7336 + $0x20] sm:$0xf]
      %v7343 = vsel %vm3020, %v7328, 0
      %v7346 = vsel %vm3020, %v7329, 0
      %v7349 = vsel %vm3020, %v7330, 0
      %v7352 = vsel %vm3020, %v7331, 0
      %v7355 = vsel %vm3020, %v7332, 0
      %v7358 = vsel %vm3020, %v7333, 0
      %v7361 = vsel %vm3020, %v7334, 0
      %v7364 = vsel %vm3020, %v7335, 0
      %v7367 = vsel %vm1720, %v7341, 0
      %7369 = vmatprep.subr.mxu0 0.0
      %7370 = vmatpush1.msra.mxu0 %v7337
      %7371 = vmatprep.subr.mxu0 0.0
      %7372 = vmatpush1.msra.mxu0 %v7338
      %7373 = vmatprep.subr.mxu0 0.0
      %7374 = vmatpush1.msra.mxu0 %v7339
      %7375 = vmatprep.subr.mxu0 0.0
      %7376 = vmatpush1.msra.mxu0 %v7340
      %7377 = vmatprep.subr.mxu0 0.0
      %7378 = vmatpush1.msra.mxu0 %v7367
      %7379 = vmatprep.subr.mxu0 0.0
      %7380 = vmatpush1.msra.mxu0 0.0
      %7381 = vmatprep.subr.mxu0 0.0
      %7382 = vmatpush1.msra.mxu0 0.0
      %7383 = vmatprep.subr.mxu0 0.0
      %7384 = vmatpush1.msra.mxu0 0.0
      %7385 = vmatprep.subr.mxu0 0.0
      %7386 = vmatpush1.msra.mxu0 0.0
      %7387 = vmatprep.subr.mxu0 0.0
      %7388 = vmatpush1.msra.mxu0 0.0
      %7389 = vmatprep.subr.mxu0 0.0
      %7390 = vmatpush1.msra.mxu0 0.0
      %7391 = vmatprep.subr.mxu0 0.0
      %7392 = vmatpush1.msra.mxu0 0.0
      %7393 = vmatprep.subr.mxu0 0.0
      %7394 = vmatpush1.msra.mxu0 0.0
      %7395 = vmatprep.subr.mxu0 0.0
      %7396 = vmatpush1.msra.mxu0 0.0
      %7397 = vmatprep.subr.mxu0 0.0
      %7398 = vmatpush1.msra.mxu0 0.0
      %7399 = vmatprep.subr.mxu0 0.0
      %7400 = vmatpush1.msra.mxu0 0.0
      %7401 = vmatprep.subr.mxu0 0.0
      %7402 = vmatpush1.msra.mxu0 0.0
      %7403 = vmatprep.subr.mxu0 0.0
      %7404 = vmatpush1.msra.mxu0 0.0
      %7405 = vmatprep.subr.mxu0 0.0
      %7406 = vmatpush1.msra.mxu0 0.0
      %7407 = vmatprep.subr.mxu0 0.0
      %7408 = vmatpush1.msra.mxu0 0.0
      %7409 = vmatprep.subr.mxu0 0.0
      %7410 = vmatpush1.msra.mxu0 0.0
      %7411 = vmatprep.subr.mxu0 0.0
      %7412 = vmatpush1.msra.mxu0 0.0
      %7413 = vmatprep.subr.mxu0 0.0
      %7414 = vmatpush1.msra.mxu0 0.0
      %7415 = vmatprep.subr.mxu0 0.0
      %7416 = vmatpush1.msra.mxu0 0.0
      %7417 = vmatprep.subr.mxu0 0.0
      %7418 = vmatpush1.msra.mxu0 0.0
      %7419 = vmatprep.subr.mxu0 0.0
      %7420 = vmatpush1.msra.mxu0 0.0
      %7421 = vmatprep.subr.mxu0 0.0
      %7422 = vmatpush1.msra.mxu0 0.0
      %7423 = vmatprep.subr.mxu0 0.0
      %7424 = vmatpush1.msra.mxu0 0.0
      %7425 = vmatprep.subr.mxu0 0.0
      %7426 = vmatpush1.msra.mxu0 0.0
      %7427 = vmatprep.subr.mxu0 0.0
      %7428 = vmatpush1.msra.mxu0 0.0
      %7429 = vmatprep.subr.mxu0 0.0
      %7430 = vmatpush1.msra.mxu0 0.0
      %7431 = vmatprep.subr.mxu0 0.0
      %7432 = vmatpush1.msra.mxu0 0.0
      %7433 = vmatprep.mubr.f32.mxu0 0.0
      %7434 = vmatmul.mubr.f32.gmra.mrb[0].mxu0 %v7343
      %v7435 = vpop.f32.mrb[0].mxu0
      %v7436 = vadd.f32 0.0, %v7435
      %v7437 = vpop.f32.mrb[0].mxu0
      %7438 = vmatprep.mubr.f32.mxu0 0.0
      %7439 = vmatmul.mubr.f32.gmra.mrb[0].mxu0 %v7346
      %v7440 = vpop.f32.mrb[0].mxu0
      %v7441 = vadd.f32 0.0, %v7440
      %v7442 = vpop.f32.mrb[0].mxu0
      %7443 = vmatprep.mubr.f32.mxu0 0.0
      %7444 = vmatmul.mubr.f32.gmra.mrb[0].mxu0 %v7349
      %v7445 = vpop.f32.mrb[0].mxu0
      %v7446 = vadd.f32 0.0, %v7445
      %v7447 = vpop.f32.mrb[0].mxu0
      %7448 = vmatprep.mubr.f32.mxu0 0.0
      %7449 = vmatmul.mubr.f32.gmra.mrb[0].mxu0 %v7352
      %v7450 = vpop.f32.mrb[0].mxu0
      %v7451 = vadd.f32 0.0, %v7450
      %v7452 = vpop.f32.mrb[0].mxu0
      %7453 = vmatprep.mubr.f32.mxu0 0.0
      %7454 = vmatmul.mubr.f32.gmra.mrb[0].mxu0 %v7355
      %v7455 = vpop.f32.mrb[0].mxu0
      %v7456 = vadd.f32 0.0, %v7455
      %v7457 = vpop.f32.mrb[0].mxu0
      %7458 = vmatprep.mubr.f32.mxu0 0.0
      %7459 = vmatmul.mubr.f32.gmra.mrb[0].mxu0 %v7358
      %v7460 = vpop.f32.mrb[0].mxu0
      %v7461 = vadd.f32 0.0, %v7460
      %v7462 = vpop.f32.mrb[0].mxu0
      %7463 = vmatprep.mubr.f32.mxu0 0.0
      %7464 = vmatmul.mubr.f32.gmra.mrb[0].mxu0 %v7361
      %v7465 = vpop.f32.mrb[0].mxu0
      %v7466 = vadd.f32 0.0, %v7465
      %v7467 = vpop.f32.mrb[0].mxu0
      %7468 = vmatprep.mubr.f32.mxu0 0.0
      %7469 = vmatmul.mubr.f32.gmra.mrb[0].mxu0 %v7364
      %v7470 = vpop.f32.mrb[0].mxu0
      %v7471 = vadd.f32 0.0, %v7470
      %v7472 = vpop.f32.mrb[0].mxu0
      %7473 = vdwg.mxu0
      %v7474 = vadd.f32 %v6888, %v7436
      %v7475 = vadd.f32 %v6893, %v7441
      %v7476 = vadd.f32 %v6898, %v7446
      %v7477 = vadd.f32 %v6903, %v7451
      %v7478 = vadd.f32 %v6908, %v7456
      %v7479 = vadd.f32 %v6913, %v7461
      %v7480 = vadd.f32 %v6918, %v7466
      %v7481 = vadd.f32 %v6923, %v7471
      %s7482 = scalar_lea.vmem %s8, 2
      %v7483 = vld [vmem:[%s7482] sm:$0x1]
      %v7485 = vlaneseq
      %v7486 = vshrl.u32 %v7485, 7
      %v7487 = vsub.s32 0, %v7486
      %v7488 = vrot.slane %v7483, %v7487
      %v7490 = vadd.f32 %v7474, %v7488
      %v7491 = vadd.f32 %v7475, %v7488
      %v7492 = vadd.f32 %v7476, %v7488
      %v7493 = vadd.f32 %v7477, %v7488
      %v7494 = vadd.f32 %v7478, %v7488
      %v7495 = vadd.f32 %v7479, %v7488
      %v7496 = vadd.f32 %v7480, %v7488
      %v7497 = vadd.f32 %v7481, %v7488
      %v7498 = vmax.f32 %v7490, 0.0
      %v7499 = vmax.f32 %v7491, 0.0
      %v7500 = vmax.f32 %v7492, 0.0
      %v7501 = vmax.f32 %v7493, 0.0
      %v7502 = vmax.f32 %v7494, 0.0
      %v7503 = vmax.f32 %v7495, 0.0
      %v7504 = vmax.f32 %v7496, 0.0
      %v7505 = vmax.f32 %v7497, 0.0
      %v7506 = vld [vmem:[#allocation4] sm:$0xff]
      %v7507 = vld [vmem:[#allocation4 + $0x8] sm:$0xff]
      %v7508 = vld [vmem:[#allocation4 + $0x10] sm:$0xff]
      %v7509 = vld [vmem:[#allocation4 + $0x18] sm:$0xff]
      %v7510 = vld [vmem:[#allocation4 + $0x20] sm:$0xff]
      %v7511 = vld [vmem:[#allocation4 + $0x28] sm:$0xff]
      %v7512 = vld [vmem:[#allocation4 + $0x30] sm:$0xff]
      %v7513 = vld [vmem:[#allocation4 + $0x38] sm:$0xff]
      %s7514 = scalar_lea.vmem %s9, 256
      %v7515 = vld [vmem:[%s7514] sm:$0xff]
      %v7516 = vld [vmem:[%s7514 + $0x8] sm:$0xff]
      %v7517 = vld [vmem:[%s7514 + $0x10] sm:$0xff]
      %v7518 = vld [vmem:[%s7514 + $0x18] sm:$0xff]
      %v7519 = vld [vmem:[%s7514 + $0x20] sm:$0xff]
      %v7520 = vld [vmem:[%s7514 + $0x28] sm:$0xff]
      %v7521 = vld [vmem:[%s7514 + $0x30] sm:$0xff]
      %v7522 = vld [vmem:[%s7514 + $0x38] sm:$0xff]
      %v7523 = vld [vmem:[%s7514 + $0x40] sm:$0xff]
      %v7524 = vld [vmem:[%s7514 + $0x48] sm:$0xff]
      %v7525 = vld [vmem:[%s7514 + $0x50] sm:$0xff]
      %v7526 = vld [vmem:[%s7514 + $0x58] sm:$0xff]
      %v7527 = vld [vmem:[%s7514 + $0x60] sm:$0xff]
      %v7528 = vld [vmem:[%s7514 + $0x68] sm:$0xff]
      %v7529 = vld [vmem:[%s7514 + $0x70] sm:$0xff]
      %v7530 = vld [vmem:[%s7514 + $0x78] sm:$0xff]
      %7531 = vmatprep.subr.mxu0 0.0
      %7532 = vmatpush1.msra.mxu0 %v7515
      %7533 = vmatprep.subr.mxu0 0.0
      %7534 = vmatpush1.msra.mxu0 %v7516
      %7535 = vmatprep.subr.mxu0 0.0
      %7536 = vmatpush1.msra.mxu0 %v7517
      %7537 = vmatprep.subr.mxu0 0.0
      %7538 = vmatpush1.msra.mxu0 %v7518
      %7539 = vmatprep.subr.mxu0 0.0
      %7540 = vmatpush1.msra.mxu0 %v7519
      %7541 = vmatprep.subr.mxu0 0.0
      %7542 = vmatpush1.msra.mxu0 %v7520
      %7543 = vmatprep.subr.mxu0 0.0
      %7544 = vmatpush1.msra.mxu0 %v7521
      %7545 = vmatprep.subr.mxu0 0.0
      %7546 = vmatpush1.msra.mxu0 %v7522
      %7547 = vmatprep.subr.mxu0 0.0
      %7548 = vmatpush1.msra.mxu0 %v7523
      %7549 = vmatprep.subr.mxu0 0.0
      %7550 = vmatpush1.msra.mxu0 %v7524
      %7551 = vmatprep.subr.mxu0 0.0
      %7552 = vmatpush1.msra.mxu0 %v7525
      %7553 = vmatprep.subr.mxu0 0.0
      %7554 = vmatpush1.msra.mxu0 %v7526
      %7555 = vmatprep.subr.mxu0 0.0
      %7556 = vmatpush1.msra.mxu0 %v7527
      %7557 = vmatprep.subr.mxu0 0.0
      %7558 = vmatpush1.msra.mxu0 %v7528
      %7559 = vmatprep.subr.mxu0 0.0
      %7560 = vmatpush1.msra.mxu0 %v7529
      %7561 = vmatprep.subr.mxu0 0.0
      %7562 = vmatpush1.msra.mxu0 %v7530
      %7563 = vmatprep.subr.mxu0 0.0
      %7564 = vmatpush1.msra.mxu0 0.0
      %7565 = vmatprep.subr.mxu0 0.0
      %7566 = vmatpush1.msra.mxu0 0.0
      %7567 = vmatprep.subr.mxu0 0.0
      %7568 = vmatpush1.msra.mxu0 0.0
      %7569 = vmatprep.subr.mxu0 0.0
      %7570 = vmatpush1.msra.mxu0 0.0
      %7571 = vmatprep.subr.mxu0 0.0
      %7572 = vmatpush1.msra.mxu0 0.0
      %7573 = vmatprep.subr.mxu0 0.0
      %7574 = vmatpush1.msra.mxu0 0.0
      %7575 = vmatprep.subr.mxu0 0.0
      %7576 = vmatpush1.msra.mxu0 0.0
      %7577 = vmatprep.subr.mxu0 0.0
      %7578 = vmatpush1.msra.mxu0 0.0
      %7579 = vmatprep.subr.mxu0 0.0
      %7580 = vmatpush1.msra.mxu0 0.0
      %7581 = vmatprep.subr.mxu0 0.0
      %7582 = vmatpush1.msra.mxu0 0.0
      %7583 = vmatprep.subr.mxu0 0.0
      %7584 = vmatpush1.msra.mxu0 0.0
      %7585 = vmatprep.subr.mxu0 0.0
      %7586 = vmatpush1.msra.mxu0 0.0
      %7587 = vmatprep.subr.mxu0 0.0
      %7588 = vmatpush1.msra.mxu0 0.0
      %7589 = vmatprep.subr.mxu0 0.0
      %7590 = vmatpush1.msra.mxu0 0.0
      %7591 = vmatprep.subr.mxu0 0.0
      %7592 = vmatpush1.msra.mxu0 0.0
      %7593 = vmatprep.subr.mxu0 0.0
      %7594 = vmatpush1.msra.mxu0 0.0
      %7595 = vmatprep.mubr.f32.mxu0 0.0
      %7596 = vmatmul.mubr.f32.gmra.mrb[0].mxu0 %v7498
      %v7597 = vpop.f32.mrb[0].mxu0
      %v7598 = vadd.f32 0.0, %v7597
      %v7599 = vpop.f32.mrb[0].mxu0
      %7600 = vmatprep.mubr.f32.mxu0 0.0
      %7601 = vmatmul.mubr.f32.gmra.mrb[0].mxu0 %v7499
      %v7602 = vpop.f32.mrb[0].mxu0
      %v7603 = vadd.f32 0.0, %v7602
      %v7604 = vpop.f32.mrb[0].mxu0
      %7605 = vmatprep.mubr.f32.mxu0 0.0
      %7606 = vmatmul.mubr.f32.gmra.mrb[0].mxu0 %v7500
      %v7607 = vpop.f32.mrb[0].mxu0
      %v7608 = vadd.f32 0.0, %v7607
      %v7609 = vpop.f32.mrb[0].mxu0
      %7610 = vmatprep.mubr.f32.mxu0 0.0
      %7611 = vmatmul.mubr.f32.gmra.mrb[0].mxu0 %v7501
      %v7612 = vpop.f32.mrb[0].mxu0
      %v7613 = vadd.f32 0.0, %v7612
      %v7614 = vpop.f32.mrb[0].mxu0
      %7615 = vmatprep.mubr.f32.mxu0 0.0
      %7616 = vmatmul.mubr.f32.gmra.mrb[0].mxu0 %v7502
      %v7617 = vpop.f32.mrb[0].mxu0
      %v7618 = vadd.f32 0.0, %v7617
      %v7619 = vpop.f32.mrb[0].mxu0
      %7620 = vmatprep.mubr.f32.mxu0 0.0
      %7621 = vmatmul.mubr.f32.gmra.mrb[0].mxu0 %v7503
      %v7622 = vpop.f32.mrb[0].mxu0
      %v7623 = vadd.f32 0.0, %v7622
      %v7624 = vpop.f32.mrb[0].mxu0
      %7625 = vmatprep.mubr.f32.mxu0 0.0
      %7626 = vmatmul.mubr.f32.gmra.mrb[0].mxu0 %v7504
      %v7627 = vpop.f32.mrb[0].mxu0
      %v7628 = vadd.f32 0.0, %v7627
      %v7629 = vpop.f32.mrb[0].mxu0
      %7630 = vmatprep.mubr.f32.mxu0 0.0
      %7631 = vmatmul.mubr.f32.gmra.mrb[0].mxu0 %v7505
      %v7632 = vpop.f32.mrb[0].mxu0
      %v7633 = vadd.f32 0.0, %v7632
      %v7634 = vpop.f32.mrb[0].mxu0
      %7635 = vdwg.mxu0
      %v7636 = vadd.f32 %v7506, %v7598
      %v7637 = vadd.f32 %v7507, %v7603
      %v7638 = vadd.f32 %v7508, %v7608
      %v7639 = vadd.f32 %v7509, %v7613
      %v7640 = vadd.f32 %v7510, %v7618
      %v7641 = vadd.f32 %v7511, %v7623
      %v7642 = vadd.f32 %v7512, %v7628
      %v7643 = vadd.f32 %v7513, %v7633
      %7644 = vst [vmem:[#allocation4] sm:$0xff] %v7636
      %7645 = vst [vmem:[#allocation4 + $0x8] sm:$0xff] %v7637
      %7646 = vst [vmem:[#allocation4 + $0x10] sm:$0xff] %v7638
      %7647 = vst [vmem:[#allocation4 + $0x18] sm:$0xff] %v7639
      %7648 = vst [vmem:[#allocation4 + $0x20] sm:$0xff] %v7640
      %7649 = vst [vmem:[#allocation4 + $0x28] sm:$0xff] %v7641
      %7650 = vst [vmem:[#allocation4 + $0x30] sm:$0xff] %v7642
      %7651 = vst [vmem:[#allocation4 + $0x38] sm:$0xff] %v7643
      %v7652 = vld [vmem:[#allocation4] sm:$0xff]
      %v7653 = vld [vmem:[#allocation4 + $0x8] sm:$0xff]
      %v7654 = vld [vmem:[#allocation4 + $0x10] sm:$0xff]
      %v7655 = vld [vmem:[#allocation4 + $0x18] sm:$0xff]
      %v7656 = vld [vmem:[#allocation4 + $0x20] sm:$0xff]
      %v7657 = vld [vmem:[#allocation4 + $0x28] sm:$0xff]
      %v7658 = vld [vmem:[#allocation4 + $0x30] sm:$0xff]
      %v7659 = vld [vmem:[#allocation4 + $0x38] sm:$0xff]
      %v7660 = vmax.f32 %v7652, 0.0
      %v7661 = vmax.f32 %v7653, 0.0
      %v7662 = vmax.f32 %v7654, 0.0
      %v7663 = vmax.f32 %v7655, 0.0
      %v7664 = vmax.f32 %v7656, 0.0
      %v7665 = vmax.f32 %v7657, 0.0
      %v7666 = vmax.f32 %v7658, 0.0
      %v7667 = vmax.f32 %v7659, 0.0
      %7668 = vst [vmem:[%s830] sm:$0xff] %v7660
      %7669 = vst [vmem:[%s830 + $0x8] sm:$0xff] %v7661
      %7670 = vst [vmem:[%s830 + $0x10] sm:$0xff] %v7662
      %7671 = vst [vmem:[%s830 + $0x18] sm:$0xff] %v7663
      %7672 = vst [vmem:[%s830 + $0x20] sm:$0xff] %v7664
      %7673 = vst [vmem:[%s830 + $0x28] sm:$0xff] %v7665
      %7674 = vst [vmem:[%s830 + $0x30] sm:$0xff] %v7666
      %7675 = vst [vmem:[%s830 + $0x38] sm:$0xff] %v7667
      %p7676 = scmp.lt.s32.totalorder %s32, 1
      %s7677 = scalar_select %p7676, %s32, 1
      %p7678 = scmp.lt.s32.totalorder %s33, 7
      %s7679 = scalar_select %p7678, %s33, 7
      %s7680 = smul.addr %s7679, 8
      %s7681 = smul.addr %s7677, 64
      %s7682 = sadd.s32 %s7680, %s7681
      %s7683 = smul.addr %s7682, 8
      %s7684 = scalar_lea.vmem %s17, %s7683
      // Predicated region
      $region89: #{_aspp_forward_impl.1} parent=87 // pred_check
        %p7685 = pneg %p478
      $region90: #{_aspp_forward_impl.1} parent=87 // pred_check_branch
        %7687 = sbr.rel (%p7685) target = $region92
      $region91: #{_aspp_forward_impl.1} parent=87 // pred_region
        _
      $region92: #{_aspp_forward_impl.1} parent=87 // pred_fallthru
        _
    $region88: #{_aspp_forward_impl.1} parent=5 // pred_fallthru
      _
    %p7688 = scmp.le.s32.totalorder 2, %s23
    // Predicated region
    $region93: #{_aspp_forward_impl.1} parent=5 // pred_check
      %p7689 = pneg %p7688
    $region94: #{_aspp_forward_impl.1} parent=5 // pred_check_branch
      %7691 = sbr.rel (%p7689) target = $region96
    $region95: #{_aspp_forward_impl.1} parent=5 // pred_region
      %s7692 = ssub.s32 %s23, 2
      // Predicated region
      $region97: #{_aspp_forward_impl.1} parent=95 // pred_check
        %p7693 = pneg %p484
      $region98: #{_aspp_forward_impl.1} parent=95 // pred_check_branch
        %7695 = sbr.rel (%p7693) target = $region100
      $region99: #{_aspp_forward_impl.1} parent=95 // pred_region
        %p7696 = scmp.lt.s32.totalorder %s34, 1
        %s7697 = scalar_select %p7696, %s34, 1
        %p7698 = scmp.lt.s32.totalorder %s35, 7
        %s7699 = scalar_select %p7698, %s35, 7
        %s7700 = smul.addr %s7699, 8
        %s7701 = smul.addr %s7697, 64
        %s7702 = sadd.s32 %s7700, %s7701
        %s7703 = smul.addr %s7702, 8
        %s7704 = scalar_lea.vmem %s17, %s7703
      $region100: #{_aspp_forward_impl.1} parent=95 // pred_fallthru
        _
    $region96: #{_aspp_forward_impl.1} parent=5 // pred_fallthru
      _
  $region6: #{_aspp_forward_impl.1} parent=0 // loop_footer
    %s27 = sadd.s32 1, %s23
  $region7: #{_aspp_forward_impl.1} parent=0 // loop_footer_branch
    %22 = sbr.rel target = $region3
  $region8: #{_aspp_forward_impl.1} parent=0 // loop_exit
    _

</llo_original>
